<compile_context>
chip_gen: v7x
topology: tpu7x:2x2x1
jax: 0.10.0
libtpu: 0.0.40
codegen_flags: <defaults>
</compile_context>

<pallas_src>
import jax
import jax.numpy as jnp
from jax.experimental import pallas as pl
from jax.experimental.pallas import tpu as pltpu

NEG_SLOPE = 0.01


def _leaky_relu(h, negative_slope=NEG_SLOPE):
    return jnp.where(h > 0, h, negative_slope * h)


def _round_up(x, m):
    return (x + m - 1) // m * m


def mlp_kernel(x_ref,
               w1_ref, b1_ref,
               w2_ref, b2_ref,
               w3_ref, b3_ref,
               w4_ref, b4_ref,
               o_ref):
    # All four linear layers + leaky_relu fused per batch tile.
    # Operands are bf16, accumulation is f32 on the MXU; biases are f32.
    h = jnp.dot(x_ref[...], w1_ref[...], preferred_element_type=jnp.float32) + b1_ref[...]
    h = _leaky_relu(h).astype(jnp.bfloat16)
    h = jnp.dot(h, w2_ref[...], preferred_element_type=jnp.float32) + b2_ref[...]
    h = _leaky_relu(h).astype(jnp.bfloat16)
    h = jnp.dot(h, w3_ref[...], preferred_element_type=jnp.float32) + b3_ref[...]
    h = _leaky_relu(h).astype(jnp.bfloat16)
    logit = jnp.dot(h, w4_ref[...], preferred_element_type=jnp.float32) + b4_ref[...]
    o_ref[...] = logit.astype(o_ref.dtype)


def init_params(key, input_size=2131, n_outputs=3):
    """Kaiming-normal-style init (matches initial_kaiming_normal). Weights stored
    transposed: (in_features, out_features). Biases: (1, out). All f32."""
    dims = [(input_size, 1000), (1000, 128), (128, 64), (64, n_outputs)]
    params = {}
    for idx, (fan_in, fan_out) in enumerate(dims, start=1):
        key, wk, bk = jax.random.split(key, 3)
        std = (2.0 / fan_in) ** 0.5                      # kaiming_normal_ default
        w_t = std * jax.random.normal(wk, (fan_in, fan_out), dtype=jnp.float32)
        bound = 1.0 / (fan_in ** 0.5)                    # PyTorch Linear bias default
        b = jax.random.uniform(bk, (1, fan_out), dtype=jnp.float32,
                               minval=-bound, maxval=bound)
        params[f"w{idx}"] = w_t
        params[f"b{idx}"] = b
    return params


def prepare_params(params, *, weight_dtype=jnp.bfloat16):
    """One-time load-time prep: zero-pad feature dims to multiples of 128, pad the
    output dim to a lane-dense 128-wide slab, and cast weights to bf16."""
    in_dim, h1 = params["w1"].shape
    n_out = params["w4"].shape[1]
    in_pad = _round_up(in_dim, 128)               # 2131 -> 2176
    h1_pad = _round_up(h1, 128)                   # 1000 -> 1024
    out_pad = _round_up(max(n_out, 128), 128)     # 3    -> 128

    def pad2(a, rows, cols):
        return jnp.pad(a, ((0, rows - a.shape[0]), (0, cols - a.shape[1])))

    prepared = {
        "w1": pad2(params["w1"], in_pad, h1_pad).astype(weight_dtype),
        "b1": pad2(params["b1"], 1, h1_pad).astype(jnp.float32),
        "w2": pad2(params["w2"], h1_pad, params["w2"].shape[1]).astype(weight_dtype),
        "b2": params["b2"].astype(jnp.float32),
        "w3": params["w3"].astype(weight_dtype),
        "b3": params["b3"].astype(jnp.float32),
        "w4": pad2(params["w4"], params["w4"].shape[0], out_pad).astype(weight_dtype),
        "b4": pad2(params["b4"], 1, out_pad).astype(jnp.float32),
        "in_dim": in_dim, "in_pad": in_pad, "n_out": n_out, "out_pad": out_pad,
    }
    return prepared


def mlp_forward(x, prepared, *, tile_b=None):
    """x: (B, input_size) f32.  prepared: output of prepare_params."""
    B, in_dim = x.shape
    assert in_dim == prepared["in_dim"]
    in_pad, out_pad, n_out = prepared["in_pad"], prepared["out_pad"], prepared["n_out"]

    # Pick a batch tile: fill the MXU M dim for big batches while keeping >=2 grid
    # steps so the "parallel" axis can shard across TensorCores; pad the batch so
    # divisibility never fails.
    if tile_b is None:
        if B >= 512:
            tile_b = 256
        elif B >= 256:
            tile_b = 128
        else:
            tile_b = _round_up(B, 8)
    B_pad = _round_up(B, tile_b)

    x_p = jnp.pad(x.astype(jnp.bfloat16), ((0, B_pad - B), (0, in_pad - in_dim)))

    w1, b1 = prepared["w1"], prepared["b1"]
    w2, b2 = prepared["w2"], prepared["b2"]
    w3, b3 = prepared["w3"], prepared["b3"]
    w4, b4 = prepared["w4"], prepared["b4"]

    def full_spec(a):
        # Whole-array block, constant index across the batch grid axis
        # (Pallas only DMAs it once; it stays resident in VMEM).
        return pl.BlockSpec(a.shape, lambda i: (0, 0))

    weights_and_biases = (w1, b1, w2, b2, w3, b3, w4, b4)
    flops = 2 * B_pad * sum(int(w.shape[0]) * int(w.shape[1]) for w in (w1, w2, w3, w4))
    bytes_accessed = (
        int(x_p.size) * x_p.dtype.itemsize
        + sum(int(a.size) * a.dtype.itemsize for a in weights_and_biases)
        + B_pad * out_pad * 4
    )

    out = pl.pallas_call(
        mlp_kernel,
        out_shape=jax.ShapeDtypeStruct((B_pad, out_pad), jnp.float32),
        grid_spec=pltpu.PrefetchScalarGridSpec(
            num_scalar_prefetch=0,
            grid=(B_pad // tile_b,),
            in_specs=[
                pl.BlockSpec((tile_b, in_pad), lambda i: (i, 0)),   # x tile
                full_spec(w1), full_spec(b1),
                full_spec(w2), full_spec(b2),
                full_spec(w3), full_spec(b3),
                full_spec(w4), full_spec(b4),
            ],
            out_specs=pl.BlockSpec((tile_b, out_pad), lambda i: (i, 0)),
        ),
        compiler_params=pltpu.CompilerParams(
            dimension_semantics=("parallel",),
            vmem_limit_bytes=48 << 20,          # <= v7x 64 MiB physical VMEM
        ),
        cost_estimate=pl.CostEstimate(
            flops=flops, transcendentals=0, bytes_accessed=bytes_accessed),
    )(x_p, *weights_and_biases)

    return out[:B, :n_out]


def mlp_reference(x, params):
    """Pure-JAX reference using the same bf16-operand / f32-accumulate recipe."""
    def lin(h, w, b):
        return jnp.dot(h.astype(jnp.bfloat16), w.astype(jnp.bfloat16),
                       preferred_element_type=jnp.float32) + b
    h = _leaky_relu(lin(x, params["w1"], params["b1"]))
    h = _leaky_relu(lin(h, params["w2"], params["b2"]))
    h = _leaky_relu(lin(h, params["w3"], params["b3"]))
    return lin(h, params["w4"], params["b4"])


if __name__ == "__main__":
    key = jax.random.PRNGKey(0)
    key, xkey, pkey, xkey2 = jax.random.split(key, 4)

    input_size = 2131   # module default
    n_outputs = 3       # module default

    params = init_params(pkey, input_size=input_size, n_outputs=n_outputs)
    prepared = prepare_params(params)

    # small-batch path (single tile)
    batch = 16
    x = jax.random.normal(xkey, (batch, input_size), dtype=jnp.float32)
    out = jax.block_until_ready(mlp_forward(x, prepared))
    ref = mlp_reference(x, params)
    assert out.shape == (batch, n_outputs)
    assert jnp.allclose(out, ref, atol=1e-2, rtol=1e-2), "mismatch vs pure-JAX reference (small batch)"

    # larger batch exercising tile_b=256, grid=2 ("parallel" axis) and batch padding
    big_batch = 512
    xb = jax.random.normal(xkey2, (big_batch, input_size), dtype=jnp.float32)
    outb = jax.block_until_ready(mlp_forward(xb, prepared))
    refb = mlp_reference(xb, params)
    assert outb.shape == (big_batch, n_outputs)
    assert jnp.allclose(outb, refb, atol=1e-2, rtol=1e-2), "mismatch vs pure-JAX reference (large batch)"

    print("KERNEL_OK")
</pallas_src>

<mosaic_0001>
module attributes {stable_mosaic.version = 11 : i64} {
  func.func @mlp_kernel(%arg0: i32, %arg1: memref<16x2176xbf16, #tpu.memory_space<vmem>>, %arg2: memref<2176x1024xbf16, #tpu.memory_space<vmem>>, %arg3: memref<1x1024xf32, #tpu.memory_space<vmem>>, %arg4: memref<1024x128xbf16, #tpu.memory_space<vmem>>, %arg5: memref<1x128xf32, #tpu.memory_space<vmem>>, %arg6: memref<128x64xbf16, #tpu.memory_space<vmem>>, %arg7: memref<1x64xf32, #tpu.memory_space<vmem>>, %arg8: memref<64x128xbf16, #tpu.memory_space<vmem>>, %arg9: memref<1x128xf32, #tpu.memory_space<vmem>>, %arg10: memref<16x128xf32, #tpu.memory_space<vmem>>) attributes {dimension_semantics = [#tpu.dimension_semantics<parallel>], iteration_bounds = array<i64: 1>, scalar_prefetch = 0 : i64, scratch_operands = 0 : i64, tpu.core_type = #tpu.core_type<tc>, window_params = [{transform_indices = @transform_0, window_bounds = array<i64: 16, 2176>}, {pipeline_mode = #tpu.pipeline_mode<synchronous>, transform_indices = @transform_1, window_bounds = array<i64: 2176, 1024>}, {pipeline_mode = #tpu.pipeline_mode<synchronous>, transform_indices = @transform_2, window_bounds = array<i64: 1, 1024>}, {pipeline_mode = #tpu.pipeline_mode<synchronous>, transform_indices = @transform_3, window_bounds = array<i64: 1024, 128>}, {pipeline_mode = #tpu.pipeline_mode<synchronous>, transform_indices = @transform_4, window_bounds = array<i64: 1, 128>}, {pipeline_mode = #tpu.pipeline_mode<synchronous>, transform_indices = @transform_5, window_bounds = array<i64: 128, 64>}, {pipeline_mode = #tpu.pipeline_mode<synchronous>, transform_indices = @transform_6, window_bounds = array<i64: 1, 64>}, {pipeline_mode = #tpu.pipeline_mode<synchronous>, transform_indices = @transform_7, window_bounds = array<i64: 64, 128>}, {pipeline_mode = #tpu.pipeline_mode<synchronous>, transform_indices = @transform_8, window_bounds = array<i64: 1, 128>}, {transform_indices = @transform_9, window_bounds = array<i64: 16, 128>}]} {
    %c0 = arith.constant 0 : index
    %c0_0 = arith.constant 0 : index
    %0 = vector.load %arg1[%c0, %c0_0] : memref<16x2176xbf16, #tpu.memory_space<vmem>>, vector<16x2176xbf16>
    %c0_1 = arith.constant 0 : index
    %c0_2 = arith.constant 0 : index
    %1 = vector.load %arg2[%c0_1, %c0_2] : memref<2176x1024xbf16, #tpu.memory_space<vmem>>, vector<2176x1024xbf16>
    %cst = arith.constant dense<0.000000e+00> : vector<16x1024xf32>
    %2 = tpu.matmul %0, %1, %cst {dimension_numbers = #tpu.dot_dimension_numbers<[1], [0], [0], [1], [0, 0, 1, 1], [], []>} : vector<16x2176xbf16>, vector<2176x1024xbf16>, vector<16x1024xf32> -> vector<16x1024xf32>
    %c0_3 = arith.constant 0 : index
    %c0_4 = arith.constant 0 : index
    %3 = vector.load %arg3[%c0_3, %c0_4] : memref<1x1024xf32, #tpu.memory_space<vmem>>, vector<1x1024xf32>
    %4 = vector.broadcast %3 : vector<1x1024xf32> to vector<16x1024xf32>
    %5 = arith.addf %2, %4 : vector<16x1024xf32>
    %cst_5 = arith.constant 0.000000e+00 : f32
    %6 = vector.broadcast %cst_5 : f32 to vector<16x1024xf32>
    %7 = arith.cmpf ogt, %5, %6 : vector<16x1024xf32>
    %cst_6 = arith.constant 0.00999999977 : f32
    %8 = vector.broadcast %cst_6 : f32 to vector<16x1024xf32>
    %9 = arith.mulf %8, %5 : vector<16x1024xf32>
    %10 = arith.select %7, %5, %9 : vector<16x1024xi1>, vector<16x1024xf32>
    %11 = arith.truncf %10 : vector<16x1024xf32> to vector<16x1024xbf16>
    %c0_7 = arith.constant 0 : index
    %c0_8 = arith.constant 0 : index
    %12 = vector.load %arg4[%c0_7, %c0_8] : memref<1024x128xbf16, #tpu.memory_space<vmem>>, vector<1024x128xbf16>
    %cst_9 = arith.constant dense<0.000000e+00> : vector<16x128xf32>
    %13 = tpu.matmul %11, %12, %cst_9 {dimension_numbers = #tpu.dot_dimension_numbers<[1], [0], [0], [1], [0, 0, 1, 1], [], []>} : vector<16x1024xbf16>, vector<1024x128xbf16>, vector<16x128xf32> -> vector<16x128xf32>
    %c0_10 = arith.constant 0 : index
    %c0_11 = arith.constant 0 : index
    %14 = vector.load %arg5[%c0_10, %c0_11] : memref<1x128xf32, #tpu.memory_space<vmem>>, vector<1x128xf32>
    %15 = vector.broadcast %14 : vector<1x128xf32> to vector<16x128xf32>
    %16 = arith.addf %13, %15 : vector<16x128xf32>
    %cst_12 = arith.constant 0.000000e+00 : f32
    %17 = vector.broadcast %cst_12 : f32 to vector<16x128xf32>
    %18 = arith.cmpf ogt, %16, %17 : vector<16x128xf32>
    %cst_13 = arith.constant 0.00999999977 : f32
    %19 = vector.broadcast %cst_13 : f32 to vector<16x128xf32>
    %20 = arith.mulf %19, %16 : vector<16x128xf32>
    %21 = arith.select %18, %16, %20 : vector<16x128xi1>, vector<16x128xf32>
    %22 = arith.truncf %21 : vector<16x128xf32> to vector<16x128xbf16>
    %c0_14 = arith.constant 0 : index
    %c0_15 = arith.constant 0 : index
    %23 = vector.load %arg6[%c0_14, %c0_15] : memref<128x64xbf16, #tpu.memory_space<vmem>>, vector<128x64xbf16>
    %cst_16 = arith.constant dense<0.000000e+00> : vector<16x64xf32>
    %24 = tpu.matmul %22, %23, %cst_16 {dimension_numbers = #tpu.dot_dimension_numbers<[1], [0], [0], [1], [0, 0, 1, 1], [], []>} : vector<16x128xbf16>, vector<128x64xbf16>, vector<16x64xf32> -> vector<16x64xf32>
    %c0_17 = arith.constant 0 : index
    %c0_18 = arith.constant 0 : index
    %25 = vector.load %arg7[%c0_17, %c0_18] : memref<1x64xf32, #tpu.memory_space<vmem>>, vector<1x64xf32>
    %26 = vector.broadcast %25 : vector<1x64xf32> to vector<16x64xf32>
    %27 = arith.addf %24, %26 : vector<16x64xf32>
    %cst_19 = arith.constant 0.000000e+00 : f32
    %28 = vector.broadcast %cst_19 : f32 to vector<16x64xf32>
    %29 = arith.cmpf ogt, %27, %28 : vector<16x64xf32>
    %cst_20 = arith.constant 0.00999999977 : f32
    %30 = vector.broadcast %cst_20 : f32 to vector<16x64xf32>
    %31 = arith.mulf %30, %27 : vector<16x64xf32>
    %32 = arith.select %29, %27, %31 : vector<16x64xi1>, vector<16x64xf32>
    %33 = arith.truncf %32 : vector<16x64xf32> to vector<16x64xbf16>
    %c0_21 = arith.constant 0 : index
    %c0_22 = arith.constant 0 : index
    %34 = vector.load %arg8[%c0_21, %c0_22] : memref<64x128xbf16, #tpu.memory_space<vmem>>, vector<64x128xbf16>
    %cst_23 = arith.constant dense<0.000000e+00> : vector<16x128xf32>
    %35 = tpu.matmul %33, %34, %cst_23 {dimension_numbers = #tpu.dot_dimension_numbers<[1], [0], [0], [1], [0, 0, 1, 1], [], []>} : vector<16x64xbf16>, vector<64x128xbf16>, vector<16x128xf32> -> vector<16x128xf32>
    %c0_24 = arith.constant 0 : index
    %c0_25 = arith.constant 0 : index
    %36 = vector.load %arg9[%c0_24, %c0_25] : memref<1x128xf32, #tpu.memory_space<vmem>>, vector<1x128xf32>
    %37 = vector.broadcast %36 : vector<1x128xf32> to vector<16x128xf32>
    %38 = arith.addf %35, %37 : vector<16x128xf32>
    %c0_26 = arith.constant 0 : index
    %c0_27 = arith.constant 0 : index
    %39 = vector.load %arg10[%c0_26, %c0_27] : memref<16x128xf32, #tpu.memory_space<vmem>>, vector<16x128xf32>
    tpu.vector_store %arg10[%c0_26, %c0_27], %38 {strides = array<i32>} : memref<16x128xf32, #tpu.memory_space<vmem>>, vector<16x128xf32>,
    return
  }
  func.func @transform_0(%arg0: i32) -> (i32, i32) {
    %c0_i32 = arith.constant 0 : i32
    %c0_i32_0 = arith.constant 0 : i32
    return %arg0, %c0_i32 : i32, i32
  }
  func.func @transform_1(%arg0: i32) -> (i32, i32) {
    %c0_i32 = arith.constant 0 : i32
    %c0_i32_0 = arith.constant 0 : i32
    %c0_i32_1 = arith.constant 0 : i32
    return %c0_i32, %c0_i32_0 : i32, i32
  }
  func.func @transform_2(%arg0: i32) -> (i32, i32) {
    %c0_i32 = arith.constant 0 : i32
    %c0_i32_0 = arith.constant 0 : i32
    %c0_i32_1 = arith.constant 0 : i32
    return %c0_i32, %c0_i32_0 : i32, i32
  }
  func.func @transform_3(%arg0: i32) -> (i32, i32) {
    %c0_i32 = arith.constant 0 : i32
    %c0_i32_0 = arith.constant 0 : i32
    %c0_i32_1 = arith.constant 0 : i32
    return %c0_i32, %c0_i32_0 : i32, i32
  }
  func.func @transform_4(%arg0: i32) -> (i32, i32) {
    %c0_i32 = arith.constant 0 : i32
    %c0_i32_0 = arith.constant 0 : i32
    %c0_i32_1 = arith.constant 0 : i32
    return %c0_i32, %c0_i32_0 : i32, i32
  }
  func.func @transform_5(%arg0: i32) -> (i32, i32) {
    %c0_i32 = arith.constant 0 : i32
    %c0_i32_0 = arith.constant 0 : i32
    %c0_i32_1 = arith.constant 0 : i32
    return %c0_i32, %c0_i32_0 : i32, i32
  }
  func.func @transform_6(%arg0: i32) -> (i32, i32) {
    %c0_i32 = arith.constant 0 : i32
    %c0_i32_0 = arith.constant 0 : i32
    %c0_i32_1 = arith.constant 0 : i32
    return %c0_i32, %c0_i32_0 : i32, i32
  }
  func.func @transform_7(%arg0: i32) -> (i32, i32) {
    %c0_i32 = arith.constant 0 : i32
    %c0_i32_0 = arith.constant 0 : i32
    %c0_i32_1 = arith.constant 0 : i32
    return %c0_i32, %c0_i32_0 : i32, i32
  }
  func.func @transform_8(%arg0: i32) -> (i32, i32) {
    %c0_i32 = arith.constant 0 : i32
    %c0_i32_0 = arith.constant 0 : i32
    %c0_i32_1 = arith.constant 0 : i32
    return %c0_i32, %c0_i32_0 : i32, i32
  }
  func.func @transform_9(%arg0: i32) -> (i32, i32) {
    %c0_i32 = arith.constant 0 : i32
    %c0_i32_0 = arith.constant 0 : i32
    return %arg0, %c0_i32 : i32, i32
  }
}

</mosaic_0001>

<llo_original>
// kernel: tpu_custom_call.1
$region0: #{tpu_custom_call.1}
  #allocation0 [shape = 'u32[]', space=smem, size = 0x4, offset = 0x4, fixed_abs, tag = 'smem constant byte address 0x4 - core index']
  #allocation1 [shape = 'u32[144,128]{1,0:T(1,128)}', space=vmem, size = 0x12000, scoped, tag = 'internal scratch']
  %s0 = inlined_call_operand.hbm [shape: bf16[16,2176], index: 0, kind: input, shape index: {}]
  %s1 = inlined_call_operand.hbm [shape: bf16[2176,1024], index: 1, kind: input, shape index: {}]
  %s2 = inlined_call_operand.hbm [shape: f32[1,1024], index: 2, kind: input, shape index: {}]
  %s3 = inlined_call_operand.hbm [shape: bf16[1024,128], index: 3, kind: input, shape index: {}]
  %s4 = inlined_call_operand.hbm [shape: f32[1,128], index: 4, kind: input, shape index: {}]
  %s5 = inlined_call_operand.vmem [shape: bf16[128,64], index: 5, kind: input, shape index: {}]
  %s6 = inlined_call_operand.hbm [shape: f32[1,64], index: 6, kind: input, shape index: {}]
  %s7 = inlined_call_operand.hbm [shape: bf16[64,128], index: 7, kind: input, shape index: {}]
  %s8 = inlined_call_operand.hbm [shape: f32[1,128], index: 8, kind: input, shape index: {}]
  %s9 = inlined_call_operand.hbm [shape: f32[16,128], index: 9, kind: output, shape index: {}]
  %s10 = sld [smem:[#allocation0]]
  $region78: #{tpu_custom_call.1} parent=0
    _
  %s12 = ssub.s32 1, %s10
  %s13 = scalar_select 0, %s12, %s10
  $region1: #{tpu_custom_call.1} parent=0
    #allocation2 [shape = 'u8[69632]{0}', space=vmem, size = 0x11000, scoped, tag = 'input window, operand 0, single buffered']
    #allocation3 [shape = 's32[1]{0}', space=sflag, size = 0x4, scoped, tag = 'scoped memory for tpu_custom_call.1']
    #allocation4 [shape = 's32[1]{0}', space=sflag, size = 0x4, scoped, tag = 'scoped memory for tpu_custom_call.1']
    #allocation5 [shape = 'u8[4456448]{0}', space=vmem, size = 0x440000, scoped, tag = 'input window, operand 1, single buffered']
    #allocation6 [shape = 's32[1]{0}', space=sflag, size = 0x4, scoped, tag = 'scoped memory for tpu_custom_call.1']
    #allocation7 [shape = 'u8[4096]{0}', space=vmem, size = 0x1000, scoped, tag = 'input window, operand 2, single buffered']
    #allocation8 [shape = 'u8[262144]{0}', space=vmem, size = 0x40000, scoped, tag = 'input window, operand 3, single buffered']
    #allocation9 [shape = 's32[1]{0}', space=sflag, size = 0x4, scoped, tag = 'scoped memory for tpu_custom_call.1']
    #allocation10 [shape = 'u8[512]{0}', space=vmem, size = 0x400, scoped, tag = 'input window, operand 4, single buffered']
    #allocation11 [shape = 'u8[512]{0}', space=vmem, size = 0x400, scoped, tag = 'input window, operand 6, single buffered']
    #allocation12 [shape = 's32[1]{0}', space=sflag, size = 0x4, scoped, tag = 'scoped memory for tpu_custom_call.1']
    #allocation13 [shape = 'u8[16384]{0}', space=vmem, size = 0x4000, scoped, tag = 'input window, operand 7, single buffered']
    #allocation14 [shape = 'u8[512]{0}', space=vmem, size = 0x400, scoped, tag = 'input window, operand 8, single buffered']
    #allocation15 [shape = 's32[1]{0}', space=sflag, size = 0x4, scoped, tag = 'scoped memory for tpu_custom_call.1']
    #allocation16 [shape = 'u8[8192]{0}', space=vmem, size = 0x2000, scoped, tag = 'output window, operand 0, single buffered']
    %14 = vsyncpa [#allocation3], 0
    %15 = vsyncpa [#allocation6], 0
    %16 = vsyncpa [#allocation9], 0
    %17 = vsyncpa [#allocation12], 0
    %18 = vsyncpa [#allocation15], 0
    %19 = vsyncpa [#allocation4], 0
    // Predicated region
    $region2: #{tpu_custom_call.1} parent=1 // pred_check
      _
    $region3: #{tpu_custom_call.1} parent=1 // pred_check_branch
      %21 = sbr.rel (0) target = $region5
    $region4: #{tpu_custom_call.1} parent=1 // pred_region
      %s23 = ssub.s32 2176, 2176
      %24 = vsyncadd [#allocation3], %s23
      %s25 = sshll.u32 [#allocation2], 4
      %s26 = int_to_ptr.vmem [resolvable:$true] %s25
      %31 = dma.hbm_to_vmem [thread:$0]  %s0, 2176, %s26, [#allocation3], 1088, 1088, 68
    $region5: #{tpu_custom_call.1} parent=1 // pred_fallthru
      _
    // Predicated region
    $region6: #{tpu_custom_call.1} parent=1 // pred_check
      _
    $region7: #{tpu_custom_call.1} parent=1 // pred_check_branch
      %33 = sbr.rel (0) target = $region9
    $region8: #{tpu_custom_call.1} parent=1 // pred_region
      %s35 = ssub.s32 139264, 139264
      %36 = vsyncadd [#allocation6], %s35
      %s37 = sshll.u32 [#allocation5], 4
      %s38 = int_to_ptr.vmem [resolvable:$true] %s37
      %43 = dma.hbm_to_vmem [thread:$0]  %s1, 139264, %s38, [#allocation6], 512, 512, 32
    $region9: #{tpu_custom_call.1} parent=1 // pred_fallthru
      _
    // Predicated region
    $region10: #{tpu_custom_call.1} parent=1 // pred_check
      _
    $region11: #{tpu_custom_call.1} parent=1 // pred_check_branch
      %45 = sbr.rel (0) target = $region13
    $region12: #{tpu_custom_call.1} parent=1 // pred_region
      %s47 = ssub.s32 128, 128
      %48 = vsyncadd [#allocation6], %s47
      %s50 = sshll.u32 [#allocation7], 4
      %s51 = int_to_ptr.vmem [resolvable:$true] %s50
      %53 = dma.hbm_to_vmem [thread:$0]  %s2, 128, %s51, [#allocation6]
    $region13: #{tpu_custom_call.1} parent=1 // pred_fallthru
      _
    // Predicated region
    $region14: #{tpu_custom_call.1} parent=1 // pred_check
      _
    $region15: #{tpu_custom_call.1} parent=1 // pred_check_branch
      %55 = sbr.rel (0) target = $region17
    $region16: #{tpu_custom_call.1} parent=1 // pred_region
      %s57 = ssub.s32 8192, 8192
      %58 = vsyncadd [#allocation9], %s57
      %s59 = sshll.u32 [#allocation8], 4
      %s60 = int_to_ptr.vmem [resolvable:$true] %s59
      %65 = dma.hbm_to_vmem [thread:$0]  %s3, 8192, %s60, [#allocation9], 64, 64, 4
    $region17: #{tpu_custom_call.1} parent=1 // pred_fallthru
      _
    // Predicated region
    $region18: #{tpu_custom_call.1} parent=1 // pred_check
      _
    $region19: #{tpu_custom_call.1} parent=1 // pred_check_branch
      %67 = sbr.rel (0) target = $region21
    $region20: #{tpu_custom_call.1} parent=1 // pred_region
      %s69 = ssub.s32 16, 16
      %70 = vsyncadd [#allocation9], %s69
      %s72 = sshll.u32 [#allocation10], 4
      %s73 = int_to_ptr.vmem [resolvable:$true] %s72
      %75 = dma.hbm_to_vmem [thread:$0]  %s4, 16, %s73, [#allocation9]
    $region21: #{tpu_custom_call.1} parent=1 // pred_fallthru
      _
    // Predicated region
    $region22: #{tpu_custom_call.1} parent=1 // pred_check
      _
    $region23: #{tpu_custom_call.1} parent=1 // pred_check_branch
      %77 = sbr.rel (0) target = $region25
    $region24: #{tpu_custom_call.1} parent=1 // pred_region
      _
    $region25: #{tpu_custom_call.1} parent=1 // pred_fallthru
      _
    // Predicated region
    $region26: #{tpu_custom_call.1} parent=1 // pred_check
      _
    $region27: #{tpu_custom_call.1} parent=1 // pred_check_branch
      %79 = sbr.rel (0) target = $region29
    $region28: #{tpu_custom_call.1} parent=1 // pred_region
      %s81 = ssub.s32 16, 16
      %82 = vsyncadd [#allocation12], %s81
      %s84 = sshll.u32 [#allocation11], 4
      %s85 = int_to_ptr.vmem [resolvable:$true] %s84
      %87 = dma.hbm_to_vmem [thread:$0]  %s6, 16, %s85, [#allocation12]
    $region29: #{tpu_custom_call.1} parent=1 // pred_fallthru
      _
    // Predicated region
    $region30: #{tpu_custom_call.1} parent=1 // pred_check
      _
    $region31: #{tpu_custom_call.1} parent=1 // pred_check_branch
      %89 = sbr.rel (0) target = $region33
    $region32: #{tpu_custom_call.1} parent=1 // pred_region
      %s91 = ssub.s32 512, 512
      %92 = vsyncadd [#allocation12], %s91
      %s93 = sshll.u32 [#allocation13], 4
      %s94 = int_to_ptr.vmem [resolvable:$true] %s93
      %99 = dma.hbm_to_vmem [thread:$0]  %s7, 512, %s94, [#allocation12], 64, 64, 4
    $region33: #{tpu_custom_call.1} parent=1 // pred_fallthru
      _
    // Predicated region
    $region34: #{tpu_custom_call.1} parent=1 // pred_check
      _
    $region35: #{tpu_custom_call.1} parent=1 // pred_check_branch
      %101 = sbr.rel (0) target = $region37
    $region36: #{tpu_custom_call.1} parent=1 // pred_region
      %s103 = ssub.s32 16, 16
      %104 = vsyncadd [#allocation15], %s103
      %s106 = sshll.u32 [#allocation14], 4
      %s107 = int_to_ptr.vmem [resolvable:$true] %s106
      %109 = dma.hbm_to_vmem [thread:$0]  %s8, 16, %s107, [#allocation15]
    $region37: #{tpu_custom_call.1} parent=1 // pred_fallthru
      _
    // Predicated region
    $region38: #{tpu_custom_call.1} parent=1 // pred_check
      _
    $region39: #{tpu_custom_call.1} parent=1 // pred_check_branch
      %111 = sbr.rel (0) target = $region41
    $region40: #{tpu_custom_call.1} parent=1 // pred_region
      %112 = dma.done [#allocation3], 2176
    $region41: #{tpu_custom_call.1} parent=1 // pred_fallthru
      _
    // Predicated region
    $region42: #{tpu_custom_call.1} parent=1 // pred_check
      _
    $region43: #{tpu_custom_call.1} parent=1 // pred_check_branch
      %114 = sbr.rel (0) target = $region45
    $region44: #{tpu_custom_call.1} parent=1 // pred_region
      %115 = dma.done [#allocation6], 139264
    $region45: #{tpu_custom_call.1} parent=1 // pred_fallthru
      _
    // Predicated region
    $region46: #{tpu_custom_call.1} parent=1 // pred_check
      _
    $region47: #{tpu_custom_call.1} parent=1 // pred_check_branch
      %117 = sbr.rel (0) target = $region49
    $region48: #{tpu_custom_call.1} parent=1 // pred_region
      %118 = dma.done [#allocation6], 128
    $region49: #{tpu_custom_call.1} parent=1 // pred_fallthru
      _
    // Predicated region
    $region50: #{tpu_custom_call.1} parent=1 // pred_check
      _
    $region51: #{tpu_custom_call.1} parent=1 // pred_check_branch
      %120 = sbr.rel (0) target = $region53
    $region52: #{tpu_custom_call.1} parent=1 // pred_region
      %121 = dma.done [#allocation9], 8192
    $region53: #{tpu_custom_call.1} parent=1 // pred_fallthru
      _
    // Predicated region
    $region54: #{tpu_custom_call.1} parent=1 // pred_check
      _
    $region55: #{tpu_custom_call.1} parent=1 // pred_check_branch
      %123 = sbr.rel (0) target = $region57
    $region56: #{tpu_custom_call.1} parent=1 // pred_region
      %124 = dma.done [#allocation9], 16
    $region57: #{tpu_custom_call.1} parent=1 // pred_fallthru
      _
    // Predicated region
    $region58: #{tpu_custom_call.1} parent=1 // pred_check
      _
    $region59: #{tpu_custom_call.1} parent=1 // pred_check_branch
      %126 = sbr.rel (0) target = $region61
    $region60: #{tpu_custom_call.1} parent=1 // pred_region
      %127 = dma.done [#allocation12], 16
    $region61: #{tpu_custom_call.1} parent=1 // pred_fallthru
      _
    // Predicated region
    $region62: #{tpu_custom_call.1} parent=1 // pred_check
      _
    $region63: #{tpu_custom_call.1} parent=1 // pred_check_branch
      %129 = sbr.rel (0) target = $region65
    $region64: #{tpu_custom_call.1} parent=1 // pred_region
      %130 = dma.done [#allocation12], 512
    $region65: #{tpu_custom_call.1} parent=1 // pred_fallthru
      _
    // Predicated region
    $region66: #{tpu_custom_call.1} parent=1 // pred_check
      _
    $region67: #{tpu_custom_call.1} parent=1 // pred_check_branch
      %132 = sbr.rel (0) target = $region69
    $region68: #{tpu_custom_call.1} parent=1 // pred_region
      %133 = dma.done [#allocation15], 16
    $region69: #{tpu_custom_call.1} parent=1 // pred_fallthru
      _
    %v135 = vld [vmem:[#allocation2] sm:$0xff]
    %v136 = vld [vmem:[#allocation2 + $0x8] sm:$0xff]
    %v137 = vld [vmem:[#allocation2 + $0x10] sm:$0xff]
    %v138 = vld [vmem:[#allocation2 + $0x18] sm:$0xff]
    %v139 = vld [vmem:[#allocation2 + $0x20] sm:$0xff]
    %v140 = vld [vmem:[#allocation2 + $0x28] sm:$0xff]
    %v141 = vld [vmem:[#allocation2 + $0x30] sm:$0xff]
    %v142 = vld [vmem:[#allocation2 + $0x38] sm:$0xff]
    %v143 = vld [vmem:[#allocation2 + $0x40] sm:$0xf]
    %v144 = vld [vmem:[#allocation2 + $0x44] sm:$0xff]
    %v145 = vld [vmem:[#allocation2 + $0x4c] sm:$0xff]
    %v146 = vld [vmem:[#allocation2 + $0x54] sm:$0xff]
    %v147 = vld [vmem:[#allocation2 + $0x5c] sm:$0xff]
    %v148 = vld [vmem:[#allocation2 + $0x64] sm:$0xff]
    %v149 = vld [vmem:[#allocation2 + $0x6c] sm:$0xff]
    %v150 = vld [vmem:[#allocation2 + $0x74] sm:$0xff]
    %v151 = vld [vmem:[#allocation2 + $0x7c] sm:$0xff]
    %v152 = vld [vmem:[#allocation2 + $0x84] sm:$0xf]
    %v153 = vld [vmem:[#allocation5] sm:$0xff]
    %v154 = vld [vmem:[#allocation5 + $0x8] sm:$0xff]
    %v155 = vld [vmem:[#allocation5 + $0x10] sm:$0xff]
    %v156 = vld [vmem:[#allocation5 + $0x18] sm:$0xff]
    %v157 = vld [vmem:[#allocation5 + $0x20] sm:$0xff]
    %v158 = vld [vmem:[#allocation5 + $0x28] sm:$0xff]
    %v159 = vld [vmem:[#allocation5 + $0x30] sm:$0xff]
    %v160 = vld [vmem:[#allocation5 + $0x38] sm:$0xff]
    %v161 = vld [vmem:[#allocation5 + $0x40] sm:$0xff]
    %v162 = vld [vmem:[#allocation5 + $0x48] sm:$0xff]
    %v163 = vld [vmem:[#allocation5 + $0x50] sm:$0xff]
    %v164 = vld [vmem:[#allocation5 + $0x58] sm:$0xff]
    %v165 = vld [vmem:[#allocation5 + $0x60] sm:$0xff]
    %v166 = vld [vmem:[#allocation5 + $0x68] sm:$0xff]
    %v167 = vld [vmem:[#allocation5 + $0x70] sm:$0xff]
    %v168 = vld [vmem:[#allocation5 + $0x78] sm:$0xff]
    %v169 = vld [vmem:[#allocation5 + $0x80] sm:$0xff]
    %v170 = vld [vmem:[#allocation5 + $0x88] sm:$0xff]
    %v171 = vld [vmem:[#allocation5 + $0x90] sm:$0xff]
    %v172 = vld [vmem:[#allocation5 + $0x98] sm:$0xff]
    %v173 = vld [vmem:[#allocation5 + $0xa0] sm:$0xff]
    %v174 = vld [vmem:[#allocation5 + $0xa8] sm:$0xff]
    %v175 = vld [vmem:[#allocation5 + $0xb0] sm:$0xff]
    %v176 = vld [vmem:[#allocation5 + $0xb8] sm:$0xff]
    %v177 = vld [vmem:[#allocation5 + $0xc0] sm:$0xff]
    %v178 = vld [vmem:[#allocation5 + $0xc8] sm:$0xff]
    %v179 = vld [vmem:[#allocation5 + $0xd0] sm:$0xff]
    %v180 = vld [vmem:[#allocation5 + $0xd8] sm:$0xff]
    %v181 = vld [vmem:[#allocation5 + $0xe0] sm:$0xff]
    %v182 = vld [vmem:[#allocation5 + $0xe8] sm:$0xff]
    %v183 = vld [vmem:[#allocation5 + $0xf0] sm:$0xff]
    %v184 = vld [vmem:[#allocation5 + $0xf8] sm:$0xff]
    %v185 = vld [vmem:[#allocation5 + $0x100] sm:$0xff]
    %v186 = vld [vmem:[#allocation5 + $0x108] sm:$0xff]
    %v187 = vld [vmem:[#allocation5 + $0x110] sm:$0xff]
    %v188 = vld [vmem:[#allocation5 + $0x118] sm:$0xff]
    %v189 = vld [vmem:[#allocation5 + $0x120] sm:$0xff]
    %v190 = vld [vmem:[#allocation5 + $0x128] sm:$0xff]
    %v191 = vld [vmem:[#allocation5 + $0x130] sm:$0xff]
    %v192 = vld [vmem:[#allocation5 + $0x138] sm:$0xff]
    %v193 = vld [vmem:[#allocation5 + $0x140] sm:$0xff]
    %v194 = vld [vmem:[#allocation5 + $0x148] sm:$0xff]
    %v195 = vld [vmem:[#allocation5 + $0x150] sm:$0xff]
    %v196 = vld [vmem:[#allocation5 + $0x158] sm:$0xff]
    %v197 = vld [vmem:[#allocation5 + $0x160] sm:$0xff]
    %v198 = vld [vmem:[#allocation5 + $0x168] sm:$0xff]
    %v199 = vld [vmem:[#allocation5 + $0x170] sm:$0xff]
    %v200 = vld [vmem:[#allocation5 + $0x178] sm:$0xff]
    %v201 = vld [vmem:[#allocation5 + $0x180] sm:$0xff]
    %v202 = vld [vmem:[#allocation5 + $0x188] sm:$0xff]
    %v203 = vld [vmem:[#allocation5 + $0x190] sm:$0xff]
    %v204 = vld [vmem:[#allocation5 + $0x198] sm:$0xff]
    %v205 = vld [vmem:[#allocation5 + $0x1a0] sm:$0xff]
    %v206 = vld [vmem:[#allocation5 + $0x1a8] sm:$0xff]
    %v207 = vld [vmem:[#allocation5 + $0x1b0] sm:$0xff]
    %v208 = vld [vmem:[#allocation5 + $0x1b8] sm:$0xff]
    %v209 = vld [vmem:[#allocation5 + $0x1c0] sm:$0xff]
    %v210 = vld [vmem:[#allocation5 + $0x1c8] sm:$0xff]
    %v211 = vld [vmem:[#allocation5 + $0x1d0] sm:$0xff]
    %v212 = vld [vmem:[#allocation5 + $0x1d8] sm:$0xff]
    %v213 = vld [vmem:[#allocation5 + $0x1e0] sm:$0xff]
    %v214 = vld [vmem:[#allocation5 + $0x1e8] sm:$0xff]
    %v215 = vld [vmem:[#allocation5 + $0x1f0] sm:$0xff]
    %v216 = vld [vmem:[#allocation5 + $0x1f8] sm:$0xff]
    %v217 = vld [vmem:[#allocation5 + $0x200] sm:$0xff]
    %v218 = vld [vmem:[#allocation5 + $0x208] sm:$0xff]
    %v219 = vld [vmem:[#allocation5 + $0x210] sm:$0xff]
    %v220 = vld [vmem:[#allocation5 + $0x218] sm:$0xff]
    %v221 = vld [vmem:[#allocation5 + $0x220] sm:$0xff]
    %v222 = vld [vmem:[#allocation5 + $0x228] sm:$0xff]
    %v223 = vld [vmem:[#allocation5 + $0x230] sm:$0xff]
    %v224 = vld [vmem:[#allocation5 + $0x238] sm:$0xff]
    %v225 = vld [vmem:[#allocation5 + $0x240] sm:$0xff]
    %v226 = vld [vmem:[#allocation5 + $0x248] sm:$0xff]
    %v227 = vld [vmem:[#allocation5 + $0x250] sm:$0xff]
    %v228 = vld [vmem:[#allocation5 + $0x258] sm:$0xff]
    %v229 = vld [vmem:[#allocation5 + $0x260] sm:$0xff]
    %v230 = vld [vmem:[#allocation5 + $0x268] sm:$0xff]
    %v231 = vld [vmem:[#allocation5 + $0x270] sm:$0xff]
    %v232 = vld [vmem:[#allocation5 + $0x278] sm:$0xff]
    %v233 = vld [vmem:[#allocation5 + $0x280] sm:$0xff]
    %v234 = vld [vmem:[#allocation5 + $0x288] sm:$0xff]
    %v235 = vld [vmem:[#allocation5 + $0x290] sm:$0xff]
    %v236 = vld [vmem:[#allocation5 + $0x298] sm:$0xff]
    %v237 = vld [vmem:[#allocation5 + $0x2a0] sm:$0xff]
    %v238 = vld [vmem:[#allocation5 + $0x2a8] sm:$0xff]
    %v239 = vld [vmem:[#allocation5 + $0x2b0] sm:$0xff]
    %v240 = vld [vmem:[#allocation5 + $0x2b8] sm:$0xff]
    %v241 = vld [vmem:[#allocation5 + $0x2c0] sm:$0xff]
    %v242 = vld [vmem:[#allocation5 + $0x2c8] sm:$0xff]
    %v243 = vld [vmem:[#allocation5 + $0x2d0] sm:$0xff]
    %v244 = vld [vmem:[#allocation5 + $0x2d8] sm:$0xff]
    %v245 = vld [vmem:[#allocation5 + $0x2e0] sm:$0xff]
    %v246 = vld [vmem:[#allocation5 + $0x2e8] sm:$0xff]
    %v247 = vld [vmem:[#allocation5 + $0x2f0] sm:$0xff]
    %v248 = vld [vmem:[#allocation5 + $0x2f8] sm:$0xff]
    %v249 = vld [vmem:[#allocation5 + $0x300] sm:$0xff]
    %v250 = vld [vmem:[#allocation5 + $0x308] sm:$0xff]
    %v251 = vld [vmem:[#allocation5 + $0x310] sm:$0xff]
    %v252 = vld [vmem:[#allocation5 + $0x318] sm:$0xff]
    %v253 = vld [vmem:[#allocation5 + $0x320] sm:$0xff]
    %v254 = vld [vmem:[#allocation5 + $0x328] sm:$0xff]
    %v255 = vld [vmem:[#allocation5 + $0x330] sm:$0xff]
    %v256 = vld [vmem:[#allocation5 + $0x338] sm:$0xff]
    %v257 = vld [vmem:[#allocation5 + $0x340] sm:$0xff]
    %v258 = vld [vmem:[#allocation5 + $0x348] sm:$0xff]
    %v259 = vld [vmem:[#allocation5 + $0x350] sm:$0xff]
    %v260 = vld [vmem:[#allocation5 + $0x358] sm:$0xff]
    %v261 = vld [vmem:[#allocation5 + $0x360] sm:$0xff]
    %v262 = vld [vmem:[#allocation5 + $0x368] sm:$0xff]
    %v263 = vld [vmem:[#allocation5 + $0x370] sm:$0xff]
    %v264 = vld [vmem:[#allocation5 + $0x378] sm:$0xff]
    %v265 = vld [vmem:[#allocation5 + $0x380] sm:$0xff]
    %v266 = vld [vmem:[#allocation5 + $0x388] sm:$0xff]
    %v267 = vld [vmem:[#allocation5 + $0x390] sm:$0xff]
    %v268 = vld [vmem:[#allocation5 + $0x398] sm:$0xff]
    %v269 = vld [vmem:[#allocation5 + $0x3a0] sm:$0xff]
    %v270 = vld [vmem:[#allocation5 + $0x3a8] sm:$0xff]
    %v271 = vld [vmem:[#allocation5 + $0x3b0] sm:$0xff]
    %v272 = vld [vmem:[#allocation5 + $0x3b8] sm:$0xff]
    %v273 = vld [vmem:[#allocation5 + $0x3c0] sm:$0xff]
    %v274 = vld [vmem:[#allocation5 + $0x3c8] sm:$0xff]
    %v275 = vld [vmem:[#allocation5 + $0x3d0] sm:$0xff]
    %v276 = vld [vmem:[#allocation5 + $0x3d8] sm:$0xff]
    %v277 = vld [vmem:[#allocation5 + $0x3e0] sm:$0xff]
    %v278 = vld [vmem:[#allocation5 + $0x3e8] sm:$0xff]
    %v279 = vld [vmem:[#allocation5 + $0x3f0] sm:$0xff]
    %v280 = vld [vmem:[#allocation5 + $0x3f8] sm:$0xff]
    %v281 = vld [vmem:[#allocation5 + $0x400] sm:$0xff]
    %v282 = vld [vmem:[#allocation5 + $0x408] sm:$0xff]
    %v283 = vld [vmem:[#allocation5 + $0x410] sm:$0xff]
    %v284 = vld [vmem:[#allocation5 + $0x418] sm:$0xff]
    %v285 = vld [vmem:[#allocation5 + $0x420] sm:$0xff]
    %v286 = vld [vmem:[#allocation5 + $0x428] sm:$0xff]
    %v287 = vld [vmem:[#allocation5 + $0x430] sm:$0xff]
    %v288 = vld [vmem:[#allocation5 + $0x438] sm:$0xff]
    %v289 = vld [vmem:[#allocation5 + $0x440] sm:$0xff]
    %v290 = vld [vmem:[#allocation5 + $0x448] sm:$0xff]
    %v291 = vld [vmem:[#allocation5 + $0x450] sm:$0xff]
    %v292 = vld [vmem:[#allocation5 + $0x458] sm:$0xff]
    %v293 = vld [vmem:[#allocation5 + $0x460] sm:$0xff]
    %v294 = vld [vmem:[#allocation5 + $0x468] sm:$0xff]
    %v295 = vld [vmem:[#allocation5 + $0x470] sm:$0xff]
    %v296 = vld [vmem:[#allocation5 + $0x478] sm:$0xff]
    %v297 = vld [vmem:[#allocation5 + $0x480] sm:$0xff]
    %v298 = vld [vmem:[#allocation5 + $0x488] sm:$0xff]
    %v299 = vld [vmem:[#allocation5 + $0x490] sm:$0xff]
    %v300 = vld [vmem:[#allocation5 + $0x498] sm:$0xff]
    %v301 = vld [vmem:[#allocation5 + $0x4a0] sm:$0xff]
    %v302 = vld [vmem:[#allocation5 + $0x4a8] sm:$0xff]
    %v303 = vld [vmem:[#allocation5 + $0x4b0] sm:$0xff]
    %v304 = vld [vmem:[#allocation5 + $0x4b8] sm:$0xff]
    %v305 = vld [vmem:[#allocation5 + $0x4c0] sm:$0xff]
    %v306 = vld [vmem:[#allocation5 + $0x4c8] sm:$0xff]
    %v307 = vld [vmem:[#allocation5 + $0x4d0] sm:$0xff]
    %v308 = vld [vmem:[#allocation5 + $0x4d8] sm:$0xff]
    %v309 = vld [vmem:[#allocation5 + $0x4e0] sm:$0xff]
    %v310 = vld [vmem:[#allocation5 + $0x4e8] sm:$0xff]
    %v311 = vld [vmem:[#allocation5 + $0x4f0] sm:$0xff]
    %v312 = vld [vmem:[#allocation5 + $0x4f8] sm:$0xff]
    %v313 = vld [vmem:[#allocation5 + $0x500] sm:$0xff]
    %v314 = vld [vmem:[#allocation5 + $0x508] sm:$0xff]
    %v315 = vld [vmem:[#allocation5 + $0x510] sm:$0xff]
    %v316 = vld [vmem:[#allocation5 + $0x518] sm:$0xff]
    %v317 = vld [vmem:[#allocation5 + $0x520] sm:$0xff]
    %v318 = vld [vmem:[#allocation5 + $0x528] sm:$0xff]
    %v319 = vld [vmem:[#allocation5 + $0x530] sm:$0xff]
    %v320 = vld [vmem:[#allocation5 + $0x538] sm:$0xff]
    %v321 = vld [vmem:[#allocation5 + $0x540] sm:$0xff]
    %v322 = vld [vmem:[#allocation5 + $0x548] sm:$0xff]
    %v323 = vld [vmem:[#allocation5 + $0x550] sm:$0xff]
    %v324 = vld [vmem:[#allocation5 + $0x558] sm:$0xff]
    %v325 = vld [vmem:[#allocation5 + $0x560] sm:$0xff]
    %v326 = vld [vmem:[#allocation5 + $0x568] sm:$0xff]
    %v327 = vld [vmem:[#allocation5 + $0x570] sm:$0xff]
    %v328 = vld [vmem:[#allocation5 + $0x578] sm:$0xff]
    %v329 = vld [vmem:[#allocation5 + $0x580] sm:$0xff]
    %v330 = vld [vmem:[#allocation5 + $0x588] sm:$0xff]
    %v331 = vld [vmem:[#allocation5 + $0x590] sm:$0xff]
    %v332 = vld [vmem:[#allocation5 + $0x598] sm:$0xff]
    %v333 = vld [vmem:[#allocation5 + $0x5a0] sm:$0xff]
    %v334 = vld [vmem:[#allocation5 + $0x5a8] sm:$0xff]
    %v335 = vld [vmem:[#allocation5 + $0x5b0] sm:$0xff]
    %v336 = vld [vmem:[#allocation5 + $0x5b8] sm:$0xff]
    %v337 = vld [vmem:[#allocation5 + $0x5c0] sm:$0xff]
    %v338 = vld [vmem:[#allocation5 + $0x5c8] sm:$0xff]
    %v339 = vld [vmem:[#allocation5 + $0x5d0] sm:$0xff]
    %v340 = vld [vmem:[#allocation5 + $0x5d8] sm:$0xff]
    %v341 = vld [vmem:[#allocation5 + $0x5e0] sm:$0xff]
    %v342 = vld [vmem:[#allocation5 + $0x5e8] sm:$0xff]
    %v343 = vld [vmem:[#allocation5 + $0x5f0] sm:$0xff]
    %v344 = vld [vmem:[#allocation5 + $0x5f8] sm:$0xff]
    %v345 = vld [vmem:[#allocation5 + $0x600] sm:$0xff]
    %v346 = vld [vmem:[#allocation5 + $0x608] sm:$0xff]
    %v347 = vld [vmem:[#allocation5 + $0x610] sm:$0xff]
    %v348 = vld [vmem:[#allocation5 + $0x618] sm:$0xff]
    %v349 = vld [vmem:[#allocation5 + $0x620] sm:$0xff]
    %v350 = vld [vmem:[#allocation5 + $0x628] sm:$0xff]
    %v351 = vld [vmem:[#allocation5 + $0x630] sm:$0xff]
    %v352 = vld [vmem:[#allocation5 + $0x638] sm:$0xff]
    %v353 = vld [vmem:[#allocation5 + $0x640] sm:$0xff]
    %v354 = vld [vmem:[#allocation5 + $0x648] sm:$0xff]
    %v355 = vld [vmem:[#allocation5 + $0x650] sm:$0xff]
    %v356 = vld [vmem:[#allocation5 + $0x658] sm:$0xff]
    %v357 = vld [vmem:[#allocation5 + $0x660] sm:$0xff]
    %v358 = vld [vmem:[#allocation5 + $0x668] sm:$0xff]
    %v359 = vld [vmem:[#allocation5 + $0x670] sm:$0xff]
    %v360 = vld [vmem:[#allocation5 + $0x678] sm:$0xff]
    %v361 = vld [vmem:[#allocation5 + $0x680] sm:$0xff]
    %v362 = vld [vmem:[#allocation5 + $0x688] sm:$0xff]
    %v363 = vld [vmem:[#allocation5 + $0x690] sm:$0xff]
    %v364 = vld [vmem:[#allocation5 + $0x698] sm:$0xff]
    %v365 = vld [vmem:[#allocation5 + $0x6a0] sm:$0xff]
    %v366 = vld [vmem:[#allocation5 + $0x6a8] sm:$0xff]
    %v367 = vld [vmem:[#allocation5 + $0x6b0] sm:$0xff]
    %v368 = vld [vmem:[#allocation5 + $0x6b8] sm:$0xff]
    %v369 = vld [vmem:[#allocation5 + $0x6c0] sm:$0xff]
    %v370 = vld [vmem:[#allocation5 + $0x6c8] sm:$0xff]
    %v371 = vld [vmem:[#allocation5 + $0x6d0] sm:$0xff]
    %v372 = vld [vmem:[#allocation5 + $0x6d8] sm:$0xff]
    %v373 = vld [vmem:[#allocation5 + $0x6e0] sm:$0xff]
    %v374 = vld [vmem:[#allocation5 + $0x6e8] sm:$0xff]
    %v375 = vld [vmem:[#allocation5 + $0x6f0] sm:$0xff]
    %v376 = vld [vmem:[#allocation5 + $0x6f8] sm:$0xff]
    %v377 = vld [vmem:[#allocation5 + $0x700] sm:$0xff]
    %v378 = vld [vmem:[#allocation5 + $0x708] sm:$0xff]
    %v379 = vld [vmem:[#allocation5 + $0x710] sm:$0xff]
    %v380 = vld [vmem:[#allocation5 + $0x718] sm:$0xff]
    %v381 = vld [vmem:[#allocation5 + $0x720] sm:$0xff]
    %v382 = vld [vmem:[#allocation5 + $0x728] sm:$0xff]
    %v383 = vld [vmem:[#allocation5 + $0x730] sm:$0xff]
    %v384 = vld [vmem:[#allocation5 + $0x738] sm:$0xff]
    %v385 = vld [vmem:[#allocation5 + $0x740] sm:$0xff]
    %v386 = vld [vmem:[#allocation5 + $0x748] sm:$0xff]
    %v387 = vld [vmem:[#allocation5 + $0x750] sm:$0xff]
    %v388 = vld [vmem:[#allocation5 + $0x758] sm:$0xff]
    %v389 = vld [vmem:[#allocation5 + $0x760] sm:$0xff]
    %v390 = vld [vmem:[#allocation5 + $0x768] sm:$0xff]
    %v391 = vld [vmem:[#allocation5 + $0x770] sm:$0xff]
    %v392 = vld [vmem:[#allocation5 + $0x778] sm:$0xff]
    %v393 = vld [vmem:[#allocation5 + $0x780] sm:$0xff]
    %v394 = vld [vmem:[#allocation5 + $0x788] sm:$0xff]
    %v395 = vld [vmem:[#allocation5 + $0x790] sm:$0xff]
    %v396 = vld [vmem:[#allocation5 + $0x798] sm:$0xff]
    %v397 = vld [vmem:[#allocation5 + $0x7a0] sm:$0xff]
    %v398 = vld [vmem:[#allocation5 + $0x7a8] sm:$0xff]
    %v399 = vld [vmem:[#allocation5 + $0x7b0] sm:$0xff]
    %v400 = vld [vmem:[#allocation5 + $0x7b8] sm:$0xff]
    %v401 = vld [vmem:[#allocation5 + $0x7c0] sm:$0xff]
    %v402 = vld [vmem:[#allocation5 + $0x7c8] sm:$0xff]
    %v403 = vld [vmem:[#allocation5 + $0x7d0] sm:$0xff]
    %v404 = vld [vmem:[#allocation5 + $0x7d8] sm:$0xff]
    %v405 = vld [vmem:[#allocation5 + $0x7e0] sm:$0xff]
    %v406 = vld [vmem:[#allocation5 + $0x7e8] sm:$0xff]
    %v407 = vld [vmem:[#allocation5 + $0x7f0] sm:$0xff]
    %v408 = vld [vmem:[#allocation5 + $0x7f8] sm:$0xff]
    %v409 = vld [vmem:[#allocation5 + $0x800] sm:$0xff]
    %v410 = vld [vmem:[#allocation5 + $0x808] sm:$0xff]
    %v411 = vld [vmem:[#allocation5 + $0x810] sm:$0xff]
    %v412 = vld [vmem:[#allocation5 + $0x818] sm:$0xff]
    %v413 = vld [vmem:[#allocation5 + $0x820] sm:$0xff]
    %v414 = vld [vmem:[#allocation5 + $0x828] sm:$0xff]
    %v415 = vld [vmem:[#allocation5 + $0x830] sm:$0xff]
    %v416 = vld [vmem:[#allocation5 + $0x838] sm:$0xff]
    %v417 = vld [vmem:[#allocation5 + $0x840] sm:$0xff]
    %v418 = vld [vmem:[#allocation5 + $0x848] sm:$0xff]
    %v419 = vld [vmem:[#allocation5 + $0x850] sm:$0xff]
    %v420 = vld [vmem:[#allocation5 + $0x858] sm:$0xff]
    %v421 = vld [vmem:[#allocation5 + $0x860] sm:$0xff]
    %v422 = vld [vmem:[#allocation5 + $0x868] sm:$0xff]
    %v423 = vld [vmem:[#allocation5 + $0x870] sm:$0xff]
    %v424 = vld [vmem:[#allocation5 + $0x878] sm:$0xff]
    %v425 = vld [vmem:[#allocation5 + $0x880] sm:$0xff]
    %v426 = vld [vmem:[#allocation5 + $0x888] sm:$0xff]
    %v427 = vld [vmem:[#allocation5 + $0x890] sm:$0xff]
    %v428 = vld [vmem:[#allocation5 + $0x898] sm:$0xff]
    %v429 = vld [vmem:[#allocation5 + $0x8a0] sm:$0xff]
    %v430 = vld [vmem:[#allocation5 + $0x8a8] sm:$0xff]
    %v431 = vld [vmem:[#allocation5 + $0x8b0] sm:$0xff]
    %v432 = vld [vmem:[#allocation5 + $0x8b8] sm:$0xff]
    %v433 = vld [vmem:[#allocation5 + $0x8c0] sm:$0xff]
    %v434 = vld [vmem:[#allocation5 + $0x8c8] sm:$0xff]
    %v435 = vld [vmem:[#allocation5 + $0x8d0] sm:$0xff]
    %v436 = vld [vmem:[#allocation5 + $0x8d8] sm:$0xff]
    %v437 = vld [vmem:[#allocation5 + $0x8e0] sm:$0xff]
    %v438 = vld [vmem:[#allocation5 + $0x8e8] sm:$0xff]
    %v439 = vld [vmem:[#allocation5 + $0x8f0] sm:$0xff]
    %v440 = vld [vmem:[#allocation5 + $0x8f8] sm:$0xff]
    %v441 = vld [vmem:[#allocation5 + $0x900] sm:$0xff]
    %v442 = vld [vmem:[#allocation5 + $0x908] sm:$0xff]
    %v443 = vld [vmem:[#allocation5 + $0x910] sm:$0xff]
    %v444 = vld [vmem:[#allocation5 + $0x918] sm:$0xff]
    %v445 = vld [vmem:[#allocation5 + $0x920] sm:$0xff]
    %v446 = vld [vmem:[#allocation5 + $0x928] sm:$0xff]
    %v447 = vld [vmem:[#allocation5 + $0x930] sm:$0xff]
    %v448 = vld [vmem:[#allocation5 + $0x938] sm:$0xff]
    %v449 = vld [vmem:[#allocation5 + $0x940] sm:$0xff]
    %v450 = vld [vmem:[#allocation5 + $0x948] sm:$0xff]
    %v451 = vld [vmem:[#allocation5 + $0x950] sm:$0xff]
    %v452 = vld [vmem:[#allocation5 + $0x958] sm:$0xff]
    %v453 = vld [vmem:[#allocation5 + $0x960] sm:$0xff]
    %v454 = vld [vmem:[#allocation5 + $0x968] sm:$0xff]
    %v455 = vld [vmem:[#allocation5 + $0x970] sm:$0xff]
    %v456 = vld [vmem:[#allocation5 + $0x978] sm:$0xff]
    %v457 = vld [vmem:[#allocation5 + $0x980] sm:$0xff]
    %v458 = vld [vmem:[#allocation5 + $0x988] sm:$0xff]
    %v459 = vld [vmem:[#allocation5 + $0x990] sm:$0xff]
    %v460 = vld [vmem:[#allocation5 + $0x998] sm:$0xff]
    %v461 = vld [vmem:[#allocation5 + $0x9a0] sm:$0xff]
    %v462 = vld [vmem:[#allocation5 + $0x9a8] sm:$0xff]
    %v463 = vld [vmem:[#allocation5 + $0x9b0] sm:$0xff]
    %v464 = vld [vmem:[#allocation5 + $0x9b8] sm:$0xff]
    %v465 = vld [vmem:[#allocation5 + $0x9c0] sm:$0xff]
    %v466 = vld [vmem:[#allocation5 + $0x9c8] sm:$0xff]
    %v467 = vld [vmem:[#allocation5 + $0x9d0] sm:$0xff]
    %v468 = vld [vmem:[#allocation5 + $0x9d8] sm:$0xff]
    %v469 = vld [vmem:[#allocation5 + $0x9e0] sm:$0xff]
    %v470 = vld [vmem:[#allocation5 + $0x9e8] sm:$0xff]
    %v471 = vld [vmem:[#allocation5 + $0x9f0] sm:$0xff]
    %v472 = vld [vmem:[#allocation5 + $0x9f8] sm:$0xff]
    %v473 = vld [vmem:[#allocation5 + $0xa00] sm:$0xff]
    %v474 = vld [vmem:[#allocation5 + $0xa08] sm:$0xff]
    %v475 = vld [vmem:[#allocation5 + $0xa10] sm:$0xff]
    %v476 = vld [vmem:[#allocation5 + $0xa18] sm:$0xff]
    %v477 = vld [vmem:[#allocation5 + $0xa20] sm:$0xff]
    %v478 = vld [vmem:[#allocation5 + $0xa28] sm:$0xff]
    %v479 = vld [vmem:[#allocation5 + $0xa30] sm:$0xff]
    %v480 = vld [vmem:[#allocation5 + $0xa38] sm:$0xff]
    %v481 = vld [vmem:[#allocation5 + $0xa40] sm:$0xff]
    %v482 = vld [vmem:[#allocation5 + $0xa48] sm:$0xff]
    %v483 = vld [vmem:[#allocation5 + $0xa50] sm:$0xff]
    %v484 = vld [vmem:[#allocation5 + $0xa58] sm:$0xff]
    %v485 = vld [vmem:[#allocation5 + $0xa60] sm:$0xff]
    %v486 = vld [vmem:[#allocation5 + $0xa68] sm:$0xff]
    %v487 = vld [vmem:[#allocation5 + $0xa70] sm:$0xff]
    %v488 = vld [vmem:[#allocation5 + $0xa78] sm:$0xff]
    %v489 = vld [vmem:[#allocation5 + $0xa80] sm:$0xff]
    %v490 = vld [vmem:[#allocation5 + $0xa88] sm:$0xff]
    %v491 = vld [vmem:[#allocation5 + $0xa90] sm:$0xff]
    %v492 = vld [vmem:[#allocation5 + $0xa98] sm:$0xff]
    %v493 = vld [vmem:[#allocation5 + $0xaa0] sm:$0xff]
    %v494 = vld [vmem:[#allocation5 + $0xaa8] sm:$0xff]
    %v495 = vld [vmem:[#allocation5 + $0xab0] sm:$0xff]
    %v496 = vld [vmem:[#allocation5 + $0xab8] sm:$0xff]
    %v497 = vld [vmem:[#allocation5 + $0xac0] sm:$0xff]
    %v498 = vld [vmem:[#allocation5 + $0xac8] sm:$0xff]
    %v499 = vld [vmem:[#allocation5 + $0xad0] sm:$0xff]
    %v500 = vld [vmem:[#allocation5 + $0xad8] sm:$0xff]
    %v501 = vld [vmem:[#allocation5 + $0xae0] sm:$0xff]
    %v502 = vld [vmem:[#allocation5 + $0xae8] sm:$0xff]
    %v503 = vld [vmem:[#allocation5 + $0xaf0] sm:$0xff]
    %v504 = vld [vmem:[#allocation5 + $0xaf8] sm:$0xff]
    %v505 = vld [vmem:[#allocation5 + $0xb00] sm:$0xff]
    %v506 = vld [vmem:[#allocation5 + $0xb08] sm:$0xff]
    %v507 = vld [vmem:[#allocation5 + $0xb10] sm:$0xff]
    %v508 = vld [vmem:[#allocation5 + $0xb18] sm:$0xff]
    %v509 = vld [vmem:[#allocation5 + $0xb20] sm:$0xff]
    %v510 = vld [vmem:[#allocation5 + $0xb28] sm:$0xff]
    %v511 = vld [vmem:[#allocation5 + $0xb30] sm:$0xff]
    %v512 = vld [vmem:[#allocation5 + $0xb38] sm:$0xff]
    %v513 = vld [vmem:[#allocation5 + $0xb40] sm:$0xff]
    %v514 = vld [vmem:[#allocation5 + $0xb48] sm:$0xff]
    %v515 = vld [vmem:[#allocation5 + $0xb50] sm:$0xff]
    %v516 = vld [vmem:[#allocation5 + $0xb58] sm:$0xff]
    %v517 = vld [vmem:[#allocation5 + $0xb60] sm:$0xff]
    %v518 = vld [vmem:[#allocation5 + $0xb68] sm:$0xff]
    %v519 = vld [vmem:[#allocation5 + $0xb70] sm:$0xff]
    %v520 = vld [vmem:[#allocation5 + $0xb78] sm:$0xff]
    %v521 = vld [vmem:[#allocation5 + $0xb80] sm:$0xff]
    %v522 = vld [vmem:[#allocation5 + $0xb88] sm:$0xff]
    %v523 = vld [vmem:[#allocation5 + $0xb90] sm:$0xff]
    %v524 = vld [vmem:[#allocation5 + $0xb98] sm:$0xff]
    %v525 = vld [vmem:[#allocation5 + $0xba0] sm:$0xff]
    %v526 = vld [vmem:[#allocation5 + $0xba8] sm:$0xff]
    %v527 = vld [vmem:[#allocation5 + $0xbb0] sm:$0xff]
    %v528 = vld [vmem:[#allocation5 + $0xbb8] sm:$0xff]
    %v529 = vld [vmem:[#allocation5 + $0xbc0] sm:$0xff]
    %v530 = vld [vmem:[#allocation5 + $0xbc8] sm:$0xff]
    %v531 = vld [vmem:[#allocation5 + $0xbd0] sm:$0xff]
    %v532 = vld [vmem:[#allocation5 + $0xbd8] sm:$0xff]
    %v533 = vld [vmem:[#allocation5 + $0xbe0] sm:$0xff]
    %v534 = vld [vmem:[#allocation5 + $0xbe8] sm:$0xff]
    %v535 = vld [vmem:[#allocation5 + $0xbf0] sm:$0xff]
    %v536 = vld [vmem:[#allocation5 + $0xbf8] sm:$0xff]
    %v537 = vld [vmem:[#allocation5 + $0xc00] sm:$0xff]
    %v538 = vld [vmem:[#allocation5 + $0xc08] sm:$0xff]
    %v539 = vld [vmem:[#allocation5 + $0xc10] sm:$0xff]
    %v540 = vld [vmem:[#allocation5 + $0xc18] sm:$0xff]
    %v541 = vld [vmem:[#allocation5 + $0xc20] sm:$0xff]
    %v542 = vld [vmem:[#allocation5 + $0xc28] sm:$0xff]
    %v543 = vld [vmem:[#allocation5 + $0xc30] sm:$0xff]
    %v544 = vld [vmem:[#allocation5 + $0xc38] sm:$0xff]
    %v545 = vld [vmem:[#allocation5 + $0xc40] sm:$0xff]
    %v546 = vld [vmem:[#allocation5 + $0xc48] sm:$0xff]
    %v547 = vld [vmem:[#allocation5 + $0xc50] sm:$0xff]
    %v548 = vld [vmem:[#allocation5 + $0xc58] sm:$0xff]
    %v549 = vld [vmem:[#allocation5 + $0xc60] sm:$0xff]
    %v550 = vld [vmem:[#allocation5 + $0xc68] sm:$0xff]
    %v551 = vld [vmem:[#allocation5 + $0xc70] sm:$0xff]
    %v552 = vld [vmem:[#allocation5 + $0xc78] sm:$0xff]
    %v553 = vld [vmem:[#allocation5 + $0xc80] sm:$0xff]
    %v554 = vld [vmem:[#allocation5 + $0xc88] sm:$0xff]
    %v555 = vld [vmem:[#allocation5 + $0xc90] sm:$0xff]
    %v556 = vld [vmem:[#allocation5 + $0xc98] sm:$0xff]
    %v557 = vld [vmem:[#allocation5 + $0xca0] sm:$0xff]
    %v558 = vld [vmem:[#allocation5 + $0xca8] sm:$0xff]
    %v559 = vld [vmem:[#allocation5 + $0xcb0] sm:$0xff]
    %v560 = vld [vmem:[#allocation5 + $0xcb8] sm:$0xff]
    %v561 = vld [vmem:[#allocation5 + $0xcc0] sm:$0xff]
    %v562 = vld [vmem:[#allocation5 + $0xcc8] sm:$0xff]
    %v563 = vld [vmem:[#allocation5 + $0xcd0] sm:$0xff]
    %v564 = vld [vmem:[#allocation5 + $0xcd8] sm:$0xff]
    %v565 = vld [vmem:[#allocation5 + $0xce0] sm:$0xff]
    %v566 = vld [vmem:[#allocation5 + $0xce8] sm:$0xff]
    %v567 = vld [vmem:[#allocation5 + $0xcf0] sm:$0xff]
    %v568 = vld [vmem:[#allocation5 + $0xcf8] sm:$0xff]
    %v569 = vld [vmem:[#allocation5 + $0xd00] sm:$0xff]
    %v570 = vld [vmem:[#allocation5 + $0xd08] sm:$0xff]
    %v571 = vld [vmem:[#allocation5 + $0xd10] sm:$0xff]
    %v572 = vld [vmem:[#allocation5 + $0xd18] sm:$0xff]
    %v573 = vld [vmem:[#allocation5 + $0xd20] sm:$0xff]
    %v574 = vld [vmem:[#allocation5 + $0xd28] sm:$0xff]
    %v575 = vld [vmem:[#allocation5 + $0xd30] sm:$0xff]
    %v576 = vld [vmem:[#allocation5 + $0xd38] sm:$0xff]
    %v577 = vld [vmem:[#allocation5 + $0xd40] sm:$0xff]
    %v578 = vld [vmem:[#allocation5 + $0xd48] sm:$0xff]
    %v579 = vld [vmem:[#allocation5 + $0xd50] sm:$0xff]
    %v580 = vld [vmem:[#allocation5 + $0xd58] sm:$0xff]
    %v581 = vld [vmem:[#allocation5 + $0xd60] sm:$0xff]
    %v582 = vld [vmem:[#allocation5 + $0xd68] sm:$0xff]
    %v583 = vld [vmem:[#allocation5 + $0xd70] sm:$0xff]
    %v584 = vld [vmem:[#allocation5 + $0xd78] sm:$0xff]
    %v585 = vld [vmem:[#allocation5 + $0xd80] sm:$0xff]
    %v586 = vld [vmem:[#allocation5 + $0xd88] sm:$0xff]
    %v587 = vld [vmem:[#allocation5 + $0xd90] sm:$0xff]
    %v588 = vld [vmem:[#allocation5 + $0xd98] sm:$0xff]
    %v589 = vld [vmem:[#allocation5 + $0xda0] sm:$0xff]
    %v590 = vld [vmem:[#allocation5 + $0xda8] sm:$0xff]
    %v591 = vld [vmem:[#allocation5 + $0xdb0] sm:$0xff]
    %v592 = vld [vmem:[#allocation5 + $0xdb8] sm:$0xff]
    %v593 = vld [vmem:[#allocation5 + $0xdc0] sm:$0xff]
    %v594 = vld [vmem:[#allocation5 + $0xdc8] sm:$0xff]
    %v595 = vld [vmem:[#allocation5 + $0xdd0] sm:$0xff]
    %v596 = vld [vmem:[#allocation5 + $0xdd8] sm:$0xff]
    %v597 = vld [vmem:[#allocation5 + $0xde0] sm:$0xff]
    %v598 = vld [vmem:[#allocation5 + $0xde8] sm:$0xff]
    %v599 = vld [vmem:[#allocation5 + $0xdf0] sm:$0xff]
    %v600 = vld [vmem:[#allocation5 + $0xdf8] sm:$0xff]
    %v601 = vld [vmem:[#allocation5 + $0xe00] sm:$0xff]
    %v602 = vld [vmem:[#allocation5 + $0xe08] sm:$0xff]
    %v603 = vld [vmem:[#allocation5 + $0xe10] sm:$0xff]
    %v604 = vld [vmem:[#allocation5 + $0xe18] sm:$0xff]
    %v605 = vld [vmem:[#allocation5 + $0xe20] sm:$0xff]
    %v606 = vld [vmem:[#allocation5 + $0xe28] sm:$0xff]
    %v607 = vld [vmem:[#allocation5 + $0xe30] sm:$0xff]
    %v608 = vld [vmem:[#allocation5 + $0xe38] sm:$0xff]
    %v609 = vld [vmem:[#allocation5 + $0xe40] sm:$0xff]
    %v610 = vld [vmem:[#allocation5 + $0xe48] sm:$0xff]
    %v611 = vld [vmem:[#allocation5 + $0xe50] sm:$0xff]
    %v612 = vld [vmem:[#allocation5 + $0xe58] sm:$0xff]
    %v613 = vld [vmem:[#allocation5 + $0xe60] sm:$0xff]
    %v614 = vld [vmem:[#allocation5 + $0xe68] sm:$0xff]
    %v615 = vld [vmem:[#allocation5 + $0xe70] sm:$0xff]
    %v616 = vld [vmem:[#allocation5 + $0xe78] sm:$0xff]
    %v617 = vld [vmem:[#allocation5 + $0xe80] sm:$0xff]
    %v618 = vld [vmem:[#allocation5 + $0xe88] sm:$0xff]
    %v619 = vld [vmem:[#allocation5 + $0xe90] sm:$0xff]
    %v620 = vld [vmem:[#allocation5 + $0xe98] sm:$0xff]
    %v621 = vld [vmem:[#allocation5 + $0xea0] sm:$0xff]
    %v622 = vld [vmem:[#allocation5 + $0xea8] sm:$0xff]
    %v623 = vld [vmem:[#allocation5 + $0xeb0] sm:$0xff]
    %v624 = vld [vmem:[#allocation5 + $0xeb8] sm:$0xff]
    %v625 = vld [vmem:[#allocation5 + $0xec0] sm:$0xff]
    %v626 = vld [vmem:[#allocation5 + $0xec8] sm:$0xff]
    %v627 = vld [vmem:[#allocation5 + $0xed0] sm:$0xff]
    %v628 = vld [vmem:[#allocation5 + $0xed8] sm:$0xff]
    %v629 = vld [vmem:[#allocation5 + $0xee0] sm:$0xff]
    %v630 = vld [vmem:[#allocation5 + $0xee8] sm:$0xff]
    %v631 = vld [vmem:[#allocation5 + $0xef0] sm:$0xff]
    %v632 = vld [vmem:[#allocation5 + $0xef8] sm:$0xff]
    %v633 = vld [vmem:[#allocation5 + $0xf00] sm:$0xff]
    %v634 = vld [vmem:[#allocation5 + $0xf08] sm:$0xff]
    %v635 = vld [vmem:[#allocation5 + $0xf10] sm:$0xff]
    %v636 = vld [vmem:[#allocation5 + $0xf18] sm:$0xff]
    %v637 = vld [vmem:[#allocation5 + $0xf20] sm:$0xff]
    %v638 = vld [vmem:[#allocation5 + $0xf28] sm:$0xff]
    %v639 = vld [vmem:[#allocation5 + $0xf30] sm:$0xff]
    %v640 = vld [vmem:[#allocation5 + $0xf38] sm:$0xff]
    %v641 = vld [vmem:[#allocation5 + $0xf40] sm:$0xff]
    %v642 = vld [vmem:[#allocation5 + $0xf48] sm:$0xff]
    %v643 = vld [vmem:[#allocation5 + $0xf50] sm:$0xff]
    %v644 = vld [vmem:[#allocation5 + $0xf58] sm:$0xff]
    %v645 = vld [vmem:[#allocation5 + $0xf60] sm:$0xff]
    %v646 = vld [vmem:[#allocation5 + $0xf68] sm:$0xff]
    %v647 = vld [vmem:[#allocation5 + $0xf70] sm:$0xff]
    %v648 = vld [vmem:[#allocation5 + $0xf78] sm:$0xff]
    %v649 = vld [vmem:[#allocation5 + $0xf80] sm:$0xff]
    %v650 = vld [vmem:[#allocation5 + $0xf88] sm:$0xff]
    %v651 = vld [vmem:[#allocation5 + $0xf90] sm:$0xff]
    %v652 = vld [vmem:[#allocation5 + $0xf98] sm:$0xff]
    %v653 = vld [vmem:[#allocation5 + $0xfa0] sm:$0xff]
    %v654 = vld [vmem:[#allocation5 + $0xfa8] sm:$0xff]
    %v655 = vld [vmem:[#allocation5 + $0xfb0] sm:$0xff]
    %v656 = vld [vmem:[#allocation5 + $0xfb8] sm:$0xff]
    %v657 = vld [vmem:[#allocation5 + $0xfc0] sm:$0xff]
    %v658 = vld [vmem:[#allocation5 + $0xfc8] sm:$0xff]
    %v659 = vld [vmem:[#allocation5 + $0xfd0] sm:$0xff]
    %v660 = vld [vmem:[#allocation5 + $0xfd8] sm:$0xff]
    %v661 = vld [vmem:[#allocation5 + $0xfe0] sm:$0xff]
    %v662 = vld [vmem:[#allocation5 + $0xfe8] sm:$0xff]
    %v663 = vld [vmem:[#allocation5 + $0xff0] sm:$0xff]
    %v664 = vld [vmem:[#allocation5 + $0xff8] sm:$0xff]
    %v665 = vld [vmem:[#allocation5 + $0x1000] sm:$0xff]
    %v666 = vld [vmem:[#allocation5 + $0x1008] sm:$0xff]
    %v667 = vld [vmem:[#allocation5 + $0x1010] sm:$0xff]
    %v668 = vld [vmem:[#allocation5 + $0x1018] sm:$0xff]
    %v669 = vld [vmem:[#allocation5 + $0x1020] sm:$0xff]
    %v670 = vld [vmem:[#allocation5 + $0x1028] sm:$0xff]
    %v671 = vld [vmem:[#allocation5 + $0x1030] sm:$0xff]
    %v672 = vld [vmem:[#allocation5 + $0x1038] sm:$0xff]
    %v673 = vld [vmem:[#allocation5 + $0x1040] sm:$0xff]
    %v674 = vld [vmem:[#allocation5 + $0x1048] sm:$0xff]
    %v675 = vld [vmem:[#allocation5 + $0x1050] sm:$0xff]
    %v676 = vld [vmem:[#allocation5 + $0x1058] sm:$0xff]
    %v677 = vld [vmem:[#allocation5 + $0x1060] sm:$0xff]
    %v678 = vld [vmem:[#allocation5 + $0x1068] sm:$0xff]
    %v679 = vld [vmem:[#allocation5 + $0x1070] sm:$0xff]
    %v680 = vld [vmem:[#allocation5 + $0x1078] sm:$0xff]
    %v681 = vld [vmem:[#allocation5 + $0x1080] sm:$0xff]
    %v682 = vld [vmem:[#allocation5 + $0x1088] sm:$0xff]
    %v683 = vld [vmem:[#allocation5 + $0x1090] sm:$0xff]
    %v684 = vld [vmem:[#allocation5 + $0x1098] sm:$0xff]
    %v685 = vld [vmem:[#allocation5 + $0x10a0] sm:$0xff]
    %v686 = vld [vmem:[#allocation5 + $0x10a8] sm:$0xff]
    %v687 = vld [vmem:[#allocation5 + $0x10b0] sm:$0xff]
    %v688 = vld [vmem:[#allocation5 + $0x10b8] sm:$0xff]
    %v689 = vld [vmem:[#allocation5 + $0x10c0] sm:$0xff]
    %v690 = vld [vmem:[#allocation5 + $0x10c8] sm:$0xff]
    %v691 = vld [vmem:[#allocation5 + $0x10d0] sm:$0xff]
    %v692 = vld [vmem:[#allocation5 + $0x10d8] sm:$0xff]
    %v693 = vld [vmem:[#allocation5 + $0x10e0] sm:$0xff]
    %v694 = vld [vmem:[#allocation5 + $0x10e8] sm:$0xff]
    %v695 = vld [vmem:[#allocation5 + $0x10f0] sm:$0xff]
    %v696 = vld [vmem:[#allocation5 + $0x10f8] sm:$0xff]
    %v697 = vld [vmem:[#allocation5 + $0x1100] sm:$0xff]
    %v698 = vld [vmem:[#allocation5 + $0x1108] sm:$0xff]
    %v699 = vld [vmem:[#allocation5 + $0x1110] sm:$0xff]
    %v700 = vld [vmem:[#allocation5 + $0x1118] sm:$0xff]
    %v701 = vld [vmem:[#allocation5 + $0x1120] sm:$0xff]
    %v702 = vld [vmem:[#allocation5 + $0x1128] sm:$0xff]
    %v703 = vld [vmem:[#allocation5 + $0x1130] sm:$0xff]
    %v704 = vld [vmem:[#allocation5 + $0x1138] sm:$0xff]
    %v705 = vld [vmem:[#allocation5 + $0x1140] sm:$0xff]
    %v706 = vld [vmem:[#allocation5 + $0x1148] sm:$0xff]
    %v707 = vld [vmem:[#allocation5 + $0x1150] sm:$0xff]
    %v708 = vld [vmem:[#allocation5 + $0x1158] sm:$0xff]
    %v709 = vld [vmem:[#allocation5 + $0x1160] sm:$0xff]
    %v710 = vld [vmem:[#allocation5 + $0x1168] sm:$0xff]
    %v711 = vld [vmem:[#allocation5 + $0x1170] sm:$0xff]
    %v712 = vld [vmem:[#allocation5 + $0x1178] sm:$0xff]
    %v713 = vld [vmem:[#allocation5 + $0x1180] sm:$0xff]
    %v714 = vld [vmem:[#allocation5 + $0x1188] sm:$0xff]
    %v715 = vld [vmem:[#allocation5 + $0x1190] sm:$0xff]
    %v716 = vld [vmem:[#allocation5 + $0x1198] sm:$0xff]
    %v717 = vld [vmem:[#allocation5 + $0x11a0] sm:$0xff]
    %v718 = vld [vmem:[#allocation5 + $0x11a8] sm:$0xff]
    %v719 = vld [vmem:[#allocation5 + $0x11b0] sm:$0xff]
    %v720 = vld [vmem:[#allocation5 + $0x11b8] sm:$0xff]
    %v721 = vld [vmem:[#allocation5 + $0x11c0] sm:$0xff]
    %v722 = vld [vmem:[#allocation5 + $0x11c8] sm:$0xff]
    %v723 = vld [vmem:[#allocation5 + $0x11d0] sm:$0xff]
    %v724 = vld [vmem:[#allocation5 + $0x11d8] sm:$0xff]
    %v725 = vld [vmem:[#allocation5 + $0x11e0] sm:$0xff]
    %v726 = vld [vmem:[#allocation5 + $0x11e8] sm:$0xff]
    %v727 = vld [vmem:[#allocation5 + $0x11f0] sm:$0xff]
    %v728 = vld [vmem:[#allocation5 + $0x11f8] sm:$0xff]
    %v729 = vld [vmem:[#allocation5 + $0x1200] sm:$0xff]
    %v730 = vld [vmem:[#allocation5 + $0x1208] sm:$0xff]
    %v731 = vld [vmem:[#allocation5 + $0x1210] sm:$0xff]
    %v732 = vld [vmem:[#allocation5 + $0x1218] sm:$0xff]
    %v733 = vld [vmem:[#allocation5 + $0x1220] sm:$0xff]
    %v734 = vld [vmem:[#allocation5 + $0x1228] sm:$0xff]
    %v735 = vld [vmem:[#allocation5 + $0x1230] sm:$0xff]
    %v736 = vld [vmem:[#allocation5 + $0x1238] sm:$0xff]
    %v737 = vld [vmem:[#allocation5 + $0x1240] sm:$0xff]
    %v738 = vld [vmem:[#allocation5 + $0x1248] sm:$0xff]
    %v739 = vld [vmem:[#allocation5 + $0x1250] sm:$0xff]
    %v740 = vld [vmem:[#allocation5 + $0x1258] sm:$0xff]
    %v741 = vld [vmem:[#allocation5 + $0x1260] sm:$0xff]
    %v742 = vld [vmem:[#allocation5 + $0x1268] sm:$0xff]
    %v743 = vld [vmem:[#allocation5 + $0x1270] sm:$0xff]
    %v744 = vld [vmem:[#allocation5 + $0x1278] sm:$0xff]
    %v745 = vld [vmem:[#allocation5 + $0x1280] sm:$0xff]
    %v746 = vld [vmem:[#allocation5 + $0x1288] sm:$0xff]
    %v747 = vld [vmem:[#allocation5 + $0x1290] sm:$0xff]
    %v748 = vld [vmem:[#allocation5 + $0x1298] sm:$0xff]
    %v749 = vld [vmem:[#allocation5 + $0x12a0] sm:$0xff]
    %v750 = vld [vmem:[#allocation5 + $0x12a8] sm:$0xff]
    %v751 = vld [vmem:[#allocation5 + $0x12b0] sm:$0xff]
    %v752 = vld [vmem:[#allocation5 + $0x12b8] sm:$0xff]
    %v753 = vld [vmem:[#allocation5 + $0x12c0] sm:$0xff]
    %v754 = vld [vmem:[#allocation5 + $0x12c8] sm:$0xff]
    %v755 = vld [vmem:[#allocation5 + $0x12d0] sm:$0xff]
    %v756 = vld [vmem:[#allocation5 + $0x12d8] sm:$0xff]
    %v757 = vld [vmem:[#allocation5 + $0x12e0] sm:$0xff]
    %v758 = vld [vmem:[#allocation5 + $0x12e8] sm:$0xff]
    %v759 = vld [vmem:[#allocation5 + $0x12f0] sm:$0xff]
    %v760 = vld [vmem:[#allocation5 + $0x12f8] sm:$0xff]
    %v761 = vld [vmem:[#allocation5 + $0x1300] sm:$0xff]
    %v762 = vld [vmem:[#allocation5 + $0x1308] sm:$0xff]
    %v763 = vld [vmem:[#allocation5 + $0x1310] sm:$0xff]
    %v764 = vld [vmem:[#allocation5 + $0x1318] sm:$0xff]
    %v765 = vld [vmem:[#allocation5 + $0x1320] sm:$0xff]
    %v766 = vld [vmem:[#allocation5 + $0x1328] sm:$0xff]
    %v767 = vld [vmem:[#allocation5 + $0x1330] sm:$0xff]
    %v768 = vld [vmem:[#allocation5 + $0x1338] sm:$0xff]
    %v769 = vld [vmem:[#allocation5 + $0x1340] sm:$0xff]
    %v770 = vld [vmem:[#allocation5 + $0x1348] sm:$0xff]
    %v771 = vld [vmem:[#allocation5 + $0x1350] sm:$0xff]
    %v772 = vld [vmem:[#allocation5 + $0x1358] sm:$0xff]
    %v773 = vld [vmem:[#allocation5 + $0x1360] sm:$0xff]
    %v774 = vld [vmem:[#allocation5 + $0x1368] sm:$0xff]
    %v775 = vld [vmem:[#allocation5 + $0x1370] sm:$0xff]
    %v776 = vld [vmem:[#allocation5 + $0x1378] sm:$0xff]
    %v777 = vld [vmem:[#allocation5 + $0x1380] sm:$0xff]
    %v778 = vld [vmem:[#allocation5 + $0x1388] sm:$0xff]
    %v779 = vld [vmem:[#allocation5 + $0x1390] sm:$0xff]
    %v780 = vld [vmem:[#allocation5 + $0x1398] sm:$0xff]
    %v781 = vld [vmem:[#allocation5 + $0x13a0] sm:$0xff]
    %v782 = vld [vmem:[#allocation5 + $0x13a8] sm:$0xff]
    %v783 = vld [vmem:[#allocation5 + $0x13b0] sm:$0xff]
    %v784 = vld [vmem:[#allocation5 + $0x13b8] sm:$0xff]
    %v785 = vld [vmem:[#allocation5 + $0x13c0] sm:$0xff]
    %v786 = vld [vmem:[#allocation5 + $0x13c8] sm:$0xff]
    %v787 = vld [vmem:[#allocation5 + $0x13d0] sm:$0xff]
    %v788 = vld [vmem:[#allocation5 + $0x13d8] sm:$0xff]
    %v789 = vld [vmem:[#allocation5 + $0x13e0] sm:$0xff]
    %v790 = vld [vmem:[#allocation5 + $0x13e8] sm:$0xff]
    %v791 = vld [vmem:[#allocation5 + $0x13f0] sm:$0xff]
    %v792 = vld [vmem:[#allocation5 + $0x13f8] sm:$0xff]
    %v793 = vld [vmem:[#allocation5 + $0x1400] sm:$0xff]
    %v794 = vld [vmem:[#allocation5 + $0x1408] sm:$0xff]
    %v795 = vld [vmem:[#allocation5 + $0x1410] sm:$0xff]
    %v796 = vld [vmem:[#allocation5 + $0x1418] sm:$0xff]
    %v797 = vld [vmem:[#allocation5 + $0x1420] sm:$0xff]
    %v798 = vld [vmem:[#allocation5 + $0x1428] sm:$0xff]
    %v799 = vld [vmem:[#allocation5 + $0x1430] sm:$0xff]
    %v800 = vld [vmem:[#allocation5 + $0x1438] sm:$0xff]
    %v801 = vld [vmem:[#allocation5 + $0x1440] sm:$0xff]
    %v802 = vld [vmem:[#allocation5 + $0x1448] sm:$0xff]
    %v803 = vld [vmem:[#allocation5 + $0x1450] sm:$0xff]
    %v804 = vld [vmem:[#allocation5 + $0x1458] sm:$0xff]
    %v805 = vld [vmem:[#allocation5 + $0x1460] sm:$0xff]
    %v806 = vld [vmem:[#allocation5 + $0x1468] sm:$0xff]
    %v807 = vld [vmem:[#allocation5 + $0x1470] sm:$0xff]
    %v808 = vld [vmem:[#allocation5 + $0x1478] sm:$0xff]
    %v809 = vld [vmem:[#allocation5 + $0x1480] sm:$0xff]
    %v810 = vld [vmem:[#allocation5 + $0x1488] sm:$0xff]
    %v811 = vld [vmem:[#allocation5 + $0x1490] sm:$0xff]
    %v812 = vld [vmem:[#allocation5 + $0x1498] sm:$0xff]
    %v813 = vld [vmem:[#allocation5 + $0x14a0] sm:$0xff]
    %v814 = vld [vmem:[#allocation5 + $0x14a8] sm:$0xff]
    %v815 = vld [vmem:[#allocation5 + $0x14b0] sm:$0xff]
    %v816 = vld [vmem:[#allocation5 + $0x14b8] sm:$0xff]
    %v817 = vld [vmem:[#allocation5 + $0x14c0] sm:$0xff]
    %v818 = vld [vmem:[#allocation5 + $0x14c8] sm:$0xff]
    %v819 = vld [vmem:[#allocation5 + $0x14d0] sm:$0xff]
    %v820 = vld [vmem:[#allocation5 + $0x14d8] sm:$0xff]
    %v821 = vld [vmem:[#allocation5 + $0x14e0] sm:$0xff]
    %v822 = vld [vmem:[#allocation5 + $0x14e8] sm:$0xff]
    %v823 = vld [vmem:[#allocation5 + $0x14f0] sm:$0xff]
    %v824 = vld [vmem:[#allocation5 + $0x14f8] sm:$0xff]
    %v825 = vld [vmem:[#allocation5 + $0x1500] sm:$0xff]
    %v826 = vld [vmem:[#allocation5 + $0x1508] sm:$0xff]
    %v827 = vld [vmem:[#allocation5 + $0x1510] sm:$0xff]
    %v828 = vld [vmem:[#allocation5 + $0x1518] sm:$0xff]
    %v829 = vld [vmem:[#allocation5 + $0x1520] sm:$0xff]
    %v830 = vld [vmem:[#allocation5 + $0x1528] sm:$0xff]
    %v831 = vld [vmem:[#allocation5 + $0x1530] sm:$0xff]
    %v832 = vld [vmem:[#allocation5 + $0x1538] sm:$0xff]
    %v833 = vld [vmem:[#allocation5 + $0x1540] sm:$0xff]
    %v834 = vld [vmem:[#allocation5 + $0x1548] sm:$0xff]
    %v835 = vld [vmem:[#allocation5 + $0x1550] sm:$0xff]
    %v836 = vld [vmem:[#allocation5 + $0x1558] sm:$0xff]
    %v837 = vld [vmem:[#allocation5 + $0x1560] sm:$0xff]
    %v838 = vld [vmem:[#allocation5 + $0x1568] sm:$0xff]
    %v839 = vld [vmem:[#allocation5 + $0x1570] sm:$0xff]
    %v840 = vld [vmem:[#allocation5 + $0x1578] sm:$0xff]
    %v841 = vld [vmem:[#allocation5 + $0x1580] sm:$0xff]
    %v842 = vld [vmem:[#allocation5 + $0x1588] sm:$0xff]
    %v843 = vld [vmem:[#allocation5 + $0x1590] sm:$0xff]
    %v844 = vld [vmem:[#allocation5 + $0x1598] sm:$0xff]
    %v845 = vld [vmem:[#allocation5 + $0x15a0] sm:$0xff]
    %v846 = vld [vmem:[#allocation5 + $0x15a8] sm:$0xff]
    %v847 = vld [vmem:[#allocation5 + $0x15b0] sm:$0xff]
    %v848 = vld [vmem:[#allocation5 + $0x15b8] sm:$0xff]
    %v849 = vld [vmem:[#allocation5 + $0x15c0] sm:$0xff]
    %v850 = vld [vmem:[#allocation5 + $0x15c8] sm:$0xff]
    %v851 = vld [vmem:[#allocation5 + $0x15d0] sm:$0xff]
    %v852 = vld [vmem:[#allocation5 + $0x15d8] sm:$0xff]
    %v853 = vld [vmem:[#allocation5 + $0x15e0] sm:$0xff]
    %v854 = vld [vmem:[#allocation5 + $0x15e8] sm:$0xff]
    %v855 = vld [vmem:[#allocation5 + $0x15f0] sm:$0xff]
    %v856 = vld [vmem:[#allocation5 + $0x15f8] sm:$0xff]
    %v857 = vld [vmem:[#allocation5 + $0x1600] sm:$0xff]
    %v858 = vld [vmem:[#allocation5 + $0x1608] sm:$0xff]
    %v859 = vld [vmem:[#allocation5 + $0x1610] sm:$0xff]
    %v860 = vld [vmem:[#allocation5 + $0x1618] sm:$0xff]
    %v861 = vld [vmem:[#allocation5 + $0x1620] sm:$0xff]
    %v862 = vld [vmem:[#allocation5 + $0x1628] sm:$0xff]
    %v863 = vld [vmem:[#allocation5 + $0x1630] sm:$0xff]
    %v864 = vld [vmem:[#allocation5 + $0x1638] sm:$0xff]
    %v865 = vld [vmem:[#allocation5 + $0x1640] sm:$0xff]
    %v866 = vld [vmem:[#allocation5 + $0x1648] sm:$0xff]
    %v867 = vld [vmem:[#allocation5 + $0x1650] sm:$0xff]
    %v868 = vld [vmem:[#allocation5 + $0x1658] sm:$0xff]
    %v869 = vld [vmem:[#allocation5 + $0x1660] sm:$0xff]
    %v870 = vld [vmem:[#allocation5 + $0x1668] sm:$0xff]
    %v871 = vld [vmem:[#allocation5 + $0x1670] sm:$0xff]
    %v872 = vld [vmem:[#allocation5 + $0x1678] sm:$0xff]
    %v873 = vld [vmem:[#allocation5 + $0x1680] sm:$0xff]
    %v874 = vld [vmem:[#allocation5 + $0x1688] sm:$0xff]
    %v875 = vld [vmem:[#allocation5 + $0x1690] sm:$0xff]
    %v876 = vld [vmem:[#allocation5 + $0x1698] sm:$0xff]
    %v877 = vld [vmem:[#allocation5 + $0x16a0] sm:$0xff]
    %v878 = vld [vmem:[#allocation5 + $0x16a8] sm:$0xff]
    %v879 = vld [vmem:[#allocation5 + $0x16b0] sm:$0xff]
    %v880 = vld [vmem:[#allocation5 + $0x16b8] sm:$0xff]
    %v881 = vld [vmem:[#allocation5 + $0x16c0] sm:$0xff]
    %v882 = vld [vmem:[#allocation5 + $0x16c8] sm:$0xff]
    %v883 = vld [vmem:[#allocation5 + $0x16d0] sm:$0xff]
    %v884 = vld [vmem:[#allocation5 + $0x16d8] sm:$0xff]
    %v885 = vld [vmem:[#allocation5 + $0x16e0] sm:$0xff]
    %v886 = vld [vmem:[#allocation5 + $0x16e8] sm:$0xff]
    %v887 = vld [vmem:[#allocation5 + $0x16f0] sm:$0xff]
    %v888 = vld [vmem:[#allocation5 + $0x16f8] sm:$0xff]
    %v889 = vld [vmem:[#allocation5 + $0x1700] sm:$0xff]
    %v890 = vld [vmem:[#allocation5 + $0x1708] sm:$0xff]
    %v891 = vld [vmem:[#allocation5 + $0x1710] sm:$0xff]
    %v892 = vld [vmem:[#allocation5 + $0x1718] sm:$0xff]
    %v893 = vld [vmem:[#allocation5 + $0x1720] sm:$0xff]
    %v894 = vld [vmem:[#allocation5 + $0x1728] sm:$0xff]
    %v895 = vld [vmem:[#allocation5 + $0x1730] sm:$0xff]
    %v896 = vld [vmem:[#allocation5 + $0x1738] sm:$0xff]
    %v897 = vld [vmem:[#allocation5 + $0x1740] sm:$0xff]
    %v898 = vld [vmem:[#allocation5 + $0x1748] sm:$0xff]
    %v899 = vld [vmem:[#allocation5 + $0x1750] sm:$0xff]
    %v900 = vld [vmem:[#allocation5 + $0x1758] sm:$0xff]
    %v901 = vld [vmem:[#allocation5 + $0x1760] sm:$0xff]
    %v902 = vld [vmem:[#allocation5 + $0x1768] sm:$0xff]
    %v903 = vld [vmem:[#allocation5 + $0x1770] sm:$0xff]
    %v904 = vld [vmem:[#allocation5 + $0x1778] sm:$0xff]
    %v905 = vld [vmem:[#allocation5 + $0x1780] sm:$0xff]
    %v906 = vld [vmem:[#allocation5 + $0x1788] sm:$0xff]
    %v907 = vld [vmem:[#allocation5 + $0x1790] sm:$0xff]
    %v908 = vld [vmem:[#allocation5 + $0x1798] sm:$0xff]
    %v909 = vld [vmem:[#allocation5 + $0x17a0] sm:$0xff]
    %v910 = vld [vmem:[#allocation5 + $0x17a8] sm:$0xff]
    %v911 = vld [vmem:[#allocation5 + $0x17b0] sm:$0xff]
    %v912 = vld [vmem:[#allocation5 + $0x17b8] sm:$0xff]
    %v913 = vld [vmem:[#allocation5 + $0x17c0] sm:$0xff]
    %v914 = vld [vmem:[#allocation5 + $0x17c8] sm:$0xff]
    %v915 = vld [vmem:[#allocation5 + $0x17d0] sm:$0xff]
    %v916 = vld [vmem:[#allocation5 + $0x17d8] sm:$0xff]
    %v917 = vld [vmem:[#allocation5 + $0x17e0] sm:$0xff]
    %v918 = vld [vmem:[#allocation5 + $0x17e8] sm:$0xff]
    %v919 = vld [vmem:[#allocation5 + $0x17f0] sm:$0xff]
    %v920 = vld [vmem:[#allocation5 + $0x17f8] sm:$0xff]
    %v921 = vld [vmem:[#allocation5 + $0x1800] sm:$0xff]
    %v922 = vld [vmem:[#allocation5 + $0x1808] sm:$0xff]
    %v923 = vld [vmem:[#allocation5 + $0x1810] sm:$0xff]
    %v924 = vld [vmem:[#allocation5 + $0x1818] sm:$0xff]
    %v925 = vld [vmem:[#allocation5 + $0x1820] sm:$0xff]
    %v926 = vld [vmem:[#allocation5 + $0x1828] sm:$0xff]
    %v927 = vld [vmem:[#allocation5 + $0x1830] sm:$0xff]
    %v928 = vld [vmem:[#allocation5 + $0x1838] sm:$0xff]
    %v929 = vld [vmem:[#allocation5 + $0x1840] sm:$0xff]
    %v930 = vld [vmem:[#allocation5 + $0x1848] sm:$0xff]
    %v931 = vld [vmem:[#allocation5 + $0x1850] sm:$0xff]
    %v932 = vld [vmem:[#allocation5 + $0x1858] sm:$0xff]
    %v933 = vld [vmem:[#allocation5 + $0x1860] sm:$0xff]
    %v934 = vld [vmem:[#allocation5 + $0x1868] sm:$0xff]
    %v935 = vld [vmem:[#allocation5 + $0x1870] sm:$0xff]
    %v936 = vld [vmem:[#allocation5 + $0x1878] sm:$0xff]
    %v937 = vld [vmem:[#allocation5 + $0x1880] sm:$0xff]
    %v938 = vld [vmem:[#allocation5 + $0x1888] sm:$0xff]
    %v939 = vld [vmem:[#allocation5 + $0x1890] sm:$0xff]
    %v940 = vld [vmem:[#allocation5 + $0x1898] sm:$0xff]
    %v941 = vld [vmem:[#allocation5 + $0x18a0] sm:$0xff]
    %v942 = vld [vmem:[#allocation5 + $0x18a8] sm:$0xff]
    %v943 = vld [vmem:[#allocation5 + $0x18b0] sm:$0xff]
    %v944 = vld [vmem:[#allocation5 + $0x18b8] sm:$0xff]
    %v945 = vld [vmem:[#allocation5 + $0x18c0] sm:$0xff]
    %v946 = vld [vmem:[#allocation5 + $0x18c8] sm:$0xff]
    %v947 = vld [vmem:[#allocation5 + $0x18d0] sm:$0xff]
    %v948 = vld [vmem:[#allocation5 + $0x18d8] sm:$0xff]
    %v949 = vld [vmem:[#allocation5 + $0x18e0] sm:$0xff]
    %v950 = vld [vmem:[#allocation5 + $0x18e8] sm:$0xff]
    %v951 = vld [vmem:[#allocation5 + $0x18f0] sm:$0xff]
    %v952 = vld [vmem:[#allocation5 + $0x18f8] sm:$0xff]
    %v953 = vld [vmem:[#allocation5 + $0x1900] sm:$0xff]
    %v954 = vld [vmem:[#allocation5 + $0x1908] sm:$0xff]
    %v955 = vld [vmem:[#allocation5 + $0x1910] sm:$0xff]
    %v956 = vld [vmem:[#allocation5 + $0x1918] sm:$0xff]
    %v957 = vld [vmem:[#allocation5 + $0x1920] sm:$0xff]
    %v958 = vld [vmem:[#allocation5 + $0x1928] sm:$0xff]
    %v959 = vld [vmem:[#allocation5 + $0x1930] sm:$0xff]
    %v960 = vld [vmem:[#allocation5 + $0x1938] sm:$0xff]
    %v961 = vld [vmem:[#allocation5 + $0x1940] sm:$0xff]
    %v962 = vld [vmem:[#allocation5 + $0x1948] sm:$0xff]
    %v963 = vld [vmem:[#allocation5 + $0x1950] sm:$0xff]
    %v964 = vld [vmem:[#allocation5 + $0x1958] sm:$0xff]
    %v965 = vld [vmem:[#allocation5 + $0x1960] sm:$0xff]
    %v966 = vld [vmem:[#allocation5 + $0x1968] sm:$0xff]
    %v967 = vld [vmem:[#allocation5 + $0x1970] sm:$0xff]
    %v968 = vld [vmem:[#allocation5 + $0x1978] sm:$0xff]
    %v969 = vld [vmem:[#allocation5 + $0x1980] sm:$0xff]
    %v970 = vld [vmem:[#allocation5 + $0x1988] sm:$0xff]
    %v971 = vld [vmem:[#allocation5 + $0x1990] sm:$0xff]
    %v972 = vld [vmem:[#allocation5 + $0x1998] sm:$0xff]
    %v973 = vld [vmem:[#allocation5 + $0x19a0] sm:$0xff]
    %v974 = vld [vmem:[#allocation5 + $0x19a8] sm:$0xff]
    %v975 = vld [vmem:[#allocation5 + $0x19b0] sm:$0xff]
    %v976 = vld [vmem:[#allocation5 + $0x19b8] sm:$0xff]
    %v977 = vld [vmem:[#allocation5 + $0x19c0] sm:$0xff]
    %v978 = vld [vmem:[#allocation5 + $0x19c8] sm:$0xff]
    %v979 = vld [vmem:[#allocation5 + $0x19d0] sm:$0xff]
    %v980 = vld [vmem:[#allocation5 + $0x19d8] sm:$0xff]
    %v981 = vld [vmem:[#allocation5 + $0x19e0] sm:$0xff]
    %v982 = vld [vmem:[#allocation5 + $0x19e8] sm:$0xff]
    %v983 = vld [vmem:[#allocation5 + $0x19f0] sm:$0xff]
    %v984 = vld [vmem:[#allocation5 + $0x19f8] sm:$0xff]
    %v985 = vld [vmem:[#allocation5 + $0x1a00] sm:$0xff]
    %v986 = vld [vmem:[#allocation5 + $0x1a08] sm:$0xff]
    %v987 = vld [vmem:[#allocation5 + $0x1a10] sm:$0xff]
    %v988 = vld [vmem:[#allocation5 + $0x1a18] sm:$0xff]
    %v989 = vld [vmem:[#allocation5 + $0x1a20] sm:$0xff]
    %v990 = vld [vmem:[#allocation5 + $0x1a28] sm:$0xff]
    %v991 = vld [vmem:[#allocation5 + $0x1a30] sm:$0xff]
    %v992 = vld [vmem:[#allocation5 + $0x1a38] sm:$0xff]
    %v993 = vld [vmem:[#allocation5 + $0x1a40] sm:$0xff]
    %v994 = vld [vmem:[#allocation5 + $0x1a48] sm:$0xff]
    %v995 = vld [vmem:[#allocation5 + $0x1a50] sm:$0xff]
    %v996 = vld [vmem:[#allocation5 + $0x1a58] sm:$0xff]
    %v997 = vld [vmem:[#allocation5 + $0x1a60] sm:$0xff]
    %v998 = vld [vmem:[#allocation5 + $0x1a68] sm:$0xff]
    %v999 = vld [vmem:[#allocation5 + $0x1a70] sm:$0xff]
    %v1000 = vld [vmem:[#allocation5 + $0x1a78] sm:$0xff]
    %v1001 = vld [vmem:[#allocation5 + $0x1a80] sm:$0xff]
    %v1002 = vld [vmem:[#allocation5 + $0x1a88] sm:$0xff]
    %v1003 = vld [vmem:[#allocation5 + $0x1a90] sm:$0xff]
    %v1004 = vld [vmem:[#allocation5 + $0x1a98] sm:$0xff]
    %v1005 = vld [vmem:[#allocation5 + $0x1aa0] sm:$0xff]
    %v1006 = vld [vmem:[#allocation5 + $0x1aa8] sm:$0xff]
    %v1007 = vld [vmem:[#allocation5 + $0x1ab0] sm:$0xff]
    %v1008 = vld [vmem:[#allocation5 + $0x1ab8] sm:$0xff]
    %v1009 = vld [vmem:[#allocation5 + $0x1ac0] sm:$0xff]
    %v1010 = vld [vmem:[#allocation5 + $0x1ac8] sm:$0xff]
    %v1011 = vld [vmem:[#allocation5 + $0x1ad0] sm:$0xff]
    %v1012 = vld [vmem:[#allocation5 + $0x1ad8] sm:$0xff]
    %v1013 = vld [vmem:[#allocation5 + $0x1ae0] sm:$0xff]
    %v1014 = vld [vmem:[#allocation5 + $0x1ae8] sm:$0xff]
    %v1015 = vld [vmem:[#allocation5 + $0x1af0] sm:$0xff]
    %v1016 = vld [vmem:[#allocation5 + $0x1af8] sm:$0xff]
    %v1017 = vld [vmem:[#allocation5 + $0x1b00] sm:$0xff]
    %v1018 = vld [vmem:[#allocation5 + $0x1b08] sm:$0xff]
    %v1019 = vld [vmem:[#allocation5 + $0x1b10] sm:$0xff]
    %v1020 = vld [vmem:[#allocation5 + $0x1b18] sm:$0xff]
    %v1021 = vld [vmem:[#allocation5 + $0x1b20] sm:$0xff]
    %v1022 = vld [vmem:[#allocation5 + $0x1b28] sm:$0xff]
    %v1023 = vld [vmem:[#allocation5 + $0x1b30] sm:$0xff]
    %v1024 = vld [vmem:[#allocation5 + $0x1b38] sm:$0xff]
    %v1025 = vld [vmem:[#allocation5 + $0x1b40] sm:$0xff]
    %v1026 = vld [vmem:[#allocation5 + $0x1b48] sm:$0xff]
    %v1027 = vld [vmem:[#allocation5 + $0x1b50] sm:$0xff]
    %v1028 = vld [vmem:[#allocation5 + $0x1b58] sm:$0xff]
    %v1029 = vld [vmem:[#allocation5 + $0x1b60] sm:$0xff]
    %v1030 = vld [vmem:[#allocation5 + $0x1b68] sm:$0xff]
    %v1031 = vld [vmem:[#allocation5 + $0x1b70] sm:$0xff]
    %v1032 = vld [vmem:[#allocation5 + $0x1b78] sm:$0xff]
    %v1033 = vld [vmem:[#allocation5 + $0x1b80] sm:$0xff]
    %v1034 = vld [vmem:[#allocation5 + $0x1b88] sm:$0xff]
    %v1035 = vld [vmem:[#allocation5 + $0x1b90] sm:$0xff]
    %v1036 = vld [vmem:[#allocation5 + $0x1b98] sm:$0xff]
    %v1037 = vld [vmem:[#allocation5 + $0x1ba0] sm:$0xff]
    %v1038 = vld [vmem:[#allocation5 + $0x1ba8] sm:$0xff]
    %v1039 = vld [vmem:[#allocation5 + $0x1bb0] sm:$0xff]
    %v1040 = vld [vmem:[#allocation5 + $0x1bb8] sm:$0xff]
    %v1041 = vld [vmem:[#allocation5 + $0x1bc0] sm:$0xff]
    %v1042 = vld [vmem:[#allocation5 + $0x1bc8] sm:$0xff]
    %v1043 = vld [vmem:[#allocation5 + $0x1bd0] sm:$0xff]
    %v1044 = vld [vmem:[#allocation5 + $0x1bd8] sm:$0xff]
    %v1045 = vld [vmem:[#allocation5 + $0x1be0] sm:$0xff]
    %v1046 = vld [vmem:[#allocation5 + $0x1be8] sm:$0xff]
    %v1047 = vld [vmem:[#allocation5 + $0x1bf0] sm:$0xff]
    %v1048 = vld [vmem:[#allocation5 + $0x1bf8] sm:$0xff]
    %v1049 = vld [vmem:[#allocation5 + $0x1c00] sm:$0xff]
    %v1050 = vld [vmem:[#allocation5 + $0x1c08] sm:$0xff]
    %v1051 = vld [vmem:[#allocation5 + $0x1c10] sm:$0xff]
    %v1052 = vld [vmem:[#allocation5 + $0x1c18] sm:$0xff]
    %v1053 = vld [vmem:[#allocation5 + $0x1c20] sm:$0xff]
    %v1054 = vld [vmem:[#allocation5 + $0x1c28] sm:$0xff]
    %v1055 = vld [vmem:[#allocation5 + $0x1c30] sm:$0xff]
    %v1056 = vld [vmem:[#allocation5 + $0x1c38] sm:$0xff]
    %v1057 = vld [vmem:[#allocation5 + $0x1c40] sm:$0xff]
    %v1058 = vld [vmem:[#allocation5 + $0x1c48] sm:$0xff]
    %v1059 = vld [vmem:[#allocation5 + $0x1c50] sm:$0xff]
    %v1060 = vld [vmem:[#allocation5 + $0x1c58] sm:$0xff]
    %v1061 = vld [vmem:[#allocation5 + $0x1c60] sm:$0xff]
    %v1062 = vld [vmem:[#allocation5 + $0x1c68] sm:$0xff]
    %v1063 = vld [vmem:[#allocation5 + $0x1c70] sm:$0xff]
    %v1064 = vld [vmem:[#allocation5 + $0x1c78] sm:$0xff]
    %v1065 = vld [vmem:[#allocation5 + $0x1c80] sm:$0xff]
    %v1066 = vld [vmem:[#allocation5 + $0x1c88] sm:$0xff]
    %v1067 = vld [vmem:[#allocation5 + $0x1c90] sm:$0xff]
    %v1068 = vld [vmem:[#allocation5 + $0x1c98] sm:$0xff]
    %v1069 = vld [vmem:[#allocation5 + $0x1ca0] sm:$0xff]
    %v1070 = vld [vmem:[#allocation5 + $0x1ca8] sm:$0xff]
    %v1071 = vld [vmem:[#allocation5 + $0x1cb0] sm:$0xff]
    %v1072 = vld [vmem:[#allocation5 + $0x1cb8] sm:$0xff]
    %v1073 = vld [vmem:[#allocation5 + $0x1cc0] sm:$0xff]
    %v1074 = vld [vmem:[#allocation5 + $0x1cc8] sm:$0xff]
    %v1075 = vld [vmem:[#allocation5 + $0x1cd0] sm:$0xff]
    %v1076 = vld [vmem:[#allocation5 + $0x1cd8] sm:$0xff]
    %v1077 = vld [vmem:[#allocation5 + $0x1ce0] sm:$0xff]
    %v1078 = vld [vmem:[#allocation5 + $0x1ce8] sm:$0xff]
    %v1079 = vld [vmem:[#allocation5 + $0x1cf0] sm:$0xff]
    %v1080 = vld [vmem:[#allocation5 + $0x1cf8] sm:$0xff]
    %v1081 = vld [vmem:[#allocation5 + $0x1d00] sm:$0xff]
    %v1082 = vld [vmem:[#allocation5 + $0x1d08] sm:$0xff]
    %v1083 = vld [vmem:[#allocation5 + $0x1d10] sm:$0xff]
    %v1084 = vld [vmem:[#allocation5 + $0x1d18] sm:$0xff]
    %v1085 = vld [vmem:[#allocation5 + $0x1d20] sm:$0xff]
    %v1086 = vld [vmem:[#allocation5 + $0x1d28] sm:$0xff]
    %v1087 = vld [vmem:[#allocation5 + $0x1d30] sm:$0xff]
    %v1088 = vld [vmem:[#allocation5 + $0x1d38] sm:$0xff]
    %v1089 = vld [vmem:[#allocation5 + $0x1d40] sm:$0xff]
    %v1090 = vld [vmem:[#allocation5 + $0x1d48] sm:$0xff]
    %v1091 = vld [vmem:[#allocation5 + $0x1d50] sm:$0xff]
    %v1092 = vld [vmem:[#allocation5 + $0x1d58] sm:$0xff]
    %v1093 = vld [vmem:[#allocation5 + $0x1d60] sm:$0xff]
    %v1094 = vld [vmem:[#allocation5 + $0x1d68] sm:$0xff]
    %v1095 = vld [vmem:[#allocation5 + $0x1d70] sm:$0xff]
    %v1096 = vld [vmem:[#allocation5 + $0x1d78] sm:$0xff]
    %v1097 = vld [vmem:[#allocation5 + $0x1d80] sm:$0xff]
    %v1098 = vld [vmem:[#allocation5 + $0x1d88] sm:$0xff]
    %v1099 = vld [vmem:[#allocation5 + $0x1d90] sm:$0xff]
    %v1100 = vld [vmem:[#allocation5 + $0x1d98] sm:$0xff]
    %v1101 = vld [vmem:[#allocation5 + $0x1da0] sm:$0xff]
    %v1102 = vld [vmem:[#allocation5 + $0x1da8] sm:$0xff]
    %v1103 = vld [vmem:[#allocation5 + $0x1db0] sm:$0xff]
    %v1104 = vld [vmem:[#allocation5 + $0x1db8] sm:$0xff]
    %v1105 = vld [vmem:[#allocation5 + $0x1dc0] sm:$0xff]
    %v1106 = vld [vmem:[#allocation5 + $0x1dc8] sm:$0xff]
    %v1107 = vld [vmem:[#allocation5 + $0x1dd0] sm:$0xff]
    %v1108 = vld [vmem:[#allocation5 + $0x1dd8] sm:$0xff]
    %v1109 = vld [vmem:[#allocation5 + $0x1de0] sm:$0xff]
    %v1110 = vld [vmem:[#allocation5 + $0x1de8] sm:$0xff]
    %v1111 = vld [vmem:[#allocation5 + $0x1df0] sm:$0xff]
    %v1112 = vld [vmem:[#allocation5 + $0x1df8] sm:$0xff]
    %v1113 = vld [vmem:[#allocation5 + $0x1e00] sm:$0xff]
    %v1114 = vld [vmem:[#allocation5 + $0x1e08] sm:$0xff]
    %v1115 = vld [vmem:[#allocation5 + $0x1e10] sm:$0xff]
    %v1116 = vld [vmem:[#allocation5 + $0x1e18] sm:$0xff]
    %v1117 = vld [vmem:[#allocation5 + $0x1e20] sm:$0xff]
    %v1118 = vld [vmem:[#allocation5 + $0x1e28] sm:$0xff]
    %v1119 = vld [vmem:[#allocation5 + $0x1e30] sm:$0xff]
    %v1120 = vld [vmem:[#allocation5 + $0x1e38] sm:$0xff]
    %v1121 = vld [vmem:[#allocation5 + $0x1e40] sm:$0xff]
    %v1122 = vld [vmem:[#allocation5 + $0x1e48] sm:$0xff]
    %v1123 = vld [vmem:[#allocation5 + $0x1e50] sm:$0xff]
    %v1124 = vld [vmem:[#allocation5 + $0x1e58] sm:$0xff]
    %v1125 = vld [vmem:[#allocation5 + $0x1e60] sm:$0xff]
    %v1126 = vld [vmem:[#allocation5 + $0x1e68] sm:$0xff]
    %v1127 = vld [vmem:[#allocation5 + $0x1e70] sm:$0xff]
    %v1128 = vld [vmem:[#allocation5 + $0x1e78] sm:$0xff]
    %v1129 = vld [vmem:[#allocation5 + $0x1e80] sm:$0xff]
    %v1130 = vld [vmem:[#allocation5 + $0x1e88] sm:$0xff]
    %v1131 = vld [vmem:[#allocation5 + $0x1e90] sm:$0xff]
    %v1132 = vld [vmem:[#allocation5 + $0x1e98] sm:$0xff]
    %v1133 = vld [vmem:[#allocation5 + $0x1ea0] sm:$0xff]
    %v1134 = vld [vmem:[#allocation5 + $0x1ea8] sm:$0xff]
    %v1135 = vld [vmem:[#allocation5 + $0x1eb0] sm:$0xff]
    %v1136 = vld [vmem:[#allocation5 + $0x1eb8] sm:$0xff]
    %v1137 = vld [vmem:[#allocation5 + $0x1ec0] sm:$0xff]
    %v1138 = vld [vmem:[#allocation5 + $0x1ec8] sm:$0xff]
    %v1139 = vld [vmem:[#allocation5 + $0x1ed0] sm:$0xff]
    %v1140 = vld [vmem:[#allocation5 + $0x1ed8] sm:$0xff]
    %v1141 = vld [vmem:[#allocation5 + $0x1ee0] sm:$0xff]
    %v1142 = vld [vmem:[#allocation5 + $0x1ee8] sm:$0xff]
    %v1143 = vld [vmem:[#allocation5 + $0x1ef0] sm:$0xff]
    %v1144 = vld [vmem:[#allocation5 + $0x1ef8] sm:$0xff]
    %v1145 = vld [vmem:[#allocation5 + $0x1f00] sm:$0xff]
    %v1146 = vld [vmem:[#allocation5 + $0x1f08] sm:$0xff]
    %v1147 = vld [vmem:[#allocation5 + $0x1f10] sm:$0xff]
    %v1148 = vld [vmem:[#allocation5 + $0x1f18] sm:$0xff]
    %v1149 = vld [vmem:[#allocation5 + $0x1f20] sm:$0xff]
    %v1150 = vld [vmem:[#allocation5 + $0x1f28] sm:$0xff]
    %v1151 = vld [vmem:[#allocation5 + $0x1f30] sm:$0xff]
    %v1152 = vld [vmem:[#allocation5 + $0x1f38] sm:$0xff]
    %v1153 = vld [vmem:[#allocation5 + $0x1f40] sm:$0xff]
    %v1154 = vld [vmem:[#allocation5 + $0x1f48] sm:$0xff]
    %v1155 = vld [vmem:[#allocation5 + $0x1f50] sm:$0xff]
    %v1156 = vld [vmem:[#allocation5 + $0x1f58] sm:$0xff]
    %v1157 = vld [vmem:[#allocation5 + $0x1f60] sm:$0xff]
    %v1158 = vld [vmem:[#allocation5 + $0x1f68] sm:$0xff]
    %v1159 = vld [vmem:[#allocation5 + $0x1f70] sm:$0xff]
    %v1160 = vld [vmem:[#allocation5 + $0x1f78] sm:$0xff]
    %v1161 = vld [vmem:[#allocation5 + $0x1f80] sm:$0xff]
    %v1162 = vld [vmem:[#allocation5 + $0x1f88] sm:$0xff]
    %v1163 = vld [vmem:[#allocation5 + $0x1f90] sm:$0xff]
    %v1164 = vld [vmem:[#allocation5 + $0x1f98] sm:$0xff]
    %v1165 = vld [vmem:[#allocation5 + $0x1fa0] sm:$0xff]
    %v1166 = vld [vmem:[#allocation5 + $0x1fa8] sm:$0xff]
    %v1167 = vld [vmem:[#allocation5 + $0x1fb0] sm:$0xff]
    %v1168 = vld [vmem:[#allocation5 + $0x1fb8] sm:$0xff]
    %v1169 = vld [vmem:[#allocation5 + $0x1fc0] sm:$0xff]
    %v1170 = vld [vmem:[#allocation5 + $0x1fc8] sm:$0xff]
    %v1171 = vld [vmem:[#allocation5 + $0x1fd0] sm:$0xff]
    %v1172 = vld [vmem:[#allocation5 + $0x1fd8] sm:$0xff]
    %v1173 = vld [vmem:[#allocation5 + $0x1fe0] sm:$0xff]
    %v1174 = vld [vmem:[#allocation5 + $0x1fe8] sm:$0xff]
    %v1175 = vld [vmem:[#allocation5 + $0x1ff0] sm:$0xff]
    %v1176 = vld [vmem:[#allocation5 + $0x1ff8] sm:$0xff]
    %v1177 = vld [vmem:[#allocation5 + $0x2000] sm:$0xff]
    %v1178 = vld [vmem:[#allocation5 + $0x2008] sm:$0xff]
    %v1179 = vld [vmem:[#allocation5 + $0x2010] sm:$0xff]
    %v1180 = vld [vmem:[#allocation5 + $0x2018] sm:$0xff]
    %v1181 = vld [vmem:[#allocation5 + $0x2020] sm:$0xff]
    %v1182 = vld [vmem:[#allocation5 + $0x2028] sm:$0xff]
    %v1183 = vld [vmem:[#allocation5 + $0x2030] sm:$0xff]
    %v1184 = vld [vmem:[#allocation5 + $0x2038] sm:$0xff]
    %v1185 = vld [vmem:[#allocation5 + $0x2040] sm:$0xff]
    %v1186 = vld [vmem:[#allocation5 + $0x2048] sm:$0xff]
    %v1187 = vld [vmem:[#allocation5 + $0x2050] sm:$0xff]
    %v1188 = vld [vmem:[#allocation5 + $0x2058] sm:$0xff]
    %v1189 = vld [vmem:[#allocation5 + $0x2060] sm:$0xff]
    %v1190 = vld [vmem:[#allocation5 + $0x2068] sm:$0xff]
    %v1191 = vld [vmem:[#allocation5 + $0x2070] sm:$0xff]
    %v1192 = vld [vmem:[#allocation5 + $0x2078] sm:$0xff]
    %v1193 = vld [vmem:[#allocation5 + $0x2080] sm:$0xff]
    %v1194 = vld [vmem:[#allocation5 + $0x2088] sm:$0xff]
    %v1195 = vld [vmem:[#allocation5 + $0x2090] sm:$0xff]
    %v1196 = vld [vmem:[#allocation5 + $0x2098] sm:$0xff]
    %v1197 = vld [vmem:[#allocation5 + $0x20a0] sm:$0xff]
    %v1198 = vld [vmem:[#allocation5 + $0x20a8] sm:$0xff]
    %v1199 = vld [vmem:[#allocation5 + $0x20b0] sm:$0xff]
    %v1200 = vld [vmem:[#allocation5 + $0x20b8] sm:$0xff]
    %v1201 = vld [vmem:[#allocation5 + $0x20c0] sm:$0xff]
    %v1202 = vld [vmem:[#allocation5 + $0x20c8] sm:$0xff]
    %v1203 = vld [vmem:[#allocation5 + $0x20d0] sm:$0xff]
    %v1204 = vld [vmem:[#allocation5 + $0x20d8] sm:$0xff]
    %v1205 = vld [vmem:[#allocation5 + $0x20e0] sm:$0xff]
    %v1206 = vld [vmem:[#allocation5 + $0x20e8] sm:$0xff]
    %v1207 = vld [vmem:[#allocation5 + $0x20f0] sm:$0xff]
    %v1208 = vld [vmem:[#allocation5 + $0x20f8] sm:$0xff]
    %v1209 = vld [vmem:[#allocation5 + $0x2100] sm:$0xff]
    %v1210 = vld [vmem:[#allocation5 + $0x2108] sm:$0xff]
    %v1211 = vld [vmem:[#allocation5 + $0x2110] sm:$0xff]
    %v1212 = vld [vmem:[#allocation5 + $0x2118] sm:$0xff]
    %v1213 = vld [vmem:[#allocation5 + $0x2120] sm:$0xff]
    %v1214 = vld [vmem:[#allocation5 + $0x2128] sm:$0xff]
    %v1215 = vld [vmem:[#allocation5 + $0x2130] sm:$0xff]
    %v1216 = vld [vmem:[#allocation5 + $0x2138] sm:$0xff]
    %v1217 = vld [vmem:[#allocation5 + $0x2140] sm:$0xff]
    %v1218 = vld [vmem:[#allocation5 + $0x2148] sm:$0xff]
    %v1219 = vld [vmem:[#allocation5 + $0x2150] sm:$0xff]
    %v1220 = vld [vmem:[#allocation5 + $0x2158] sm:$0xff]
    %v1221 = vld [vmem:[#allocation5 + $0x2160] sm:$0xff]
    %v1222 = vld [vmem:[#allocation5 + $0x2168] sm:$0xff]
    %v1223 = vld [vmem:[#allocation5 + $0x2170] sm:$0xff]
    %v1224 = vld [vmem:[#allocation5 + $0x2178] sm:$0xff]
    %v1225 = vld [vmem:[#allocation5 + $0x2180] sm:$0xff]
    %v1226 = vld [vmem:[#allocation5 + $0x2188] sm:$0xff]
    %v1227 = vld [vmem:[#allocation5 + $0x2190] sm:$0xff]
    %v1228 = vld [vmem:[#allocation5 + $0x2198] sm:$0xff]
    %v1229 = vld [vmem:[#allocation5 + $0x21a0] sm:$0xff]
    %v1230 = vld [vmem:[#allocation5 + $0x21a8] sm:$0xff]
    %v1231 = vld [vmem:[#allocation5 + $0x21b0] sm:$0xff]
    %v1232 = vld [vmem:[#allocation5 + $0x21b8] sm:$0xff]
    %v1233 = vld [vmem:[#allocation5 + $0x21c0] sm:$0xff]
    %v1234 = vld [vmem:[#allocation5 + $0x21c8] sm:$0xff]
    %v1235 = vld [vmem:[#allocation5 + $0x21d0] sm:$0xff]
    %v1236 = vld [vmem:[#allocation5 + $0x21d8] sm:$0xff]
    %v1237 = vld [vmem:[#allocation5 + $0x21e0] sm:$0xff]
    %v1238 = vld [vmem:[#allocation5 + $0x21e8] sm:$0xff]
    %v1239 = vld [vmem:[#allocation5 + $0x21f0] sm:$0xff]
    %v1240 = vld [vmem:[#allocation5 + $0x21f8] sm:$0xff]
    %v1241 = vld [vmem:[#allocation7] sm:$0xff]
    %v1243 = vlaneseq
    %v1244 = vshrl.u32 %v1243, 7
    %v1245 = vsub.s32 0, %v1244
    %v1246 = vrot.slane %v1241, %v1245
    %v1247 = vlaneseq
    %v1248 = vshrl.u32 %v1247, 7
    %v1249 = vsub.s32 1, %v1248
    %v1250 = vrot.slane %v1241, %v1249
    %v1251 = vlaneseq
    %v1252 = vshrl.u32 %v1251, 7
    %v1253 = vsub.s32 2, %v1252
    %v1254 = vrot.slane %v1241, %v1253
    %v1255 = vlaneseq
    %v1256 = vshrl.u32 %v1255, 7
    %v1257 = vsub.s32 3, %v1256
    %v1258 = vrot.slane %v1241, %v1257
    %v1259 = vlaneseq
    %v1260 = vshrl.u32 %v1259, 7
    %v1261 = vsub.s32 4, %v1260
    %v1262 = vrot.slane %v1241, %v1261
    %v1263 = vlaneseq
    %v1264 = vshrl.u32 %v1263, 7
    %v1265 = vsub.s32 5, %v1264
    %v1266 = vrot.slane %v1241, %v1265
    %v1267 = vlaneseq
    %v1268 = vshrl.u32 %v1267, 7
    %v1269 = vsub.s32 6, %v1268
    %v1270 = vrot.slane %v1241, %v1269
    %v1271 = vlaneseq
    %v1272 = vshrl.u32 %v1271, 7
    %v1273 = vsub.s32 7, %v1272
    %v1274 = vrot.slane %v1241, %v1273
    %v1301 = vunpack.c.l.b16 %v135
    %v1302 = vunpack.c.h.b16 %v135
    %v1303 = vunpack.c.l.b16 %v136
    %v1304 = vunpack.c.h.b16 %v136
    %v1305 = vunpack.c.l.b16 %v137
    %v1306 = vunpack.c.h.b16 %v137
    %v1307 = vunpack.c.l.b16 %v138
    %v1308 = vunpack.c.h.b16 %v138
    %v1309 = vunpack.c.l.b16 %v139
    %v1310 = vunpack.c.h.b16 %v139
    %v1311 = vunpack.c.l.b16 %v140
    %v1312 = vunpack.c.h.b16 %v140
    %v1313 = vunpack.c.l.b16 %v141
    %v1314 = vunpack.c.h.b16 %v141
    %v1315 = vunpack.c.l.b16 %v142
    %v1316 = vunpack.c.h.b16 %v142
    %v1317 = vunpack.c.l.b16 %v143
    %v1318 = vunpack.c.l.b16 %v144
    %v1319 = vunpack.c.h.b16 %v144
    %v1320 = vunpack.c.l.b16 %v145
    %v1321 = vunpack.c.h.b16 %v145
    %v1322 = vunpack.c.l.b16 %v146
    %v1323 = vunpack.c.h.b16 %v146
    %v1324 = vunpack.c.l.b16 %v147
    %v1325 = vunpack.c.h.b16 %v147
    %v1326 = vunpack.c.l.b16 %v148
    %v1327 = vunpack.c.h.b16 %v148
    %v1328 = vunpack.c.l.b16 %v149
    %v1329 = vunpack.c.h.b16 %v149
    %v1330 = vunpack.c.l.b16 %v150
    %v1331 = vunpack.c.h.b16 %v150
    %v1332 = vunpack.c.l.b16 %v151
    %v1333 = vunpack.c.h.b16 %v151
    %v1334 = vunpack.c.l.b16 %v152
    %v1335 = vpack.c.b16 %v1318, %v1301
    %v1336 = vpack.c.b16 %v1319, %v1302
    %v1337 = vpack.c.b16 %v1320, %v1303
    %v1338 = vpack.c.b16 %v1321, %v1304
    %v1339 = vpack.c.b16 %v1322, %v1305
    %v1340 = vpack.c.b16 %v1323, %v1306
    %v1341 = vpack.c.b16 %v1324, %v1307
    %v1342 = vpack.c.b16 %v1325, %v1308
    %v1343 = vpack.c.b16 %v1326, %v1309
    %v1344 = vpack.c.b16 %v1327, %v1310
    %v1345 = vpack.c.b16 %v1328, %v1311
    %v1346 = vpack.c.b16 %v1329, %v1312
    %v1347 = vpack.c.b16 %v1330, %v1313
    %v1348 = vpack.c.b16 %v1331, %v1314
    %v1349 = vpack.c.b16 %v1332, %v1315
    %v1350 = vpack.c.b16 %v1333, %v1316
    %v1351 = vpack.c.b16 %v1334, %v1317
    %v2457 = vunpack.c.l.b16 %v153
    %v2458 = vunpack.c.h.b16 %v153
    %v2459 = vunpack.c.l.b16 %v154
    %v2460 = vunpack.c.h.b16 %v154
    %v2461 = vunpack.c.l.b16 %v155
    %v2462 = vunpack.c.h.b16 %v155
    %v2463 = vunpack.c.l.b16 %v156
    %v2464 = vunpack.c.h.b16 %v156
    %v2465 = vunpack.c.l.b16 %v157
    %v2466 = vunpack.c.h.b16 %v157
    %v2467 = vunpack.c.l.b16 %v158
    %v2468 = vunpack.c.h.b16 %v158
    %v2469 = vunpack.c.l.b16 %v159
    %v2470 = vunpack.c.h.b16 %v159
    %v2471 = vunpack.c.l.b16 %v160
    %v2472 = vunpack.c.h.b16 %v160
    %v2473 = vunpack.c.l.b16 %v161
    %v2474 = vunpack.c.h.b16 %v161
    %v2475 = vunpack.c.l.b16 %v162
    %v2476 = vunpack.c.h.b16 %v162
    %v2477 = vunpack.c.l.b16 %v163
    %v2478 = vunpack.c.h.b16 %v163
    %v2479 = vunpack.c.l.b16 %v164
    %v2480 = vunpack.c.h.b16 %v164
    %v2481 = vunpack.c.l.b16 %v165
    %v2482 = vunpack.c.h.b16 %v165
    %v2483 = vunpack.c.l.b16 %v166
    %v2484 = vunpack.c.h.b16 %v166
    %v2485 = vunpack.c.l.b16 %v167
    %v2486 = vunpack.c.h.b16 %v167
    %v2487 = vunpack.c.l.b16 %v168
    %v2488 = vunpack.c.h.b16 %v168
    %v2489 = vunpack.c.l.b16 %v169
    %v2490 = vunpack.c.h.b16 %v169
    %v2491 = vunpack.c.l.b16 %v170
    %v2492 = vunpack.c.h.b16 %v170
    %v2493 = vunpack.c.l.b16 %v171
    %v2494 = vunpack.c.h.b16 %v171
    %v2495 = vunpack.c.l.b16 %v172
    %v2496 = vunpack.c.h.b16 %v172
    %v2497 = vunpack.c.l.b16 %v173
    %v2498 = vunpack.c.h.b16 %v173
    %v2499 = vunpack.c.l.b16 %v174
    %v2500 = vunpack.c.h.b16 %v174
    %v2501 = vunpack.c.l.b16 %v175
    %v2502 = vunpack.c.h.b16 %v175
    %v2503 = vunpack.c.l.b16 %v176
    %v2504 = vunpack.c.h.b16 %v176
    %v2505 = vunpack.c.l.b16 %v177
    %v2506 = vunpack.c.h.b16 %v177
    %v2507 = vunpack.c.l.b16 %v178
    %v2508 = vunpack.c.h.b16 %v178
    %v2509 = vunpack.c.l.b16 %v179
    %v2510 = vunpack.c.h.b16 %v179
    %v2511 = vunpack.c.l.b16 %v180
    %v2512 = vunpack.c.h.b16 %v180
    %v2513 = vunpack.c.l.b16 %v181
    %v2514 = vunpack.c.h.b16 %v181
    %v2515 = vunpack.c.l.b16 %v182
    %v2516 = vunpack.c.h.b16 %v182
    %v2517 = vunpack.c.l.b16 %v183
    %v2518 = vunpack.c.h.b16 %v183
    %v2519 = vunpack.c.l.b16 %v184
    %v2520 = vunpack.c.h.b16 %v184
    %v2521 = vunpack.c.l.b16 %v185
    %v2522 = vunpack.c.h.b16 %v185
    %v2523 = vunpack.c.l.b16 %v186
    %v2524 = vunpack.c.h.b16 %v186
    %v2525 = vunpack.c.l.b16 %v187
    %v2526 = vunpack.c.h.b16 %v187
    %v2527 = vunpack.c.l.b16 %v188
    %v2528 = vunpack.c.h.b16 %v188
    %v2529 = vunpack.c.l.b16 %v189
    %v2530 = vunpack.c.h.b16 %v189
    %v2531 = vunpack.c.l.b16 %v190
    %v2532 = vunpack.c.h.b16 %v190
    %v2533 = vunpack.c.l.b16 %v191
    %v2534 = vunpack.c.h.b16 %v191
    %v2535 = vunpack.c.l.b16 %v192
    %v2536 = vunpack.c.h.b16 %v192
    %v2537 = vunpack.c.l.b16 %v193
    %v2538 = vunpack.c.h.b16 %v193
    %v2539 = vunpack.c.l.b16 %v194
    %v2540 = vunpack.c.h.b16 %v194
    %v2541 = vunpack.c.l.b16 %v195
    %v2542 = vunpack.c.h.b16 %v195
    %v2543 = vunpack.c.l.b16 %v196
    %v2544 = vunpack.c.h.b16 %v196
    %v2545 = vunpack.c.l.b16 %v197
    %v2546 = vunpack.c.h.b16 %v197
    %v2547 = vunpack.c.l.b16 %v198
    %v2548 = vunpack.c.h.b16 %v198
    %v2549 = vunpack.c.l.b16 %v199
    %v2550 = vunpack.c.h.b16 %v199
    %v2551 = vunpack.c.l.b16 %v200
    %v2552 = vunpack.c.h.b16 %v200
    %v2553 = vunpack.c.l.b16 %v201
    %v2554 = vunpack.c.h.b16 %v201
    %v2555 = vunpack.c.l.b16 %v202
    %v2556 = vunpack.c.h.b16 %v202
    %v2557 = vunpack.c.l.b16 %v203
    %v2558 = vunpack.c.h.b16 %v203
    %v2559 = vunpack.c.l.b16 %v204
    %v2560 = vunpack.c.h.b16 %v204
    %v2561 = vunpack.c.l.b16 %v205
    %v2562 = vunpack.c.h.b16 %v205
    %v2563 = vunpack.c.l.b16 %v206
    %v2564 = vunpack.c.h.b16 %v206
    %v2565 = vunpack.c.l.b16 %v207
    %v2566 = vunpack.c.h.b16 %v207
    %v2567 = vunpack.c.l.b16 %v208
    %v2568 = vunpack.c.h.b16 %v208
    %v2569 = vunpack.c.l.b16 %v209
    %v2570 = vunpack.c.h.b16 %v209
    %v2571 = vunpack.c.l.b16 %v210
    %v2572 = vunpack.c.h.b16 %v210
    %v2573 = vunpack.c.l.b16 %v211
    %v2574 = vunpack.c.h.b16 %v211
    %v2575 = vunpack.c.l.b16 %v212
    %v2576 = vunpack.c.h.b16 %v212
    %v2577 = vunpack.c.l.b16 %v213
    %v2578 = vunpack.c.h.b16 %v213
    %v2579 = vunpack.c.l.b16 %v214
    %v2580 = vunpack.c.h.b16 %v214
    %v2581 = vunpack.c.l.b16 %v215
    %v2582 = vunpack.c.h.b16 %v215
    %v2583 = vunpack.c.l.b16 %v216
    %v2584 = vunpack.c.h.b16 %v216
    %v2585 = vunpack.c.l.b16 %v217
    %v2586 = vunpack.c.h.b16 %v217
    %v2587 = vunpack.c.l.b16 %v218
    %v2588 = vunpack.c.h.b16 %v218
    %v2589 = vunpack.c.l.b16 %v219
    %v2590 = vunpack.c.h.b16 %v219
    %v2591 = vunpack.c.l.b16 %v220
    %v2592 = vunpack.c.h.b16 %v220
    %v2593 = vunpack.c.l.b16 %v221
    %v2594 = vunpack.c.h.b16 %v221
    %v2595 = vunpack.c.l.b16 %v222
    %v2596 = vunpack.c.h.b16 %v222
    %v2597 = vunpack.c.l.b16 %v223
    %v2598 = vunpack.c.h.b16 %v223
    %v2599 = vunpack.c.l.b16 %v224
    %v2600 = vunpack.c.h.b16 %v224
    %v2601 = vunpack.c.l.b16 %v225
    %v2602 = vunpack.c.h.b16 %v225
    %v2603 = vunpack.c.l.b16 %v226
    %v2604 = vunpack.c.h.b16 %v226
    %v2605 = vunpack.c.l.b16 %v227
    %v2606 = vunpack.c.h.b16 %v227
    %v2607 = vunpack.c.l.b16 %v228
    %v2608 = vunpack.c.h.b16 %v228
    %v2609 = vunpack.c.l.b16 %v229
    %v2610 = vunpack.c.h.b16 %v229
    %v2611 = vunpack.c.l.b16 %v230
    %v2612 = vunpack.c.h.b16 %v230
    %v2613 = vunpack.c.l.b16 %v231
    %v2614 = vunpack.c.h.b16 %v231
    %v2615 = vunpack.c.l.b16 %v232
    %v2616 = vunpack.c.h.b16 %v232
    %v2617 = vunpack.c.l.b16 %v233
    %v2618 = vunpack.c.h.b16 %v233
    %v2619 = vunpack.c.l.b16 %v234
    %v2620 = vunpack.c.h.b16 %v234
    %v2621 = vunpack.c.l.b16 %v235
    %v2622 = vunpack.c.h.b16 %v235
    %v2623 = vunpack.c.l.b16 %v236
    %v2624 = vunpack.c.h.b16 %v236
    %v2625 = vunpack.c.l.b16 %v237
    %v2626 = vunpack.c.h.b16 %v237
    %v2627 = vunpack.c.l.b16 %v238
    %v2628 = vunpack.c.h.b16 %v238
    %v2629 = vunpack.c.l.b16 %v239
    %v2630 = vunpack.c.h.b16 %v239
    %v2631 = vunpack.c.l.b16 %v240
    %v2632 = vunpack.c.h.b16 %v240
    %v2633 = vunpack.c.l.b16 %v241
    %v2634 = vunpack.c.h.b16 %v241
    %v2635 = vunpack.c.l.b16 %v242
    %v2636 = vunpack.c.h.b16 %v242
    %v2637 = vunpack.c.l.b16 %v243
    %v2638 = vunpack.c.h.b16 %v243
    %v2639 = vunpack.c.l.b16 %v244
    %v2640 = vunpack.c.h.b16 %v244
    %v2641 = vunpack.c.l.b16 %v245
    %v2642 = vunpack.c.h.b16 %v245
    %v2643 = vunpack.c.l.b16 %v246
    %v2644 = vunpack.c.h.b16 %v246
    %v2645 = vunpack.c.l.b16 %v247
    %v2646 = vunpack.c.h.b16 %v247
    %v2647 = vunpack.c.l.b16 %v248
    %v2648 = vunpack.c.h.b16 %v248
    %v2649 = vunpack.c.l.b16 %v249
    %v2650 = vunpack.c.h.b16 %v249
    %v2651 = vunpack.c.l.b16 %v250
    %v2652 = vunpack.c.h.b16 %v250
    %v2653 = vunpack.c.l.b16 %v251
    %v2654 = vunpack.c.h.b16 %v251
    %v2655 = vunpack.c.l.b16 %v252
    %v2656 = vunpack.c.h.b16 %v252
    %v2657 = vunpack.c.l.b16 %v253
    %v2658 = vunpack.c.h.b16 %v253
    %v2659 = vunpack.c.l.b16 %v254
    %v2660 = vunpack.c.h.b16 %v254
    %v2661 = vunpack.c.l.b16 %v255
    %v2662 = vunpack.c.h.b16 %v255
    %v2663 = vunpack.c.l.b16 %v256
    %v2664 = vunpack.c.h.b16 %v256
    %v2665 = vunpack.c.l.b16 %v257
    %v2666 = vunpack.c.h.b16 %v257
    %v2667 = vunpack.c.l.b16 %v258
    %v2668 = vunpack.c.h.b16 %v258
    %v2669 = vunpack.c.l.b16 %v259
    %v2670 = vunpack.c.h.b16 %v259
    %v2671 = vunpack.c.l.b16 %v260
    %v2672 = vunpack.c.h.b16 %v260
    %v2673 = vunpack.c.l.b16 %v261
    %v2674 = vunpack.c.h.b16 %v261
    %v2675 = vunpack.c.l.b16 %v262
    %v2676 = vunpack.c.h.b16 %v262
    %v2677 = vunpack.c.l.b16 %v263
    %v2678 = vunpack.c.h.b16 %v263
    %v2679 = vunpack.c.l.b16 %v264
    %v2680 = vunpack.c.h.b16 %v264
    %v2681 = vunpack.c.l.b16 %v265
    %v2682 = vunpack.c.h.b16 %v265
    %v2683 = vunpack.c.l.b16 %v266
    %v2684 = vunpack.c.h.b16 %v266
    %v2685 = vunpack.c.l.b16 %v267
    %v2686 = vunpack.c.h.b16 %v267
    %v2687 = vunpack.c.l.b16 %v268
    %v2688 = vunpack.c.h.b16 %v268
    %v2689 = vunpack.c.l.b16 %v269
    %v2690 = vunpack.c.h.b16 %v269
    %v2691 = vunpack.c.l.b16 %v270
    %v2692 = vunpack.c.h.b16 %v270
    %v2693 = vunpack.c.l.b16 %v271
    %v2694 = vunpack.c.h.b16 %v271
    %v2695 = vunpack.c.l.b16 %v272
    %v2696 = vunpack.c.h.b16 %v272
    %v2697 = vunpack.c.l.b16 %v273
    %v2698 = vunpack.c.h.b16 %v273
    %v2699 = vunpack.c.l.b16 %v274
    %v2700 = vunpack.c.h.b16 %v274
    %v2701 = vunpack.c.l.b16 %v275
    %v2702 = vunpack.c.h.b16 %v275
    %v2703 = vunpack.c.l.b16 %v276
    %v2704 = vunpack.c.h.b16 %v276
    %v2705 = vunpack.c.l.b16 %v277
    %v2706 = vunpack.c.h.b16 %v277
    %v2707 = vunpack.c.l.b16 %v278
    %v2708 = vunpack.c.h.b16 %v278
    %v2709 = vunpack.c.l.b16 %v279
    %v2710 = vunpack.c.h.b16 %v279
    %v2711 = vunpack.c.l.b16 %v280
    %v2712 = vunpack.c.h.b16 %v280
    %v2713 = vunpack.c.l.b16 %v281
    %v2714 = vunpack.c.h.b16 %v281
    %v2715 = vunpack.c.l.b16 %v282
    %v2716 = vunpack.c.h.b16 %v282
    %v2717 = vunpack.c.l.b16 %v283
    %v2718 = vunpack.c.h.b16 %v283
    %v2719 = vunpack.c.l.b16 %v284
    %v2720 = vunpack.c.h.b16 %v284
    %v2721 = vunpack.c.l.b16 %v285
    %v2722 = vunpack.c.h.b16 %v285
    %v2723 = vunpack.c.l.b16 %v286
    %v2724 = vunpack.c.h.b16 %v286
    %v2725 = vunpack.c.l.b16 %v287
    %v2726 = vunpack.c.h.b16 %v287
    %v2727 = vunpack.c.l.b16 %v288
    %v2728 = vunpack.c.h.b16 %v288
    %v2729 = vunpack.c.l.b16 %v289
    %v2730 = vunpack.c.h.b16 %v289
    %v2731 = vunpack.c.l.b16 %v290
    %v2732 = vunpack.c.h.b16 %v290
    %v2733 = vunpack.c.l.b16 %v291
    %v2734 = vunpack.c.h.b16 %v291
    %v2735 = vunpack.c.l.b16 %v292
    %v2736 = vunpack.c.h.b16 %v292
    %v2737 = vunpack.c.l.b16 %v293
    %v2738 = vunpack.c.h.b16 %v293
    %v2739 = vunpack.c.l.b16 %v294
    %v2740 = vunpack.c.h.b16 %v294
    %v2741 = vunpack.c.l.b16 %v295
    %v2742 = vunpack.c.h.b16 %v295
    %v2743 = vunpack.c.l.b16 %v296
    %v2744 = vunpack.c.h.b16 %v296
    %v2745 = vunpack.c.l.b16 %v297
    %v2746 = vunpack.c.h.b16 %v297
    %v2747 = vunpack.c.l.b16 %v298
    %v2748 = vunpack.c.h.b16 %v298
    %v2749 = vunpack.c.l.b16 %v299
    %v2750 = vunpack.c.h.b16 %v299
    %v2751 = vunpack.c.l.b16 %v300
    %v2752 = vunpack.c.h.b16 %v300
    %v2753 = vunpack.c.l.b16 %v301
    %v2754 = vunpack.c.h.b16 %v301
    %v2755 = vunpack.c.l.b16 %v302
    %v2756 = vunpack.c.h.b16 %v302
    %v2757 = vunpack.c.l.b16 %v303
    %v2758 = vunpack.c.h.b16 %v303
    %v2759 = vunpack.c.l.b16 %v304
    %v2760 = vunpack.c.h.b16 %v304
    %v2761 = vunpack.c.l.b16 %v305
    %v2762 = vunpack.c.h.b16 %v305
    %v2763 = vunpack.c.l.b16 %v306
    %v2764 = vunpack.c.h.b16 %v306
    %v2765 = vunpack.c.l.b16 %v307
    %v2766 = vunpack.c.h.b16 %v307
    %v2767 = vunpack.c.l.b16 %v308
    %v2768 = vunpack.c.h.b16 %v308
    %v2769 = vunpack.c.l.b16 %v309
    %v2770 = vunpack.c.h.b16 %v309
    %v2771 = vunpack.c.l.b16 %v310
    %v2772 = vunpack.c.h.b16 %v310
    %v2773 = vunpack.c.l.b16 %v311
    %v2774 = vunpack.c.h.b16 %v311
    %v2775 = vunpack.c.l.b16 %v312
    %v2776 = vunpack.c.h.b16 %v312
    %v2777 = vunpack.c.l.b16 %v313
    %v2778 = vunpack.c.h.b16 %v313
    %v2779 = vunpack.c.l.b16 %v314
    %v2780 = vunpack.c.h.b16 %v314
    %v2781 = vunpack.c.l.b16 %v315
    %v2782 = vunpack.c.h.b16 %v315
    %v2783 = vunpack.c.l.b16 %v316
    %v2784 = vunpack.c.h.b16 %v316
    %v2785 = vunpack.c.l.b16 %v317
    %v2786 = vunpack.c.h.b16 %v317
    %v2787 = vunpack.c.l.b16 %v318
    %v2788 = vunpack.c.h.b16 %v318
    %v2789 = vunpack.c.l.b16 %v319
    %v2790 = vunpack.c.h.b16 %v319
    %v2791 = vunpack.c.l.b16 %v320
    %v2792 = vunpack.c.h.b16 %v320
    %v2793 = vunpack.c.l.b16 %v321
    %v2794 = vunpack.c.h.b16 %v321
    %v2795 = vunpack.c.l.b16 %v322
    %v2796 = vunpack.c.h.b16 %v322
    %v2797 = vunpack.c.l.b16 %v323
    %v2798 = vunpack.c.h.b16 %v323
    %v2799 = vunpack.c.l.b16 %v324
    %v2800 = vunpack.c.h.b16 %v324
    %v2801 = vunpack.c.l.b16 %v325
    %v2802 = vunpack.c.h.b16 %v325
    %v2803 = vunpack.c.l.b16 %v326
    %v2804 = vunpack.c.h.b16 %v326
    %v2805 = vunpack.c.l.b16 %v327
    %v2806 = vunpack.c.h.b16 %v327
    %v2807 = vunpack.c.l.b16 %v328
    %v2808 = vunpack.c.h.b16 %v328
    %v2809 = vunpack.c.l.b16 %v329
    %v2810 = vunpack.c.h.b16 %v329
    %v2811 = vunpack.c.l.b16 %v330
    %v2812 = vunpack.c.h.b16 %v330
    %v2813 = vunpack.c.l.b16 %v331
    %v2814 = vunpack.c.h.b16 %v331
    %v2815 = vunpack.c.l.b16 %v332
    %v2816 = vunpack.c.h.b16 %v332
    %v2817 = vunpack.c.l.b16 %v333
    %v2818 = vunpack.c.h.b16 %v333
    %v2819 = vunpack.c.l.b16 %v334
    %v2820 = vunpack.c.h.b16 %v334
    %v2821 = vunpack.c.l.b16 %v335
    %v2822 = vunpack.c.h.b16 %v335
    %v2823 = vunpack.c.l.b16 %v336
    %v2824 = vunpack.c.h.b16 %v336
    %v2825 = vunpack.c.l.b16 %v337
    %v2826 = vunpack.c.h.b16 %v337
    %v2827 = vunpack.c.l.b16 %v338
    %v2828 = vunpack.c.h.b16 %v338
    %v2829 = vunpack.c.l.b16 %v339
    %v2830 = vunpack.c.h.b16 %v339
    %v2831 = vunpack.c.l.b16 %v340
    %v2832 = vunpack.c.h.b16 %v340
    %v2833 = vunpack.c.l.b16 %v341
    %v2834 = vunpack.c.h.b16 %v341
    %v2835 = vunpack.c.l.b16 %v342
    %v2836 = vunpack.c.h.b16 %v342
    %v2837 = vunpack.c.l.b16 %v343
    %v2838 = vunpack.c.h.b16 %v343
    %v2839 = vunpack.c.l.b16 %v344
    %v2840 = vunpack.c.h.b16 %v344
    %v2841 = vunpack.c.l.b16 %v345
    %v2842 = vunpack.c.h.b16 %v345
    %v2843 = vunpack.c.l.b16 %v346
    %v2844 = vunpack.c.h.b16 %v346
    %v2845 = vunpack.c.l.b16 %v347
    %v2846 = vunpack.c.h.b16 %v347
    %v2847 = vunpack.c.l.b16 %v348
    %v2848 = vunpack.c.h.b16 %v348
    %v2849 = vunpack.c.l.b16 %v349
    %v2850 = vunpack.c.h.b16 %v349
    %v2851 = vunpack.c.l.b16 %v350
    %v2852 = vunpack.c.h.b16 %v350
    %v2853 = vunpack.c.l.b16 %v351
    %v2854 = vunpack.c.h.b16 %v351
    %v2855 = vunpack.c.l.b16 %v352
    %v2856 = vunpack.c.h.b16 %v352
    %v2857 = vunpack.c.l.b16 %v353
    %v2858 = vunpack.c.h.b16 %v353
    %v2859 = vunpack.c.l.b16 %v354
    %v2860 = vunpack.c.h.b16 %v354
    %v2861 = vunpack.c.l.b16 %v355
    %v2862 = vunpack.c.h.b16 %v355
    %v2863 = vunpack.c.l.b16 %v356
    %v2864 = vunpack.c.h.b16 %v356
    %v2865 = vunpack.c.l.b16 %v357
    %v2866 = vunpack.c.h.b16 %v357
    %v2867 = vunpack.c.l.b16 %v358
    %v2868 = vunpack.c.h.b16 %v358
    %v2869 = vunpack.c.l.b16 %v359
    %v2870 = vunpack.c.h.b16 %v359
    %v2871 = vunpack.c.l.b16 %v360
    %v2872 = vunpack.c.h.b16 %v360
    %v2873 = vunpack.c.l.b16 %v361
    %v2874 = vunpack.c.h.b16 %v361
    %v2875 = vunpack.c.l.b16 %v362
    %v2876 = vunpack.c.h.b16 %v362
    %v2877 = vunpack.c.l.b16 %v363
    %v2878 = vunpack.c.h.b16 %v363
    %v2879 = vunpack.c.l.b16 %v364
    %v2880 = vunpack.c.h.b16 %v364
    %v2881 = vunpack.c.l.b16 %v365
    %v2882 = vunpack.c.h.b16 %v365
    %v2883 = vunpack.c.l.b16 %v366
    %v2884 = vunpack.c.h.b16 %v366
    %v2885 = vunpack.c.l.b16 %v367
    %v2886 = vunpack.c.h.b16 %v367
    %v2887 = vunpack.c.l.b16 %v368
    %v2888 = vunpack.c.h.b16 %v368
    %v2889 = vunpack.c.l.b16 %v369
    %v2890 = vunpack.c.h.b16 %v369
    %v2891 = vunpack.c.l.b16 %v370
    %v2892 = vunpack.c.h.b16 %v370
    %v2893 = vunpack.c.l.b16 %v371
    %v2894 = vunpack.c.h.b16 %v371
    %v2895 = vunpack.c.l.b16 %v372
    %v2896 = vunpack.c.h.b16 %v372
    %v2897 = vunpack.c.l.b16 %v373
    %v2898 = vunpack.c.h.b16 %v373
    %v2899 = vunpack.c.l.b16 %v374
    %v2900 = vunpack.c.h.b16 %v374
    %v2901 = vunpack.c.l.b16 %v375
    %v2902 = vunpack.c.h.b16 %v375
    %v2903 = vunpack.c.l.b16 %v376
    %v2904 = vunpack.c.h.b16 %v376
    %v2905 = vunpack.c.l.b16 %v377
    %v2906 = vunpack.c.h.b16 %v377
    %v2907 = vunpack.c.l.b16 %v378
    %v2908 = vunpack.c.h.b16 %v378
    %v2909 = vunpack.c.l.b16 %v379
    %v2910 = vunpack.c.h.b16 %v379
    %v2911 = vunpack.c.l.b16 %v380
    %v2912 = vunpack.c.h.b16 %v380
    %v2913 = vunpack.c.l.b16 %v381
    %v2914 = vunpack.c.h.b16 %v381
    %v2915 = vunpack.c.l.b16 %v382
    %v2916 = vunpack.c.h.b16 %v382
    %v2917 = vunpack.c.l.b16 %v383
    %v2918 = vunpack.c.h.b16 %v383
    %v2919 = vunpack.c.l.b16 %v384
    %v2920 = vunpack.c.h.b16 %v384
    %v2921 = vunpack.c.l.b16 %v385
    %v2922 = vunpack.c.h.b16 %v385
    %v2923 = vunpack.c.l.b16 %v386
    %v2924 = vunpack.c.h.b16 %v386
    %v2925 = vunpack.c.l.b16 %v387
    %v2926 = vunpack.c.h.b16 %v387
    %v2927 = vunpack.c.l.b16 %v388
    %v2928 = vunpack.c.h.b16 %v388
    %v2929 = vunpack.c.l.b16 %v389
    %v2930 = vunpack.c.h.b16 %v389
    %v2931 = vunpack.c.l.b16 %v390
    %v2932 = vunpack.c.h.b16 %v390
    %v2933 = vunpack.c.l.b16 %v391
    %v2934 = vunpack.c.h.b16 %v391
    %v2935 = vunpack.c.l.b16 %v392
    %v2936 = vunpack.c.h.b16 %v392
    %v2937 = vunpack.c.l.b16 %v393
    %v2938 = vunpack.c.h.b16 %v393
    %v2939 = vunpack.c.l.b16 %v394
    %v2940 = vunpack.c.h.b16 %v394
    %v2941 = vunpack.c.l.b16 %v395
    %v2942 = vunpack.c.h.b16 %v395
    %v2943 = vunpack.c.l.b16 %v396
    %v2944 = vunpack.c.h.b16 %v396
    %v2945 = vunpack.c.l.b16 %v397
    %v2946 = vunpack.c.h.b16 %v397
    %v2947 = vunpack.c.l.b16 %v398
    %v2948 = vunpack.c.h.b16 %v398
    %v2949 = vunpack.c.l.b16 %v399
    %v2950 = vunpack.c.h.b16 %v399
    %v2951 = vunpack.c.l.b16 %v400
    %v2952 = vunpack.c.h.b16 %v400
    %v2953 = vunpack.c.l.b16 %v401
    %v2954 = vunpack.c.h.b16 %v401
    %v2955 = vunpack.c.l.b16 %v402
    %v2956 = vunpack.c.h.b16 %v402
    %v2957 = vunpack.c.l.b16 %v403
    %v2958 = vunpack.c.h.b16 %v403
    %v2959 = vunpack.c.l.b16 %v404
    %v2960 = vunpack.c.h.b16 %v404
    %v2961 = vunpack.c.l.b16 %v405
    %v2962 = vunpack.c.h.b16 %v405
    %v2963 = vunpack.c.l.b16 %v406
    %v2964 = vunpack.c.h.b16 %v406
    %v2965 = vunpack.c.l.b16 %v407
    %v2966 = vunpack.c.h.b16 %v407
    %v2967 = vunpack.c.l.b16 %v408
    %v2968 = vunpack.c.h.b16 %v408
    %v2969 = vunpack.c.l.b16 %v409
    %v2970 = vunpack.c.h.b16 %v409
    %v2971 = vunpack.c.l.b16 %v410
    %v2972 = vunpack.c.h.b16 %v410
    %v2973 = vunpack.c.l.b16 %v411
    %v2974 = vunpack.c.h.b16 %v411
    %v2975 = vunpack.c.l.b16 %v412
    %v2976 = vunpack.c.h.b16 %v412
    %v2977 = vunpack.c.l.b16 %v413
    %v2978 = vunpack.c.h.b16 %v413
    %v2979 = vunpack.c.l.b16 %v414
    %v2980 = vunpack.c.h.b16 %v414
    %v2981 = vunpack.c.l.b16 %v415
    %v2982 = vunpack.c.h.b16 %v415
    %v2983 = vunpack.c.l.b16 %v416
    %v2984 = vunpack.c.h.b16 %v416
    %v2985 = vunpack.c.l.b16 %v417
    %v2986 = vunpack.c.h.b16 %v417
    %v2987 = vunpack.c.l.b16 %v418
    %v2988 = vunpack.c.h.b16 %v418
    %v2989 = vunpack.c.l.b16 %v419
    %v2990 = vunpack.c.h.b16 %v419
    %v2991 = vunpack.c.l.b16 %v420
    %v2992 = vunpack.c.h.b16 %v420
    %v2993 = vunpack.c.l.b16 %v421
    %v2994 = vunpack.c.h.b16 %v421
    %v2995 = vunpack.c.l.b16 %v422
    %v2996 = vunpack.c.h.b16 %v422
    %v2997 = vunpack.c.l.b16 %v423
    %v2998 = vunpack.c.h.b16 %v423
    %v2999 = vunpack.c.l.b16 %v424
    %v3000 = vunpack.c.h.b16 %v424
    %v3001 = vunpack.c.l.b16 %v425
    %v3002 = vunpack.c.h.b16 %v425
    %v3003 = vunpack.c.l.b16 %v426
    %v3004 = vunpack.c.h.b16 %v426
    %v3005 = vunpack.c.l.b16 %v427
    %v3006 = vunpack.c.h.b16 %v427
    %v3007 = vunpack.c.l.b16 %v428
    %v3008 = vunpack.c.h.b16 %v428
    %v3009 = vunpack.c.l.b16 %v429
    %v3010 = vunpack.c.h.b16 %v429
    %v3011 = vunpack.c.l.b16 %v430
    %v3012 = vunpack.c.h.b16 %v430
    %v3013 = vunpack.c.l.b16 %v431
    %v3014 = vunpack.c.h.b16 %v431
    %v3015 = vunpack.c.l.b16 %v432
    %v3016 = vunpack.c.h.b16 %v432
    %v3017 = vunpack.c.l.b16 %v433
    %v3018 = vunpack.c.h.b16 %v433
    %v3019 = vunpack.c.l.b16 %v434
    %v3020 = vunpack.c.h.b16 %v434
    %v3021 = vunpack.c.l.b16 %v435
    %v3022 = vunpack.c.h.b16 %v435
    %v3023 = vunpack.c.l.b16 %v436
    %v3024 = vunpack.c.h.b16 %v436
    %v3025 = vunpack.c.l.b16 %v437
    %v3026 = vunpack.c.h.b16 %v437
    %v3027 = vunpack.c.l.b16 %v438
    %v3028 = vunpack.c.h.b16 %v438
    %v3029 = vunpack.c.l.b16 %v439
    %v3030 = vunpack.c.h.b16 %v439
    %v3031 = vunpack.c.l.b16 %v440
    %v3032 = vunpack.c.h.b16 %v440
    %v3033 = vunpack.c.l.b16 %v441
    %v3034 = vunpack.c.h.b16 %v441
    %v3035 = vunpack.c.l.b16 %v442
    %v3036 = vunpack.c.h.b16 %v442
    %v3037 = vunpack.c.l.b16 %v443
    %v3038 = vunpack.c.h.b16 %v443
    %v3039 = vunpack.c.l.b16 %v444
    %v3040 = vunpack.c.h.b16 %v444
    %v3041 = vunpack.c.l.b16 %v445
    %v3042 = vunpack.c.h.b16 %v445
    %v3043 = vunpack.c.l.b16 %v446
    %v3044 = vunpack.c.h.b16 %v446
    %v3045 = vunpack.c.l.b16 %v447
    %v3046 = vunpack.c.h.b16 %v447
    %v3047 = vunpack.c.l.b16 %v448
    %v3048 = vunpack.c.h.b16 %v448
    %v3049 = vunpack.c.l.b16 %v449
    %v3050 = vunpack.c.h.b16 %v449
    %v3051 = vunpack.c.l.b16 %v450
    %v3052 = vunpack.c.h.b16 %v450
    %v3053 = vunpack.c.l.b16 %v451
    %v3054 = vunpack.c.h.b16 %v451
    %v3055 = vunpack.c.l.b16 %v452
    %v3056 = vunpack.c.h.b16 %v452
    %v3057 = vunpack.c.l.b16 %v453
    %v3058 = vunpack.c.h.b16 %v453
    %v3059 = vunpack.c.l.b16 %v454
    %v3060 = vunpack.c.h.b16 %v454
    %v3061 = vunpack.c.l.b16 %v455
    %v3062 = vunpack.c.h.b16 %v455
    %v3063 = vunpack.c.l.b16 %v456
    %v3064 = vunpack.c.h.b16 %v456
    %v3065 = vunpack.c.l.b16 %v457
    %v3066 = vunpack.c.h.b16 %v457
    %v3067 = vunpack.c.l.b16 %v458
    %v3068 = vunpack.c.h.b16 %v458
    %v3069 = vunpack.c.l.b16 %v459
    %v3070 = vunpack.c.h.b16 %v459
    %v3071 = vunpack.c.l.b16 %v460
    %v3072 = vunpack.c.h.b16 %v460
    %v3073 = vunpack.c.l.b16 %v461
    %v3074 = vunpack.c.h.b16 %v461
    %v3075 = vunpack.c.l.b16 %v462
    %v3076 = vunpack.c.h.b16 %v462
    %v3077 = vunpack.c.l.b16 %v463
    %v3078 = vunpack.c.h.b16 %v463
    %v3079 = vunpack.c.l.b16 %v464
    %v3080 = vunpack.c.h.b16 %v464
    %v3081 = vunpack.c.l.b16 %v465
    %v3082 = vunpack.c.h.b16 %v465
    %v3083 = vunpack.c.l.b16 %v466
    %v3084 = vunpack.c.h.b16 %v466
    %v3085 = vunpack.c.l.b16 %v467
    %v3086 = vunpack.c.h.b16 %v467
    %v3087 = vunpack.c.l.b16 %v468
    %v3088 = vunpack.c.h.b16 %v468
    %v3089 = vunpack.c.l.b16 %v469
    %v3090 = vunpack.c.h.b16 %v469
    %v3091 = vunpack.c.l.b16 %v470
    %v3092 = vunpack.c.h.b16 %v470
    %v3093 = vunpack.c.l.b16 %v471
    %v3094 = vunpack.c.h.b16 %v471
    %v3095 = vunpack.c.l.b16 %v472
    %v3096 = vunpack.c.h.b16 %v472
    %v3097 = vunpack.c.l.b16 %v473
    %v3098 = vunpack.c.h.b16 %v473
    %v3099 = vunpack.c.l.b16 %v474
    %v3100 = vunpack.c.h.b16 %v474
    %v3101 = vunpack.c.l.b16 %v475
    %v3102 = vunpack.c.h.b16 %v475
    %v3103 = vunpack.c.l.b16 %v476
    %v3104 = vunpack.c.h.b16 %v476
    %v3105 = vunpack.c.l.b16 %v477
    %v3106 = vunpack.c.h.b16 %v477
    %v3107 = vunpack.c.l.b16 %v478
    %v3108 = vunpack.c.h.b16 %v478
    %v3109 = vunpack.c.l.b16 %v479
    %v3110 = vunpack.c.h.b16 %v479
    %v3111 = vunpack.c.l.b16 %v480
    %v3112 = vunpack.c.h.b16 %v480
    %v3113 = vunpack.c.l.b16 %v481
    %v3114 = vunpack.c.h.b16 %v481
    %v3115 = vunpack.c.l.b16 %v482
    %v3116 = vunpack.c.h.b16 %v482
    %v3117 = vunpack.c.l.b16 %v483
    %v3118 = vunpack.c.h.b16 %v483
    %v3119 = vunpack.c.l.b16 %v484
    %v3120 = vunpack.c.h.b16 %v484
    %v3121 = vunpack.c.l.b16 %v485
    %v3122 = vunpack.c.h.b16 %v485
    %v3123 = vunpack.c.l.b16 %v486
    %v3124 = vunpack.c.h.b16 %v486
    %v3125 = vunpack.c.l.b16 %v487
    %v3126 = vunpack.c.h.b16 %v487
    %v3127 = vunpack.c.l.b16 %v488
    %v3128 = vunpack.c.h.b16 %v488
    %v3129 = vunpack.c.l.b16 %v489
    %v3130 = vunpack.c.h.b16 %v489
    %v3131 = vunpack.c.l.b16 %v490
    %v3132 = vunpack.c.h.b16 %v490
    %v3133 = vunpack.c.l.b16 %v491
    %v3134 = vunpack.c.h.b16 %v491
    %v3135 = vunpack.c.l.b16 %v492
    %v3136 = vunpack.c.h.b16 %v492
    %v3137 = vunpack.c.l.b16 %v493
    %v3138 = vunpack.c.h.b16 %v493
    %v3139 = vunpack.c.l.b16 %v494
    %v3140 = vunpack.c.h.b16 %v494
    %v3141 = vunpack.c.l.b16 %v495
    %v3142 = vunpack.c.h.b16 %v495
    %v3143 = vunpack.c.l.b16 %v496
    %v3144 = vunpack.c.h.b16 %v496
    %v3145 = vunpack.c.l.b16 %v497
    %v3146 = vunpack.c.h.b16 %v497
    %v3147 = vunpack.c.l.b16 %v498
    %v3148 = vunpack.c.h.b16 %v498
    %v3149 = vunpack.c.l.b16 %v499
    %v3150 = vunpack.c.h.b16 %v499
    %v3151 = vunpack.c.l.b16 %v500
    %v3152 = vunpack.c.h.b16 %v500
    %v3153 = vunpack.c.l.b16 %v501
    %v3154 = vunpack.c.h.b16 %v501
    %v3155 = vunpack.c.l.b16 %v502
    %v3156 = vunpack.c.h.b16 %v502
    %v3157 = vunpack.c.l.b16 %v503
    %v3158 = vunpack.c.h.b16 %v503
    %v3159 = vunpack.c.l.b16 %v504
    %v3160 = vunpack.c.h.b16 %v504
    %v3161 = vunpack.c.l.b16 %v505
    %v3162 = vunpack.c.h.b16 %v505
    %v3163 = vunpack.c.l.b16 %v506
    %v3164 = vunpack.c.h.b16 %v506
    %v3165 = vunpack.c.l.b16 %v507
    %v3166 = vunpack.c.h.b16 %v507
    %v3167 = vunpack.c.l.b16 %v508
    %v3168 = vunpack.c.h.b16 %v508
    %v3169 = vunpack.c.l.b16 %v509
    %v3170 = vunpack.c.h.b16 %v509
    %v3171 = vunpack.c.l.b16 %v510
    %v3172 = vunpack.c.h.b16 %v510
    %v3173 = vunpack.c.l.b16 %v511
    %v3174 = vunpack.c.h.b16 %v511
    %v3175 = vunpack.c.l.b16 %v512
    %v3176 = vunpack.c.h.b16 %v512
    %v3177 = vunpack.c.l.b16 %v513
    %v3178 = vunpack.c.h.b16 %v513
    %v3179 = vunpack.c.l.b16 %v514
    %v3180 = vunpack.c.h.b16 %v514
    %v3181 = vunpack.c.l.b16 %v515
    %v3182 = vunpack.c.h.b16 %v515
    %v3183 = vunpack.c.l.b16 %v516
    %v3184 = vunpack.c.h.b16 %v516
    %v3185 = vunpack.c.l.b16 %v517
    %v3186 = vunpack.c.h.b16 %v517
    %v3187 = vunpack.c.l.b16 %v518
    %v3188 = vunpack.c.h.b16 %v518
    %v3189 = vunpack.c.l.b16 %v519
    %v3190 = vunpack.c.h.b16 %v519
    %v3191 = vunpack.c.l.b16 %v520
    %v3192 = vunpack.c.h.b16 %v520
    %v3193 = vunpack.c.l.b16 %v521
    %v3194 = vunpack.c.h.b16 %v521
    %v3195 = vunpack.c.l.b16 %v522
    %v3196 = vunpack.c.h.b16 %v522
    %v3197 = vunpack.c.l.b16 %v523
    %v3198 = vunpack.c.h.b16 %v523
    %v3199 = vunpack.c.l.b16 %v524
    %v3200 = vunpack.c.h.b16 %v524
    %v3201 = vunpack.c.l.b16 %v525
    %v3202 = vunpack.c.h.b16 %v525
    %v3203 = vunpack.c.l.b16 %v526
    %v3204 = vunpack.c.h.b16 %v526
    %v3205 = vunpack.c.l.b16 %v527
    %v3206 = vunpack.c.h.b16 %v527
    %v3207 = vunpack.c.l.b16 %v528
    %v3208 = vunpack.c.h.b16 %v528
    %v3209 = vunpack.c.l.b16 %v529
    %v3210 = vunpack.c.h.b16 %v529
    %v3211 = vunpack.c.l.b16 %v530
    %v3212 = vunpack.c.h.b16 %v530
    %v3213 = vunpack.c.l.b16 %v531
    %v3214 = vunpack.c.h.b16 %v531
    %v3215 = vunpack.c.l.b16 %v532
    %v3216 = vunpack.c.h.b16 %v532
    %v3217 = vunpack.c.l.b16 %v533
    %v3218 = vunpack.c.h.b16 %v533
    %v3219 = vunpack.c.l.b16 %v534
    %v3220 = vunpack.c.h.b16 %v534
    %v3221 = vunpack.c.l.b16 %v535
    %v3222 = vunpack.c.h.b16 %v535
    %v3223 = vunpack.c.l.b16 %v536
    %v3224 = vunpack.c.h.b16 %v536
    %v3225 = vunpack.c.l.b16 %v537
    %v3226 = vunpack.c.h.b16 %v537
    %v3227 = vunpack.c.l.b16 %v538
    %v3228 = vunpack.c.h.b16 %v538
    %v3229 = vunpack.c.l.b16 %v539
    %v3230 = vunpack.c.h.b16 %v539
    %v3231 = vunpack.c.l.b16 %v540
    %v3232 = vunpack.c.h.b16 %v540
    %v3233 = vunpack.c.l.b16 %v541
    %v3234 = vunpack.c.h.b16 %v541
    %v3235 = vunpack.c.l.b16 %v542
    %v3236 = vunpack.c.h.b16 %v542
    %v3237 = vunpack.c.l.b16 %v543
    %v3238 = vunpack.c.h.b16 %v543
    %v3239 = vunpack.c.l.b16 %v544
    %v3240 = vunpack.c.h.b16 %v544
    %v3241 = vunpack.c.l.b16 %v545
    %v3242 = vunpack.c.h.b16 %v545
    %v3243 = vunpack.c.l.b16 %v546
    %v3244 = vunpack.c.h.b16 %v546
    %v3245 = vunpack.c.l.b16 %v547
    %v3246 = vunpack.c.h.b16 %v547
    %v3247 = vunpack.c.l.b16 %v548
    %v3248 = vunpack.c.h.b16 %v548
    %v3249 = vunpack.c.l.b16 %v549
    %v3250 = vunpack.c.h.b16 %v549
    %v3251 = vunpack.c.l.b16 %v550
    %v3252 = vunpack.c.h.b16 %v550
    %v3253 = vunpack.c.l.b16 %v551
    %v3254 = vunpack.c.h.b16 %v551
    %v3255 = vunpack.c.l.b16 %v552
    %v3256 = vunpack.c.h.b16 %v552
    %v3257 = vunpack.c.l.b16 %v553
    %v3258 = vunpack.c.h.b16 %v553
    %v3259 = vunpack.c.l.b16 %v554
    %v3260 = vunpack.c.h.b16 %v554
    %v3261 = vunpack.c.l.b16 %v555
    %v3262 = vunpack.c.h.b16 %v555
    %v3263 = vunpack.c.l.b16 %v556
    %v3264 = vunpack.c.h.b16 %v556
    %v3265 = vunpack.c.l.b16 %v557
    %v3266 = vunpack.c.h.b16 %v557
    %v3267 = vunpack.c.l.b16 %v558
    %v3268 = vunpack.c.h.b16 %v558
    %v3269 = vunpack.c.l.b16 %v559
    %v3270 = vunpack.c.h.b16 %v559
    %v3271 = vunpack.c.l.b16 %v560
    %v3272 = vunpack.c.h.b16 %v560
    %v3273 = vunpack.c.l.b16 %v561
    %v3274 = vunpack.c.h.b16 %v561
    %v3275 = vunpack.c.l.b16 %v562
    %v3276 = vunpack.c.h.b16 %v562
    %v3277 = vunpack.c.l.b16 %v563
    %v3278 = vunpack.c.h.b16 %v563
    %v3279 = vunpack.c.l.b16 %v564
    %v3280 = vunpack.c.h.b16 %v564
    %v3281 = vunpack.c.l.b16 %v565
    %v3282 = vunpack.c.h.b16 %v565
    %v3283 = vunpack.c.l.b16 %v566
    %v3284 = vunpack.c.h.b16 %v566
    %v3285 = vunpack.c.l.b16 %v567
    %v3286 = vunpack.c.h.b16 %v567
    %v3287 = vunpack.c.l.b16 %v568
    %v3288 = vunpack.c.h.b16 %v568
    %v3289 = vunpack.c.l.b16 %v569
    %v3290 = vunpack.c.h.b16 %v569
    %v3291 = vunpack.c.l.b16 %v570
    %v3292 = vunpack.c.h.b16 %v570
    %v3293 = vunpack.c.l.b16 %v571
    %v3294 = vunpack.c.h.b16 %v571
    %v3295 = vunpack.c.l.b16 %v572
    %v3296 = vunpack.c.h.b16 %v572
    %v3297 = vunpack.c.l.b16 %v573
    %v3298 = vunpack.c.h.b16 %v573
    %v3299 = vunpack.c.l.b16 %v574
    %v3300 = vunpack.c.h.b16 %v574
    %v3301 = vunpack.c.l.b16 %v575
    %v3302 = vunpack.c.h.b16 %v575
    %v3303 = vunpack.c.l.b16 %v576
    %v3304 = vunpack.c.h.b16 %v576
    %v3305 = vunpack.c.l.b16 %v577
    %v3306 = vunpack.c.h.b16 %v577
    %v3307 = vunpack.c.l.b16 %v578
    %v3308 = vunpack.c.h.b16 %v578
    %v3309 = vunpack.c.l.b16 %v579
    %v3310 = vunpack.c.h.b16 %v579
    %v3311 = vunpack.c.l.b16 %v580
    %v3312 = vunpack.c.h.b16 %v580
    %v3313 = vunpack.c.l.b16 %v581
    %v3314 = vunpack.c.h.b16 %v581
    %v3315 = vunpack.c.l.b16 %v582
    %v3316 = vunpack.c.h.b16 %v582
    %v3317 = vunpack.c.l.b16 %v583
    %v3318 = vunpack.c.h.b16 %v583
    %v3319 = vunpack.c.l.b16 %v584
    %v3320 = vunpack.c.h.b16 %v584
    %v3321 = vunpack.c.l.b16 %v585
    %v3322 = vunpack.c.h.b16 %v585
    %v3323 = vunpack.c.l.b16 %v586
    %v3324 = vunpack.c.h.b16 %v586
    %v3325 = vunpack.c.l.b16 %v587
    %v3326 = vunpack.c.h.b16 %v587
    %v3327 = vunpack.c.l.b16 %v588
    %v3328 = vunpack.c.h.b16 %v588
    %v3329 = vunpack.c.l.b16 %v589
    %v3330 = vunpack.c.h.b16 %v589
    %v3331 = vunpack.c.l.b16 %v590
    %v3332 = vunpack.c.h.b16 %v590
    %v3333 = vunpack.c.l.b16 %v591
    %v3334 = vunpack.c.h.b16 %v591
    %v3335 = vunpack.c.l.b16 %v592
    %v3336 = vunpack.c.h.b16 %v592
    %v3337 = vunpack.c.l.b16 %v593
    %v3338 = vunpack.c.h.b16 %v593
    %v3339 = vunpack.c.l.b16 %v594
    %v3340 = vunpack.c.h.b16 %v594
    %v3341 = vunpack.c.l.b16 %v595
    %v3342 = vunpack.c.h.b16 %v595
    %v3343 = vunpack.c.l.b16 %v596
    %v3344 = vunpack.c.h.b16 %v596
    %v3345 = vunpack.c.l.b16 %v597
    %v3346 = vunpack.c.h.b16 %v597
    %v3347 = vunpack.c.l.b16 %v598
    %v3348 = vunpack.c.h.b16 %v598
    %v3349 = vunpack.c.l.b16 %v599
    %v3350 = vunpack.c.h.b16 %v599
    %v3351 = vunpack.c.l.b16 %v600
    %v3352 = vunpack.c.h.b16 %v600
    %v3353 = vunpack.c.l.b16 %v601
    %v3354 = vunpack.c.h.b16 %v601
    %v3355 = vunpack.c.l.b16 %v602
    %v3356 = vunpack.c.h.b16 %v602
    %v3357 = vunpack.c.l.b16 %v603
    %v3358 = vunpack.c.h.b16 %v603
    %v3359 = vunpack.c.l.b16 %v604
    %v3360 = vunpack.c.h.b16 %v604
    %v3361 = vunpack.c.l.b16 %v605
    %v3362 = vunpack.c.h.b16 %v605
    %v3363 = vunpack.c.l.b16 %v606
    %v3364 = vunpack.c.h.b16 %v606
    %v3365 = vunpack.c.l.b16 %v607
    %v3366 = vunpack.c.h.b16 %v607
    %v3367 = vunpack.c.l.b16 %v608
    %v3368 = vunpack.c.h.b16 %v608
    %v3369 = vunpack.c.l.b16 %v609
    %v3370 = vunpack.c.h.b16 %v609
    %v3371 = vunpack.c.l.b16 %v610
    %v3372 = vunpack.c.h.b16 %v610
    %v3373 = vunpack.c.l.b16 %v611
    %v3374 = vunpack.c.h.b16 %v611
    %v3375 = vunpack.c.l.b16 %v612
    %v3376 = vunpack.c.h.b16 %v612
    %v3377 = vunpack.c.l.b16 %v613
    %v3378 = vunpack.c.h.b16 %v613
    %v3379 = vunpack.c.l.b16 %v614
    %v3380 = vunpack.c.h.b16 %v614
    %v3381 = vunpack.c.l.b16 %v615
    %v3382 = vunpack.c.h.b16 %v615
    %v3383 = vunpack.c.l.b16 %v616
    %v3384 = vunpack.c.h.b16 %v616
    %v3385 = vunpack.c.l.b16 %v617
    %v3386 = vunpack.c.h.b16 %v617
    %v3387 = vunpack.c.l.b16 %v618
    %v3388 = vunpack.c.h.b16 %v618
    %v3389 = vunpack.c.l.b16 %v619
    %v3390 = vunpack.c.h.b16 %v619
    %v3391 = vunpack.c.l.b16 %v620
    %v3392 = vunpack.c.h.b16 %v620
    %v3393 = vunpack.c.l.b16 %v621
    %v3394 = vunpack.c.h.b16 %v621
    %v3395 = vunpack.c.l.b16 %v622
    %v3396 = vunpack.c.h.b16 %v622
    %v3397 = vunpack.c.l.b16 %v623
    %v3398 = vunpack.c.h.b16 %v623
    %v3399 = vunpack.c.l.b16 %v624
    %v3400 = vunpack.c.h.b16 %v624
    %v3401 = vunpack.c.l.b16 %v625
    %v3402 = vunpack.c.h.b16 %v625
    %v3403 = vunpack.c.l.b16 %v626
    %v3404 = vunpack.c.h.b16 %v626
    %v3405 = vunpack.c.l.b16 %v627
    %v3406 = vunpack.c.h.b16 %v627
    %v3407 = vunpack.c.l.b16 %v628
    %v3408 = vunpack.c.h.b16 %v628
    %v3409 = vunpack.c.l.b16 %v629
    %v3410 = vunpack.c.h.b16 %v629
    %v3411 = vunpack.c.l.b16 %v630
    %v3412 = vunpack.c.h.b16 %v630
    %v3413 = vunpack.c.l.b16 %v631
    %v3414 = vunpack.c.h.b16 %v631
    %v3415 = vunpack.c.l.b16 %v632
    %v3416 = vunpack.c.h.b16 %v632
    %v3417 = vunpack.c.l.b16 %v633
    %v3418 = vunpack.c.h.b16 %v633
    %v3419 = vunpack.c.l.b16 %v634
    %v3420 = vunpack.c.h.b16 %v634
    %v3421 = vunpack.c.l.b16 %v635
    %v3422 = vunpack.c.h.b16 %v635
    %v3423 = vunpack.c.l.b16 %v636
    %v3424 = vunpack.c.h.b16 %v636
    %v3425 = vunpack.c.l.b16 %v637
    %v3426 = vunpack.c.h.b16 %v637
    %v3427 = vunpack.c.l.b16 %v638
    %v3428 = vunpack.c.h.b16 %v638
    %v3429 = vunpack.c.l.b16 %v639
    %v3430 = vunpack.c.h.b16 %v639
    %v3431 = vunpack.c.l.b16 %v640
    %v3432 = vunpack.c.h.b16 %v640
    %v3433 = vunpack.c.l.b16 %v641
    %v3434 = vunpack.c.h.b16 %v641
    %v3435 = vunpack.c.l.b16 %v642
    %v3436 = vunpack.c.h.b16 %v642
    %v3437 = vunpack.c.l.b16 %v643
    %v3438 = vunpack.c.h.b16 %v643
    %v3439 = vunpack.c.l.b16 %v644
    %v3440 = vunpack.c.h.b16 %v644
    %v3441 = vunpack.c.l.b16 %v645
    %v3442 = vunpack.c.h.b16 %v645
    %v3443 = vunpack.c.l.b16 %v646
    %v3444 = vunpack.c.h.b16 %v646
    %v3445 = vunpack.c.l.b16 %v647
    %v3446 = vunpack.c.h.b16 %v647
    %v3447 = vunpack.c.l.b16 %v648
    %v3448 = vunpack.c.h.b16 %v648
    %v3449 = vunpack.c.l.b16 %v649
    %v3450 = vunpack.c.h.b16 %v649
    %v3451 = vunpack.c.l.b16 %v650
    %v3452 = vunpack.c.h.b16 %v650
    %v3453 = vunpack.c.l.b16 %v651
    %v3454 = vunpack.c.h.b16 %v651
    %v3455 = vunpack.c.l.b16 %v652
    %v3456 = vunpack.c.h.b16 %v652
    %v3457 = vunpack.c.l.b16 %v653
    %v3458 = vunpack.c.h.b16 %v653
    %v3459 = vunpack.c.l.b16 %v654
    %v3460 = vunpack.c.h.b16 %v654
    %v3461 = vunpack.c.l.b16 %v655
    %v3462 = vunpack.c.h.b16 %v655
    %v3463 = vunpack.c.l.b16 %v656
    %v3464 = vunpack.c.h.b16 %v656
    %v3465 = vunpack.c.l.b16 %v657
    %v3466 = vunpack.c.h.b16 %v657
    %v3467 = vunpack.c.l.b16 %v658
    %v3468 = vunpack.c.h.b16 %v658
    %v3469 = vunpack.c.l.b16 %v659
    %v3470 = vunpack.c.h.b16 %v659
    %v3471 = vunpack.c.l.b16 %v660
    %v3472 = vunpack.c.h.b16 %v660
    %v3473 = vunpack.c.l.b16 %v661
    %v3474 = vunpack.c.h.b16 %v661
    %v3475 = vunpack.c.l.b16 %v662
    %v3476 = vunpack.c.h.b16 %v662
    %v3477 = vunpack.c.l.b16 %v663
    %v3478 = vunpack.c.h.b16 %v663
    %v3479 = vunpack.c.l.b16 %v664
    %v3480 = vunpack.c.h.b16 %v664
    %v3481 = vunpack.c.l.b16 %v665
    %v3482 = vunpack.c.h.b16 %v665
    %v3483 = vunpack.c.l.b16 %v666
    %v3484 = vunpack.c.h.b16 %v666
    %v3485 = vunpack.c.l.b16 %v667
    %v3486 = vunpack.c.h.b16 %v667
    %v3487 = vunpack.c.l.b16 %v668
    %v3488 = vunpack.c.h.b16 %v668
    %v3489 = vunpack.c.l.b16 %v669
    %v3490 = vunpack.c.h.b16 %v669
    %v3491 = vunpack.c.l.b16 %v670
    %v3492 = vunpack.c.h.b16 %v670
    %v3493 = vunpack.c.l.b16 %v671
    %v3494 = vunpack.c.h.b16 %v671
    %v3495 = vunpack.c.l.b16 %v672
    %v3496 = vunpack.c.h.b16 %v672
    %v3497 = vunpack.c.l.b16 %v673
    %v3498 = vunpack.c.h.b16 %v673
    %v3499 = vunpack.c.l.b16 %v674
    %v3500 = vunpack.c.h.b16 %v674
    %v3501 = vunpack.c.l.b16 %v675
    %v3502 = vunpack.c.h.b16 %v675
    %v3503 = vunpack.c.l.b16 %v676
    %v3504 = vunpack.c.h.b16 %v676
    %v3505 = vunpack.c.l.b16 %v677
    %v3506 = vunpack.c.h.b16 %v677
    %v3507 = vunpack.c.l.b16 %v678
    %v3508 = vunpack.c.h.b16 %v678
    %v3509 = vunpack.c.l.b16 %v679
    %v3510 = vunpack.c.h.b16 %v679
    %v3511 = vunpack.c.l.b16 %v680
    %v3512 = vunpack.c.h.b16 %v680
    %v3513 = vunpack.c.l.b16 %v681
    %v3514 = vunpack.c.h.b16 %v681
    %v3515 = vunpack.c.l.b16 %v682
    %v3516 = vunpack.c.h.b16 %v682
    %v3517 = vunpack.c.l.b16 %v683
    %v3518 = vunpack.c.h.b16 %v683
    %v3519 = vunpack.c.l.b16 %v684
    %v3520 = vunpack.c.h.b16 %v684
    %v3521 = vunpack.c.l.b16 %v685
    %v3522 = vunpack.c.h.b16 %v685
    %v3523 = vunpack.c.l.b16 %v686
    %v3524 = vunpack.c.h.b16 %v686
    %v3525 = vunpack.c.l.b16 %v687
    %v3526 = vunpack.c.h.b16 %v687
    %v3527 = vunpack.c.l.b16 %v688
    %v3528 = vunpack.c.h.b16 %v688
    %v3529 = vunpack.c.l.b16 %v689
    %v3530 = vunpack.c.h.b16 %v689
    %v3531 = vunpack.c.l.b16 %v690
    %v3532 = vunpack.c.h.b16 %v690
    %v3533 = vunpack.c.l.b16 %v691
    %v3534 = vunpack.c.h.b16 %v691
    %v3535 = vunpack.c.l.b16 %v692
    %v3536 = vunpack.c.h.b16 %v692
    %v3537 = vunpack.c.l.b16 %v693
    %v3538 = vunpack.c.h.b16 %v693
    %v3539 = vunpack.c.l.b16 %v694
    %v3540 = vunpack.c.h.b16 %v694
    %v3541 = vunpack.c.l.b16 %v695
    %v3542 = vunpack.c.h.b16 %v695
    %v3543 = vunpack.c.l.b16 %v696
    %v3544 = vunpack.c.h.b16 %v696
    %v3545 = vunpack.c.l.b16 %v697
    %v3546 = vunpack.c.h.b16 %v697
    %v3547 = vunpack.c.l.b16 %v698
    %v3548 = vunpack.c.h.b16 %v698
    %v3549 = vunpack.c.l.b16 %v699
    %v3550 = vunpack.c.h.b16 %v699
    %v3551 = vunpack.c.l.b16 %v700
    %v3552 = vunpack.c.h.b16 %v700
    %v3553 = vunpack.c.l.b16 %v701
    %v3554 = vunpack.c.h.b16 %v701
    %v3555 = vunpack.c.l.b16 %v702
    %v3556 = vunpack.c.h.b16 %v702
    %v3557 = vunpack.c.l.b16 %v703
    %v3558 = vunpack.c.h.b16 %v703
    %v3559 = vunpack.c.l.b16 %v704
    %v3560 = vunpack.c.h.b16 %v704
    %v3561 = vunpack.c.l.b16 %v705
    %v3562 = vunpack.c.h.b16 %v705
    %v3563 = vunpack.c.l.b16 %v706
    %v3564 = vunpack.c.h.b16 %v706
    %v3565 = vunpack.c.l.b16 %v707
    %v3566 = vunpack.c.h.b16 %v707
    %v3567 = vunpack.c.l.b16 %v708
    %v3568 = vunpack.c.h.b16 %v708
    %v3569 = vunpack.c.l.b16 %v709
    %v3570 = vunpack.c.h.b16 %v709
    %v3571 = vunpack.c.l.b16 %v710
    %v3572 = vunpack.c.h.b16 %v710
    %v3573 = vunpack.c.l.b16 %v711
    %v3574 = vunpack.c.h.b16 %v711
    %v3575 = vunpack.c.l.b16 %v712
    %v3576 = vunpack.c.h.b16 %v712
    %v3577 = vunpack.c.l.b16 %v713
    %v3578 = vunpack.c.h.b16 %v713
    %v3579 = vunpack.c.l.b16 %v714
    %v3580 = vunpack.c.h.b16 %v714
    %v3581 = vunpack.c.l.b16 %v715
    %v3582 = vunpack.c.h.b16 %v715
    %v3583 = vunpack.c.l.b16 %v716
    %v3584 = vunpack.c.h.b16 %v716
    %v3585 = vunpack.c.l.b16 %v717
    %v3586 = vunpack.c.h.b16 %v717
    %v3587 = vunpack.c.l.b16 %v718
    %v3588 = vunpack.c.h.b16 %v718
    %v3589 = vunpack.c.l.b16 %v719
    %v3590 = vunpack.c.h.b16 %v719
    %v3591 = vunpack.c.l.b16 %v720
    %v3592 = vunpack.c.h.b16 %v720
    %v3593 = vunpack.c.l.b16 %v721
    %v3594 = vunpack.c.h.b16 %v721
    %v3595 = vunpack.c.l.b16 %v722
    %v3596 = vunpack.c.h.b16 %v722
    %v3597 = vunpack.c.l.b16 %v723
    %v3598 = vunpack.c.h.b16 %v723
    %v3599 = vunpack.c.l.b16 %v724
    %v3600 = vunpack.c.h.b16 %v724
    %v3601 = vunpack.c.l.b16 %v725
    %v3602 = vunpack.c.h.b16 %v725
    %v3603 = vunpack.c.l.b16 %v726
    %v3604 = vunpack.c.h.b16 %v726
    %v3605 = vunpack.c.l.b16 %v727
    %v3606 = vunpack.c.h.b16 %v727
    %v3607 = vunpack.c.l.b16 %v728
    %v3608 = vunpack.c.h.b16 %v728
    %v3609 = vunpack.c.l.b16 %v729
    %v3610 = vunpack.c.h.b16 %v729
    %v3611 = vunpack.c.l.b16 %v730
    %v3612 = vunpack.c.h.b16 %v730
    %v3613 = vunpack.c.l.b16 %v731
    %v3614 = vunpack.c.h.b16 %v731
    %v3615 = vunpack.c.l.b16 %v732
    %v3616 = vunpack.c.h.b16 %v732
    %v3617 = vunpack.c.l.b16 %v733
    %v3618 = vunpack.c.h.b16 %v733
    %v3619 = vunpack.c.l.b16 %v734
    %v3620 = vunpack.c.h.b16 %v734
    %v3621 = vunpack.c.l.b16 %v735
    %v3622 = vunpack.c.h.b16 %v735
    %v3623 = vunpack.c.l.b16 %v736
    %v3624 = vunpack.c.h.b16 %v736
    %v3625 = vunpack.c.l.b16 %v737
    %v3626 = vunpack.c.h.b16 %v737
    %v3627 = vunpack.c.l.b16 %v738
    %v3628 = vunpack.c.h.b16 %v738
    %v3629 = vunpack.c.l.b16 %v739
    %v3630 = vunpack.c.h.b16 %v739
    %v3631 = vunpack.c.l.b16 %v740
    %v3632 = vunpack.c.h.b16 %v740
    %v3633 = vunpack.c.l.b16 %v741
    %v3634 = vunpack.c.h.b16 %v741
    %v3635 = vunpack.c.l.b16 %v742
    %v3636 = vunpack.c.h.b16 %v742
    %v3637 = vunpack.c.l.b16 %v743
    %v3638 = vunpack.c.h.b16 %v743
    %v3639 = vunpack.c.l.b16 %v744
    %v3640 = vunpack.c.h.b16 %v744
    %v3641 = vunpack.c.l.b16 %v745
    %v3642 = vunpack.c.h.b16 %v745
    %v3643 = vunpack.c.l.b16 %v746
    %v3644 = vunpack.c.h.b16 %v746
    %v3645 = vunpack.c.l.b16 %v747
    %v3646 = vunpack.c.h.b16 %v747
    %v3647 = vunpack.c.l.b16 %v748
    %v3648 = vunpack.c.h.b16 %v748
    %v3649 = vunpack.c.l.b16 %v749
    %v3650 = vunpack.c.h.b16 %v749
    %v3651 = vunpack.c.l.b16 %v750
    %v3652 = vunpack.c.h.b16 %v750
    %v3653 = vunpack.c.l.b16 %v751
    %v3654 = vunpack.c.h.b16 %v751
    %v3655 = vunpack.c.l.b16 %v752
    %v3656 = vunpack.c.h.b16 %v752
    %v3657 = vunpack.c.l.b16 %v753
    %v3658 = vunpack.c.h.b16 %v753
    %v3659 = vunpack.c.l.b16 %v754
    %v3660 = vunpack.c.h.b16 %v754
    %v3661 = vunpack.c.l.b16 %v755
    %v3662 = vunpack.c.h.b16 %v755
    %v3663 = vunpack.c.l.b16 %v756
    %v3664 = vunpack.c.h.b16 %v756
    %v3665 = vunpack.c.l.b16 %v757
    %v3666 = vunpack.c.h.b16 %v757
    %v3667 = vunpack.c.l.b16 %v758
    %v3668 = vunpack.c.h.b16 %v758
    %v3669 = vunpack.c.l.b16 %v759
    %v3670 = vunpack.c.h.b16 %v759
    %v3671 = vunpack.c.l.b16 %v760
    %v3672 = vunpack.c.h.b16 %v760
    %v3673 = vunpack.c.l.b16 %v761
    %v3674 = vunpack.c.h.b16 %v761
    %v3675 = vunpack.c.l.b16 %v762
    %v3676 = vunpack.c.h.b16 %v762
    %v3677 = vunpack.c.l.b16 %v763
    %v3678 = vunpack.c.h.b16 %v763
    %v3679 = vunpack.c.l.b16 %v764
    %v3680 = vunpack.c.h.b16 %v764
    %v3681 = vunpack.c.l.b16 %v765
    %v3682 = vunpack.c.h.b16 %v765
    %v3683 = vunpack.c.l.b16 %v766
    %v3684 = vunpack.c.h.b16 %v766
    %v3685 = vunpack.c.l.b16 %v767
    %v3686 = vunpack.c.h.b16 %v767
    %v3687 = vunpack.c.l.b16 %v768
    %v3688 = vunpack.c.h.b16 %v768
    %v3689 = vunpack.c.l.b16 %v769
    %v3690 = vunpack.c.h.b16 %v769
    %v3691 = vunpack.c.l.b16 %v770
    %v3692 = vunpack.c.h.b16 %v770
    %v3693 = vunpack.c.l.b16 %v771
    %v3694 = vunpack.c.h.b16 %v771
    %v3695 = vunpack.c.l.b16 %v772
    %v3696 = vunpack.c.h.b16 %v772
    %v3697 = vunpack.c.l.b16 %v773
    %v3698 = vunpack.c.h.b16 %v773
    %v3699 = vunpack.c.l.b16 %v774
    %v3700 = vunpack.c.h.b16 %v774
    %v3701 = vunpack.c.l.b16 %v775
    %v3702 = vunpack.c.h.b16 %v775
    %v3703 = vunpack.c.l.b16 %v776
    %v3704 = vunpack.c.h.b16 %v776
    %v3705 = vunpack.c.l.b16 %v777
    %v3706 = vunpack.c.h.b16 %v777
    %v3707 = vunpack.c.l.b16 %v778
    %v3708 = vunpack.c.h.b16 %v778
    %v3709 = vunpack.c.l.b16 %v779
    %v3710 = vunpack.c.h.b16 %v779
    %v3711 = vunpack.c.l.b16 %v780
    %v3712 = vunpack.c.h.b16 %v780
    %v3713 = vunpack.c.l.b16 %v781
    %v3714 = vunpack.c.h.b16 %v781
    %v3715 = vunpack.c.l.b16 %v782
    %v3716 = vunpack.c.h.b16 %v782
    %v3717 = vunpack.c.l.b16 %v783
    %v3718 = vunpack.c.h.b16 %v783
    %v3719 = vunpack.c.l.b16 %v784
    %v3720 = vunpack.c.h.b16 %v784
    %v3721 = vunpack.c.l.b16 %v785
    %v3722 = vunpack.c.h.b16 %v785
    %v3723 = vunpack.c.l.b16 %v786
    %v3724 = vunpack.c.h.b16 %v786
    %v3725 = vunpack.c.l.b16 %v787
    %v3726 = vunpack.c.h.b16 %v787
    %v3727 = vunpack.c.l.b16 %v788
    %v3728 = vunpack.c.h.b16 %v788
    %v3729 = vunpack.c.l.b16 %v789
    %v3730 = vunpack.c.h.b16 %v789
    %v3731 = vunpack.c.l.b16 %v790
    %v3732 = vunpack.c.h.b16 %v790
    %v3733 = vunpack.c.l.b16 %v791
    %v3734 = vunpack.c.h.b16 %v791
    %v3735 = vunpack.c.l.b16 %v792
    %v3736 = vunpack.c.h.b16 %v792
    %v3737 = vunpack.c.l.b16 %v793
    %v3738 = vunpack.c.h.b16 %v793
    %v3739 = vunpack.c.l.b16 %v794
    %v3740 = vunpack.c.h.b16 %v794
    %v3741 = vunpack.c.l.b16 %v795
    %v3742 = vunpack.c.h.b16 %v795
    %v3743 = vunpack.c.l.b16 %v796
    %v3744 = vunpack.c.h.b16 %v796
    %v3745 = vunpack.c.l.b16 %v797
    %v3746 = vunpack.c.h.b16 %v797
    %v3747 = vunpack.c.l.b16 %v798
    %v3748 = vunpack.c.h.b16 %v798
    %v3749 = vunpack.c.l.b16 %v799
    %v3750 = vunpack.c.h.b16 %v799
    %v3751 = vunpack.c.l.b16 %v800
    %v3752 = vunpack.c.h.b16 %v800
    %v3753 = vunpack.c.l.b16 %v801
    %v3754 = vunpack.c.h.b16 %v801
    %v3755 = vunpack.c.l.b16 %v802
    %v3756 = vunpack.c.h.b16 %v802
    %v3757 = vunpack.c.l.b16 %v803
    %v3758 = vunpack.c.h.b16 %v803
    %v3759 = vunpack.c.l.b16 %v804
    %v3760 = vunpack.c.h.b16 %v804
    %v3761 = vunpack.c.l.b16 %v805
    %v3762 = vunpack.c.h.b16 %v805
    %v3763 = vunpack.c.l.b16 %v806
    %v3764 = vunpack.c.h.b16 %v806
    %v3765 = vunpack.c.l.b16 %v807
    %v3766 = vunpack.c.h.b16 %v807
    %v3767 = vunpack.c.l.b16 %v808
    %v3768 = vunpack.c.h.b16 %v808
    %v3769 = vunpack.c.l.b16 %v809
    %v3770 = vunpack.c.h.b16 %v809
    %v3771 = vunpack.c.l.b16 %v810
    %v3772 = vunpack.c.h.b16 %v810
    %v3773 = vunpack.c.l.b16 %v811
    %v3774 = vunpack.c.h.b16 %v811
    %v3775 = vunpack.c.l.b16 %v812
    %v3776 = vunpack.c.h.b16 %v812
    %v3777 = vunpack.c.l.b16 %v813
    %v3778 = vunpack.c.h.b16 %v813
    %v3779 = vunpack.c.l.b16 %v814
    %v3780 = vunpack.c.h.b16 %v814
    %v3781 = vunpack.c.l.b16 %v815
    %v3782 = vunpack.c.h.b16 %v815
    %v3783 = vunpack.c.l.b16 %v816
    %v3784 = vunpack.c.h.b16 %v816
    %v3785 = vunpack.c.l.b16 %v817
    %v3786 = vunpack.c.h.b16 %v817
    %v3787 = vunpack.c.l.b16 %v818
    %v3788 = vunpack.c.h.b16 %v818
    %v3789 = vunpack.c.l.b16 %v819
    %v3790 = vunpack.c.h.b16 %v819
    %v3791 = vunpack.c.l.b16 %v820
    %v3792 = vunpack.c.h.b16 %v820
    %v3793 = vunpack.c.l.b16 %v821
    %v3794 = vunpack.c.h.b16 %v821
    %v3795 = vunpack.c.l.b16 %v822
    %v3796 = vunpack.c.h.b16 %v822
    %v3797 = vunpack.c.l.b16 %v823
    %v3798 = vunpack.c.h.b16 %v823
    %v3799 = vunpack.c.l.b16 %v824
    %v3800 = vunpack.c.h.b16 %v824
    %v3801 = vunpack.c.l.b16 %v825
    %v3802 = vunpack.c.h.b16 %v825
    %v3803 = vunpack.c.l.b16 %v826
    %v3804 = vunpack.c.h.b16 %v826
    %v3805 = vunpack.c.l.b16 %v827
    %v3806 = vunpack.c.h.b16 %v827
    %v3807 = vunpack.c.l.b16 %v828
    %v3808 = vunpack.c.h.b16 %v828
    %v3809 = vunpack.c.l.b16 %v829
    %v3810 = vunpack.c.h.b16 %v829
    %v3811 = vunpack.c.l.b16 %v830
    %v3812 = vunpack.c.h.b16 %v830
    %v3813 = vunpack.c.l.b16 %v831
    %v3814 = vunpack.c.h.b16 %v831
    %v3815 = vunpack.c.l.b16 %v832
    %v3816 = vunpack.c.h.b16 %v832
    %v3817 = vunpack.c.l.b16 %v833
    %v3818 = vunpack.c.h.b16 %v833
    %v3819 = vunpack.c.l.b16 %v834
    %v3820 = vunpack.c.h.b16 %v834
    %v3821 = vunpack.c.l.b16 %v835
    %v3822 = vunpack.c.h.b16 %v835
    %v3823 = vunpack.c.l.b16 %v836
    %v3824 = vunpack.c.h.b16 %v836
    %v3825 = vunpack.c.l.b16 %v837
    %v3826 = vunpack.c.h.b16 %v837
    %v3827 = vunpack.c.l.b16 %v838
    %v3828 = vunpack.c.h.b16 %v838
    %v3829 = vunpack.c.l.b16 %v839
    %v3830 = vunpack.c.h.b16 %v839
    %v3831 = vunpack.c.l.b16 %v840
    %v3832 = vunpack.c.h.b16 %v840
    %v3833 = vunpack.c.l.b16 %v841
    %v3834 = vunpack.c.h.b16 %v841
    %v3835 = vunpack.c.l.b16 %v842
    %v3836 = vunpack.c.h.b16 %v842
    %v3837 = vunpack.c.l.b16 %v843
    %v3838 = vunpack.c.h.b16 %v843
    %v3839 = vunpack.c.l.b16 %v844
    %v3840 = vunpack.c.h.b16 %v844
    %v3841 = vunpack.c.l.b16 %v845
    %v3842 = vunpack.c.h.b16 %v845
    %v3843 = vunpack.c.l.b16 %v846
    %v3844 = vunpack.c.h.b16 %v846
    %v3845 = vunpack.c.l.b16 %v847
    %v3846 = vunpack.c.h.b16 %v847
    %v3847 = vunpack.c.l.b16 %v848
    %v3848 = vunpack.c.h.b16 %v848
    %v3849 = vunpack.c.l.b16 %v849
    %v3850 = vunpack.c.h.b16 %v849
    %v3851 = vunpack.c.l.b16 %v850
    %v3852 = vunpack.c.h.b16 %v850
    %v3853 = vunpack.c.l.b16 %v851
    %v3854 = vunpack.c.h.b16 %v851
    %v3855 = vunpack.c.l.b16 %v852
    %v3856 = vunpack.c.h.b16 %v852
    %v3857 = vunpack.c.l.b16 %v853
    %v3858 = vunpack.c.h.b16 %v853
    %v3859 = vunpack.c.l.b16 %v854
    %v3860 = vunpack.c.h.b16 %v854
    %v3861 = vunpack.c.l.b16 %v855
    %v3862 = vunpack.c.h.b16 %v855
    %v3863 = vunpack.c.l.b16 %v856
    %v3864 = vunpack.c.h.b16 %v856
    %v3865 = vunpack.c.l.b16 %v857
    %v3866 = vunpack.c.h.b16 %v857
    %v3867 = vunpack.c.l.b16 %v858
    %v3868 = vunpack.c.h.b16 %v858
    %v3869 = vunpack.c.l.b16 %v859
    %v3870 = vunpack.c.h.b16 %v859
    %v3871 = vunpack.c.l.b16 %v860
    %v3872 = vunpack.c.h.b16 %v860
    %v3873 = vunpack.c.l.b16 %v861
    %v3874 = vunpack.c.h.b16 %v861
    %v3875 = vunpack.c.l.b16 %v862
    %v3876 = vunpack.c.h.b16 %v862
    %v3877 = vunpack.c.l.b16 %v863
    %v3878 = vunpack.c.h.b16 %v863
    %v3879 = vunpack.c.l.b16 %v864
    %v3880 = vunpack.c.h.b16 %v864
    %v3881 = vunpack.c.l.b16 %v865
    %v3882 = vunpack.c.h.b16 %v865
    %v3883 = vunpack.c.l.b16 %v866
    %v3884 = vunpack.c.h.b16 %v866
    %v3885 = vunpack.c.l.b16 %v867
    %v3886 = vunpack.c.h.b16 %v867
    %v3887 = vunpack.c.l.b16 %v868
    %v3888 = vunpack.c.h.b16 %v868
    %v3889 = vunpack.c.l.b16 %v869
    %v3890 = vunpack.c.h.b16 %v869
    %v3891 = vunpack.c.l.b16 %v870
    %v3892 = vunpack.c.h.b16 %v870
    %v3893 = vunpack.c.l.b16 %v871
    %v3894 = vunpack.c.h.b16 %v871
    %v3895 = vunpack.c.l.b16 %v872
    %v3896 = vunpack.c.h.b16 %v872
    %v3897 = vunpack.c.l.b16 %v873
    %v3898 = vunpack.c.h.b16 %v873
    %v3899 = vunpack.c.l.b16 %v874
    %v3900 = vunpack.c.h.b16 %v874
    %v3901 = vunpack.c.l.b16 %v875
    %v3902 = vunpack.c.h.b16 %v875
    %v3903 = vunpack.c.l.b16 %v876
    %v3904 = vunpack.c.h.b16 %v876
    %v3905 = vunpack.c.l.b16 %v877
    %v3906 = vunpack.c.h.b16 %v877
    %v3907 = vunpack.c.l.b16 %v878
    %v3908 = vunpack.c.h.b16 %v878
    %v3909 = vunpack.c.l.b16 %v879
    %v3910 = vunpack.c.h.b16 %v879
    %v3911 = vunpack.c.l.b16 %v880
    %v3912 = vunpack.c.h.b16 %v880
    %v3913 = vunpack.c.l.b16 %v881
    %v3914 = vunpack.c.h.b16 %v881
    %v3915 = vunpack.c.l.b16 %v882
    %v3916 = vunpack.c.h.b16 %v882
    %v3917 = vunpack.c.l.b16 %v883
    %v3918 = vunpack.c.h.b16 %v883
    %v3919 = vunpack.c.l.b16 %v884
    %v3920 = vunpack.c.h.b16 %v884
    %v3921 = vunpack.c.l.b16 %v885
    %v3922 = vunpack.c.h.b16 %v885
    %v3923 = vunpack.c.l.b16 %v886
    %v3924 = vunpack.c.h.b16 %v886
    %v3925 = vunpack.c.l.b16 %v887
    %v3926 = vunpack.c.h.b16 %v887
    %v3927 = vunpack.c.l.b16 %v888
    %v3928 = vunpack.c.h.b16 %v888
    %v3929 = vunpack.c.l.b16 %v889
    %v3930 = vunpack.c.h.b16 %v889
    %v3931 = vunpack.c.l.b16 %v890
    %v3932 = vunpack.c.h.b16 %v890
    %v3933 = vunpack.c.l.b16 %v891
    %v3934 = vunpack.c.h.b16 %v891
    %v3935 = vunpack.c.l.b16 %v892
    %v3936 = vunpack.c.h.b16 %v892
    %v3937 = vunpack.c.l.b16 %v893
    %v3938 = vunpack.c.h.b16 %v893
    %v3939 = vunpack.c.l.b16 %v894
    %v3940 = vunpack.c.h.b16 %v894
    %v3941 = vunpack.c.l.b16 %v895
    %v3942 = vunpack.c.h.b16 %v895
    %v3943 = vunpack.c.l.b16 %v896
    %v3944 = vunpack.c.h.b16 %v896
    %v3945 = vunpack.c.l.b16 %v897
    %v3946 = vunpack.c.h.b16 %v897
    %v3947 = vunpack.c.l.b16 %v898
    %v3948 = vunpack.c.h.b16 %v898
    %v3949 = vunpack.c.l.b16 %v899
    %v3950 = vunpack.c.h.b16 %v899
    %v3951 = vunpack.c.l.b16 %v900
    %v3952 = vunpack.c.h.b16 %v900
    %v3953 = vunpack.c.l.b16 %v901
    %v3954 = vunpack.c.h.b16 %v901
    %v3955 = vunpack.c.l.b16 %v902
    %v3956 = vunpack.c.h.b16 %v902
    %v3957 = vunpack.c.l.b16 %v903
    %v3958 = vunpack.c.h.b16 %v903
    %v3959 = vunpack.c.l.b16 %v904
    %v3960 = vunpack.c.h.b16 %v904
    %v3961 = vunpack.c.l.b16 %v905
    %v3962 = vunpack.c.h.b16 %v905
    %v3963 = vunpack.c.l.b16 %v906
    %v3964 = vunpack.c.h.b16 %v906
    %v3965 = vunpack.c.l.b16 %v907
    %v3966 = vunpack.c.h.b16 %v907
    %v3967 = vunpack.c.l.b16 %v908
    %v3968 = vunpack.c.h.b16 %v908
    %v3969 = vunpack.c.l.b16 %v909
    %v3970 = vunpack.c.h.b16 %v909
    %v3971 = vunpack.c.l.b16 %v910
    %v3972 = vunpack.c.h.b16 %v910
    %v3973 = vunpack.c.l.b16 %v911
    %v3974 = vunpack.c.h.b16 %v911
    %v3975 = vunpack.c.l.b16 %v912
    %v3976 = vunpack.c.h.b16 %v912
    %v3977 = vunpack.c.l.b16 %v913
    %v3978 = vunpack.c.h.b16 %v913
    %v3979 = vunpack.c.l.b16 %v914
    %v3980 = vunpack.c.h.b16 %v914
    %v3981 = vunpack.c.l.b16 %v915
    %v3982 = vunpack.c.h.b16 %v915
    %v3983 = vunpack.c.l.b16 %v916
    %v3984 = vunpack.c.h.b16 %v916
    %v3985 = vunpack.c.l.b16 %v917
    %v3986 = vunpack.c.h.b16 %v917
    %v3987 = vunpack.c.l.b16 %v918
    %v3988 = vunpack.c.h.b16 %v918
    %v3989 = vunpack.c.l.b16 %v919
    %v3990 = vunpack.c.h.b16 %v919
    %v3991 = vunpack.c.l.b16 %v920
    %v3992 = vunpack.c.h.b16 %v920
    %v3993 = vunpack.c.l.b16 %v921
    %v3994 = vunpack.c.h.b16 %v921
    %v3995 = vunpack.c.l.b16 %v922
    %v3996 = vunpack.c.h.b16 %v922
    %v3997 = vunpack.c.l.b16 %v923
    %v3998 = vunpack.c.h.b16 %v923
    %v3999 = vunpack.c.l.b16 %v924
    %v4000 = vunpack.c.h.b16 %v924
    %v4001 = vunpack.c.l.b16 %v925
    %v4002 = vunpack.c.h.b16 %v925
    %v4003 = vunpack.c.l.b16 %v926
    %v4004 = vunpack.c.h.b16 %v926
    %v4005 = vunpack.c.l.b16 %v927
    %v4006 = vunpack.c.h.b16 %v927
    %v4007 = vunpack.c.l.b16 %v928
    %v4008 = vunpack.c.h.b16 %v928
    %v4009 = vunpack.c.l.b16 %v929
    %v4010 = vunpack.c.h.b16 %v929
    %v4011 = vunpack.c.l.b16 %v930
    %v4012 = vunpack.c.h.b16 %v930
    %v4013 = vunpack.c.l.b16 %v931
    %v4014 = vunpack.c.h.b16 %v931
    %v4015 = vunpack.c.l.b16 %v932
    %v4016 = vunpack.c.h.b16 %v932
    %v4017 = vunpack.c.l.b16 %v933
    %v4018 = vunpack.c.h.b16 %v933
    %v4019 = vunpack.c.l.b16 %v934
    %v4020 = vunpack.c.h.b16 %v934
    %v4021 = vunpack.c.l.b16 %v935
    %v4022 = vunpack.c.h.b16 %v935
    %v4023 = vunpack.c.l.b16 %v936
    %v4024 = vunpack.c.h.b16 %v936
    %v4025 = vunpack.c.l.b16 %v937
    %v4026 = vunpack.c.h.b16 %v937
    %v4027 = vunpack.c.l.b16 %v938
    %v4028 = vunpack.c.h.b16 %v938
    %v4029 = vunpack.c.l.b16 %v939
    %v4030 = vunpack.c.h.b16 %v939
    %v4031 = vunpack.c.l.b16 %v940
    %v4032 = vunpack.c.h.b16 %v940
    %v4033 = vunpack.c.l.b16 %v941
    %v4034 = vunpack.c.h.b16 %v941
    %v4035 = vunpack.c.l.b16 %v942
    %v4036 = vunpack.c.h.b16 %v942
    %v4037 = vunpack.c.l.b16 %v943
    %v4038 = vunpack.c.h.b16 %v943
    %v4039 = vunpack.c.l.b16 %v944
    %v4040 = vunpack.c.h.b16 %v944
    %v4041 = vunpack.c.l.b16 %v945
    %v4042 = vunpack.c.h.b16 %v945
    %v4043 = vunpack.c.l.b16 %v946
    %v4044 = vunpack.c.h.b16 %v946
    %v4045 = vunpack.c.l.b16 %v947
    %v4046 = vunpack.c.h.b16 %v947
    %v4047 = vunpack.c.l.b16 %v948
    %v4048 = vunpack.c.h.b16 %v948
    %v4049 = vunpack.c.l.b16 %v949
    %v4050 = vunpack.c.h.b16 %v949
    %v4051 = vunpack.c.l.b16 %v950
    %v4052 = vunpack.c.h.b16 %v950
    %v4053 = vunpack.c.l.b16 %v951
    %v4054 = vunpack.c.h.b16 %v951
    %v4055 = vunpack.c.l.b16 %v952
    %v4056 = vunpack.c.h.b16 %v952
    %v4057 = vunpack.c.l.b16 %v953
    %v4058 = vunpack.c.h.b16 %v953
    %v4059 = vunpack.c.l.b16 %v954
    %v4060 = vunpack.c.h.b16 %v954
    %v4061 = vunpack.c.l.b16 %v955
    %v4062 = vunpack.c.h.b16 %v955
    %v4063 = vunpack.c.l.b16 %v956
    %v4064 = vunpack.c.h.b16 %v956
    %v4065 = vunpack.c.l.b16 %v957
    %v4066 = vunpack.c.h.b16 %v957
    %v4067 = vunpack.c.l.b16 %v958
    %v4068 = vunpack.c.h.b16 %v958
    %v4069 = vunpack.c.l.b16 %v959
    %v4070 = vunpack.c.h.b16 %v959
    %v4071 = vunpack.c.l.b16 %v960
    %v4072 = vunpack.c.h.b16 %v960
    %v4073 = vunpack.c.l.b16 %v961
    %v4074 = vunpack.c.h.b16 %v961
    %v4075 = vunpack.c.l.b16 %v962
    %v4076 = vunpack.c.h.b16 %v962
    %v4077 = vunpack.c.l.b16 %v963
    %v4078 = vunpack.c.h.b16 %v963
    %v4079 = vunpack.c.l.b16 %v964
    %v4080 = vunpack.c.h.b16 %v964
    %v4081 = vunpack.c.l.b16 %v965
    %v4082 = vunpack.c.h.b16 %v965
    %v4083 = vunpack.c.l.b16 %v966
    %v4084 = vunpack.c.h.b16 %v966
    %v4085 = vunpack.c.l.b16 %v967
    %v4086 = vunpack.c.h.b16 %v967
    %v4087 = vunpack.c.l.b16 %v968
    %v4088 = vunpack.c.h.b16 %v968
    %v4089 = vunpack.c.l.b16 %v969
    %v4090 = vunpack.c.h.b16 %v969
    %v4091 = vunpack.c.l.b16 %v970
    %v4092 = vunpack.c.h.b16 %v970
    %v4093 = vunpack.c.l.b16 %v971
    %v4094 = vunpack.c.h.b16 %v971
    %v4095 = vunpack.c.l.b16 %v972
    %v4096 = vunpack.c.h.b16 %v972
    %v4097 = vunpack.c.l.b16 %v973
    %v4098 = vunpack.c.h.b16 %v973
    %v4099 = vunpack.c.l.b16 %v974
    %v4100 = vunpack.c.h.b16 %v974
    %v4101 = vunpack.c.l.b16 %v975
    %v4102 = vunpack.c.h.b16 %v975
    %v4103 = vunpack.c.l.b16 %v976
    %v4104 = vunpack.c.h.b16 %v976
    %v4105 = vunpack.c.l.b16 %v977
    %v4106 = vunpack.c.h.b16 %v977
    %v4107 = vunpack.c.l.b16 %v978
    %v4108 = vunpack.c.h.b16 %v978
    %v4109 = vunpack.c.l.b16 %v979
    %v4110 = vunpack.c.h.b16 %v979
    %v4111 = vunpack.c.l.b16 %v980
    %v4112 = vunpack.c.h.b16 %v980
    %v4113 = vunpack.c.l.b16 %v981
    %v4114 = vunpack.c.h.b16 %v981
    %v4115 = vunpack.c.l.b16 %v982
    %v4116 = vunpack.c.h.b16 %v982
    %v4117 = vunpack.c.l.b16 %v983
    %v4118 = vunpack.c.h.b16 %v983
    %v4119 = vunpack.c.l.b16 %v984
    %v4120 = vunpack.c.h.b16 %v984
    %v4121 = vunpack.c.l.b16 %v985
    %v4122 = vunpack.c.h.b16 %v985
    %v4123 = vunpack.c.l.b16 %v986
    %v4124 = vunpack.c.h.b16 %v986
    %v4125 = vunpack.c.l.b16 %v987
    %v4126 = vunpack.c.h.b16 %v987
    %v4127 = vunpack.c.l.b16 %v988
    %v4128 = vunpack.c.h.b16 %v988
    %v4129 = vunpack.c.l.b16 %v989
    %v4130 = vunpack.c.h.b16 %v989
    %v4131 = vunpack.c.l.b16 %v990
    %v4132 = vunpack.c.h.b16 %v990
    %v4133 = vunpack.c.l.b16 %v991
    %v4134 = vunpack.c.h.b16 %v991
    %v4135 = vunpack.c.l.b16 %v992
    %v4136 = vunpack.c.h.b16 %v992
    %v4137 = vunpack.c.l.b16 %v993
    %v4138 = vunpack.c.h.b16 %v993
    %v4139 = vunpack.c.l.b16 %v994
    %v4140 = vunpack.c.h.b16 %v994
    %v4141 = vunpack.c.l.b16 %v995
    %v4142 = vunpack.c.h.b16 %v995
    %v4143 = vunpack.c.l.b16 %v996
    %v4144 = vunpack.c.h.b16 %v996
    %v4145 = vunpack.c.l.b16 %v997
    %v4146 = vunpack.c.h.b16 %v997
    %v4147 = vunpack.c.l.b16 %v998
    %v4148 = vunpack.c.h.b16 %v998
    %v4149 = vunpack.c.l.b16 %v999
    %v4150 = vunpack.c.h.b16 %v999
    %v4151 = vunpack.c.l.b16 %v1000
    %v4152 = vunpack.c.h.b16 %v1000
    %v4153 = vunpack.c.l.b16 %v1001
    %v4154 = vunpack.c.h.b16 %v1001
    %v4155 = vunpack.c.l.b16 %v1002
    %v4156 = vunpack.c.h.b16 %v1002
    %v4157 = vunpack.c.l.b16 %v1003
    %v4158 = vunpack.c.h.b16 %v1003
    %v4159 = vunpack.c.l.b16 %v1004
    %v4160 = vunpack.c.h.b16 %v1004
    %v4161 = vunpack.c.l.b16 %v1005
    %v4162 = vunpack.c.h.b16 %v1005
    %v4163 = vunpack.c.l.b16 %v1006
    %v4164 = vunpack.c.h.b16 %v1006
    %v4165 = vunpack.c.l.b16 %v1007
    %v4166 = vunpack.c.h.b16 %v1007
    %v4167 = vunpack.c.l.b16 %v1008
    %v4168 = vunpack.c.h.b16 %v1008
    %v4169 = vunpack.c.l.b16 %v1009
    %v4170 = vunpack.c.h.b16 %v1009
    %v4171 = vunpack.c.l.b16 %v1010
    %v4172 = vunpack.c.h.b16 %v1010
    %v4173 = vunpack.c.l.b16 %v1011
    %v4174 = vunpack.c.h.b16 %v1011
    %v4175 = vunpack.c.l.b16 %v1012
    %v4176 = vunpack.c.h.b16 %v1012
    %v4177 = vunpack.c.l.b16 %v1013
    %v4178 = vunpack.c.h.b16 %v1013
    %v4179 = vunpack.c.l.b16 %v1014
    %v4180 = vunpack.c.h.b16 %v1014
    %v4181 = vunpack.c.l.b16 %v1015
    %v4182 = vunpack.c.h.b16 %v1015
    %v4183 = vunpack.c.l.b16 %v1016
    %v4184 = vunpack.c.h.b16 %v1016
    %v4185 = vunpack.c.l.b16 %v1017
    %v4186 = vunpack.c.h.b16 %v1017
    %v4187 = vunpack.c.l.b16 %v1018
    %v4188 = vunpack.c.h.b16 %v1018
    %v4189 = vunpack.c.l.b16 %v1019
    %v4190 = vunpack.c.h.b16 %v1019
    %v4191 = vunpack.c.l.b16 %v1020
    %v4192 = vunpack.c.h.b16 %v1020
    %v4193 = vunpack.c.l.b16 %v1021
    %v4194 = vunpack.c.h.b16 %v1021
    %v4195 = vunpack.c.l.b16 %v1022
    %v4196 = vunpack.c.h.b16 %v1022
    %v4197 = vunpack.c.l.b16 %v1023
    %v4198 = vunpack.c.h.b16 %v1023
    %v4199 = vunpack.c.l.b16 %v1024
    %v4200 = vunpack.c.h.b16 %v1024
    %v4201 = vunpack.c.l.b16 %v1025
    %v4202 = vunpack.c.h.b16 %v1025
    %v4203 = vunpack.c.l.b16 %v1026
    %v4204 = vunpack.c.h.b16 %v1026
    %v4205 = vunpack.c.l.b16 %v1027
    %v4206 = vunpack.c.h.b16 %v1027
    %v4207 = vunpack.c.l.b16 %v1028
    %v4208 = vunpack.c.h.b16 %v1028
    %v4209 = vunpack.c.l.b16 %v1029
    %v4210 = vunpack.c.h.b16 %v1029
    %v4211 = vunpack.c.l.b16 %v1030
    %v4212 = vunpack.c.h.b16 %v1030
    %v4213 = vunpack.c.l.b16 %v1031
    %v4214 = vunpack.c.h.b16 %v1031
    %v4215 = vunpack.c.l.b16 %v1032
    %v4216 = vunpack.c.h.b16 %v1032
    %v4217 = vunpack.c.l.b16 %v1033
    %v4218 = vunpack.c.h.b16 %v1033
    %v4219 = vunpack.c.l.b16 %v1034
    %v4220 = vunpack.c.h.b16 %v1034
    %v4221 = vunpack.c.l.b16 %v1035
    %v4222 = vunpack.c.h.b16 %v1035
    %v4223 = vunpack.c.l.b16 %v1036
    %v4224 = vunpack.c.h.b16 %v1036
    %v4225 = vunpack.c.l.b16 %v1037
    %v4226 = vunpack.c.h.b16 %v1037
    %v4227 = vunpack.c.l.b16 %v1038
    %v4228 = vunpack.c.h.b16 %v1038
    %v4229 = vunpack.c.l.b16 %v1039
    %v4230 = vunpack.c.h.b16 %v1039
    %v4231 = vunpack.c.l.b16 %v1040
    %v4232 = vunpack.c.h.b16 %v1040
    %v4233 = vunpack.c.l.b16 %v1041
    %v4234 = vunpack.c.h.b16 %v1041
    %v4235 = vunpack.c.l.b16 %v1042
    %v4236 = vunpack.c.h.b16 %v1042
    %v4237 = vunpack.c.l.b16 %v1043
    %v4238 = vunpack.c.h.b16 %v1043
    %v4239 = vunpack.c.l.b16 %v1044
    %v4240 = vunpack.c.h.b16 %v1044
    %v4241 = vunpack.c.l.b16 %v1045
    %v4242 = vunpack.c.h.b16 %v1045
    %v4243 = vunpack.c.l.b16 %v1046
    %v4244 = vunpack.c.h.b16 %v1046
    %v4245 = vunpack.c.l.b16 %v1047
    %v4246 = vunpack.c.h.b16 %v1047
    %v4247 = vunpack.c.l.b16 %v1048
    %v4248 = vunpack.c.h.b16 %v1048
    %v4249 = vunpack.c.l.b16 %v1049
    %v4250 = vunpack.c.h.b16 %v1049
    %v4251 = vunpack.c.l.b16 %v1050
    %v4252 = vunpack.c.h.b16 %v1050
    %v4253 = vunpack.c.l.b16 %v1051
    %v4254 = vunpack.c.h.b16 %v1051
    %v4255 = vunpack.c.l.b16 %v1052
    %v4256 = vunpack.c.h.b16 %v1052
    %v4257 = vunpack.c.l.b16 %v1053
    %v4258 = vunpack.c.h.b16 %v1053
    %v4259 = vunpack.c.l.b16 %v1054
    %v4260 = vunpack.c.h.b16 %v1054
    %v4261 = vunpack.c.l.b16 %v1055
    %v4262 = vunpack.c.h.b16 %v1055
    %v4263 = vunpack.c.l.b16 %v1056
    %v4264 = vunpack.c.h.b16 %v1056
    %v4265 = vunpack.c.l.b16 %v1057
    %v4266 = vunpack.c.h.b16 %v1057
    %v4267 = vunpack.c.l.b16 %v1058
    %v4268 = vunpack.c.h.b16 %v1058
    %v4269 = vunpack.c.l.b16 %v1059
    %v4270 = vunpack.c.h.b16 %v1059
    %v4271 = vunpack.c.l.b16 %v1060
    %v4272 = vunpack.c.h.b16 %v1060
    %v4273 = vunpack.c.l.b16 %v1061
    %v4274 = vunpack.c.h.b16 %v1061
    %v4275 = vunpack.c.l.b16 %v1062
    %v4276 = vunpack.c.h.b16 %v1062
    %v4277 = vunpack.c.l.b16 %v1063
    %v4278 = vunpack.c.h.b16 %v1063
    %v4279 = vunpack.c.l.b16 %v1064
    %v4280 = vunpack.c.h.b16 %v1064
    %v4281 = vunpack.c.l.b16 %v1065
    %v4282 = vunpack.c.h.b16 %v1065
    %v4283 = vunpack.c.l.b16 %v1066
    %v4284 = vunpack.c.h.b16 %v1066
    %v4285 = vunpack.c.l.b16 %v1067
    %v4286 = vunpack.c.h.b16 %v1067
    %v4287 = vunpack.c.l.b16 %v1068
    %v4288 = vunpack.c.h.b16 %v1068
    %v4289 = vunpack.c.l.b16 %v1069
    %v4290 = vunpack.c.h.b16 %v1069
    %v4291 = vunpack.c.l.b16 %v1070
    %v4292 = vunpack.c.h.b16 %v1070
    %v4293 = vunpack.c.l.b16 %v1071
    %v4294 = vunpack.c.h.b16 %v1071
    %v4295 = vunpack.c.l.b16 %v1072
    %v4296 = vunpack.c.h.b16 %v1072
    %v4297 = vunpack.c.l.b16 %v1073
    %v4298 = vunpack.c.h.b16 %v1073
    %v4299 = vunpack.c.l.b16 %v1074
    %v4300 = vunpack.c.h.b16 %v1074
    %v4301 = vunpack.c.l.b16 %v1075
    %v4302 = vunpack.c.h.b16 %v1075
    %v4303 = vunpack.c.l.b16 %v1076
    %v4304 = vunpack.c.h.b16 %v1076
    %v4305 = vunpack.c.l.b16 %v1077
    %v4306 = vunpack.c.h.b16 %v1077
    %v4307 = vunpack.c.l.b16 %v1078
    %v4308 = vunpack.c.h.b16 %v1078
    %v4309 = vunpack.c.l.b16 %v1079
    %v4310 = vunpack.c.h.b16 %v1079
    %v4311 = vunpack.c.l.b16 %v1080
    %v4312 = vunpack.c.h.b16 %v1080
    %v4313 = vunpack.c.l.b16 %v1081
    %v4314 = vunpack.c.h.b16 %v1081
    %v4315 = vunpack.c.l.b16 %v1082
    %v4316 = vunpack.c.h.b16 %v1082
    %v4317 = vunpack.c.l.b16 %v1083
    %v4318 = vunpack.c.h.b16 %v1083
    %v4319 = vunpack.c.l.b16 %v1084
    %v4320 = vunpack.c.h.b16 %v1084
    %v4321 = vunpack.c.l.b16 %v1085
    %v4322 = vunpack.c.h.b16 %v1085
    %v4323 = vunpack.c.l.b16 %v1086
    %v4324 = vunpack.c.h.b16 %v1086
    %v4325 = vunpack.c.l.b16 %v1087
    %v4326 = vunpack.c.h.b16 %v1087
    %v4327 = vunpack.c.l.b16 %v1088
    %v4328 = vunpack.c.h.b16 %v1088
    %v4329 = vunpack.c.l.b16 %v1089
    %v4330 = vunpack.c.h.b16 %v1089
    %v4331 = vunpack.c.l.b16 %v1090
    %v4332 = vunpack.c.h.b16 %v1090
    %v4333 = vunpack.c.l.b16 %v1091
    %v4334 = vunpack.c.h.b16 %v1091
    %v4335 = vunpack.c.l.b16 %v1092
    %v4336 = vunpack.c.h.b16 %v1092
    %v4337 = vunpack.c.l.b16 %v1093
    %v4338 = vunpack.c.h.b16 %v1093
    %v4339 = vunpack.c.l.b16 %v1094
    %v4340 = vunpack.c.h.b16 %v1094
    %v4341 = vunpack.c.l.b16 %v1095
    %v4342 = vunpack.c.h.b16 %v1095
    %v4343 = vunpack.c.l.b16 %v1096
    %v4344 = vunpack.c.h.b16 %v1096
    %v4345 = vunpack.c.l.b16 %v1097
    %v4346 = vunpack.c.h.b16 %v1097
    %v4347 = vunpack.c.l.b16 %v1098
    %v4348 = vunpack.c.h.b16 %v1098
    %v4349 = vunpack.c.l.b16 %v1099
    %v4350 = vunpack.c.h.b16 %v1099
    %v4351 = vunpack.c.l.b16 %v1100
    %v4352 = vunpack.c.h.b16 %v1100
    %v4353 = vunpack.c.l.b16 %v1101
    %v4354 = vunpack.c.h.b16 %v1101
    %v4355 = vunpack.c.l.b16 %v1102
    %v4356 = vunpack.c.h.b16 %v1102
    %v4357 = vunpack.c.l.b16 %v1103
    %v4358 = vunpack.c.h.b16 %v1103
    %v4359 = vunpack.c.l.b16 %v1104
    %v4360 = vunpack.c.h.b16 %v1104
    %v4361 = vunpack.c.l.b16 %v1105
    %v4362 = vunpack.c.h.b16 %v1105
    %v4363 = vunpack.c.l.b16 %v1106
    %v4364 = vunpack.c.h.b16 %v1106
    %v4365 = vunpack.c.l.b16 %v1107
    %v4366 = vunpack.c.h.b16 %v1107
    %v4367 = vunpack.c.l.b16 %v1108
    %v4368 = vunpack.c.h.b16 %v1108
    %v4369 = vunpack.c.l.b16 %v1109
    %v4370 = vunpack.c.h.b16 %v1109
    %v4371 = vunpack.c.l.b16 %v1110
    %v4372 = vunpack.c.h.b16 %v1110
    %v4373 = vunpack.c.l.b16 %v1111
    %v4374 = vunpack.c.h.b16 %v1111
    %v4375 = vunpack.c.l.b16 %v1112
    %v4376 = vunpack.c.h.b16 %v1112
    %v4377 = vunpack.c.l.b16 %v1113
    %v4378 = vunpack.c.h.b16 %v1113
    %v4379 = vunpack.c.l.b16 %v1114
    %v4380 = vunpack.c.h.b16 %v1114
    %v4381 = vunpack.c.l.b16 %v1115
    %v4382 = vunpack.c.h.b16 %v1115
    %v4383 = vunpack.c.l.b16 %v1116
    %v4384 = vunpack.c.h.b16 %v1116
    %v4385 = vunpack.c.l.b16 %v1117
    %v4386 = vunpack.c.h.b16 %v1117
    %v4387 = vunpack.c.l.b16 %v1118
    %v4388 = vunpack.c.h.b16 %v1118
    %v4389 = vunpack.c.l.b16 %v1119
    %v4390 = vunpack.c.h.b16 %v1119
    %v4391 = vunpack.c.l.b16 %v1120
    %v4392 = vunpack.c.h.b16 %v1120
    %v4393 = vunpack.c.l.b16 %v1121
    %v4394 = vunpack.c.h.b16 %v1121
    %v4395 = vunpack.c.l.b16 %v1122
    %v4396 = vunpack.c.h.b16 %v1122
    %v4397 = vunpack.c.l.b16 %v1123
    %v4398 = vunpack.c.h.b16 %v1123
    %v4399 = vunpack.c.l.b16 %v1124
    %v4400 = vunpack.c.h.b16 %v1124
    %v4401 = vunpack.c.l.b16 %v1125
    %v4402 = vunpack.c.h.b16 %v1125
    %v4403 = vunpack.c.l.b16 %v1126
    %v4404 = vunpack.c.h.b16 %v1126
    %v4405 = vunpack.c.l.b16 %v1127
    %v4406 = vunpack.c.h.b16 %v1127
    %v4407 = vunpack.c.l.b16 %v1128
    %v4408 = vunpack.c.h.b16 %v1128
    %v4409 = vunpack.c.l.b16 %v1129
    %v4410 = vunpack.c.h.b16 %v1129
    %v4411 = vunpack.c.l.b16 %v1130
    %v4412 = vunpack.c.h.b16 %v1130
    %v4413 = vunpack.c.l.b16 %v1131
    %v4414 = vunpack.c.h.b16 %v1131
    %v4415 = vunpack.c.l.b16 %v1132
    %v4416 = vunpack.c.h.b16 %v1132
    %v4417 = vunpack.c.l.b16 %v1133
    %v4418 = vunpack.c.h.b16 %v1133
    %v4419 = vunpack.c.l.b16 %v1134
    %v4420 = vunpack.c.h.b16 %v1134
    %v4421 = vunpack.c.l.b16 %v1135
    %v4422 = vunpack.c.h.b16 %v1135
    %v4423 = vunpack.c.l.b16 %v1136
    %v4424 = vunpack.c.h.b16 %v1136
    %v4425 = vunpack.c.l.b16 %v1137
    %v4426 = vunpack.c.h.b16 %v1137
    %v4427 = vunpack.c.l.b16 %v1138
    %v4428 = vunpack.c.h.b16 %v1138
    %v4429 = vunpack.c.l.b16 %v1139
    %v4430 = vunpack.c.h.b16 %v1139
    %v4431 = vunpack.c.l.b16 %v1140
    %v4432 = vunpack.c.h.b16 %v1140
    %v4433 = vunpack.c.l.b16 %v1141
    %v4434 = vunpack.c.h.b16 %v1141
    %v4435 = vunpack.c.l.b16 %v1142
    %v4436 = vunpack.c.h.b16 %v1142
    %v4437 = vunpack.c.l.b16 %v1143
    %v4438 = vunpack.c.h.b16 %v1143
    %v4439 = vunpack.c.l.b16 %v1144
    %v4440 = vunpack.c.h.b16 %v1144
    %v4441 = vunpack.c.l.b16 %v1145
    %v4442 = vunpack.c.h.b16 %v1145
    %v4443 = vunpack.c.l.b16 %v1146
    %v4444 = vunpack.c.h.b16 %v1146
    %v4445 = vunpack.c.l.b16 %v1147
    %v4446 = vunpack.c.h.b16 %v1147
    %v4447 = vunpack.c.l.b16 %v1148
    %v4448 = vunpack.c.h.b16 %v1148
    %v4449 = vunpack.c.l.b16 %v1149
    %v4450 = vunpack.c.h.b16 %v1149
    %v4451 = vunpack.c.l.b16 %v1150
    %v4452 = vunpack.c.h.b16 %v1150
    %v4453 = vunpack.c.l.b16 %v1151
    %v4454 = vunpack.c.h.b16 %v1151
    %v4455 = vunpack.c.l.b16 %v1152
    %v4456 = vunpack.c.h.b16 %v1152
    %v4457 = vunpack.c.l.b16 %v1153
    %v4458 = vunpack.c.h.b16 %v1153
    %v4459 = vunpack.c.l.b16 %v1154
    %v4460 = vunpack.c.h.b16 %v1154
    %v4461 = vunpack.c.l.b16 %v1155
    %v4462 = vunpack.c.h.b16 %v1155
    %v4463 = vunpack.c.l.b16 %v1156
    %v4464 = vunpack.c.h.b16 %v1156
    %v4465 = vunpack.c.l.b16 %v1157
    %v4466 = vunpack.c.h.b16 %v1157
    %v4467 = vunpack.c.l.b16 %v1158
    %v4468 = vunpack.c.h.b16 %v1158
    %v4469 = vunpack.c.l.b16 %v1159
    %v4470 = vunpack.c.h.b16 %v1159
    %v4471 = vunpack.c.l.b16 %v1160
    %v4472 = vunpack.c.h.b16 %v1160
    %v4473 = vunpack.c.l.b16 %v1161
    %v4474 = vunpack.c.h.b16 %v1161
    %v4475 = vunpack.c.l.b16 %v1162
    %v4476 = vunpack.c.h.b16 %v1162
    %v4477 = vunpack.c.l.b16 %v1163
    %v4478 = vunpack.c.h.b16 %v1163
    %v4479 = vunpack.c.l.b16 %v1164
    %v4480 = vunpack.c.h.b16 %v1164
    %v4481 = vunpack.c.l.b16 %v1165
    %v4482 = vunpack.c.h.b16 %v1165
    %v4483 = vunpack.c.l.b16 %v1166
    %v4484 = vunpack.c.h.b16 %v1166
    %v4485 = vunpack.c.l.b16 %v1167
    %v4486 = vunpack.c.h.b16 %v1167
    %v4487 = vunpack.c.l.b16 %v1168
    %v4488 = vunpack.c.h.b16 %v1168
    %v4489 = vunpack.c.l.b16 %v1169
    %v4490 = vunpack.c.h.b16 %v1169
    %v4491 = vunpack.c.l.b16 %v1170
    %v4492 = vunpack.c.h.b16 %v1170
    %v4493 = vunpack.c.l.b16 %v1171
    %v4494 = vunpack.c.h.b16 %v1171
    %v4495 = vunpack.c.l.b16 %v1172
    %v4496 = vunpack.c.h.b16 %v1172
    %v4497 = vunpack.c.l.b16 %v1173
    %v4498 = vunpack.c.h.b16 %v1173
    %v4499 = vunpack.c.l.b16 %v1174
    %v4500 = vunpack.c.h.b16 %v1174
    %v4501 = vunpack.c.l.b16 %v1175
    %v4502 = vunpack.c.h.b16 %v1175
    %v4503 = vunpack.c.l.b16 %v1176
    %v4504 = vunpack.c.h.b16 %v1176
    %v4505 = vunpack.c.l.b16 %v1177
    %v4506 = vunpack.c.h.b16 %v1177
    %v4507 = vunpack.c.l.b16 %v1178
    %v4508 = vunpack.c.h.b16 %v1178
    %v4509 = vunpack.c.l.b16 %v1179
    %v4510 = vunpack.c.h.b16 %v1179
    %v4511 = vunpack.c.l.b16 %v1180
    %v4512 = vunpack.c.h.b16 %v1180
    %v4513 = vunpack.c.l.b16 %v1181
    %v4514 = vunpack.c.h.b16 %v1181
    %v4515 = vunpack.c.l.b16 %v1182
    %v4516 = vunpack.c.h.b16 %v1182
    %v4517 = vunpack.c.l.b16 %v1183
    %v4518 = vunpack.c.h.b16 %v1183
    %v4519 = vunpack.c.l.b16 %v1184
    %v4520 = vunpack.c.h.b16 %v1184
    %v4521 = vunpack.c.l.b16 %v1185
    %v4522 = vunpack.c.h.b16 %v1185
    %v4523 = vunpack.c.l.b16 %v1186
    %v4524 = vunpack.c.h.b16 %v1186
    %v4525 = vunpack.c.l.b16 %v1187
    %v4526 = vunpack.c.h.b16 %v1187
    %v4527 = vunpack.c.l.b16 %v1188
    %v4528 = vunpack.c.h.b16 %v1188
    %v4529 = vunpack.c.l.b16 %v1189
    %v4530 = vunpack.c.h.b16 %v1189
    %v4531 = vunpack.c.l.b16 %v1190
    %v4532 = vunpack.c.h.b16 %v1190
    %v4533 = vunpack.c.l.b16 %v1191
    %v4534 = vunpack.c.h.b16 %v1191
    %v4535 = vunpack.c.l.b16 %v1192
    %v4536 = vunpack.c.h.b16 %v1192
    %v4537 = vunpack.c.l.b16 %v1193
    %v4538 = vunpack.c.h.b16 %v1193
    %v4539 = vunpack.c.l.b16 %v1194
    %v4540 = vunpack.c.h.b16 %v1194
    %v4541 = vunpack.c.l.b16 %v1195
    %v4542 = vunpack.c.h.b16 %v1195
    %v4543 = vunpack.c.l.b16 %v1196
    %v4544 = vunpack.c.h.b16 %v1196
    %v4545 = vunpack.c.l.b16 %v1197
    %v4546 = vunpack.c.h.b16 %v1197
    %v4547 = vunpack.c.l.b16 %v1198
    %v4548 = vunpack.c.h.b16 %v1198
    %v4549 = vunpack.c.l.b16 %v1199
    %v4550 = vunpack.c.h.b16 %v1199
    %v4551 = vunpack.c.l.b16 %v1200
    %v4552 = vunpack.c.h.b16 %v1200
    %v4553 = vunpack.c.l.b16 %v1201
    %v4554 = vunpack.c.h.b16 %v1201
    %v4555 = vunpack.c.l.b16 %v1202
    %v4556 = vunpack.c.h.b16 %v1202
    %v4557 = vunpack.c.l.b16 %v1203
    %v4558 = vunpack.c.h.b16 %v1203
    %v4559 = vunpack.c.l.b16 %v1204
    %v4560 = vunpack.c.h.b16 %v1204
    %v4561 = vunpack.c.l.b16 %v1205
    %v4562 = vunpack.c.h.b16 %v1205
    %v4563 = vunpack.c.l.b16 %v1206
    %v4564 = vunpack.c.h.b16 %v1206
    %v4565 = vunpack.c.l.b16 %v1207
    %v4566 = vunpack.c.h.b16 %v1207
    %v4567 = vunpack.c.l.b16 %v1208
    %v4568 = vunpack.c.h.b16 %v1208
    %v4569 = vunpack.c.l.b16 %v1209
    %v4570 = vunpack.c.h.b16 %v1209
    %v4571 = vunpack.c.l.b16 %v1210
    %v4572 = vunpack.c.h.b16 %v1210
    %v4573 = vunpack.c.l.b16 %v1211
    %v4574 = vunpack.c.h.b16 %v1211
    %v4575 = vunpack.c.l.b16 %v1212
    %v4576 = vunpack.c.h.b16 %v1212
    %v4577 = vunpack.c.l.b16 %v1213
    %v4578 = vunpack.c.h.b16 %v1213
    %v4579 = vunpack.c.l.b16 %v1214
    %v4580 = vunpack.c.h.b16 %v1214
    %v4581 = vunpack.c.l.b16 %v1215
    %v4582 = vunpack.c.h.b16 %v1215
    %v4583 = vunpack.c.l.b16 %v1216
    %v4584 = vunpack.c.h.b16 %v1216
    %v4585 = vunpack.c.l.b16 %v1217
    %v4586 = vunpack.c.h.b16 %v1217
    %v4587 = vunpack.c.l.b16 %v1218
    %v4588 = vunpack.c.h.b16 %v1218
    %v4589 = vunpack.c.l.b16 %v1219
    %v4590 = vunpack.c.h.b16 %v1219
    %v4591 = vunpack.c.l.b16 %v1220
    %v4592 = vunpack.c.h.b16 %v1220
    %v4593 = vunpack.c.l.b16 %v1221
    %v4594 = vunpack.c.h.b16 %v1221
    %v4595 = vunpack.c.l.b16 %v1222
    %v4596 = vunpack.c.h.b16 %v1222
    %v4597 = vunpack.c.l.b16 %v1223
    %v4598 = vunpack.c.h.b16 %v1223
    %v4599 = vunpack.c.l.b16 %v1224
    %v4600 = vunpack.c.h.b16 %v1224
    %v4601 = vunpack.c.l.b16 %v1225
    %v4602 = vunpack.c.h.b16 %v1225
    %v4603 = vunpack.c.l.b16 %v1226
    %v4604 = vunpack.c.h.b16 %v1226
    %v4605 = vunpack.c.l.b16 %v1227
    %v4606 = vunpack.c.h.b16 %v1227
    %v4607 = vunpack.c.l.b16 %v1228
    %v4608 = vunpack.c.h.b16 %v1228
    %v4609 = vunpack.c.l.b16 %v1229
    %v4610 = vunpack.c.h.b16 %v1229
    %v4611 = vunpack.c.l.b16 %v1230
    %v4612 = vunpack.c.h.b16 %v1230
    %v4613 = vunpack.c.l.b16 %v1231
    %v4614 = vunpack.c.h.b16 %v1231
    %v4615 = vunpack.c.l.b16 %v1232
    %v4616 = vunpack.c.h.b16 %v1232
    %v4617 = vunpack.c.l.b16 %v1233
    %v4618 = vunpack.c.h.b16 %v1233
    %v4619 = vunpack.c.l.b16 %v1234
    %v4620 = vunpack.c.h.b16 %v1234
    %v4621 = vunpack.c.l.b16 %v1235
    %v4622 = vunpack.c.h.b16 %v1235
    %v4623 = vunpack.c.l.b16 %v1236
    %v4624 = vunpack.c.h.b16 %v1236
    %v4625 = vunpack.c.l.b16 %v1237
    %v4626 = vunpack.c.h.b16 %v1237
    %v4627 = vunpack.c.l.b16 %v1238
    %v4628 = vunpack.c.h.b16 %v1238
    %v4629 = vunpack.c.l.b16 %v1239
    %v4630 = vunpack.c.h.b16 %v1239
    %v4631 = vunpack.c.l.b16 %v1240
    %v4632 = vunpack.c.h.b16 %v1240
    %v4633 = vpack.c.b16 %v2465, %v2457
    %v4634 = vpack.c.b16 %v2466, %v2458
    %v4635 = vpack.c.b16 %v2467, %v2459
    %v4636 = vpack.c.b16 %v2468, %v2460
    %v4637 = vpack.c.b16 %v2469, %v2461
    %v4638 = vpack.c.b16 %v2470, %v2462
    %v4639 = vpack.c.b16 %v2471, %v2463
    %v4640 = vpack.c.b16 %v2472, %v2464
    %v4641 = vpack.c.b16 %v2481, %v2473
    %v4642 = vpack.c.b16 %v2482, %v2474
    %v4643 = vpack.c.b16 %v2483, %v2475
    %v4644 = vpack.c.b16 %v2484, %v2476
    %v4645 = vpack.c.b16 %v2485, %v2477
    %v4646 = vpack.c.b16 %v2486, %v2478
    %v4647 = vpack.c.b16 %v2487, %v2479
    %v4648 = vpack.c.b16 %v2488, %v2480
    %v4649 = vpack.c.b16 %v2497, %v2489
    %v4650 = vpack.c.b16 %v2498, %v2490
    %v4651 = vpack.c.b16 %v2499, %v2491
    %v4652 = vpack.c.b16 %v2500, %v2492
    %v4653 = vpack.c.b16 %v2501, %v2493
    %v4654 = vpack.c.b16 %v2502, %v2494
    %v4655 = vpack.c.b16 %v2503, %v2495
    %v4656 = vpack.c.b16 %v2504, %v2496
    %v4657 = vpack.c.b16 %v2513, %v2505
    %v4658 = vpack.c.b16 %v2514, %v2506
    %v4659 = vpack.c.b16 %v2515, %v2507
    %v4660 = vpack.c.b16 %v2516, %v2508
    %v4661 = vpack.c.b16 %v2517, %v2509
    %v4662 = vpack.c.b16 %v2518, %v2510
    %v4663 = vpack.c.b16 %v2519, %v2511
    %v4664 = vpack.c.b16 %v2520, %v2512
    %v4665 = vpack.c.b16 %v2529, %v2521
    %v4666 = vpack.c.b16 %v2530, %v2522
    %v4667 = vpack.c.b16 %v2531, %v2523
    %v4668 = vpack.c.b16 %v2532, %v2524
    %v4669 = vpack.c.b16 %v2533, %v2525
    %v4670 = vpack.c.b16 %v2534, %v2526
    %v4671 = vpack.c.b16 %v2535, %v2527
    %v4672 = vpack.c.b16 %v2536, %v2528
    %v4673 = vpack.c.b16 %v2545, %v2537
    %v4674 = vpack.c.b16 %v2546, %v2538
    %v4675 = vpack.c.b16 %v2547, %v2539
    %v4676 = vpack.c.b16 %v2548, %v2540
    %v4677 = vpack.c.b16 %v2549, %v2541
    %v4678 = vpack.c.b16 %v2550, %v2542
    %v4679 = vpack.c.b16 %v2551, %v2543
    %v4680 = vpack.c.b16 %v2552, %v2544
    %v4681 = vpack.c.b16 %v2561, %v2553
    %v4682 = vpack.c.b16 %v2562, %v2554
    %v4683 = vpack.c.b16 %v2563, %v2555
    %v4684 = vpack.c.b16 %v2564, %v2556
    %v4685 = vpack.c.b16 %v2565, %v2557
    %v4686 = vpack.c.b16 %v2566, %v2558
    %v4687 = vpack.c.b16 %v2567, %v2559
    %v4688 = vpack.c.b16 %v2568, %v2560
    %v4689 = vpack.c.b16 %v2577, %v2569
    %v4690 = vpack.c.b16 %v2578, %v2570
    %v4691 = vpack.c.b16 %v2579, %v2571
    %v4692 = vpack.c.b16 %v2580, %v2572
    %v4693 = vpack.c.b16 %v2581, %v2573
    %v4694 = vpack.c.b16 %v2582, %v2574
    %v4695 = vpack.c.b16 %v2583, %v2575
    %v4696 = vpack.c.b16 %v2584, %v2576
    %v4697 = vpack.c.b16 %v2593, %v2585
    %v4698 = vpack.c.b16 %v2594, %v2586
    %v4699 = vpack.c.b16 %v2595, %v2587
    %v4700 = vpack.c.b16 %v2596, %v2588
    %v4701 = vpack.c.b16 %v2597, %v2589
    %v4702 = vpack.c.b16 %v2598, %v2590
    %v4703 = vpack.c.b16 %v2599, %v2591
    %v4704 = vpack.c.b16 %v2600, %v2592
    %v4705 = vpack.c.b16 %v2609, %v2601
    %v4706 = vpack.c.b16 %v2610, %v2602
    %v4707 = vpack.c.b16 %v2611, %v2603
    %v4708 = vpack.c.b16 %v2612, %v2604
    %v4709 = vpack.c.b16 %v2613, %v2605
    %v4710 = vpack.c.b16 %v2614, %v2606
    %v4711 = vpack.c.b16 %v2615, %v2607
    %v4712 = vpack.c.b16 %v2616, %v2608
    %v4713 = vpack.c.b16 %v2625, %v2617
    %v4714 = vpack.c.b16 %v2626, %v2618
    %v4715 = vpack.c.b16 %v2627, %v2619
    %v4716 = vpack.c.b16 %v2628, %v2620
    %v4717 = vpack.c.b16 %v2629, %v2621
    %v4718 = vpack.c.b16 %v2630, %v2622
    %v4719 = vpack.c.b16 %v2631, %v2623
    %v4720 = vpack.c.b16 %v2632, %v2624
    %v4721 = vpack.c.b16 %v2641, %v2633
    %v4722 = vpack.c.b16 %v2642, %v2634
    %v4723 = vpack.c.b16 %v2643, %v2635
    %v4724 = vpack.c.b16 %v2644, %v2636
    %v4725 = vpack.c.b16 %v2645, %v2637
    %v4726 = vpack.c.b16 %v2646, %v2638
    %v4727 = vpack.c.b16 %v2647, %v2639
    %v4728 = vpack.c.b16 %v2648, %v2640
    %v4729 = vpack.c.b16 %v2657, %v2649
    %v4730 = vpack.c.b16 %v2658, %v2650
    %v4731 = vpack.c.b16 %v2659, %v2651
    %v4732 = vpack.c.b16 %v2660, %v2652
    %v4733 = vpack.c.b16 %v2661, %v2653
    %v4734 = vpack.c.b16 %v2662, %v2654
    %v4735 = vpack.c.b16 %v2663, %v2655
    %v4736 = vpack.c.b16 %v2664, %v2656
    %v4737 = vpack.c.b16 %v2673, %v2665
    %v4738 = vpack.c.b16 %v2674, %v2666
    %v4739 = vpack.c.b16 %v2675, %v2667
    %v4740 = vpack.c.b16 %v2676, %v2668
    %v4741 = vpack.c.b16 %v2677, %v2669
    %v4742 = vpack.c.b16 %v2678, %v2670
    %v4743 = vpack.c.b16 %v2679, %v2671
    %v4744 = vpack.c.b16 %v2680, %v2672
    %v4745 = vpack.c.b16 %v2689, %v2681
    %v4746 = vpack.c.b16 %v2690, %v2682
    %v4747 = vpack.c.b16 %v2691, %v2683
    %v4748 = vpack.c.b16 %v2692, %v2684
    %v4749 = vpack.c.b16 %v2693, %v2685
    %v4750 = vpack.c.b16 %v2694, %v2686
    %v4751 = vpack.c.b16 %v2695, %v2687
    %v4752 = vpack.c.b16 %v2696, %v2688
    %v4753 = vpack.c.b16 %v2705, %v2697
    %v4754 = vpack.c.b16 %v2706, %v2698
    %v4755 = vpack.c.b16 %v2707, %v2699
    %v4756 = vpack.c.b16 %v2708, %v2700
    %v4757 = vpack.c.b16 %v2709, %v2701
    %v4758 = vpack.c.b16 %v2710, %v2702
    %v4759 = vpack.c.b16 %v2711, %v2703
    %v4760 = vpack.c.b16 %v2712, %v2704
    %v4761 = vpack.c.b16 %v2721, %v2713
    %v4762 = vpack.c.b16 %v2722, %v2714
    %v4763 = vpack.c.b16 %v2723, %v2715
    %v4764 = vpack.c.b16 %v2724, %v2716
    %v4765 = vpack.c.b16 %v2725, %v2717
    %v4766 = vpack.c.b16 %v2726, %v2718
    %v4767 = vpack.c.b16 %v2727, %v2719
    %v4768 = vpack.c.b16 %v2728, %v2720
    %v4769 = vpack.c.b16 %v2737, %v2729
    %v4770 = vpack.c.b16 %v2738, %v2730
    %v4771 = vpack.c.b16 %v2739, %v2731
    %v4772 = vpack.c.b16 %v2740, %v2732
    %v4773 = vpack.c.b16 %v2741, %v2733
    %v4774 = vpack.c.b16 %v2742, %v2734
    %v4775 = vpack.c.b16 %v2743, %v2735
    %v4776 = vpack.c.b16 %v2744, %v2736
    %v4777 = vpack.c.b16 %v2753, %v2745
    %v4778 = vpack.c.b16 %v2754, %v2746
    %v4779 = vpack.c.b16 %v2755, %v2747
    %v4780 = vpack.c.b16 %v2756, %v2748
    %v4781 = vpack.c.b16 %v2757, %v2749
    %v4782 = vpack.c.b16 %v2758, %v2750
    %v4783 = vpack.c.b16 %v2759, %v2751
    %v4784 = vpack.c.b16 %v2760, %v2752
    %v4785 = vpack.c.b16 %v2769, %v2761
    %v4786 = vpack.c.b16 %v2770, %v2762
    %v4787 = vpack.c.b16 %v2771, %v2763
    %v4788 = vpack.c.b16 %v2772, %v2764
    %v4789 = vpack.c.b16 %v2773, %v2765
    %v4790 = vpack.c.b16 %v2774, %v2766
    %v4791 = vpack.c.b16 %v2775, %v2767
    %v4792 = vpack.c.b16 %v2776, %v2768
    %v4793 = vpack.c.b16 %v2785, %v2777
    %v4794 = vpack.c.b16 %v2786, %v2778
    %v4795 = vpack.c.b16 %v2787, %v2779
    %v4796 = vpack.c.b16 %v2788, %v2780
    %v4797 = vpack.c.b16 %v2789, %v2781
    %v4798 = vpack.c.b16 %v2790, %v2782
    %v4799 = vpack.c.b16 %v2791, %v2783
    %v4800 = vpack.c.b16 %v2792, %v2784
    %v4801 = vpack.c.b16 %v2801, %v2793
    %v4802 = vpack.c.b16 %v2802, %v2794
    %v4803 = vpack.c.b16 %v2803, %v2795
    %v4804 = vpack.c.b16 %v2804, %v2796
    %v4805 = vpack.c.b16 %v2805, %v2797
    %v4806 = vpack.c.b16 %v2806, %v2798
    %v4807 = vpack.c.b16 %v2807, %v2799
    %v4808 = vpack.c.b16 %v2808, %v2800
    %v4809 = vpack.c.b16 %v2817, %v2809
    %v4810 = vpack.c.b16 %v2818, %v2810
    %v4811 = vpack.c.b16 %v2819, %v2811
    %v4812 = vpack.c.b16 %v2820, %v2812
    %v4813 = vpack.c.b16 %v2821, %v2813
    %v4814 = vpack.c.b16 %v2822, %v2814
    %v4815 = vpack.c.b16 %v2823, %v2815
    %v4816 = vpack.c.b16 %v2824, %v2816
    %v4817 = vpack.c.b16 %v2833, %v2825
    %v4818 = vpack.c.b16 %v2834, %v2826
    %v4819 = vpack.c.b16 %v2835, %v2827
    %v4820 = vpack.c.b16 %v2836, %v2828
    %v4821 = vpack.c.b16 %v2837, %v2829
    %v4822 = vpack.c.b16 %v2838, %v2830
    %v4823 = vpack.c.b16 %v2839, %v2831
    %v4824 = vpack.c.b16 %v2840, %v2832
    %v4825 = vpack.c.b16 %v2849, %v2841
    %v4826 = vpack.c.b16 %v2850, %v2842
    %v4827 = vpack.c.b16 %v2851, %v2843
    %v4828 = vpack.c.b16 %v2852, %v2844
    %v4829 = vpack.c.b16 %v2853, %v2845
    %v4830 = vpack.c.b16 %v2854, %v2846
    %v4831 = vpack.c.b16 %v2855, %v2847
    %v4832 = vpack.c.b16 %v2856, %v2848
    %v4833 = vpack.c.b16 %v2865, %v2857
    %v4834 = vpack.c.b16 %v2866, %v2858
    %v4835 = vpack.c.b16 %v2867, %v2859
    %v4836 = vpack.c.b16 %v2868, %v2860
    %v4837 = vpack.c.b16 %v2869, %v2861
    %v4838 = vpack.c.b16 %v2870, %v2862
    %v4839 = vpack.c.b16 %v2871, %v2863
    %v4840 = vpack.c.b16 %v2872, %v2864
    %v4841 = vpack.c.b16 %v2881, %v2873
    %v4842 = vpack.c.b16 %v2882, %v2874
    %v4843 = vpack.c.b16 %v2883, %v2875
    %v4844 = vpack.c.b16 %v2884, %v2876
    %v4845 = vpack.c.b16 %v2885, %v2877
    %v4846 = vpack.c.b16 %v2886, %v2878
    %v4847 = vpack.c.b16 %v2887, %v2879
    %v4848 = vpack.c.b16 %v2888, %v2880
    %v4849 = vpack.c.b16 %v2897, %v2889
    %v4850 = vpack.c.b16 %v2898, %v2890
    %v4851 = vpack.c.b16 %v2899, %v2891
    %v4852 = vpack.c.b16 %v2900, %v2892
    %v4853 = vpack.c.b16 %v2901, %v2893
    %v4854 = vpack.c.b16 %v2902, %v2894
    %v4855 = vpack.c.b16 %v2903, %v2895
    %v4856 = vpack.c.b16 %v2904, %v2896
    %v4857 = vpack.c.b16 %v2913, %v2905
    %v4858 = vpack.c.b16 %v2914, %v2906
    %v4859 = vpack.c.b16 %v2915, %v2907
    %v4860 = vpack.c.b16 %v2916, %v2908
    %v4861 = vpack.c.b16 %v2917, %v2909
    %v4862 = vpack.c.b16 %v2918, %v2910
    %v4863 = vpack.c.b16 %v2919, %v2911
    %v4864 = vpack.c.b16 %v2920, %v2912
    %v4865 = vpack.c.b16 %v2929, %v2921
    %v4866 = vpack.c.b16 %v2930, %v2922
    %v4867 = vpack.c.b16 %v2931, %v2923
    %v4868 = vpack.c.b16 %v2932, %v2924
    %v4869 = vpack.c.b16 %v2933, %v2925
    %v4870 = vpack.c.b16 %v2934, %v2926
    %v4871 = vpack.c.b16 %v2935, %v2927
    %v4872 = vpack.c.b16 %v2936, %v2928
    %v4873 = vpack.c.b16 %v2945, %v2937
    %v4874 = vpack.c.b16 %v2946, %v2938
    %v4875 = vpack.c.b16 %v2947, %v2939
    %v4876 = vpack.c.b16 %v2948, %v2940
    %v4877 = vpack.c.b16 %v2949, %v2941
    %v4878 = vpack.c.b16 %v2950, %v2942
    %v4879 = vpack.c.b16 %v2951, %v2943
    %v4880 = vpack.c.b16 %v2952, %v2944
    %v4881 = vpack.c.b16 %v2961, %v2953
    %v4882 = vpack.c.b16 %v2962, %v2954
    %v4883 = vpack.c.b16 %v2963, %v2955
    %v4884 = vpack.c.b16 %v2964, %v2956
    %v4885 = vpack.c.b16 %v2965, %v2957
    %v4886 = vpack.c.b16 %v2966, %v2958
    %v4887 = vpack.c.b16 %v2967, %v2959
    %v4888 = vpack.c.b16 %v2968, %v2960
    %v4889 = vpack.c.b16 %v2977, %v2969
    %v4890 = vpack.c.b16 %v2978, %v2970
    %v4891 = vpack.c.b16 %v2979, %v2971
    %v4892 = vpack.c.b16 %v2980, %v2972
    %v4893 = vpack.c.b16 %v2981, %v2973
    %v4894 = vpack.c.b16 %v2982, %v2974
    %v4895 = vpack.c.b16 %v2983, %v2975
    %v4896 = vpack.c.b16 %v2984, %v2976
    %v4897 = vpack.c.b16 %v2993, %v2985
    %v4898 = vpack.c.b16 %v2994, %v2986
    %v4899 = vpack.c.b16 %v2995, %v2987
    %v4900 = vpack.c.b16 %v2996, %v2988
    %v4901 = vpack.c.b16 %v2997, %v2989
    %v4902 = vpack.c.b16 %v2998, %v2990
    %v4903 = vpack.c.b16 %v2999, %v2991
    %v4904 = vpack.c.b16 %v3000, %v2992
    %v4905 = vpack.c.b16 %v3009, %v3001
    %v4906 = vpack.c.b16 %v3010, %v3002
    %v4907 = vpack.c.b16 %v3011, %v3003
    %v4908 = vpack.c.b16 %v3012, %v3004
    %v4909 = vpack.c.b16 %v3013, %v3005
    %v4910 = vpack.c.b16 %v3014, %v3006
    %v4911 = vpack.c.b16 %v3015, %v3007
    %v4912 = vpack.c.b16 %v3016, %v3008
    %v4913 = vpack.c.b16 %v3025, %v3017
    %v4914 = vpack.c.b16 %v3026, %v3018
    %v4915 = vpack.c.b16 %v3027, %v3019
    %v4916 = vpack.c.b16 %v3028, %v3020
    %v4917 = vpack.c.b16 %v3029, %v3021
    %v4918 = vpack.c.b16 %v3030, %v3022
    %v4919 = vpack.c.b16 %v3031, %v3023
    %v4920 = vpack.c.b16 %v3032, %v3024
    %v4921 = vpack.c.b16 %v3041, %v3033
    %v4922 = vpack.c.b16 %v3042, %v3034
    %v4923 = vpack.c.b16 %v3043, %v3035
    %v4924 = vpack.c.b16 %v3044, %v3036
    %v4925 = vpack.c.b16 %v3045, %v3037
    %v4926 = vpack.c.b16 %v3046, %v3038
    %v4927 = vpack.c.b16 %v3047, %v3039
    %v4928 = vpack.c.b16 %v3048, %v3040
    %v4929 = vpack.c.b16 %v3057, %v3049
    %v4930 = vpack.c.b16 %v3058, %v3050
    %v4931 = vpack.c.b16 %v3059, %v3051
    %v4932 = vpack.c.b16 %v3060, %v3052
    %v4933 = vpack.c.b16 %v3061, %v3053
    %v4934 = vpack.c.b16 %v3062, %v3054
    %v4935 = vpack.c.b16 %v3063, %v3055
    %v4936 = vpack.c.b16 %v3064, %v3056
    %v4937 = vpack.c.b16 %v3073, %v3065
    %v4938 = vpack.c.b16 %v3074, %v3066
    %v4939 = vpack.c.b16 %v3075, %v3067
    %v4940 = vpack.c.b16 %v3076, %v3068
    %v4941 = vpack.c.b16 %v3077, %v3069
    %v4942 = vpack.c.b16 %v3078, %v3070
    %v4943 = vpack.c.b16 %v3079, %v3071
    %v4944 = vpack.c.b16 %v3080, %v3072
    %v4945 = vpack.c.b16 %v3089, %v3081
    %v4946 = vpack.c.b16 %v3090, %v3082
    %v4947 = vpack.c.b16 %v3091, %v3083
    %v4948 = vpack.c.b16 %v3092, %v3084
    %v4949 = vpack.c.b16 %v3093, %v3085
    %v4950 = vpack.c.b16 %v3094, %v3086
    %v4951 = vpack.c.b16 %v3095, %v3087
    %v4952 = vpack.c.b16 %v3096, %v3088
    %v4953 = vpack.c.b16 %v3105, %v3097
    %v4954 = vpack.c.b16 %v3106, %v3098
    %v4955 = vpack.c.b16 %v3107, %v3099
    %v4956 = vpack.c.b16 %v3108, %v3100
    %v4957 = vpack.c.b16 %v3109, %v3101
    %v4958 = vpack.c.b16 %v3110, %v3102
    %v4959 = vpack.c.b16 %v3111, %v3103
    %v4960 = vpack.c.b16 %v3112, %v3104
    %v4961 = vpack.c.b16 %v3121, %v3113
    %v4962 = vpack.c.b16 %v3122, %v3114
    %v4963 = vpack.c.b16 %v3123, %v3115
    %v4964 = vpack.c.b16 %v3124, %v3116
    %v4965 = vpack.c.b16 %v3125, %v3117
    %v4966 = vpack.c.b16 %v3126, %v3118
    %v4967 = vpack.c.b16 %v3127, %v3119
    %v4968 = vpack.c.b16 %v3128, %v3120
    %v4969 = vpack.c.b16 %v3137, %v3129
    %v4970 = vpack.c.b16 %v3138, %v3130
    %v4971 = vpack.c.b16 %v3139, %v3131
    %v4972 = vpack.c.b16 %v3140, %v3132
    %v4973 = vpack.c.b16 %v3141, %v3133
    %v4974 = vpack.c.b16 %v3142, %v3134
    %v4975 = vpack.c.b16 %v3143, %v3135
    %v4976 = vpack.c.b16 %v3144, %v3136
    %v4977 = vpack.c.b16 %v3153, %v3145
    %v4978 = vpack.c.b16 %v3154, %v3146
    %v4979 = vpack.c.b16 %v3155, %v3147
    %v4980 = vpack.c.b16 %v3156, %v3148
    %v4981 = vpack.c.b16 %v3157, %v3149
    %v4982 = vpack.c.b16 %v3158, %v3150
    %v4983 = vpack.c.b16 %v3159, %v3151
    %v4984 = vpack.c.b16 %v3160, %v3152
    %v4985 = vpack.c.b16 %v3169, %v3161
    %v4986 = vpack.c.b16 %v3170, %v3162
    %v4987 = vpack.c.b16 %v3171, %v3163
    %v4988 = vpack.c.b16 %v3172, %v3164
    %v4989 = vpack.c.b16 %v3173, %v3165
    %v4990 = vpack.c.b16 %v3174, %v3166
    %v4991 = vpack.c.b16 %v3175, %v3167
    %v4992 = vpack.c.b16 %v3176, %v3168
    %v4993 = vpack.c.b16 %v3185, %v3177
    %v4994 = vpack.c.b16 %v3186, %v3178
    %v4995 = vpack.c.b16 %v3187, %v3179
    %v4996 = vpack.c.b16 %v3188, %v3180
    %v4997 = vpack.c.b16 %v3189, %v3181
    %v4998 = vpack.c.b16 %v3190, %v3182
    %v4999 = vpack.c.b16 %v3191, %v3183
    %v5000 = vpack.c.b16 %v3192, %v3184
    %v5001 = vpack.c.b16 %v3201, %v3193
    %v5002 = vpack.c.b16 %v3202, %v3194
    %v5003 = vpack.c.b16 %v3203, %v3195
    %v5004 = vpack.c.b16 %v3204, %v3196
    %v5005 = vpack.c.b16 %v3205, %v3197
    %v5006 = vpack.c.b16 %v3206, %v3198
    %v5007 = vpack.c.b16 %v3207, %v3199
    %v5008 = vpack.c.b16 %v3208, %v3200
    %v5009 = vpack.c.b16 %v3217, %v3209
    %v5010 = vpack.c.b16 %v3218, %v3210
    %v5011 = vpack.c.b16 %v3219, %v3211
    %v5012 = vpack.c.b16 %v3220, %v3212
    %v5013 = vpack.c.b16 %v3221, %v3213
    %v5014 = vpack.c.b16 %v3222, %v3214
    %v5015 = vpack.c.b16 %v3223, %v3215
    %v5016 = vpack.c.b16 %v3224, %v3216
    %v5017 = vpack.c.b16 %v3233, %v3225
    %v5018 = vpack.c.b16 %v3234, %v3226
    %v5019 = vpack.c.b16 %v3235, %v3227
    %v5020 = vpack.c.b16 %v3236, %v3228
    %v5021 = vpack.c.b16 %v3237, %v3229
    %v5022 = vpack.c.b16 %v3238, %v3230
    %v5023 = vpack.c.b16 %v3239, %v3231
    %v5024 = vpack.c.b16 %v3240, %v3232
    %v5025 = vpack.c.b16 %v3249, %v3241
    %v5026 = vpack.c.b16 %v3250, %v3242
    %v5027 = vpack.c.b16 %v3251, %v3243
    %v5028 = vpack.c.b16 %v3252, %v3244
    %v5029 = vpack.c.b16 %v3253, %v3245
    %v5030 = vpack.c.b16 %v3254, %v3246
    %v5031 = vpack.c.b16 %v3255, %v3247
    %v5032 = vpack.c.b16 %v3256, %v3248
    %v5033 = vpack.c.b16 %v3265, %v3257
    %v5034 = vpack.c.b16 %v3266, %v3258
    %v5035 = vpack.c.b16 %v3267, %v3259
    %v5036 = vpack.c.b16 %v3268, %v3260
    %v5037 = vpack.c.b16 %v3269, %v3261
    %v5038 = vpack.c.b16 %v3270, %v3262
    %v5039 = vpack.c.b16 %v3271, %v3263
    %v5040 = vpack.c.b16 %v3272, %v3264
    %v5041 = vpack.c.b16 %v3281, %v3273
    %v5042 = vpack.c.b16 %v3282, %v3274
    %v5043 = vpack.c.b16 %v3283, %v3275
    %v5044 = vpack.c.b16 %v3284, %v3276
    %v5045 = vpack.c.b16 %v3285, %v3277
    %v5046 = vpack.c.b16 %v3286, %v3278
    %v5047 = vpack.c.b16 %v3287, %v3279
    %v5048 = vpack.c.b16 %v3288, %v3280
    %v5049 = vpack.c.b16 %v3297, %v3289
    %v5050 = vpack.c.b16 %v3298, %v3290
    %v5051 = vpack.c.b16 %v3299, %v3291
    %v5052 = vpack.c.b16 %v3300, %v3292
    %v5053 = vpack.c.b16 %v3301, %v3293
    %v5054 = vpack.c.b16 %v3302, %v3294
    %v5055 = vpack.c.b16 %v3303, %v3295
    %v5056 = vpack.c.b16 %v3304, %v3296
    %v5057 = vpack.c.b16 %v3313, %v3305
    %v5058 = vpack.c.b16 %v3314, %v3306
    %v5059 = vpack.c.b16 %v3315, %v3307
    %v5060 = vpack.c.b16 %v3316, %v3308
    %v5061 = vpack.c.b16 %v3317, %v3309
    %v5062 = vpack.c.b16 %v3318, %v3310
    %v5063 = vpack.c.b16 %v3319, %v3311
    %v5064 = vpack.c.b16 %v3320, %v3312
    %v5065 = vpack.c.b16 %v3329, %v3321
    %v5066 = vpack.c.b16 %v3330, %v3322
    %v5067 = vpack.c.b16 %v3331, %v3323
    %v5068 = vpack.c.b16 %v3332, %v3324
    %v5069 = vpack.c.b16 %v3333, %v3325
    %v5070 = vpack.c.b16 %v3334, %v3326
    %v5071 = vpack.c.b16 %v3335, %v3327
    %v5072 = vpack.c.b16 %v3336, %v3328
    %v5073 = vpack.c.b16 %v3345, %v3337
    %v5074 = vpack.c.b16 %v3346, %v3338
    %v5075 = vpack.c.b16 %v3347, %v3339
    %v5076 = vpack.c.b16 %v3348, %v3340
    %v5077 = vpack.c.b16 %v3349, %v3341
    %v5078 = vpack.c.b16 %v3350, %v3342
    %v5079 = vpack.c.b16 %v3351, %v3343
    %v5080 = vpack.c.b16 %v3352, %v3344
    %v5081 = vpack.c.b16 %v3361, %v3353
    %v5082 = vpack.c.b16 %v3362, %v3354
    %v5083 = vpack.c.b16 %v3363, %v3355
    %v5084 = vpack.c.b16 %v3364, %v3356
    %v5085 = vpack.c.b16 %v3365, %v3357
    %v5086 = vpack.c.b16 %v3366, %v3358
    %v5087 = vpack.c.b16 %v3367, %v3359
    %v5088 = vpack.c.b16 %v3368, %v3360
    %v5089 = vpack.c.b16 %v3377, %v3369
    %v5090 = vpack.c.b16 %v3378, %v3370
    %v5091 = vpack.c.b16 %v3379, %v3371
    %v5092 = vpack.c.b16 %v3380, %v3372
    %v5093 = vpack.c.b16 %v3381, %v3373
    %v5094 = vpack.c.b16 %v3382, %v3374
    %v5095 = vpack.c.b16 %v3383, %v3375
    %v5096 = vpack.c.b16 %v3384, %v3376
    %v5097 = vpack.c.b16 %v3393, %v3385
    %v5098 = vpack.c.b16 %v3394, %v3386
    %v5099 = vpack.c.b16 %v3395, %v3387
    %v5100 = vpack.c.b16 %v3396, %v3388
    %v5101 = vpack.c.b16 %v3397, %v3389
    %v5102 = vpack.c.b16 %v3398, %v3390
    %v5103 = vpack.c.b16 %v3399, %v3391
    %v5104 = vpack.c.b16 %v3400, %v3392
    %v5105 = vpack.c.b16 %v3409, %v3401
    %v5106 = vpack.c.b16 %v3410, %v3402
    %v5107 = vpack.c.b16 %v3411, %v3403
    %v5108 = vpack.c.b16 %v3412, %v3404
    %v5109 = vpack.c.b16 %v3413, %v3405
    %v5110 = vpack.c.b16 %v3414, %v3406
    %v5111 = vpack.c.b16 %v3415, %v3407
    %v5112 = vpack.c.b16 %v3416, %v3408
    %v5113 = vpack.c.b16 %v3425, %v3417
    %v5114 = vpack.c.b16 %v3426, %v3418
    %v5115 = vpack.c.b16 %v3427, %v3419
    %v5116 = vpack.c.b16 %v3428, %v3420
    %v5117 = vpack.c.b16 %v3429, %v3421
    %v5118 = vpack.c.b16 %v3430, %v3422
    %v5119 = vpack.c.b16 %v3431, %v3423
    %v5120 = vpack.c.b16 %v3432, %v3424
    %v5121 = vpack.c.b16 %v3441, %v3433
    %v5122 = vpack.c.b16 %v3442, %v3434
    %v5123 = vpack.c.b16 %v3443, %v3435
    %v5124 = vpack.c.b16 %v3444, %v3436
    %v5125 = vpack.c.b16 %v3445, %v3437
    %v5126 = vpack.c.b16 %v3446, %v3438
    %v5127 = vpack.c.b16 %v3447, %v3439
    %v5128 = vpack.c.b16 %v3448, %v3440
    %v5129 = vpack.c.b16 %v3457, %v3449
    %v5130 = vpack.c.b16 %v3458, %v3450
    %v5131 = vpack.c.b16 %v3459, %v3451
    %v5132 = vpack.c.b16 %v3460, %v3452
    %v5133 = vpack.c.b16 %v3461, %v3453
    %v5134 = vpack.c.b16 %v3462, %v3454
    %v5135 = vpack.c.b16 %v3463, %v3455
    %v5136 = vpack.c.b16 %v3464, %v3456
    %v5137 = vpack.c.b16 %v3473, %v3465
    %v5138 = vpack.c.b16 %v3474, %v3466
    %v5139 = vpack.c.b16 %v3475, %v3467
    %v5140 = vpack.c.b16 %v3476, %v3468
    %v5141 = vpack.c.b16 %v3477, %v3469
    %v5142 = vpack.c.b16 %v3478, %v3470
    %v5143 = vpack.c.b16 %v3479, %v3471
    %v5144 = vpack.c.b16 %v3480, %v3472
    %v5145 = vpack.c.b16 %v3489, %v3481
    %v5146 = vpack.c.b16 %v3490, %v3482
    %v5147 = vpack.c.b16 %v3491, %v3483
    %v5148 = vpack.c.b16 %v3492, %v3484
    %v5149 = vpack.c.b16 %v3493, %v3485
    %v5150 = vpack.c.b16 %v3494, %v3486
    %v5151 = vpack.c.b16 %v3495, %v3487
    %v5152 = vpack.c.b16 %v3496, %v3488
    %v5153 = vpack.c.b16 %v3505, %v3497
    %v5154 = vpack.c.b16 %v3506, %v3498
    %v5155 = vpack.c.b16 %v3507, %v3499
    %v5156 = vpack.c.b16 %v3508, %v3500
    %v5157 = vpack.c.b16 %v3509, %v3501
    %v5158 = vpack.c.b16 %v3510, %v3502
    %v5159 = vpack.c.b16 %v3511, %v3503
    %v5160 = vpack.c.b16 %v3512, %v3504
    %v5161 = vpack.c.b16 %v3521, %v3513
    %v5162 = vpack.c.b16 %v3522, %v3514
    %v5163 = vpack.c.b16 %v3523, %v3515
    %v5164 = vpack.c.b16 %v3524, %v3516
    %v5165 = vpack.c.b16 %v3525, %v3517
    %v5166 = vpack.c.b16 %v3526, %v3518
    %v5167 = vpack.c.b16 %v3527, %v3519
    %v5168 = vpack.c.b16 %v3528, %v3520
    %v5169 = vpack.c.b16 %v3537, %v3529
    %v5170 = vpack.c.b16 %v3538, %v3530
    %v5171 = vpack.c.b16 %v3539, %v3531
    %v5172 = vpack.c.b16 %v3540, %v3532
    %v5173 = vpack.c.b16 %v3541, %v3533
    %v5174 = vpack.c.b16 %v3542, %v3534
    %v5175 = vpack.c.b16 %v3543, %v3535
    %v5176 = vpack.c.b16 %v3544, %v3536
    %v5177 = vpack.c.b16 %v3553, %v3545
    %v5178 = vpack.c.b16 %v3554, %v3546
    %v5179 = vpack.c.b16 %v3555, %v3547
    %v5180 = vpack.c.b16 %v3556, %v3548
    %v5181 = vpack.c.b16 %v3557, %v3549
    %v5182 = vpack.c.b16 %v3558, %v3550
    %v5183 = vpack.c.b16 %v3559, %v3551
    %v5184 = vpack.c.b16 %v3560, %v3552
    %v5185 = vpack.c.b16 %v3569, %v3561
    %v5186 = vpack.c.b16 %v3570, %v3562
    %v5187 = vpack.c.b16 %v3571, %v3563
    %v5188 = vpack.c.b16 %v3572, %v3564
    %v5189 = vpack.c.b16 %v3573, %v3565
    %v5190 = vpack.c.b16 %v3574, %v3566
    %v5191 = vpack.c.b16 %v3575, %v3567
    %v5192 = vpack.c.b16 %v3576, %v3568
    %v5193 = vpack.c.b16 %v3585, %v3577
    %v5194 = vpack.c.b16 %v3586, %v3578
    %v5195 = vpack.c.b16 %v3587, %v3579
    %v5196 = vpack.c.b16 %v3588, %v3580
    %v5197 = vpack.c.b16 %v3589, %v3581
    %v5198 = vpack.c.b16 %v3590, %v3582
    %v5199 = vpack.c.b16 %v3591, %v3583
    %v5200 = vpack.c.b16 %v3592, %v3584
    %v5201 = vpack.c.b16 %v3601, %v3593
    %v5202 = vpack.c.b16 %v3602, %v3594
    %v5203 = vpack.c.b16 %v3603, %v3595
    %v5204 = vpack.c.b16 %v3604, %v3596
    %v5205 = vpack.c.b16 %v3605, %v3597
    %v5206 = vpack.c.b16 %v3606, %v3598
    %v5207 = vpack.c.b16 %v3607, %v3599
    %v5208 = vpack.c.b16 %v3608, %v3600
    %v5209 = vpack.c.b16 %v3617, %v3609
    %v5210 = vpack.c.b16 %v3618, %v3610
    %v5211 = vpack.c.b16 %v3619, %v3611
    %v5212 = vpack.c.b16 %v3620, %v3612
    %v5213 = vpack.c.b16 %v3621, %v3613
    %v5214 = vpack.c.b16 %v3622, %v3614
    %v5215 = vpack.c.b16 %v3623, %v3615
    %v5216 = vpack.c.b16 %v3624, %v3616
    %v5217 = vpack.c.b16 %v3633, %v3625
    %v5218 = vpack.c.b16 %v3634, %v3626
    %v5219 = vpack.c.b16 %v3635, %v3627
    %v5220 = vpack.c.b16 %v3636, %v3628
    %v5221 = vpack.c.b16 %v3637, %v3629
    %v5222 = vpack.c.b16 %v3638, %v3630
    %v5223 = vpack.c.b16 %v3639, %v3631
    %v5224 = vpack.c.b16 %v3640, %v3632
    %v5225 = vpack.c.b16 %v3649, %v3641
    %v5226 = vpack.c.b16 %v3650, %v3642
    %v5227 = vpack.c.b16 %v3651, %v3643
    %v5228 = vpack.c.b16 %v3652, %v3644
    %v5229 = vpack.c.b16 %v3653, %v3645
    %v5230 = vpack.c.b16 %v3654, %v3646
    %v5231 = vpack.c.b16 %v3655, %v3647
    %v5232 = vpack.c.b16 %v3656, %v3648
    %v5233 = vpack.c.b16 %v3665, %v3657
    %v5234 = vpack.c.b16 %v3666, %v3658
    %v5235 = vpack.c.b16 %v3667, %v3659
    %v5236 = vpack.c.b16 %v3668, %v3660
    %v5237 = vpack.c.b16 %v3669, %v3661
    %v5238 = vpack.c.b16 %v3670, %v3662
    %v5239 = vpack.c.b16 %v3671, %v3663
    %v5240 = vpack.c.b16 %v3672, %v3664
    %v5241 = vpack.c.b16 %v3681, %v3673
    %v5242 = vpack.c.b16 %v3682, %v3674
    %v5243 = vpack.c.b16 %v3683, %v3675
    %v5244 = vpack.c.b16 %v3684, %v3676
    %v5245 = vpack.c.b16 %v3685, %v3677
    %v5246 = vpack.c.b16 %v3686, %v3678
    %v5247 = vpack.c.b16 %v3687, %v3679
    %v5248 = vpack.c.b16 %v3688, %v3680
    %v5249 = vpack.c.b16 %v3697, %v3689
    %v5250 = vpack.c.b16 %v3698, %v3690
    %v5251 = vpack.c.b16 %v3699, %v3691
    %v5252 = vpack.c.b16 %v3700, %v3692
    %v5253 = vpack.c.b16 %v3701, %v3693
    %v5254 = vpack.c.b16 %v3702, %v3694
    %v5255 = vpack.c.b16 %v3703, %v3695
    %v5256 = vpack.c.b16 %v3704, %v3696
    %v5257 = vpack.c.b16 %v3713, %v3705
    %v5258 = vpack.c.b16 %v3714, %v3706
    %v5259 = vpack.c.b16 %v3715, %v3707
    %v5260 = vpack.c.b16 %v3716, %v3708
    %v5261 = vpack.c.b16 %v3717, %v3709
    %v5262 = vpack.c.b16 %v3718, %v3710
    %v5263 = vpack.c.b16 %v3719, %v3711
    %v5264 = vpack.c.b16 %v3720, %v3712
    %v5265 = vpack.c.b16 %v3729, %v3721
    %v5266 = vpack.c.b16 %v3730, %v3722
    %v5267 = vpack.c.b16 %v3731, %v3723
    %v5268 = vpack.c.b16 %v3732, %v3724
    %v5269 = vpack.c.b16 %v3733, %v3725
    %v5270 = vpack.c.b16 %v3734, %v3726
    %v5271 = vpack.c.b16 %v3735, %v3727
    %v5272 = vpack.c.b16 %v3736, %v3728
    %v5273 = vpack.c.b16 %v3745, %v3737
    %v5274 = vpack.c.b16 %v3746, %v3738
    %v5275 = vpack.c.b16 %v3747, %v3739
    %v5276 = vpack.c.b16 %v3748, %v3740
    %v5277 = vpack.c.b16 %v3749, %v3741
    %v5278 = vpack.c.b16 %v3750, %v3742
    %v5279 = vpack.c.b16 %v3751, %v3743
    %v5280 = vpack.c.b16 %v3752, %v3744
    %v5281 = vpack.c.b16 %v3761, %v3753
    %v5282 = vpack.c.b16 %v3762, %v3754
    %v5283 = vpack.c.b16 %v3763, %v3755
    %v5284 = vpack.c.b16 %v3764, %v3756
    %v5285 = vpack.c.b16 %v3765, %v3757
    %v5286 = vpack.c.b16 %v3766, %v3758
    %v5287 = vpack.c.b16 %v3767, %v3759
    %v5288 = vpack.c.b16 %v3768, %v3760
    %v5289 = vpack.c.b16 %v3777, %v3769
    %v5290 = vpack.c.b16 %v3778, %v3770
    %v5291 = vpack.c.b16 %v3779, %v3771
    %v5292 = vpack.c.b16 %v3780, %v3772
    %v5293 = vpack.c.b16 %v3781, %v3773
    %v5294 = vpack.c.b16 %v3782, %v3774
    %v5295 = vpack.c.b16 %v3783, %v3775
    %v5296 = vpack.c.b16 %v3784, %v3776
    %v5297 = vpack.c.b16 %v3793, %v3785
    %v5298 = vpack.c.b16 %v3794, %v3786
    %v5299 = vpack.c.b16 %v3795, %v3787
    %v5300 = vpack.c.b16 %v3796, %v3788
    %v5301 = vpack.c.b16 %v3797, %v3789
    %v5302 = vpack.c.b16 %v3798, %v3790
    %v5303 = vpack.c.b16 %v3799, %v3791
    %v5304 = vpack.c.b16 %v3800, %v3792
    %v5305 = vpack.c.b16 %v3809, %v3801
    %v5306 = vpack.c.b16 %v3810, %v3802
    %v5307 = vpack.c.b16 %v3811, %v3803
    %v5308 = vpack.c.b16 %v3812, %v3804
    %v5309 = vpack.c.b16 %v3813, %v3805
    %v5310 = vpack.c.b16 %v3814, %v3806
    %v5311 = vpack.c.b16 %v3815, %v3807
    %v5312 = vpack.c.b16 %v3816, %v3808
    %v5313 = vpack.c.b16 %v3825, %v3817
    %v5314 = vpack.c.b16 %v3826, %v3818
    %v5315 = vpack.c.b16 %v3827, %v3819
    %v5316 = vpack.c.b16 %v3828, %v3820
    %v5317 = vpack.c.b16 %v3829, %v3821
    %v5318 = vpack.c.b16 %v3830, %v3822
    %v5319 = vpack.c.b16 %v3831, %v3823
    %v5320 = vpack.c.b16 %v3832, %v3824
    %v5321 = vpack.c.b16 %v3841, %v3833
    %v5322 = vpack.c.b16 %v3842, %v3834
    %v5323 = vpack.c.b16 %v3843, %v3835
    %v5324 = vpack.c.b16 %v3844, %v3836
    %v5325 = vpack.c.b16 %v3845, %v3837
    %v5326 = vpack.c.b16 %v3846, %v3838
    %v5327 = vpack.c.b16 %v3847, %v3839
    %v5328 = vpack.c.b16 %v3848, %v3840
    %v5329 = vpack.c.b16 %v3857, %v3849
    %v5330 = vpack.c.b16 %v3858, %v3850
    %v5331 = vpack.c.b16 %v3859, %v3851
    %v5332 = vpack.c.b16 %v3860, %v3852
    %v5333 = vpack.c.b16 %v3861, %v3853
    %v5334 = vpack.c.b16 %v3862, %v3854
    %v5335 = vpack.c.b16 %v3863, %v3855
    %v5336 = vpack.c.b16 %v3864, %v3856
    %v5337 = vpack.c.b16 %v3873, %v3865
    %v5338 = vpack.c.b16 %v3874, %v3866
    %v5339 = vpack.c.b16 %v3875, %v3867
    %v5340 = vpack.c.b16 %v3876, %v3868
    %v5341 = vpack.c.b16 %v3877, %v3869
    %v5342 = vpack.c.b16 %v3878, %v3870
    %v5343 = vpack.c.b16 %v3879, %v3871
    %v5344 = vpack.c.b16 %v3880, %v3872
    %v5345 = vpack.c.b16 %v3889, %v3881
    %v5346 = vpack.c.b16 %v3890, %v3882
    %v5347 = vpack.c.b16 %v3891, %v3883
    %v5348 = vpack.c.b16 %v3892, %v3884
    %v5349 = vpack.c.b16 %v3893, %v3885
    %v5350 = vpack.c.b16 %v3894, %v3886
    %v5351 = vpack.c.b16 %v3895, %v3887
    %v5352 = vpack.c.b16 %v3896, %v3888
    %v5353 = vpack.c.b16 %v3905, %v3897
    %v5354 = vpack.c.b16 %v3906, %v3898
    %v5355 = vpack.c.b16 %v3907, %v3899
    %v5356 = vpack.c.b16 %v3908, %v3900
    %v5357 = vpack.c.b16 %v3909, %v3901
    %v5358 = vpack.c.b16 %v3910, %v3902
    %v5359 = vpack.c.b16 %v3911, %v3903
    %v5360 = vpack.c.b16 %v3912, %v3904
    %v5361 = vpack.c.b16 %v3921, %v3913
    %v5362 = vpack.c.b16 %v3922, %v3914
    %v5363 = vpack.c.b16 %v3923, %v3915
    %v5364 = vpack.c.b16 %v3924, %v3916
    %v5365 = vpack.c.b16 %v3925, %v3917
    %v5366 = vpack.c.b16 %v3926, %v3918
    %v5367 = vpack.c.b16 %v3927, %v3919
    %v5368 = vpack.c.b16 %v3928, %v3920
    %v5369 = vpack.c.b16 %v3937, %v3929
    %v5370 = vpack.c.b16 %v3938, %v3930
    %v5371 = vpack.c.b16 %v3939, %v3931
    %v5372 = vpack.c.b16 %v3940, %v3932
    %v5373 = vpack.c.b16 %v3941, %v3933
    %v5374 = vpack.c.b16 %v3942, %v3934
    %v5375 = vpack.c.b16 %v3943, %v3935
    %v5376 = vpack.c.b16 %v3944, %v3936
    %v5377 = vpack.c.b16 %v3953, %v3945
    %v5378 = vpack.c.b16 %v3954, %v3946
    %v5379 = vpack.c.b16 %v3955, %v3947
    %v5380 = vpack.c.b16 %v3956, %v3948
    %v5381 = vpack.c.b16 %v3957, %v3949
    %v5382 = vpack.c.b16 %v3958, %v3950
    %v5383 = vpack.c.b16 %v3959, %v3951
    %v5384 = vpack.c.b16 %v3960, %v3952
    %v5385 = vpack.c.b16 %v3969, %v3961
    %v5386 = vpack.c.b16 %v3970, %v3962
    %v5387 = vpack.c.b16 %v3971, %v3963
    %v5388 = vpack.c.b16 %v3972, %v3964
    %v5389 = vpack.c.b16 %v3973, %v3965
    %v5390 = vpack.c.b16 %v3974, %v3966
    %v5391 = vpack.c.b16 %v3975, %v3967
    %v5392 = vpack.c.b16 %v3976, %v3968
    %v5393 = vpack.c.b16 %v3985, %v3977
    %v5394 = vpack.c.b16 %v3986, %v3978
    %v5395 = vpack.c.b16 %v3987, %v3979
    %v5396 = vpack.c.b16 %v3988, %v3980
    %v5397 = vpack.c.b16 %v3989, %v3981
    %v5398 = vpack.c.b16 %v3990, %v3982
    %v5399 = vpack.c.b16 %v3991, %v3983
    %v5400 = vpack.c.b16 %v3992, %v3984
    %v5401 = vpack.c.b16 %v4001, %v3993
    %v5402 = vpack.c.b16 %v4002, %v3994
    %v5403 = vpack.c.b16 %v4003, %v3995
    %v5404 = vpack.c.b16 %v4004, %v3996
    %v5405 = vpack.c.b16 %v4005, %v3997
    %v5406 = vpack.c.b16 %v4006, %v3998
    %v5407 = vpack.c.b16 %v4007, %v3999
    %v5408 = vpack.c.b16 %v4008, %v4000
    %v5409 = vpack.c.b16 %v4017, %v4009
    %v5410 = vpack.c.b16 %v4018, %v4010
    %v5411 = vpack.c.b16 %v4019, %v4011
    %v5412 = vpack.c.b16 %v4020, %v4012
    %v5413 = vpack.c.b16 %v4021, %v4013
    %v5414 = vpack.c.b16 %v4022, %v4014
    %v5415 = vpack.c.b16 %v4023, %v4015
    %v5416 = vpack.c.b16 %v4024, %v4016
    %v5417 = vpack.c.b16 %v4033, %v4025
    %v5418 = vpack.c.b16 %v4034, %v4026
    %v5419 = vpack.c.b16 %v4035, %v4027
    %v5420 = vpack.c.b16 %v4036, %v4028
    %v5421 = vpack.c.b16 %v4037, %v4029
    %v5422 = vpack.c.b16 %v4038, %v4030
    %v5423 = vpack.c.b16 %v4039, %v4031
    %v5424 = vpack.c.b16 %v4040, %v4032
    %v5425 = vpack.c.b16 %v4049, %v4041
    %v5426 = vpack.c.b16 %v4050, %v4042
    %v5427 = vpack.c.b16 %v4051, %v4043
    %v5428 = vpack.c.b16 %v4052, %v4044
    %v5429 = vpack.c.b16 %v4053, %v4045
    %v5430 = vpack.c.b16 %v4054, %v4046
    %v5431 = vpack.c.b16 %v4055, %v4047
    %v5432 = vpack.c.b16 %v4056, %v4048
    %v5433 = vpack.c.b16 %v4065, %v4057
    %v5434 = vpack.c.b16 %v4066, %v4058
    %v5435 = vpack.c.b16 %v4067, %v4059
    %v5436 = vpack.c.b16 %v4068, %v4060
    %v5437 = vpack.c.b16 %v4069, %v4061
    %v5438 = vpack.c.b16 %v4070, %v4062
    %v5439 = vpack.c.b16 %v4071, %v4063
    %v5440 = vpack.c.b16 %v4072, %v4064
    %v5441 = vpack.c.b16 %v4081, %v4073
    %v5442 = vpack.c.b16 %v4082, %v4074
    %v5443 = vpack.c.b16 %v4083, %v4075
    %v5444 = vpack.c.b16 %v4084, %v4076
    %v5445 = vpack.c.b16 %v4085, %v4077
    %v5446 = vpack.c.b16 %v4086, %v4078
    %v5447 = vpack.c.b16 %v4087, %v4079
    %v5448 = vpack.c.b16 %v4088, %v4080
    %v5449 = vpack.c.b16 %v4097, %v4089
    %v5450 = vpack.c.b16 %v4098, %v4090
    %v5451 = vpack.c.b16 %v4099, %v4091
    %v5452 = vpack.c.b16 %v4100, %v4092
    %v5453 = vpack.c.b16 %v4101, %v4093
    %v5454 = vpack.c.b16 %v4102, %v4094
    %v5455 = vpack.c.b16 %v4103, %v4095
    %v5456 = vpack.c.b16 %v4104, %v4096
    %v5457 = vpack.c.b16 %v4113, %v4105
    %v5458 = vpack.c.b16 %v4114, %v4106
    %v5459 = vpack.c.b16 %v4115, %v4107
    %v5460 = vpack.c.b16 %v4116, %v4108
    %v5461 = vpack.c.b16 %v4117, %v4109
    %v5462 = vpack.c.b16 %v4118, %v4110
    %v5463 = vpack.c.b16 %v4119, %v4111
    %v5464 = vpack.c.b16 %v4120, %v4112
    %v5465 = vpack.c.b16 %v4129, %v4121
    %v5466 = vpack.c.b16 %v4130, %v4122
    %v5467 = vpack.c.b16 %v4131, %v4123
    %v5468 = vpack.c.b16 %v4132, %v4124
    %v5469 = vpack.c.b16 %v4133, %v4125
    %v5470 = vpack.c.b16 %v4134, %v4126
    %v5471 = vpack.c.b16 %v4135, %v4127
    %v5472 = vpack.c.b16 %v4136, %v4128
    %v5473 = vpack.c.b16 %v4145, %v4137
    %v5474 = vpack.c.b16 %v4146, %v4138
    %v5475 = vpack.c.b16 %v4147, %v4139
    %v5476 = vpack.c.b16 %v4148, %v4140
    %v5477 = vpack.c.b16 %v4149, %v4141
    %v5478 = vpack.c.b16 %v4150, %v4142
    %v5479 = vpack.c.b16 %v4151, %v4143
    %v5480 = vpack.c.b16 %v4152, %v4144
    %v5481 = vpack.c.b16 %v4161, %v4153
    %v5482 = vpack.c.b16 %v4162, %v4154
    %v5483 = vpack.c.b16 %v4163, %v4155
    %v5484 = vpack.c.b16 %v4164, %v4156
    %v5485 = vpack.c.b16 %v4165, %v4157
    %v5486 = vpack.c.b16 %v4166, %v4158
    %v5487 = vpack.c.b16 %v4167, %v4159
    %v5488 = vpack.c.b16 %v4168, %v4160
    %v5489 = vpack.c.b16 %v4177, %v4169
    %v5490 = vpack.c.b16 %v4178, %v4170
    %v5491 = vpack.c.b16 %v4179, %v4171
    %v5492 = vpack.c.b16 %v4180, %v4172
    %v5493 = vpack.c.b16 %v4181, %v4173
    %v5494 = vpack.c.b16 %v4182, %v4174
    %v5495 = vpack.c.b16 %v4183, %v4175
    %v5496 = vpack.c.b16 %v4184, %v4176
    %v5497 = vpack.c.b16 %v4193, %v4185
    %v5498 = vpack.c.b16 %v4194, %v4186
    %v5499 = vpack.c.b16 %v4195, %v4187
    %v5500 = vpack.c.b16 %v4196, %v4188
    %v5501 = vpack.c.b16 %v4197, %v4189
    %v5502 = vpack.c.b16 %v4198, %v4190
    %v5503 = vpack.c.b16 %v4199, %v4191
    %v5504 = vpack.c.b16 %v4200, %v4192
    %v5505 = vpack.c.b16 %v4209, %v4201
    %v5506 = vpack.c.b16 %v4210, %v4202
    %v5507 = vpack.c.b16 %v4211, %v4203
    %v5508 = vpack.c.b16 %v4212, %v4204
    %v5509 = vpack.c.b16 %v4213, %v4205
    %v5510 = vpack.c.b16 %v4214, %v4206
    %v5511 = vpack.c.b16 %v4215, %v4207
    %v5512 = vpack.c.b16 %v4216, %v4208
    %v5513 = vpack.c.b16 %v4225, %v4217
    %v5514 = vpack.c.b16 %v4226, %v4218
    %v5515 = vpack.c.b16 %v4227, %v4219
    %v5516 = vpack.c.b16 %v4228, %v4220
    %v5517 = vpack.c.b16 %v4229, %v4221
    %v5518 = vpack.c.b16 %v4230, %v4222
    %v5519 = vpack.c.b16 %v4231, %v4223
    %v5520 = vpack.c.b16 %v4232, %v4224
    %v5521 = vpack.c.b16 %v4241, %v4233
    %v5522 = vpack.c.b16 %v4242, %v4234
    %v5523 = vpack.c.b16 %v4243, %v4235
    %v5524 = vpack.c.b16 %v4244, %v4236
    %v5525 = vpack.c.b16 %v4245, %v4237
    %v5526 = vpack.c.b16 %v4246, %v4238
    %v5527 = vpack.c.b16 %v4247, %v4239
    %v5528 = vpack.c.b16 %v4248, %v4240
    %v5529 = vpack.c.b16 %v4257, %v4249
    %v5530 = vpack.c.b16 %v4258, %v4250
    %v5531 = vpack.c.b16 %v4259, %v4251
    %v5532 = vpack.c.b16 %v4260, %v4252
    %v5533 = vpack.c.b16 %v4261, %v4253
    %v5534 = vpack.c.b16 %v4262, %v4254
    %v5535 = vpack.c.b16 %v4263, %v4255
    %v5536 = vpack.c.b16 %v4264, %v4256
    %v5537 = vpack.c.b16 %v4273, %v4265
    %v5538 = vpack.c.b16 %v4274, %v4266
    %v5539 = vpack.c.b16 %v4275, %v4267
    %v5540 = vpack.c.b16 %v4276, %v4268
    %v5541 = vpack.c.b16 %v4277, %v4269
    %v5542 = vpack.c.b16 %v4278, %v4270
    %v5543 = vpack.c.b16 %v4279, %v4271
    %v5544 = vpack.c.b16 %v4280, %v4272
    %v5545 = vpack.c.b16 %v4289, %v4281
    %v5546 = vpack.c.b16 %v4290, %v4282
    %v5547 = vpack.c.b16 %v4291, %v4283
    %v5548 = vpack.c.b16 %v4292, %v4284
    %v5549 = vpack.c.b16 %v4293, %v4285
    %v5550 = vpack.c.b16 %v4294, %v4286
    %v5551 = vpack.c.b16 %v4295, %v4287
    %v5552 = vpack.c.b16 %v4296, %v4288
    %v5553 = vpack.c.b16 %v4305, %v4297
    %v5554 = vpack.c.b16 %v4306, %v4298
    %v5555 = vpack.c.b16 %v4307, %v4299
    %v5556 = vpack.c.b16 %v4308, %v4300
    %v5557 = vpack.c.b16 %v4309, %v4301
    %v5558 = vpack.c.b16 %v4310, %v4302
    %v5559 = vpack.c.b16 %v4311, %v4303
    %v5560 = vpack.c.b16 %v4312, %v4304
    %v5561 = vpack.c.b16 %v4321, %v4313
    %v5562 = vpack.c.b16 %v4322, %v4314
    %v5563 = vpack.c.b16 %v4323, %v4315
    %v5564 = vpack.c.b16 %v4324, %v4316
    %v5565 = vpack.c.b16 %v4325, %v4317
    %v5566 = vpack.c.b16 %v4326, %v4318
    %v5567 = vpack.c.b16 %v4327, %v4319
    %v5568 = vpack.c.b16 %v4328, %v4320
    %v5569 = vpack.c.b16 %v4337, %v4329
    %v5570 = vpack.c.b16 %v4338, %v4330
    %v5571 = vpack.c.b16 %v4339, %v4331
    %v5572 = vpack.c.b16 %v4340, %v4332
    %v5573 = vpack.c.b16 %v4341, %v4333
    %v5574 = vpack.c.b16 %v4342, %v4334
    %v5575 = vpack.c.b16 %v4343, %v4335
    %v5576 = vpack.c.b16 %v4344, %v4336
    %v5577 = vpack.c.b16 %v4353, %v4345
    %v5578 = vpack.c.b16 %v4354, %v4346
    %v5579 = vpack.c.b16 %v4355, %v4347
    %v5580 = vpack.c.b16 %v4356, %v4348
    %v5581 = vpack.c.b16 %v4357, %v4349
    %v5582 = vpack.c.b16 %v4358, %v4350
    %v5583 = vpack.c.b16 %v4359, %v4351
    %v5584 = vpack.c.b16 %v4360, %v4352
    %v5585 = vpack.c.b16 %v4369, %v4361
    %v5586 = vpack.c.b16 %v4370, %v4362
    %v5587 = vpack.c.b16 %v4371, %v4363
    %v5588 = vpack.c.b16 %v4372, %v4364
    %v5589 = vpack.c.b16 %v4373, %v4365
    %v5590 = vpack.c.b16 %v4374, %v4366
    %v5591 = vpack.c.b16 %v4375, %v4367
    %v5592 = vpack.c.b16 %v4376, %v4368
    %v5593 = vpack.c.b16 %v4385, %v4377
    %v5594 = vpack.c.b16 %v4386, %v4378
    %v5595 = vpack.c.b16 %v4387, %v4379
    %v5596 = vpack.c.b16 %v4388, %v4380
    %v5597 = vpack.c.b16 %v4389, %v4381
    %v5598 = vpack.c.b16 %v4390, %v4382
    %v5599 = vpack.c.b16 %v4391, %v4383
    %v5600 = vpack.c.b16 %v4392, %v4384
    %v5601 = vpack.c.b16 %v4401, %v4393
    %v5602 = vpack.c.b16 %v4402, %v4394
    %v5603 = vpack.c.b16 %v4403, %v4395
    %v5604 = vpack.c.b16 %v4404, %v4396
    %v5605 = vpack.c.b16 %v4405, %v4397
    %v5606 = vpack.c.b16 %v4406, %v4398
    %v5607 = vpack.c.b16 %v4407, %v4399
    %v5608 = vpack.c.b16 %v4408, %v4400
    %v5609 = vpack.c.b16 %v4417, %v4409
    %v5610 = vpack.c.b16 %v4418, %v4410
    %v5611 = vpack.c.b16 %v4419, %v4411
    %v5612 = vpack.c.b16 %v4420, %v4412
    %v5613 = vpack.c.b16 %v4421, %v4413
    %v5614 = vpack.c.b16 %v4422, %v4414
    %v5615 = vpack.c.b16 %v4423, %v4415
    %v5616 = vpack.c.b16 %v4424, %v4416
    %v5617 = vpack.c.b16 %v4433, %v4425
    %v5618 = vpack.c.b16 %v4434, %v4426
    %v5619 = vpack.c.b16 %v4435, %v4427
    %v5620 = vpack.c.b16 %v4436, %v4428
    %v5621 = vpack.c.b16 %v4437, %v4429
    %v5622 = vpack.c.b16 %v4438, %v4430
    %v5623 = vpack.c.b16 %v4439, %v4431
    %v5624 = vpack.c.b16 %v4440, %v4432
    %v5625 = vpack.c.b16 %v4449, %v4441
    %v5626 = vpack.c.b16 %v4450, %v4442
    %v5627 = vpack.c.b16 %v4451, %v4443
    %v5628 = vpack.c.b16 %v4452, %v4444
    %v5629 = vpack.c.b16 %v4453, %v4445
    %v5630 = vpack.c.b16 %v4454, %v4446
    %v5631 = vpack.c.b16 %v4455, %v4447
    %v5632 = vpack.c.b16 %v4456, %v4448
    %v5633 = vpack.c.b16 %v4465, %v4457
    %v5634 = vpack.c.b16 %v4466, %v4458
    %v5635 = vpack.c.b16 %v4467, %v4459
    %v5636 = vpack.c.b16 %v4468, %v4460
    %v5637 = vpack.c.b16 %v4469, %v4461
    %v5638 = vpack.c.b16 %v4470, %v4462
    %v5639 = vpack.c.b16 %v4471, %v4463
    %v5640 = vpack.c.b16 %v4472, %v4464
    %v5641 = vpack.c.b16 %v4481, %v4473
    %v5642 = vpack.c.b16 %v4482, %v4474
    %v5643 = vpack.c.b16 %v4483, %v4475
    %v5644 = vpack.c.b16 %v4484, %v4476
    %v5645 = vpack.c.b16 %v4485, %v4477
    %v5646 = vpack.c.b16 %v4486, %v4478
    %v5647 = vpack.c.b16 %v4487, %v4479
    %v5648 = vpack.c.b16 %v4488, %v4480
    %v5649 = vpack.c.b16 %v4497, %v4489
    %v5650 = vpack.c.b16 %v4498, %v4490
    %v5651 = vpack.c.b16 %v4499, %v4491
    %v5652 = vpack.c.b16 %v4500, %v4492
    %v5653 = vpack.c.b16 %v4501, %v4493
    %v5654 = vpack.c.b16 %v4502, %v4494
    %v5655 = vpack.c.b16 %v4503, %v4495
    %v5656 = vpack.c.b16 %v4504, %v4496
    %v5657 = vpack.c.b16 %v4513, %v4505
    %v5658 = vpack.c.b16 %v4514, %v4506
    %v5659 = vpack.c.b16 %v4515, %v4507
    %v5660 = vpack.c.b16 %v4516, %v4508
    %v5661 = vpack.c.b16 %v4517, %v4509
    %v5662 = vpack.c.b16 %v4518, %v4510
    %v5663 = vpack.c.b16 %v4519, %v4511
    %v5664 = vpack.c.b16 %v4520, %v4512
    %v5665 = vpack.c.b16 %v4529, %v4521
    %v5666 = vpack.c.b16 %v4530, %v4522
    %v5667 = vpack.c.b16 %v4531, %v4523
    %v5668 = vpack.c.b16 %v4532, %v4524
    %v5669 = vpack.c.b16 %v4533, %v4525
    %v5670 = vpack.c.b16 %v4534, %v4526
    %v5671 = vpack.c.b16 %v4535, %v4527
    %v5672 = vpack.c.b16 %v4536, %v4528
    %v5673 = vpack.c.b16 %v4545, %v4537
    %v5674 = vpack.c.b16 %v4546, %v4538
    %v5675 = vpack.c.b16 %v4547, %v4539
    %v5676 = vpack.c.b16 %v4548, %v4540
    %v5677 = vpack.c.b16 %v4549, %v4541
    %v5678 = vpack.c.b16 %v4550, %v4542
    %v5679 = vpack.c.b16 %v4551, %v4543
    %v5680 = vpack.c.b16 %v4552, %v4544
    %v5681 = vpack.c.b16 %v4561, %v4553
    %v5682 = vpack.c.b16 %v4562, %v4554
    %v5683 = vpack.c.b16 %v4563, %v4555
    %v5684 = vpack.c.b16 %v4564, %v4556
    %v5685 = vpack.c.b16 %v4565, %v4557
    %v5686 = vpack.c.b16 %v4566, %v4558
    %v5687 = vpack.c.b16 %v4567, %v4559
    %v5688 = vpack.c.b16 %v4568, %v4560
    %v5689 = vpack.c.b16 %v4577, %v4569
    %v5690 = vpack.c.b16 %v4578, %v4570
    %v5691 = vpack.c.b16 %v4579, %v4571
    %v5692 = vpack.c.b16 %v4580, %v4572
    %v5693 = vpack.c.b16 %v4581, %v4573
    %v5694 = vpack.c.b16 %v4582, %v4574
    %v5695 = vpack.c.b16 %v4583, %v4575
    %v5696 = vpack.c.b16 %v4584, %v4576
    %v5697 = vpack.c.b16 %v4593, %v4585
    %v5698 = vpack.c.b16 %v4594, %v4586
    %v5699 = vpack.c.b16 %v4595, %v4587
    %v5700 = vpack.c.b16 %v4596, %v4588
    %v5701 = vpack.c.b16 %v4597, %v4589
    %v5702 = vpack.c.b16 %v4598, %v4590
    %v5703 = vpack.c.b16 %v4599, %v4591
    %v5704 = vpack.c.b16 %v4600, %v4592
    %v5705 = vpack.c.b16 %v4609, %v4601
    %v5706 = vpack.c.b16 %v4610, %v4602
    %v5707 = vpack.c.b16 %v4611, %v4603
    %v5708 = vpack.c.b16 %v4612, %v4604
    %v5709 = vpack.c.b16 %v4613, %v4605
    %v5710 = vpack.c.b16 %v4614, %v4606
    %v5711 = vpack.c.b16 %v4615, %v4607
    %v5712 = vpack.c.b16 %v4616, %v4608
    %v5713 = vpack.c.b16 %v4625, %v4617
    %v5714 = vpack.c.b16 %v4626, %v4618
    %v5715 = vpack.c.b16 %v4627, %v4619
    %v5716 = vpack.c.b16 %v4628, %v4620
    %v5717 = vpack.c.b16 %v4629, %v4621
    %v5718 = vpack.c.b16 %v4630, %v4622
    %v5719 = vpack.c.b16 %v4631, %v4623
    %v5720 = vpack.c.b16 %v4632, %v4624
    %6809 = vmatprep.subr.bf16.mxu0 %v4634
    %6810 = vmatpush1.bf16.msra.mxu0 %v4633
    %6811 = vmatprep.subr.bf16.mxu0 %v4642
    %6812 = vmatpush1.bf16.msra.mxu0 %v4641
    %6813 = vmatprep.subr.bf16.mxu0 %v4650
    %6814 = vmatpush1.bf16.msra.mxu0 %v4649
    %6815 = vmatprep.subr.bf16.mxu0 %v4658
    %6816 = vmatpush1.bf16.msra.mxu0 %v4657
    %6817 = vmatprep.subr.bf16.mxu0 %v4666
    %6818 = vmatpush1.bf16.msra.mxu0 %v4665
    %6819 = vmatprep.subr.bf16.mxu0 %v4674
    %6820 = vmatpush1.bf16.msra.mxu0 %v4673
    %6821 = vmatprep.subr.bf16.mxu0 %v4682
    %6822 = vmatpush1.bf16.msra.mxu0 %v4681
    %6823 = vmatprep.subr.bf16.mxu0 %v4690
    %6824 = vmatpush1.bf16.msra.mxu0 %v4689
    %6825 = vmatprep.subr.bf16.mxu0 %v4698
    %6826 = vmatpush1.bf16.msra.mxu0 %v4697
    %6827 = vmatprep.subr.bf16.mxu0 %v4706
    %6828 = vmatpush1.bf16.msra.mxu0 %v4705
    %6829 = vmatprep.subr.bf16.mxu0 %v4714
    %6830 = vmatpush1.bf16.msra.mxu0 %v4713
    %6831 = vmatprep.subr.bf16.mxu0 %v4722
    %6832 = vmatpush1.bf16.msra.mxu0 %v4721
    %6833 = vmatprep.subr.bf16.mxu0 %v4730
    %6834 = vmatpush1.bf16.msra.mxu0 %v4729
    %6835 = vmatprep.subr.bf16.mxu0 %v4738
    %6836 = vmatpush1.bf16.msra.mxu0 %v4737
    %6837 = vmatprep.subr.bf16.mxu0 %v4746
    %6838 = vmatpush1.bf16.msra.mxu0 %v4745
    %6839 = vmatprep.subr.bf16.mxu0 %v4754
    %6840 = vmatpush1.bf16.msra.mxu0 %v4753
    %6841 = vmatprep.mubr.bf16.mxu0 %v1336
    %6842 = vmatmul.mubr.bf16.gmra.mrb[0].mxu0 %v1335
    %v6843 = vpop.f32.mrb[0].mxu0
    %v6844 = vadd.f32 %v1246, %v6843
    %v6845 = vpop.f32.mrb[0].mxu0
    %v6846 = vadd.f32 %v1250, %v6845
    %v6847 = vpop.f32.mrb[0].mxu0
    %v6848 = vadd.f32 %v1246, %v6847
    %v6849 = vpop.f32.mrb[0].mxu0
    %v6850 = vadd.f32 %v1250, %v6849
    %6851 = vdwg.mxu0
    %6852 = vmatprep.subr.bf16.mxu0 %v4762
    %6853 = vmatpush1.bf16.msra.mxu0 %v4761
    %6854 = vmatprep.subr.bf16.mxu0 %v4770
    %6855 = vmatpush1.bf16.msra.mxu0 %v4769
    %6856 = vmatprep.subr.bf16.mxu0 %v4778
    %6857 = vmatpush1.bf16.msra.mxu0 %v4777
    %6858 = vmatprep.subr.bf16.mxu0 %v4786
    %6859 = vmatpush1.bf16.msra.mxu0 %v4785
    %6860 = vmatprep.subr.bf16.mxu0 %v4794
    %6861 = vmatpush1.bf16.msra.mxu0 %v4793
    %6862 = vmatprep.subr.bf16.mxu0 %v4802
    %6863 = vmatpush1.bf16.msra.mxu0 %v4801
    %6864 = vmatprep.subr.bf16.mxu0 %v4810
    %6865 = vmatpush1.bf16.msra.mxu0 %v4809
    %6866 = vmatprep.subr.bf16.mxu0 %v4818
    %6867 = vmatpush1.bf16.msra.mxu0 %v4817
    %6868 = vmatprep.subr.bf16.mxu0 %v4826
    %6869 = vmatpush1.bf16.msra.mxu0 %v4825
    %6870 = vmatprep.subr.bf16.mxu0 %v4834
    %6871 = vmatpush1.bf16.msra.mxu0 %v4833
    %6872 = vmatprep.subr.bf16.mxu0 %v4842
    %6873 = vmatpush1.bf16.msra.mxu0 %v4841
    %6874 = vmatprep.subr.bf16.mxu0 %v4850
    %6875 = vmatpush1.bf16.msra.mxu0 %v4849
    %6876 = vmatprep.subr.bf16.mxu0 %v4858
    %6877 = vmatpush1.bf16.msra.mxu0 %v4857
    %6878 = vmatprep.subr.bf16.mxu0 %v4866
    %6879 = vmatpush1.bf16.msra.mxu0 %v4865
    %6880 = vmatprep.subr.bf16.mxu0 %v4874
    %6881 = vmatpush1.bf16.msra.mxu0 %v4873
    %6882 = vmatprep.subr.bf16.mxu0 %v4882
    %6883 = vmatpush1.bf16.msra.mxu0 %v4881
    %6884 = vmatprep.mubr.bf16.mxu0 %v1338
    %6885 = vmatmul.mubr.bf16.gmra.mrb[0].mxu0 %v1337
    %v6886 = vpop.f32.mrb[0].mxu0
    %v6887 = vadd.f32 %v6844, %v6886
    %v6888 = vpop.f32.mrb[0].mxu0
    %v6889 = vadd.f32 %v6846, %v6888
    %v6890 = vpop.f32.mrb[0].mxu0
    %v6891 = vadd.f32 %v6848, %v6890
    %v6892 = vpop.f32.mrb[0].mxu0
    %v6893 = vadd.f32 %v6850, %v6892
    %6894 = vdwg.mxu0
    %6895 = vmatprep.subr.bf16.mxu0 %v4890
    %6896 = vmatpush1.bf16.msra.mxu0 %v4889
    %6897 = vmatprep.subr.bf16.mxu0 %v4898
    %6898 = vmatpush1.bf16.msra.mxu0 %v4897
    %6899 = vmatprep.subr.bf16.mxu0 %v4906
    %6900 = vmatpush1.bf16.msra.mxu0 %v4905
    %6901 = vmatprep.subr.bf16.mxu0 %v4914
    %6902 = vmatpush1.bf16.msra.mxu0 %v4913
    %6903 = vmatprep.subr.bf16.mxu0 %v4922
    %6904 = vmatpush1.bf16.msra.mxu0 %v4921
    %6905 = vmatprep.subr.bf16.mxu0 %v4930
    %6906 = vmatpush1.bf16.msra.mxu0 %v4929
    %6907 = vmatprep.subr.bf16.mxu0 %v4938
    %6908 = vmatpush1.bf16.msra.mxu0 %v4937
    %6909 = vmatprep.subr.bf16.mxu0 %v4946
    %6910 = vmatpush1.bf16.msra.mxu0 %v4945
    %6911 = vmatprep.subr.bf16.mxu0 %v4954
    %6912 = vmatpush1.bf16.msra.mxu0 %v4953
    %6913 = vmatprep.subr.bf16.mxu0 %v4962
    %6914 = vmatpush1.bf16.msra.mxu0 %v4961
    %6915 = vmatprep.subr.bf16.mxu0 %v4970
    %6916 = vmatpush1.bf16.msra.mxu0 %v4969
    %6917 = vmatprep.subr.bf16.mxu0 %v4978
    %6918 = vmatpush1.bf16.msra.mxu0 %v4977
    %6919 = vmatprep.subr.bf16.mxu0 %v4986
    %6920 = vmatpush1.bf16.msra.mxu0 %v4985
    %6921 = vmatprep.subr.bf16.mxu0 %v4994
    %6922 = vmatpush1.bf16.msra.mxu0 %v4993
    %6923 = vmatprep.subr.bf16.mxu0 %v5002
    %6924 = vmatpush1.bf16.msra.mxu0 %v5001
    %6925 = vmatprep.subr.bf16.mxu0 %v5010
    %6926 = vmatpush1.bf16.msra.mxu0 %v5009
    %6927 = vmatprep.mubr.bf16.mxu0 %v1340
    %6928 = vmatmul.mubr.bf16.gmra.mrb[0].mxu0 %v1339
    %v6929 = vpop.f32.mrb[0].mxu0
    %v6930 = vadd.f32 %v6887, %v6929
    %v6931 = vpop.f32.mrb[0].mxu0
    %v6932 = vadd.f32 %v6889, %v6931
    %v6933 = vpop.f32.mrb[0].mxu0
    %v6934 = vadd.f32 %v6891, %v6933
    %v6935 = vpop.f32.mrb[0].mxu0
    %v6936 = vadd.f32 %v6893, %v6935
    %6937 = vdwg.mxu0
    %6938 = vmatprep.subr.bf16.mxu0 %v5018
    %6939 = vmatpush1.bf16.msra.mxu0 %v5017
    %6940 = vmatprep.subr.bf16.mxu0 %v5026
    %6941 = vmatpush1.bf16.msra.mxu0 %v5025
    %6942 = vmatprep.subr.bf16.mxu0 %v5034
    %6943 = vmatpush1.bf16.msra.mxu0 %v5033
    %6944 = vmatprep.subr.bf16.mxu0 %v5042
    %6945 = vmatpush1.bf16.msra.mxu0 %v5041
    %6946 = vmatprep.subr.bf16.mxu0 %v5050
    %6947 = vmatpush1.bf16.msra.mxu0 %v5049
    %6948 = vmatprep.subr.bf16.mxu0 %v5058
    %6949 = vmatpush1.bf16.msra.mxu0 %v5057
    %6950 = vmatprep.subr.bf16.mxu0 %v5066
    %6951 = vmatpush1.bf16.msra.mxu0 %v5065
    %6952 = vmatprep.subr.bf16.mxu0 %v5074
    %6953 = vmatpush1.bf16.msra.mxu0 %v5073
    %6954 = vmatprep.subr.bf16.mxu0 %v5082
    %6955 = vmatpush1.bf16.msra.mxu0 %v5081
    %6956 = vmatprep.subr.bf16.mxu0 %v5090
    %6957 = vmatpush1.bf16.msra.mxu0 %v5089
    %6958 = vmatprep.subr.bf16.mxu0 %v5098
    %6959 = vmatpush1.bf16.msra.mxu0 %v5097
    %6960 = vmatprep.subr.bf16.mxu0 %v5106
    %6961 = vmatpush1.bf16.msra.mxu0 %v5105
    %6962 = vmatprep.subr.bf16.mxu0 %v5114
    %6963 = vmatpush1.bf16.msra.mxu0 %v5113
    %6964 = vmatprep.subr.bf16.mxu0 %v5122
    %6965 = vmatpush1.bf16.msra.mxu0 %v5121
    %6966 = vmatprep.subr.bf16.mxu0 %v5130
    %6967 = vmatpush1.bf16.msra.mxu0 %v5129
    %6968 = vmatprep.subr.bf16.mxu0 %v5138
    %6969 = vmatpush1.bf16.msra.mxu0 %v5137
    %6970 = vmatprep.mubr.bf16.mxu0 %v1342
    %6971 = vmatmul.mubr.bf16.gmra.mrb[0].mxu0 %v1341
    %v6972 = vpop.f32.mrb[0].mxu0
    %v6973 = vadd.f32 %v6930, %v6972
    %v6974 = vpop.f32.mrb[0].mxu0
    %v6975 = vadd.f32 %v6932, %v6974
    %v6976 = vpop.f32.mrb[0].mxu0
    %v6977 = vadd.f32 %v6934, %v6976
    %v6978 = vpop.f32.mrb[0].mxu0
    %v6979 = vadd.f32 %v6936, %v6978
    %6980 = vdwg.mxu0
    %6981 = vmatprep.subr.bf16.mxu0 %v5146
    %6982 = vmatpush1.bf16.msra.mxu0 %v5145
    %6983 = vmatprep.subr.bf16.mxu0 %v5154
    %6984 = vmatpush1.bf16.msra.mxu0 %v5153
    %6985 = vmatprep.subr.bf16.mxu0 %v5162
    %6986 = vmatpush1.bf16.msra.mxu0 %v5161
    %6987 = vmatprep.subr.bf16.mxu0 %v5170
    %6988 = vmatpush1.bf16.msra.mxu0 %v5169
    %6989 = vmatprep.subr.bf16.mxu0 %v5178
    %6990 = vmatpush1.bf16.msra.mxu0 %v5177
    %6991 = vmatprep.subr.bf16.mxu0 %v5186
    %6992 = vmatpush1.bf16.msra.mxu0 %v5185
    %6993 = vmatprep.subr.bf16.mxu0 %v5194
    %6994 = vmatpush1.bf16.msra.mxu0 %v5193
    %6995 = vmatprep.subr.bf16.mxu0 %v5202
    %6996 = vmatpush1.bf16.msra.mxu0 %v5201
    %6997 = vmatprep.subr.bf16.mxu0 %v5210
    %6998 = vmatpush1.bf16.msra.mxu0 %v5209
    %6999 = vmatprep.subr.bf16.mxu0 %v5218
    %7000 = vmatpush1.bf16.msra.mxu0 %v5217
    %7001 = vmatprep.subr.bf16.mxu0 %v5226
    %7002 = vmatpush1.bf16.msra.mxu0 %v5225
    %7003 = vmatprep.subr.bf16.mxu0 %v5234
    %7004 = vmatpush1.bf16.msra.mxu0 %v5233
    %7005 = vmatprep.subr.bf16.mxu0 %v5242
    %7006 = vmatpush1.bf16.msra.mxu0 %v5241
    %7007 = vmatprep.subr.bf16.mxu0 %v5250
    %7008 = vmatpush1.bf16.msra.mxu0 %v5249
    %7009 = vmatprep.subr.bf16.mxu0 %v5258
    %7010 = vmatpush1.bf16.msra.mxu0 %v5257
    %7011 = vmatprep.subr.bf16.mxu0 %v5266
    %7012 = vmatpush1.bf16.msra.mxu0 %v5265
    %7013 = vmatprep.mubr.bf16.mxu0 %v1344
    %7014 = vmatmul.mubr.bf16.gmra.mrb[0].mxu0 %v1343
    %v7015 = vpop.f32.mrb[0].mxu0
    %v7016 = vadd.f32 %v6973, %v7015
    %v7017 = vpop.f32.mrb[0].mxu0
    %v7018 = vadd.f32 %v6975, %v7017
    %v7019 = vpop.f32.mrb[0].mxu0
    %v7020 = vadd.f32 %v6977, %v7019
    %v7021 = vpop.f32.mrb[0].mxu0
    %v7022 = vadd.f32 %v6979, %v7021
    %7023 = vdwg.mxu0
    %7024 = vmatprep.subr.bf16.mxu0 %v5274
    %7025 = vmatpush1.bf16.msra.mxu0 %v5273
    %7026 = vmatprep.subr.bf16.mxu0 %v5282
    %7027 = vmatpush1.bf16.msra.mxu0 %v5281
    %7028 = vmatprep.subr.bf16.mxu0 %v5290
    %7029 = vmatpush1.bf16.msra.mxu0 %v5289
    %7030 = vmatprep.subr.bf16.mxu0 %v5298
    %7031 = vmatpush1.bf16.msra.mxu0 %v5297
    %7032 = vmatprep.subr.bf16.mxu0 %v5306
    %7033 = vmatpush1.bf16.msra.mxu0 %v5305
    %7034 = vmatprep.subr.bf16.mxu0 %v5314
    %7035 = vmatpush1.bf16.msra.mxu0 %v5313
    %7036 = vmatprep.subr.bf16.mxu0 %v5322
    %7037 = vmatpush1.bf16.msra.mxu0 %v5321
    %7038 = vmatprep.subr.bf16.mxu0 %v5330
    %7039 = vmatpush1.bf16.msra.mxu0 %v5329
    %7040 = vmatprep.subr.bf16.mxu0 %v5338
    %7041 = vmatpush1.bf16.msra.mxu0 %v5337
    %7042 = vmatprep.subr.bf16.mxu0 %v5346
    %7043 = vmatpush1.bf16.msra.mxu0 %v5345
    %7044 = vmatprep.subr.bf16.mxu0 %v5354
    %7045 = vmatpush1.bf16.msra.mxu0 %v5353
    %7046 = vmatprep.subr.bf16.mxu0 %v5362
    %7047 = vmatpush1.bf16.msra.mxu0 %v5361
    %7048 = vmatprep.subr.bf16.mxu0 %v5370
    %7049 = vmatpush1.bf16.msra.mxu0 %v5369
    %7050 = vmatprep.subr.bf16.mxu0 %v5378
    %7051 = vmatpush1.bf16.msra.mxu0 %v5377
    %7052 = vmatprep.subr.bf16.mxu0 %v5386
    %7053 = vmatpush1.bf16.msra.mxu0 %v5385
    %7054 = vmatprep.subr.bf16.mxu0 %v5394
    %7055 = vmatpush1.bf16.msra.mxu0 %v5393
    %7056 = vmatprep.mubr.bf16.mxu0 %v1346
    %7057 = vmatmul.mubr.bf16.gmra.mrb[0].mxu0 %v1345
    %v7058 = vpop.f32.mrb[0].mxu0
    %v7059 = vadd.f32 %v7016, %v7058
    %v7060 = vpop.f32.mrb[0].mxu0
    %v7061 = vadd.f32 %v7018, %v7060
    %v7062 = vpop.f32.mrb[0].mxu0
    %v7063 = vadd.f32 %v7020, %v7062
    %v7064 = vpop.f32.mrb[0].mxu0
    %v7065 = vadd.f32 %v7022, %v7064
    %7066 = vdwg.mxu0
    %7067 = vmatprep.subr.bf16.mxu0 %v5402
    %7068 = vmatpush1.bf16.msra.mxu0 %v5401
    %7069 = vmatprep.subr.bf16.mxu0 %v5410
    %7070 = vmatpush1.bf16.msra.mxu0 %v5409
    %7071 = vmatprep.subr.bf16.mxu0 %v5418
    %7072 = vmatpush1.bf16.msra.mxu0 %v5417
    %7073 = vmatprep.subr.bf16.mxu0 %v5426
    %7074 = vmatpush1.bf16.msra.mxu0 %v5425
    %7075 = vmatprep.subr.bf16.mxu0 %v5434
    %7076 = vmatpush1.bf16.msra.mxu0 %v5433
    %7077 = vmatprep.subr.bf16.mxu0 %v5442
    %7078 = vmatpush1.bf16.msra.mxu0 %v5441
    %7079 = vmatprep.subr.bf16.mxu0 %v5450
    %7080 = vmatpush1.bf16.msra.mxu0 %v5449
    %7081 = vmatprep.subr.bf16.mxu0 %v5458
    %7082 = vmatpush1.bf16.msra.mxu0 %v5457
    %7083 = vmatprep.subr.bf16.mxu0 %v5466
    %7084 = vmatpush1.bf16.msra.mxu0 %v5465
    %7085 = vmatprep.subr.bf16.mxu0 %v5474
    %7086 = vmatpush1.bf16.msra.mxu0 %v5473
    %7087 = vmatprep.subr.bf16.mxu0 %v5482
    %7088 = vmatpush1.bf16.msra.mxu0 %v5481
    %7089 = vmatprep.subr.bf16.mxu0 %v5490
    %7090 = vmatpush1.bf16.msra.mxu0 %v5489
    %7091 = vmatprep.subr.bf16.mxu0 %v5498
    %7092 = vmatpush1.bf16.msra.mxu0 %v5497
    %7093 = vmatprep.subr.bf16.mxu0 %v5506
    %7094 = vmatpush1.bf16.msra.mxu0 %v5505
    %7095 = vmatprep.subr.bf16.mxu0 %v5514
    %7096 = vmatpush1.bf16.msra.mxu0 %v5513
    %7097 = vmatprep.subr.bf16.mxu0 %v5522
    %7098 = vmatpush1.bf16.msra.mxu0 %v5521
    %7099 = vmatprep.mubr.bf16.mxu0 %v1348
    %7100 = vmatmul.mubr.bf16.gmra.mrb[0].mxu0 %v1347
    %v7101 = vpop.f32.mrb[0].mxu0
    %v7102 = vadd.f32 %v7059, %v7101
    %v7103 = vpop.f32.mrb[0].mxu0
    %v7104 = vadd.f32 %v7061, %v7103
    %v7105 = vpop.f32.mrb[0].mxu0
    %v7106 = vadd.f32 %v7063, %v7105
    %v7107 = vpop.f32.mrb[0].mxu0
    %v7108 = vadd.f32 %v7065, %v7107
    %7109 = vdwg.mxu0
    %7110 = vmatprep.subr.bf16.mxu0 %v5530
    %7111 = vmatpush1.bf16.msra.mxu0 %v5529
    %7112 = vmatprep.subr.bf16.mxu0 %v5538
    %7113 = vmatpush1.bf16.msra.mxu0 %v5537
    %7114 = vmatprep.subr.bf16.mxu0 %v5546
    %7115 = vmatpush1.bf16.msra.mxu0 %v5545
    %7116 = vmatprep.subr.bf16.mxu0 %v5554
    %7117 = vmatpush1.bf16.msra.mxu0 %v5553
    %7118 = vmatprep.subr.bf16.mxu0 %v5562
    %7119 = vmatpush1.bf16.msra.mxu0 %v5561
    %7120 = vmatprep.subr.bf16.mxu0 %v5570
    %7121 = vmatpush1.bf16.msra.mxu0 %v5569
    %7122 = vmatprep.subr.bf16.mxu0 %v5578
    %7123 = vmatpush1.bf16.msra.mxu0 %v5577
    %7124 = vmatprep.subr.bf16.mxu0 %v5586
    %7125 = vmatpush1.bf16.msra.mxu0 %v5585
    %7126 = vmatprep.subr.bf16.mxu0 %v5594
    %7127 = vmatpush1.bf16.msra.mxu0 %v5593
    %7128 = vmatprep.subr.bf16.mxu0 %v5602
    %7129 = vmatpush1.bf16.msra.mxu0 %v5601
    %7130 = vmatprep.subr.bf16.mxu0 %v5610
    %7131 = vmatpush1.bf16.msra.mxu0 %v5609
    %7132 = vmatprep.subr.bf16.mxu0 %v5618
    %7133 = vmatpush1.bf16.msra.mxu0 %v5617
    %7134 = vmatprep.subr.bf16.mxu0 %v5626
    %7135 = vmatpush1.bf16.msra.mxu0 %v5625
    %7136 = vmatprep.subr.bf16.mxu0 %v5634
    %7137 = vmatpush1.bf16.msra.mxu0 %v5633
    %7138 = vmatprep.subr.bf16.mxu0 %v5642
    %7139 = vmatpush1.bf16.msra.mxu0 %v5641
    %7140 = vmatprep.subr.bf16.mxu0 %v5650
    %7141 = vmatpush1.bf16.msra.mxu0 %v5649
    %7142 = vmatprep.mubr.bf16.mxu0 %v1350
    %7143 = vmatmul.mubr.bf16.gmra.mrb[0].mxu0 %v1349
    %v7144 = vpop.f32.mrb[0].mxu0
    %v7145 = vadd.f32 %v7102, %v7144
    %v7146 = vpop.f32.mrb[0].mxu0
    %v7147 = vadd.f32 %v7104, %v7146
    %v7148 = vpop.f32.mrb[0].mxu0
    %v7149 = vadd.f32 %v7106, %v7148
    %v7150 = vpop.f32.mrb[0].mxu0
    %v7151 = vadd.f32 %v7108, %v7150
    %7152 = vdwg.mxu0
    %7153 = vmatprep.subr.bf16.mxu0 %v5658
    %7154 = vmatpush1.bf16.msra.mxu0 %v5657
    %7155 = vmatprep.subr.bf16.mxu0 %v5666
    %7156 = vmatpush1.bf16.msra.mxu0 %v5665
    %7157 = vmatprep.subr.bf16.mxu0 %v5674
    %7158 = vmatpush1.bf16.msra.mxu0 %v5673
    %7159 = vmatprep.subr.bf16.mxu0 %v5682
    %7160 = vmatpush1.bf16.msra.mxu0 %v5681
    %7161 = vmatprep.subr.bf16.mxu0 %v5690
    %7162 = vmatpush1.bf16.msra.mxu0 %v5689
    %7163 = vmatprep.subr.bf16.mxu0 %v5698
    %7164 = vmatpush1.bf16.msra.mxu0 %v5697
    %7165 = vmatprep.subr.bf16.mxu0 %v5706
    %7166 = vmatpush1.bf16.msra.mxu0 %v5705
    %7167 = vmatprep.subr.bf16.mxu0 %v5714
    %7168 = vmatpush1.bf16.msra.mxu0 %v5713
    %7169 = vmatprep.subr.bf16.mxu0 0
    %7170 = vmatpush1.bf16.msra.mxu0 0
    %7171 = vmatprep.subr.bf16.mxu0 0
    %7172 = vmatpush1.bf16.msra.mxu0 0
    %7173 = vmatprep.subr.bf16.mxu0 0
    %7174 = vmatpush1.bf16.msra.mxu0 0
    %7175 = vmatprep.subr.bf16.mxu0 0
    %7176 = vmatpush1.bf16.msra.mxu0 0
    %7177 = vmatprep.subr.bf16.mxu0 0
    %7178 = vmatpush1.bf16.msra.mxu0 0
    %7179 = vmatprep.subr.bf16.mxu0 0
    %7180 = vmatpush1.bf16.msra.mxu0 0
    %7181 = vmatprep.subr.bf16.mxu0 0
    %7182 = vmatpush1.bf16.msra.mxu0 0
    %7183 = vmatprep.subr.bf16.mxu0 0
    %7184 = vmatpush1.bf16.msra.mxu0 0
    %7185 = vmatprep.mubr.bf16.mxu0 0
    %7186 = vmatmul.mubr.bf16.gmra.mrb[0].mxu0 %v1351
    %v7187 = vpop.f32.mrb[0].mxu0
    %v7188 = vadd.f32 %v7145, %v7187
    %v7189 = vpop.f32.mrb[0].mxu0
    %v7190 = vadd.f32 %v7147, %v7189
    %v7191 = vpop.f32.mrb[0].mxu0
    %v7192 = vadd.f32 %v7149, %v7191
    %v7193 = vpop.f32.mrb[0].mxu0
    %v7194 = vadd.f32 %v7151, %v7193
    %7195 = vdwg.mxu0
    %7196 = vmatprep.subr.bf16.mxu0 %v4636
    %7197 = vmatpush1.bf16.msra.mxu0 %v4635
    %7198 = vmatprep.subr.bf16.mxu0 %v4644
    %7199 = vmatpush1.bf16.msra.mxu0 %v4643
    %7200 = vmatprep.subr.bf16.mxu0 %v4652
    %7201 = vmatpush1.bf16.msra.mxu0 %v4651
    %7202 = vmatprep.subr.bf16.mxu0 %v4660
    %7203 = vmatpush1.bf16.msra.mxu0 %v4659
    %7204 = vmatprep.subr.bf16.mxu0 %v4668
    %7205 = vmatpush1.bf16.msra.mxu0 %v4667
    %7206 = vmatprep.subr.bf16.mxu0 %v4676
    %7207 = vmatpush1.bf16.msra.mxu0 %v4675
    %7208 = vmatprep.subr.bf16.mxu0 %v4684
    %7209 = vmatpush1.bf16.msra.mxu0 %v4683
    %7210 = vmatprep.subr.bf16.mxu0 %v4692
    %7211 = vmatpush1.bf16.msra.mxu0 %v4691
    %7212 = vmatprep.subr.bf16.mxu0 %v4700
    %7213 = vmatpush1.bf16.msra.mxu0 %v4699
    %7214 = vmatprep.subr.bf16.mxu0 %v4708
    %7215 = vmatpush1.bf16.msra.mxu0 %v4707
    %7216 = vmatprep.subr.bf16.mxu0 %v4716
    %7217 = vmatpush1.bf16.msra.mxu0 %v4715
    %7218 = vmatprep.subr.bf16.mxu0 %v4724
    %7219 = vmatpush1.bf16.msra.mxu0 %v4723
    %7220 = vmatprep.subr.bf16.mxu0 %v4732
    %7221 = vmatpush1.bf16.msra.mxu0 %v4731
    %7222 = vmatprep.subr.bf16.mxu0 %v4740
    %7223 = vmatpush1.bf16.msra.mxu0 %v4739
    %7224 = vmatprep.subr.bf16.mxu0 %v4748
    %7225 = vmatpush1.bf16.msra.mxu0 %v4747
    %7226 = vmatprep.subr.bf16.mxu0 %v4756
    %7227 = vmatpush1.bf16.msra.mxu0 %v4755
    %7228 = vmatprep.mubr.bf16.mxu0 %v1336
    %7229 = vmatmul.mubr.bf16.gmra.mrb[0].mxu0 %v1335
    %v7230 = vpop.f32.mrb[0].mxu0
    %v7231 = vadd.f32 %v1254, %v7230
    %v7232 = vpop.f32.mrb[0].mxu0
    %v7233 = vadd.f32 %v1258, %v7232
    %v7234 = vpop.f32.mrb[0].mxu0
    %v7235 = vadd.f32 %v1254, %v7234
    %v7236 = vpop.f32.mrb[0].mxu0
    %v7237 = vadd.f32 %v1258, %v7236
    %7238 = vdwg.mxu0
    %7239 = vmatprep.subr.bf16.mxu0 %v4764
    %7240 = vmatpush1.bf16.msra.mxu0 %v4763
    %7241 = vmatprep.subr.bf16.mxu0 %v4772
    %7242 = vmatpush1.bf16.msra.mxu0 %v4771
    %7243 = vmatprep.subr.bf16.mxu0 %v4780
    %7244 = vmatpush1.bf16.msra.mxu0 %v4779
    %7245 = vmatprep.subr.bf16.mxu0 %v4788
    %7246 = vmatpush1.bf16.msra.mxu0 %v4787
    %7247 = vmatprep.subr.bf16.mxu0 %v4796
    %7248 = vmatpush1.bf16.msra.mxu0 %v4795
    %7249 = vmatprep.subr.bf16.mxu0 %v4804
    %7250 = vmatpush1.bf16.msra.mxu0 %v4803
    %7251 = vmatprep.subr.bf16.mxu0 %v4812
    %7252 = vmatpush1.bf16.msra.mxu0 %v4811
    %7253 = vmatprep.subr.bf16.mxu0 %v4820
    %7254 = vmatpush1.bf16.msra.mxu0 %v4819
    %7255 = vmatprep.subr.bf16.mxu0 %v4828
    %7256 = vmatpush1.bf16.msra.mxu0 %v4827
    %7257 = vmatprep.subr.bf16.mxu0 %v4836
    %7258 = vmatpush1.bf16.msra.mxu0 %v4835
    %7259 = vmatprep.subr.bf16.mxu0 %v4844
    %7260 = vmatpush1.bf16.msra.mxu0 %v4843
    %7261 = vmatprep.subr.bf16.mxu0 %v4852
    %7262 = vmatpush1.bf16.msra.mxu0 %v4851
    %7263 = vmatprep.subr.bf16.mxu0 %v4860
    %7264 = vmatpush1.bf16.msra.mxu0 %v4859
    %7265 = vmatprep.subr.bf16.mxu0 %v4868
    %7266 = vmatpush1.bf16.msra.mxu0 %v4867
    %7267 = vmatprep.subr.bf16.mxu0 %v4876
    %7268 = vmatpush1.bf16.msra.mxu0 %v4875
    %7269 = vmatprep.subr.bf16.mxu0 %v4884
    %7270 = vmatpush1.bf16.msra.mxu0 %v4883
    %7271 = vmatprep.mubr.bf16.mxu0 %v1338
    %7272 = vmatmul.mubr.bf16.gmra.mrb[0].mxu0 %v1337
    %v7273 = vpop.f32.mrb[0].mxu0
    %v7274 = vadd.f32 %v7231, %v7273
    %v7275 = vpop.f32.mrb[0].mxu0
    %v7276 = vadd.f32 %v7233, %v7275
    %v7277 = vpop.f32.mrb[0].mxu0
    %v7278 = vadd.f32 %v7235, %v7277
    %v7279 = vpop.f32.mrb[0].mxu0
    %v7280 = vadd.f32 %v7237, %v7279
    %7281 = vdwg.mxu0
    %7282 = vmatprep.subr.bf16.mxu0 %v4892
    %7283 = vmatpush1.bf16.msra.mxu0 %v4891
    %7284 = vmatprep.subr.bf16.mxu0 %v4900
    %7285 = vmatpush1.bf16.msra.mxu0 %v4899
    %7286 = vmatprep.subr.bf16.mxu0 %v4908
    %7287 = vmatpush1.bf16.msra.mxu0 %v4907
    %7288 = vmatprep.subr.bf16.mxu0 %v4916
    %7289 = vmatpush1.bf16.msra.mxu0 %v4915
    %7290 = vmatprep.subr.bf16.mxu0 %v4924
    %7291 = vmatpush1.bf16.msra.mxu0 %v4923
    %7292 = vmatprep.subr.bf16.mxu0 %v4932
    %7293 = vmatpush1.bf16.msra.mxu0 %v4931
    %7294 = vmatprep.subr.bf16.mxu0 %v4940
    %7295 = vmatpush1.bf16.msra.mxu0 %v4939
    %7296 = vmatprep.subr.bf16.mxu0 %v4948
    %7297 = vmatpush1.bf16.msra.mxu0 %v4947
    %7298 = vmatprep.subr.bf16.mxu0 %v4956
    %7299 = vmatpush1.bf16.msra.mxu0 %v4955
    %7300 = vmatprep.subr.bf16.mxu0 %v4964
    %7301 = vmatpush1.bf16.msra.mxu0 %v4963
    %7302 = vmatprep.subr.bf16.mxu0 %v4972
    %7303 = vmatpush1.bf16.msra.mxu0 %v4971
    %7304 = vmatprep.subr.bf16.mxu0 %v4980
    %7305 = vmatpush1.bf16.msra.mxu0 %v4979
    %7306 = vmatprep.subr.bf16.mxu0 %v4988
    %7307 = vmatpush1.bf16.msra.mxu0 %v4987
    %7308 = vmatprep.subr.bf16.mxu0 %v4996
    %7309 = vmatpush1.bf16.msra.mxu0 %v4995
    %7310 = vmatprep.subr.bf16.mxu0 %v5004
    %7311 = vmatpush1.bf16.msra.mxu0 %v5003
    %7312 = vmatprep.subr.bf16.mxu0 %v5012
    %7313 = vmatpush1.bf16.msra.mxu0 %v5011
    %7314 = vmatprep.mubr.bf16.mxu0 %v1340
    %7315 = vmatmul.mubr.bf16.gmra.mrb[0].mxu0 %v1339
    %v7316 = vpop.f32.mrb[0].mxu0
    %v7317 = vadd.f32 %v7274, %v7316
    %v7318 = vpop.f32.mrb[0].mxu0
    %v7319 = vadd.f32 %v7276, %v7318
    %v7320 = vpop.f32.mrb[0].mxu0
    %v7321 = vadd.f32 %v7278, %v7320
    %v7322 = vpop.f32.mrb[0].mxu0
    %v7323 = vadd.f32 %v7280, %v7322
    %7324 = vdwg.mxu0
    %7325 = vmatprep.subr.bf16.mxu0 %v5020
    %7326 = vmatpush1.bf16.msra.mxu0 %v5019
    %7327 = vmatprep.subr.bf16.mxu0 %v5028
    %7328 = vmatpush1.bf16.msra.mxu0 %v5027
    %7329 = vmatprep.subr.bf16.mxu0 %v5036
    %7330 = vmatpush1.bf16.msra.mxu0 %v5035
    %7331 = vmatprep.subr.bf16.mxu0 %v5044
    %7332 = vmatpush1.bf16.msra.mxu0 %v5043
    %7333 = vmatprep.subr.bf16.mxu0 %v5052
    %7334 = vmatpush1.bf16.msra.mxu0 %v5051
    %7335 = vmatprep.subr.bf16.mxu0 %v5060
    %7336 = vmatpush1.bf16.msra.mxu0 %v5059
    %7337 = vmatprep.subr.bf16.mxu0 %v5068
    %7338 = vmatpush1.bf16.msra.mxu0 %v5067
    %7339 = vmatprep.subr.bf16.mxu0 %v5076
    %7340 = vmatpush1.bf16.msra.mxu0 %v5075
    %7341 = vmatprep.subr.bf16.mxu0 %v5084
    %7342 = vmatpush1.bf16.msra.mxu0 %v5083
    %7343 = vmatprep.subr.bf16.mxu0 %v5092
    %7344 = vmatpush1.bf16.msra.mxu0 %v5091
    %7345 = vmatprep.subr.bf16.mxu0 %v5100
    %7346 = vmatpush1.bf16.msra.mxu0 %v5099
    %7347 = vmatprep.subr.bf16.mxu0 %v5108
    %7348 = vmatpush1.bf16.msra.mxu0 %v5107
    %7349 = vmatprep.subr.bf16.mxu0 %v5116
    %7350 = vmatpush1.bf16.msra.mxu0 %v5115
    %7351 = vmatprep.subr.bf16.mxu0 %v5124
    %7352 = vmatpush1.bf16.msra.mxu0 %v5123
    %7353 = vmatprep.subr.bf16.mxu0 %v5132
    %7354 = vmatpush1.bf16.msra.mxu0 %v5131
    %7355 = vmatprep.subr.bf16.mxu0 %v5140
    %7356 = vmatpush1.bf16.msra.mxu0 %v5139
    %7357 = vmatprep.mubr.bf16.mxu0 %v1342
    %7358 = vmatmul.mubr.bf16.gmra.mrb[0].mxu0 %v1341
    %v7359 = vpop.f32.mrb[0].mxu0
    %v7360 = vadd.f32 %v7317, %v7359
    %v7361 = vpop.f32.mrb[0].mxu0
    %v7362 = vadd.f32 %v7319, %v7361
    %v7363 = vpop.f32.mrb[0].mxu0
    %v7364 = vadd.f32 %v7321, %v7363
    %v7365 = vpop.f32.mrb[0].mxu0
    %v7366 = vadd.f32 %v7323, %v7365
    %7367 = vdwg.mxu0
    %7368 = vmatprep.subr.bf16.mxu0 %v5148
    %7369 = vmatpush1.bf16.msra.mxu0 %v5147
    %7370 = vmatprep.subr.bf16.mxu0 %v5156
    %7371 = vmatpush1.bf16.msra.mxu0 %v5155
    %7372 = vmatprep.subr.bf16.mxu0 %v5164
    %7373 = vmatpush1.bf16.msra.mxu0 %v5163
    %7374 = vmatprep.subr.bf16.mxu0 %v5172
    %7375 = vmatpush1.bf16.msra.mxu0 %v5171
    %7376 = vmatprep.subr.bf16.mxu0 %v5180
    %7377 = vmatpush1.bf16.msra.mxu0 %v5179
    %7378 = vmatprep.subr.bf16.mxu0 %v5188
    %7379 = vmatpush1.bf16.msra.mxu0 %v5187
    %7380 = vmatprep.subr.bf16.mxu0 %v5196
    %7381 = vmatpush1.bf16.msra.mxu0 %v5195
    %7382 = vmatprep.subr.bf16.mxu0 %v5204
    %7383 = vmatpush1.bf16.msra.mxu0 %v5203
    %7384 = vmatprep.subr.bf16.mxu0 %v5212
    %7385 = vmatpush1.bf16.msra.mxu0 %v5211
    %7386 = vmatprep.subr.bf16.mxu0 %v5220
    %7387 = vmatpush1.bf16.msra.mxu0 %v5219
    %7388 = vmatprep.subr.bf16.mxu0 %v5228
    %7389 = vmatpush1.bf16.msra.mxu0 %v5227
    %7390 = vmatprep.subr.bf16.mxu0 %v5236
    %7391 = vmatpush1.bf16.msra.mxu0 %v5235
    %7392 = vmatprep.subr.bf16.mxu0 %v5244
    %7393 = vmatpush1.bf16.msra.mxu0 %v5243
    %7394 = vmatprep.subr.bf16.mxu0 %v5252
    %7395 = vmatpush1.bf16.msra.mxu0 %v5251
    %7396 = vmatprep.subr.bf16.mxu0 %v5260
    %7397 = vmatpush1.bf16.msra.mxu0 %v5259
    %7398 = vmatprep.subr.bf16.mxu0 %v5268
    %7399 = vmatpush1.bf16.msra.mxu0 %v5267
    %7400 = vmatprep.mubr.bf16.mxu0 %v1344
    %7401 = vmatmul.mubr.bf16.gmra.mrb[0].mxu0 %v1343
    %v7402 = vpop.f32.mrb[0].mxu0
    %v7403 = vadd.f32 %v7360, %v7402
    %v7404 = vpop.f32.mrb[0].mxu0
    %v7405 = vadd.f32 %v7362, %v7404
    %v7406 = vpop.f32.mrb[0].mxu0
    %v7407 = vadd.f32 %v7364, %v7406
    %v7408 = vpop.f32.mrb[0].mxu0
    %v7409 = vadd.f32 %v7366, %v7408
    %7410 = vdwg.mxu0
    %7411 = vmatprep.subr.bf16.mxu0 %v5276
    %7412 = vmatpush1.bf16.msra.mxu0 %v5275
    %7413 = vmatprep.subr.bf16.mxu0 %v5284
    %7414 = vmatpush1.bf16.msra.mxu0 %v5283
    %7415 = vmatprep.subr.bf16.mxu0 %v5292
    %7416 = vmatpush1.bf16.msra.mxu0 %v5291
    %7417 = vmatprep.subr.bf16.mxu0 %v5300
    %7418 = vmatpush1.bf16.msra.mxu0 %v5299
    %7419 = vmatprep.subr.bf16.mxu0 %v5308
    %7420 = vmatpush1.bf16.msra.mxu0 %v5307
    %7421 = vmatprep.subr.bf16.mxu0 %v5316
    %7422 = vmatpush1.bf16.msra.mxu0 %v5315
    %7423 = vmatprep.subr.bf16.mxu0 %v5324
    %7424 = vmatpush1.bf16.msra.mxu0 %v5323
    %7425 = vmatprep.subr.bf16.mxu0 %v5332
    %7426 = vmatpush1.bf16.msra.mxu0 %v5331
    %7427 = vmatprep.subr.bf16.mxu0 %v5340
    %7428 = vmatpush1.bf16.msra.mxu0 %v5339
    %7429 = vmatprep.subr.bf16.mxu0 %v5348
    %7430 = vmatpush1.bf16.msra.mxu0 %v5347
    %7431 = vmatprep.subr.bf16.mxu0 %v5356
    %7432 = vmatpush1.bf16.msra.mxu0 %v5355
    %7433 = vmatprep.subr.bf16.mxu0 %v5364
    %7434 = vmatpush1.bf16.msra.mxu0 %v5363
    %7435 = vmatprep.subr.bf16.mxu0 %v5372
    %7436 = vmatpush1.bf16.msra.mxu0 %v5371
    %7437 = vmatprep.subr.bf16.mxu0 %v5380
    %7438 = vmatpush1.bf16.msra.mxu0 %v5379
    %7439 = vmatprep.subr.bf16.mxu0 %v5388
    %7440 = vmatpush1.bf16.msra.mxu0 %v5387
    %7441 = vmatprep.subr.bf16.mxu0 %v5396
    %7442 = vmatpush1.bf16.msra.mxu0 %v5395
    %7443 = vmatprep.mubr.bf16.mxu0 %v1346
    %7444 = vmatmul.mubr.bf16.gmra.mrb[0].mxu0 %v1345
    %v7445 = vpop.f32.mrb[0].mxu0
    %v7446 = vadd.f32 %v7403, %v7445
    %v7447 = vpop.f32.mrb[0].mxu0
    %v7448 = vadd.f32 %v7405, %v7447
    %v7449 = vpop.f32.mrb[0].mxu0
    %v7450 = vadd.f32 %v7407, %v7449
    %v7451 = vpop.f32.mrb[0].mxu0
    %v7452 = vadd.f32 %v7409, %v7451
    %7453 = vdwg.mxu0
    %7454 = vmatprep.subr.bf16.mxu0 %v5404
    %7455 = vmatpush1.bf16.msra.mxu0 %v5403
    %7456 = vmatprep.subr.bf16.mxu0 %v5412
    %7457 = vmatpush1.bf16.msra.mxu0 %v5411
    %7458 = vmatprep.subr.bf16.mxu0 %v5420
    %7459 = vmatpush1.bf16.msra.mxu0 %v5419
    %7460 = vmatprep.subr.bf16.mxu0 %v5428
    %7461 = vmatpush1.bf16.msra.mxu0 %v5427
    %7462 = vmatprep.subr.bf16.mxu0 %v5436
    %7463 = vmatpush1.bf16.msra.mxu0 %v5435
    %7464 = vmatprep.subr.bf16.mxu0 %v5444
    %7465 = vmatpush1.bf16.msra.mxu0 %v5443
    %7466 = vmatprep.subr.bf16.mxu0 %v5452
    %7467 = vmatpush1.bf16.msra.mxu0 %v5451
    %7468 = vmatprep.subr.bf16.mxu0 %v5460
    %7469 = vmatpush1.bf16.msra.mxu0 %v5459
    %7470 = vmatprep.subr.bf16.mxu0 %v5468
    %7471 = vmatpush1.bf16.msra.mxu0 %v5467
    %7472 = vmatprep.subr.bf16.mxu0 %v5476
    %7473 = vmatpush1.bf16.msra.mxu0 %v5475
    %7474 = vmatprep.subr.bf16.mxu0 %v5484
    %7475 = vmatpush1.bf16.msra.mxu0 %v5483
    %7476 = vmatprep.subr.bf16.mxu0 %v5492
    %7477 = vmatpush1.bf16.msra.mxu0 %v5491
    %7478 = vmatprep.subr.bf16.mxu0 %v5500
    %7479 = vmatpush1.bf16.msra.mxu0 %v5499
    %7480 = vmatprep.subr.bf16.mxu0 %v5508
    %7481 = vmatpush1.bf16.msra.mxu0 %v5507
    %7482 = vmatprep.subr.bf16.mxu0 %v5516
    %7483 = vmatpush1.bf16.msra.mxu0 %v5515
    %7484 = vmatprep.subr.bf16.mxu0 %v5524
    %7485 = vmatpush1.bf16.msra.mxu0 %v5523
    %7486 = vmatprep.mubr.bf16.mxu0 %v1348
    %7487 = vmatmul.mubr.bf16.gmra.mrb[0].mxu0 %v1347
    %v7488 = vpop.f32.mrb[0].mxu0
    %v7489 = vadd.f32 %v7446, %v7488
    %v7490 = vpop.f32.mrb[0].mxu0
    %v7491 = vadd.f32 %v7448, %v7490
    %v7492 = vpop.f32.mrb[0].mxu0
    %v7493 = vadd.f32 %v7450, %v7492
    %v7494 = vpop.f32.mrb[0].mxu0
    %v7495 = vadd.f32 %v7452, %v7494
    %7496 = vdwg.mxu0
    %7497 = vmatprep.subr.bf16.mxu0 %v5532
    %7498 = vmatpush1.bf16.msra.mxu0 %v5531
    %7499 = vmatprep.subr.bf16.mxu0 %v5540
    %7500 = vmatpush1.bf16.msra.mxu0 %v5539
    %7501 = vmatprep.subr.bf16.mxu0 %v5548
    %7502 = vmatpush1.bf16.msra.mxu0 %v5547
    %7503 = vmatprep.subr.bf16.mxu0 %v5556
    %7504 = vmatpush1.bf16.msra.mxu0 %v5555
    %7505 = vmatprep.subr.bf16.mxu0 %v5564
    %7506 = vmatpush1.bf16.msra.mxu0 %v5563
    %7507 = vmatprep.subr.bf16.mxu0 %v5572
    %7508 = vmatpush1.bf16.msra.mxu0 %v5571
    %7509 = vmatprep.subr.bf16.mxu0 %v5580
    %7510 = vmatpush1.bf16.msra.mxu0 %v5579
    %7511 = vmatprep.subr.bf16.mxu0 %v5588
    %7512 = vmatpush1.bf16.msra.mxu0 %v5587
    %7513 = vmatprep.subr.bf16.mxu0 %v5596
    %7514 = vmatpush1.bf16.msra.mxu0 %v5595
    %7515 = vmatprep.subr.bf16.mxu0 %v5604
    %7516 = vmatpush1.bf16.msra.mxu0 %v5603
    %7517 = vmatprep.subr.bf16.mxu0 %v5612
    %7518 = vmatpush1.bf16.msra.mxu0 %v5611
    %7519 = vmatprep.subr.bf16.mxu0 %v5620
    %7520 = vmatpush1.bf16.msra.mxu0 %v5619
    %7521 = vmatprep.subr.bf16.mxu0 %v5628
    %7522 = vmatpush1.bf16.msra.mxu0 %v5627
    %7523 = vmatprep.subr.bf16.mxu0 %v5636
    %7524 = vmatpush1.bf16.msra.mxu0 %v5635
    %7525 = vmatprep.subr.bf16.mxu0 %v5644
    %7526 = vmatpush1.bf16.msra.mxu0 %v5643
    %7527 = vmatprep.subr.bf16.mxu0 %v5652
    %7528 = vmatpush1.bf16.msra.mxu0 %v5651
    %7529 = vmatprep.mubr.bf16.mxu0 %v1350
    %7530 = vmatmul.mubr.bf16.gmra.mrb[0].mxu0 %v1349
    %v7531 = vpop.f32.mrb[0].mxu0
    %v7532 = vadd.f32 %v7489, %v7531
    %v7533 = vpop.f32.mrb[0].mxu0
    %v7534 = vadd.f32 %v7491, %v7533
    %v7535 = vpop.f32.mrb[0].mxu0
    %v7536 = vadd.f32 %v7493, %v7535
    %v7537 = vpop.f32.mrb[0].mxu0
    %v7538 = vadd.f32 %v7495, %v7537
    %7539 = vdwg.mxu0
    %7540 = vmatprep.subr.bf16.mxu0 %v5660
    %7541 = vmatpush1.bf16.msra.mxu0 %v5659
    %7542 = vmatprep.subr.bf16.mxu0 %v5668
    %7543 = vmatpush1.bf16.msra.mxu0 %v5667
    %7544 = vmatprep.subr.bf16.mxu0 %v5676
    %7545 = vmatpush1.bf16.msra.mxu0 %v5675
    %7546 = vmatprep.subr.bf16.mxu0 %v5684
    %7547 = vmatpush1.bf16.msra.mxu0 %v5683
    %7548 = vmatprep.subr.bf16.mxu0 %v5692
    %7549 = vmatpush1.bf16.msra.mxu0 %v5691
    %7550 = vmatprep.subr.bf16.mxu0 %v5700
    %7551 = vmatpush1.bf16.msra.mxu0 %v5699
    %7552 = vmatprep.subr.bf16.mxu0 %v5708
    %7553 = vmatpush1.bf16.msra.mxu0 %v5707
    %7554 = vmatprep.subr.bf16.mxu0 %v5716
    %7555 = vmatpush1.bf16.msra.mxu0 %v5715
    %7556 = vmatprep.subr.bf16.mxu0 0
    %7557 = vmatpush1.bf16.msra.mxu0 0
    %7558 = vmatprep.subr.bf16.mxu0 0
    %7559 = vmatpush1.bf16.msra.mxu0 0
    %7560 = vmatprep.subr.bf16.mxu0 0
    %7561 = vmatpush1.bf16.msra.mxu0 0
    %7562 = vmatprep.subr.bf16.mxu0 0
    %7563 = vmatpush1.bf16.msra.mxu0 0
    %7564 = vmatprep.subr.bf16.mxu0 0
    %7565 = vmatpush1.bf16.msra.mxu0 0
    %7566 = vmatprep.subr.bf16.mxu0 0
    %7567 = vmatpush1.bf16.msra.mxu0 0
    %7568 = vmatprep.subr.bf16.mxu0 0
    %7569 = vmatpush1.bf16.msra.mxu0 0
    %7570 = vmatprep.subr.bf16.mxu0 0
    %7571 = vmatpush1.bf16.msra.mxu0 0
    %7572 = vmatprep.mubr.bf16.mxu0 0
    %7573 = vmatmul.mubr.bf16.gmra.mrb[0].mxu0 %v1351
    %v7574 = vpop.f32.mrb[0].mxu0
    %v7575 = vadd.f32 %v7532, %v7574
    %v7576 = vpop.f32.mrb[0].mxu0
    %v7577 = vadd.f32 %v7534, %v7576
    %v7578 = vpop.f32.mrb[0].mxu0
    %v7579 = vadd.f32 %v7536, %v7578
    %v7580 = vpop.f32.mrb[0].mxu0
    %v7581 = vadd.f32 %v7538, %v7580
    %7582 = vdwg.mxu0
    %7583 = vmatprep.subr.bf16.mxu0 %v4638
    %7584 = vmatpush1.bf16.msra.mxu0 %v4637
    %7585 = vmatprep.subr.bf16.mxu0 %v4646
    %7586 = vmatpush1.bf16.msra.mxu0 %v4645
    %7587 = vmatprep.subr.bf16.mxu0 %v4654
    %7588 = vmatpush1.bf16.msra.mxu0 %v4653
    %7589 = vmatprep.subr.bf16.mxu0 %v4662
    %7590 = vmatpush1.bf16.msra.mxu0 %v4661
    %7591 = vmatprep.subr.bf16.mxu0 %v4670
    %7592 = vmatpush1.bf16.msra.mxu0 %v4669
    %7593 = vmatprep.subr.bf16.mxu0 %v4678
    %7594 = vmatpush1.bf16.msra.mxu0 %v4677
    %7595 = vmatprep.subr.bf16.mxu0 %v4686
    %7596 = vmatpush1.bf16.msra.mxu0 %v4685
    %7597 = vmatprep.subr.bf16.mxu0 %v4694
    %7598 = vmatpush1.bf16.msra.mxu0 %v4693
    %7599 = vmatprep.subr.bf16.mxu0 %v4702
    %7600 = vmatpush1.bf16.msra.mxu0 %v4701
    %7601 = vmatprep.subr.bf16.mxu0 %v4710
    %7602 = vmatpush1.bf16.msra.mxu0 %v4709
    %7603 = vmatprep.subr.bf16.mxu0 %v4718
    %7604 = vmatpush1.bf16.msra.mxu0 %v4717
    %7605 = vmatprep.subr.bf16.mxu0 %v4726
    %7606 = vmatpush1.bf16.msra.mxu0 %v4725
    %7607 = vmatprep.subr.bf16.mxu0 %v4734
    %7608 = vmatpush1.bf16.msra.mxu0 %v4733
    %7609 = vmatprep.subr.bf16.mxu0 %v4742
    %7610 = vmatpush1.bf16.msra.mxu0 %v4741
    %7611 = vmatprep.subr.bf16.mxu0 %v4750
    %7612 = vmatpush1.bf16.msra.mxu0 %v4749
    %7613 = vmatprep.subr.bf16.mxu0 %v4758
    %7614 = vmatpush1.bf16.msra.mxu0 %v4757
    %7615 = vmatprep.mubr.bf16.mxu0 %v1336
    %7616 = vmatmul.mubr.bf16.gmra.mrb[0].mxu0 %v1335
    %v7617 = vpop.f32.mrb[0].mxu0
    %v7618 = vadd.f32 %v1262, %v7617
    %v7619 = vpop.f32.mrb[0].mxu0
    %v7620 = vadd.f32 %v1266, %v7619
    %v7621 = vpop.f32.mrb[0].mxu0
    %v7622 = vadd.f32 %v1262, %v7621
    %v7623 = vpop.f32.mrb[0].mxu0
    %v7624 = vadd.f32 %v1266, %v7623
    %7625 = vdwg.mxu0
    %7626 = vmatprep.subr.bf16.mxu0 %v4766
    %7627 = vmatpush1.bf16.msra.mxu0 %v4765
    %7628 = vmatprep.subr.bf16.mxu0 %v4774
    %7629 = vmatpush1.bf16.msra.mxu0 %v4773
    %7630 = vmatprep.subr.bf16.mxu0 %v4782
    %7631 = vmatpush1.bf16.msra.mxu0 %v4781
    %7632 = vmatprep.subr.bf16.mxu0 %v4790
    %7633 = vmatpush1.bf16.msra.mxu0 %v4789
    %7634 = vmatprep.subr.bf16.mxu0 %v4798
    %7635 = vmatpush1.bf16.msra.mxu0 %v4797
    %7636 = vmatprep.subr.bf16.mxu0 %v4806
    %7637 = vmatpush1.bf16.msra.mxu0 %v4805
    %7638 = vmatprep.subr.bf16.mxu0 %v4814
    %7639 = vmatpush1.bf16.msra.mxu0 %v4813
    %7640 = vmatprep.subr.bf16.mxu0 %v4822
    %7641 = vmatpush1.bf16.msra.mxu0 %v4821
    %7642 = vmatprep.subr.bf16.mxu0 %v4830
    %7643 = vmatpush1.bf16.msra.mxu0 %v4829
    %7644 = vmatprep.subr.bf16.mxu0 %v4838
    %7645 = vmatpush1.bf16.msra.mxu0 %v4837
    %7646 = vmatprep.subr.bf16.mxu0 %v4846
    %7647 = vmatpush1.bf16.msra.mxu0 %v4845
    %7648 = vmatprep.subr.bf16.mxu0 %v4854
    %7649 = vmatpush1.bf16.msra.mxu0 %v4853
    %7650 = vmatprep.subr.bf16.mxu0 %v4862
    %7651 = vmatpush1.bf16.msra.mxu0 %v4861
    %7652 = vmatprep.subr.bf16.mxu0 %v4870
    %7653 = vmatpush1.bf16.msra.mxu0 %v4869
    %7654 = vmatprep.subr.bf16.mxu0 %v4878
    %7655 = vmatpush1.bf16.msra.mxu0 %v4877
    %7656 = vmatprep.subr.bf16.mxu0 %v4886
    %7657 = vmatpush1.bf16.msra.mxu0 %v4885
    %7658 = vmatprep.mubr.bf16.mxu0 %v1338
    %7659 = vmatmul.mubr.bf16.gmra.mrb[0].mxu0 %v1337
    %v7660 = vpop.f32.mrb[0].mxu0
    %v7661 = vadd.f32 %v7618, %v7660
    %v7662 = vpop.f32.mrb[0].mxu0
    %v7663 = vadd.f32 %v7620, %v7662
    %v7664 = vpop.f32.mrb[0].mxu0
    %v7665 = vadd.f32 %v7622, %v7664
    %v7666 = vpop.f32.mrb[0].mxu0
    %v7667 = vadd.f32 %v7624, %v7666
    %7668 = vdwg.mxu0
    %7669 = vmatprep.subr.bf16.mxu0 %v4894
    %7670 = vmatpush1.bf16.msra.mxu0 %v4893
    %7671 = vmatprep.subr.bf16.mxu0 %v4902
    %7672 = vmatpush1.bf16.msra.mxu0 %v4901
    %7673 = vmatprep.subr.bf16.mxu0 %v4910
    %7674 = vmatpush1.bf16.msra.mxu0 %v4909
    %7675 = vmatprep.subr.bf16.mxu0 %v4918
    %7676 = vmatpush1.bf16.msra.mxu0 %v4917
    %7677 = vmatprep.subr.bf16.mxu0 %v4926
    %7678 = vmatpush1.bf16.msra.mxu0 %v4925
    %7679 = vmatprep.subr.bf16.mxu0 %v4934
    %7680 = vmatpush1.bf16.msra.mxu0 %v4933
    %7681 = vmatprep.subr.bf16.mxu0 %v4942
    %7682 = vmatpush1.bf16.msra.mxu0 %v4941
    %7683 = vmatprep.subr.bf16.mxu0 %v4950
    %7684 = vmatpush1.bf16.msra.mxu0 %v4949
    %7685 = vmatprep.subr.bf16.mxu0 %v4958
    %7686 = vmatpush1.bf16.msra.mxu0 %v4957
    %7687 = vmatprep.subr.bf16.mxu0 %v4966
    %7688 = vmatpush1.bf16.msra.mxu0 %v4965
    %7689 = vmatprep.subr.bf16.mxu0 %v4974
    %7690 = vmatpush1.bf16.msra.mxu0 %v4973
    %7691 = vmatprep.subr.bf16.mxu0 %v4982
    %7692 = vmatpush1.bf16.msra.mxu0 %v4981
    %7693 = vmatprep.subr.bf16.mxu0 %v4990
    %7694 = vmatpush1.bf16.msra.mxu0 %v4989
    %7695 = vmatprep.subr.bf16.mxu0 %v4998
    %7696 = vmatpush1.bf16.msra.mxu0 %v4997
    %7697 = vmatprep.subr.bf16.mxu0 %v5006
    %7698 = vmatpush1.bf16.msra.mxu0 %v5005
    %7699 = vmatprep.subr.bf16.mxu0 %v5014
    %7700 = vmatpush1.bf16.msra.mxu0 %v5013
    %7701 = vmatprep.mubr.bf16.mxu0 %v1340
    %7702 = vmatmul.mubr.bf16.gmra.mrb[0].mxu0 %v1339
    %v7703 = vpop.f32.mrb[0].mxu0
    %v7704 = vadd.f32 %v7661, %v7703
    %v7705 = vpop.f32.mrb[0].mxu0
    %v7706 = vadd.f32 %v7663, %v7705
    %v7707 = vpop.f32.mrb[0].mxu0
    %v7708 = vadd.f32 %v7665, %v7707
    %v7709 = vpop.f32.mrb[0].mxu0
    %v7710 = vadd.f32 %v7667, %v7709
    %7711 = vdwg.mxu0
    %7712 = vmatprep.subr.bf16.mxu0 %v5022
    %7713 = vmatpush1.bf16.msra.mxu0 %v5021
    %7714 = vmatprep.subr.bf16.mxu0 %v5030
    %7715 = vmatpush1.bf16.msra.mxu0 %v5029
    %7716 = vmatprep.subr.bf16.mxu0 %v5038
    %7717 = vmatpush1.bf16.msra.mxu0 %v5037
    %7718 = vmatprep.subr.bf16.mxu0 %v5046
    %7719 = vmatpush1.bf16.msra.mxu0 %v5045
    %7720 = vmatprep.subr.bf16.mxu0 %v5054
    %7721 = vmatpush1.bf16.msra.mxu0 %v5053
    %7722 = vmatprep.subr.bf16.mxu0 %v5062
    %7723 = vmatpush1.bf16.msra.mxu0 %v5061
    %7724 = vmatprep.subr.bf16.mxu0 %v5070
    %7725 = vmatpush1.bf16.msra.mxu0 %v5069
    %7726 = vmatprep.subr.bf16.mxu0 %v5078
    %7727 = vmatpush1.bf16.msra.mxu0 %v5077
    %7728 = vmatprep.subr.bf16.mxu0 %v5086
    %7729 = vmatpush1.bf16.msra.mxu0 %v5085
    %7730 = vmatprep.subr.bf16.mxu0 %v5094
    %7731 = vmatpush1.bf16.msra.mxu0 %v5093
    %7732 = vmatprep.subr.bf16.mxu0 %v5102
    %7733 = vmatpush1.bf16.msra.mxu0 %v5101
    %7734 = vmatprep.subr.bf16.mxu0 %v5110
    %7735 = vmatpush1.bf16.msra.mxu0 %v5109
    %7736 = vmatprep.subr.bf16.mxu0 %v5118
    %7737 = vmatpush1.bf16.msra.mxu0 %v5117
    %7738 = vmatprep.subr.bf16.mxu0 %v5126
    %7739 = vmatpush1.bf16.msra.mxu0 %v5125
    %7740 = vmatprep.subr.bf16.mxu0 %v5134
    %7741 = vmatpush1.bf16.msra.mxu0 %v5133
    %7742 = vmatprep.subr.bf16.mxu0 %v5142
    %7743 = vmatpush1.bf16.msra.mxu0 %v5141
    %7744 = vmatprep.mubr.bf16.mxu0 %v1342
    %7745 = vmatmul.mubr.bf16.gmra.mrb[0].mxu0 %v1341
    %v7746 = vpop.f32.mrb[0].mxu0
    %v7747 = vadd.f32 %v7704, %v7746
    %v7748 = vpop.f32.mrb[0].mxu0
    %v7749 = vadd.f32 %v7706, %v7748
    %v7750 = vpop.f32.mrb[0].mxu0
    %v7751 = vadd.f32 %v7708, %v7750
    %v7752 = vpop.f32.mrb[0].mxu0
    %v7753 = vadd.f32 %v7710, %v7752
    %7754 = vdwg.mxu0
    %7755 = vmatprep.subr.bf16.mxu0 %v5150
    %7756 = vmatpush1.bf16.msra.mxu0 %v5149
    %7757 = vmatprep.subr.bf16.mxu0 %v5158
    %7758 = vmatpush1.bf16.msra.mxu0 %v5157
    %7759 = vmatprep.subr.bf16.mxu0 %v5166
    %7760 = vmatpush1.bf16.msra.mxu0 %v5165
    %7761 = vmatprep.subr.bf16.mxu0 %v5174
    %7762 = vmatpush1.bf16.msra.mxu0 %v5173
    %7763 = vmatprep.subr.bf16.mxu0 %v5182
    %7764 = vmatpush1.bf16.msra.mxu0 %v5181
    %7765 = vmatprep.subr.bf16.mxu0 %v5190
    %7766 = vmatpush1.bf16.msra.mxu0 %v5189
    %7767 = vmatprep.subr.bf16.mxu0 %v5198
    %7768 = vmatpush1.bf16.msra.mxu0 %v5197
    %7769 = vmatprep.subr.bf16.mxu0 %v5206
    %7770 = vmatpush1.bf16.msra.mxu0 %v5205
    %7771 = vmatprep.subr.bf16.mxu0 %v5214
    %7772 = vmatpush1.bf16.msra.mxu0 %v5213
    %7773 = vmatprep.subr.bf16.mxu0 %v5222
    %7774 = vmatpush1.bf16.msra.mxu0 %v5221
    %7775 = vmatprep.subr.bf16.mxu0 %v5230
    %7776 = vmatpush1.bf16.msra.mxu0 %v5229
    %7777 = vmatprep.subr.bf16.mxu0 %v5238
    %7778 = vmatpush1.bf16.msra.mxu0 %v5237
    %7779 = vmatprep.subr.bf16.mxu0 %v5246
    %7780 = vmatpush1.bf16.msra.mxu0 %v5245
    %7781 = vmatprep.subr.bf16.mxu0 %v5254
    %7782 = vmatpush1.bf16.msra.mxu0 %v5253
    %7783 = vmatprep.subr.bf16.mxu0 %v5262
    %7784 = vmatpush1.bf16.msra.mxu0 %v5261
    %7785 = vmatprep.subr.bf16.mxu0 %v5270
    %7786 = vmatpush1.bf16.msra.mxu0 %v5269
    %7787 = vmatprep.mubr.bf16.mxu0 %v1344
    %7788 = vmatmul.mubr.bf16.gmra.mrb[0].mxu0 %v1343
    %v7789 = vpop.f32.mrb[0].mxu0
    %v7790 = vadd.f32 %v7747, %v7789
    %v7791 = vpop.f32.mrb[0].mxu0
    %v7792 = vadd.f32 %v7749, %v7791
    %v7793 = vpop.f32.mrb[0].mxu0
    %v7794 = vadd.f32 %v7751, %v7793
    %v7795 = vpop.f32.mrb[0].mxu0
    %v7796 = vadd.f32 %v7753, %v7795
    %7797 = vdwg.mxu0
    %7798 = vmatprep.subr.bf16.mxu0 %v5278
    %7799 = vmatpush1.bf16.msra.mxu0 %v5277
    %7800 = vmatprep.subr.bf16.mxu0 %v5286
    %7801 = vmatpush1.bf16.msra.mxu0 %v5285
    %7802 = vmatprep.subr.bf16.mxu0 %v5294
    %7803 = vmatpush1.bf16.msra.mxu0 %v5293
    %7804 = vmatprep.subr.bf16.mxu0 %v5302
    %7805 = vmatpush1.bf16.msra.mxu0 %v5301
    %7806 = vmatprep.subr.bf16.mxu0 %v5310
    %7807 = vmatpush1.bf16.msra.mxu0 %v5309
    %7808 = vmatprep.subr.bf16.mxu0 %v5318
    %7809 = vmatpush1.bf16.msra.mxu0 %v5317
    %7810 = vmatprep.subr.bf16.mxu0 %v5326
    %7811 = vmatpush1.bf16.msra.mxu0 %v5325
    %7812 = vmatprep.subr.bf16.mxu0 %v5334
    %7813 = vmatpush1.bf16.msra.mxu0 %v5333
    %7814 = vmatprep.subr.bf16.mxu0 %v5342
    %7815 = vmatpush1.bf16.msra.mxu0 %v5341
    %7816 = vmatprep.subr.bf16.mxu0 %v5350
    %7817 = vmatpush1.bf16.msra.mxu0 %v5349
    %7818 = vmatprep.subr.bf16.mxu0 %v5358
    %7819 = vmatpush1.bf16.msra.mxu0 %v5357
    %7820 = vmatprep.subr.bf16.mxu0 %v5366
    %7821 = vmatpush1.bf16.msra.mxu0 %v5365
    %7822 = vmatprep.subr.bf16.mxu0 %v5374
    %7823 = vmatpush1.bf16.msra.mxu0 %v5373
    %7824 = vmatprep.subr.bf16.mxu0 %v5382
    %7825 = vmatpush1.bf16.msra.mxu0 %v5381
    %7826 = vmatprep.subr.bf16.mxu0 %v5390
    %7827 = vmatpush1.bf16.msra.mxu0 %v5389
    %7828 = vmatprep.subr.bf16.mxu0 %v5398
    %7829 = vmatpush1.bf16.msra.mxu0 %v5397
    %7830 = vmatprep.mubr.bf16.mxu0 %v1346
    %7831 = vmatmul.mubr.bf16.gmra.mrb[0].mxu0 %v1345
    %v7832 = vpop.f32.mrb[0].mxu0
    %v7833 = vadd.f32 %v7790, %v7832
    %v7834 = vpop.f32.mrb[0].mxu0
    %v7835 = vadd.f32 %v7792, %v7834
    %v7836 = vpop.f32.mrb[0].mxu0
    %v7837 = vadd.f32 %v7794, %v7836
    %v7838 = vpop.f32.mrb[0].mxu0
    %v7839 = vadd.f32 %v7796, %v7838
    %7840 = vdwg.mxu0
    %7841 = vmatprep.subr.bf16.mxu0 %v5406
    %7842 = vmatpush1.bf16.msra.mxu0 %v5405
    %7843 = vmatprep.subr.bf16.mxu0 %v5414
    %7844 = vmatpush1.bf16.msra.mxu0 %v5413
    %7845 = vmatprep.subr.bf16.mxu0 %v5422
    %7846 = vmatpush1.bf16.msra.mxu0 %v5421
    %7847 = vmatprep.subr.bf16.mxu0 %v5430
    %7848 = vmatpush1.bf16.msra.mxu0 %v5429
    %7849 = vmatprep.subr.bf16.mxu0 %v5438
    %7850 = vmatpush1.bf16.msra.mxu0 %v5437
    %7851 = vmatprep.subr.bf16.mxu0 %v5446
    %7852 = vmatpush1.bf16.msra.mxu0 %v5445
    %7853 = vmatprep.subr.bf16.mxu0 %v5454
    %7854 = vmatpush1.bf16.msra.mxu0 %v5453
    %7855 = vmatprep.subr.bf16.mxu0 %v5462
    %7856 = vmatpush1.bf16.msra.mxu0 %v5461
    %7857 = vmatprep.subr.bf16.mxu0 %v5470
    %7858 = vmatpush1.bf16.msra.mxu0 %v5469
    %7859 = vmatprep.subr.bf16.mxu0 %v5478
    %7860 = vmatpush1.bf16.msra.mxu0 %v5477
    %7861 = vmatprep.subr.bf16.mxu0 %v5486
    %7862 = vmatpush1.bf16.msra.mxu0 %v5485
    %7863 = vmatprep.subr.bf16.mxu0 %v5494
    %7864 = vmatpush1.bf16.msra.mxu0 %v5493
    %7865 = vmatprep.subr.bf16.mxu0 %v5502
    %7866 = vmatpush1.bf16.msra.mxu0 %v5501
    %7867 = vmatprep.subr.bf16.mxu0 %v5510
    %7868 = vmatpush1.bf16.msra.mxu0 %v5509
    %7869 = vmatprep.subr.bf16.mxu0 %v5518
    %7870 = vmatpush1.bf16.msra.mxu0 %v5517
    %7871 = vmatprep.subr.bf16.mxu0 %v5526
    %7872 = vmatpush1.bf16.msra.mxu0 %v5525
    %7873 = vmatprep.mubr.bf16.mxu0 %v1348
    %7874 = vmatmul.mubr.bf16.gmra.mrb[0].mxu0 %v1347
    %v7875 = vpop.f32.mrb[0].mxu0
    %v7876 = vadd.f32 %v7833, %v7875
    %v7877 = vpop.f32.mrb[0].mxu0
    %v7878 = vadd.f32 %v7835, %v7877
    %v7879 = vpop.f32.mrb[0].mxu0
    %v7880 = vadd.f32 %v7837, %v7879
    %v7881 = vpop.f32.mrb[0].mxu0
    %v7882 = vadd.f32 %v7839, %v7881
    %7883 = vdwg.mxu0
    %7884 = vmatprep.subr.bf16.mxu0 %v5534
    %7885 = vmatpush1.bf16.msra.mxu0 %v5533
    %7886 = vmatprep.subr.bf16.mxu0 %v5542
    %7887 = vmatpush1.bf16.msra.mxu0 %v5541
    %7888 = vmatprep.subr.bf16.mxu0 %v5550
    %7889 = vmatpush1.bf16.msra.mxu0 %v5549
    %7890 = vmatprep.subr.bf16.mxu0 %v5558
    %7891 = vmatpush1.bf16.msra.mxu0 %v5557
    %7892 = vmatprep.subr.bf16.mxu0 %v5566
    %7893 = vmatpush1.bf16.msra.mxu0 %v5565
    %7894 = vmatprep.subr.bf16.mxu0 %v5574
    %7895 = vmatpush1.bf16.msra.mxu0 %v5573
    %7896 = vmatprep.subr.bf16.mxu0 %v5582
    %7897 = vmatpush1.bf16.msra.mxu0 %v5581
    %7898 = vmatprep.subr.bf16.mxu0 %v5590
    %7899 = vmatpush1.bf16.msra.mxu0 %v5589
    %7900 = vmatprep.subr.bf16.mxu0 %v5598
    %7901 = vmatpush1.bf16.msra.mxu0 %v5597
    %7902 = vmatprep.subr.bf16.mxu0 %v5606
    %7903 = vmatpush1.bf16.msra.mxu0 %v5605
    %7904 = vmatprep.subr.bf16.mxu0 %v5614
    %7905 = vmatpush1.bf16.msra.mxu0 %v5613
    %7906 = vmatprep.subr.bf16.mxu0 %v5622
    %7907 = vmatpush1.bf16.msra.mxu0 %v5621
    %7908 = vmatprep.subr.bf16.mxu0 %v5630
    %7909 = vmatpush1.bf16.msra.mxu0 %v5629
    %7910 = vmatprep.subr.bf16.mxu0 %v5638
    %7911 = vmatpush1.bf16.msra.mxu0 %v5637
    %7912 = vmatprep.subr.bf16.mxu0 %v5646
    %7913 = vmatpush1.bf16.msra.mxu0 %v5645
    %7914 = vmatprep.subr.bf16.mxu0 %v5654
    %7915 = vmatpush1.bf16.msra.mxu0 %v5653
    %7916 = vmatprep.mubr.bf16.mxu0 %v1350
    %7917 = vmatmul.mubr.bf16.gmra.mrb[0].mxu0 %v1349
    %v7918 = vpop.f32.mrb[0].mxu0
    %v7919 = vadd.f32 %v7876, %v7918
    %v7920 = vpop.f32.mrb[0].mxu0
    %v7921 = vadd.f32 %v7878, %v7920
    %v7922 = vpop.f32.mrb[0].mxu0
    %v7923 = vadd.f32 %v7880, %v7922
    %v7924 = vpop.f32.mrb[0].mxu0
    %v7925 = vadd.f32 %v7882, %v7924
    %7926 = vdwg.mxu0
    %7927 = vmatprep.subr.bf16.mxu0 %v5662
    %7928 = vmatpush1.bf16.msra.mxu0 %v5661
    %7929 = vmatprep.subr.bf16.mxu0 %v5670
    %7930 = vmatpush1.bf16.msra.mxu0 %v5669
    %7931 = vmatprep.subr.bf16.mxu0 %v5678
    %7932 = vmatpush1.bf16.msra.mxu0 %v5677
    %7933 = vmatprep.subr.bf16.mxu0 %v5686
    %7934 = vmatpush1.bf16.msra.mxu0 %v5685
    %7935 = vmatprep.subr.bf16.mxu0 %v5694
    %7936 = vmatpush1.bf16.msra.mxu0 %v5693
    %7937 = vmatprep.subr.bf16.mxu0 %v5702
    %7938 = vmatpush1.bf16.msra.mxu0 %v5701
    %7939 = vmatprep.subr.bf16.mxu0 %v5710
    %7940 = vmatpush1.bf16.msra.mxu0 %v5709
    %7941 = vmatprep.subr.bf16.mxu0 %v5718
    %7942 = vmatpush1.bf16.msra.mxu0 %v5717
    %7943 = vmatprep.subr.bf16.mxu0 0
    %7944 = vmatpush1.bf16.msra.mxu0 0
    %7945 = vmatprep.subr.bf16.mxu0 0
    %7946 = vmatpush1.bf16.msra.mxu0 0
    %7947 = vmatprep.subr.bf16.mxu0 0
    %7948 = vmatpush1.bf16.msra.mxu0 0
    %7949 = vmatprep.subr.bf16.mxu0 0
    %7950 = vmatpush1.bf16.msra.mxu0 0
    %7951 = vmatprep.subr.bf16.mxu0 0
    %7952 = vmatpush1.bf16.msra.mxu0 0
    %7953 = vmatprep.subr.bf16.mxu0 0
    %7954 = vmatpush1.bf16.msra.mxu0 0
    %7955 = vmatprep.subr.bf16.mxu0 0
    %7956 = vmatpush1.bf16.msra.mxu0 0
    %7957 = vmatprep.subr.bf16.mxu0 0
    %7958 = vmatpush1.bf16.msra.mxu0 0
    %7959 = vmatprep.mubr.bf16.mxu0 0
    %7960 = vmatmul.mubr.bf16.gmra.mrb[0].mxu0 %v1351
    %v7961 = vpop.f32.mrb[0].mxu0
    %v7962 = vadd.f32 %v7919, %v7961
    %v7963 = vpop.f32.mrb[0].mxu0
    %v7964 = vadd.f32 %v7921, %v7963
    %v7965 = vpop.f32.mrb[0].mxu0
    %v7966 = vadd.f32 %v7923, %v7965
    %v7967 = vpop.f32.mrb[0].mxu0
    %v7968 = vadd.f32 %v7925, %v7967
    %7969 = vdwg.mxu0
    %7970 = vmatprep.subr.bf16.mxu0 %v4640
    %7971 = vmatpush1.bf16.msra.mxu0 %v4639
    %7972 = vmatprep.subr.bf16.mxu0 %v4648
    %7973 = vmatpush1.bf16.msra.mxu0 %v4647
    %7974 = vmatprep.subr.bf16.mxu0 %v4656
    %7975 = vmatpush1.bf16.msra.mxu0 %v4655
    %7976 = vmatprep.subr.bf16.mxu0 %v4664
    %7977 = vmatpush1.bf16.msra.mxu0 %v4663
    %7978 = vmatprep.subr.bf16.mxu0 %v4672
    %7979 = vmatpush1.bf16.msra.mxu0 %v4671
    %7980 = vmatprep.subr.bf16.mxu0 %v4680
    %7981 = vmatpush1.bf16.msra.mxu0 %v4679
    %7982 = vmatprep.subr.bf16.mxu0 %v4688
    %7983 = vmatpush1.bf16.msra.mxu0 %v4687
    %7984 = vmatprep.subr.bf16.mxu0 %v4696
    %7985 = vmatpush1.bf16.msra.mxu0 %v4695
    %7986 = vmatprep.subr.bf16.mxu0 %v4704
    %7987 = vmatpush1.bf16.msra.mxu0 %v4703
    %7988 = vmatprep.subr.bf16.mxu0 %v4712
    %7989 = vmatpush1.bf16.msra.mxu0 %v4711
    %7990 = vmatprep.subr.bf16.mxu0 %v4720
    %7991 = vmatpush1.bf16.msra.mxu0 %v4719
    %7992 = vmatprep.subr.bf16.mxu0 %v4728
    %7993 = vmatpush1.bf16.msra.mxu0 %v4727
    %7994 = vmatprep.subr.bf16.mxu0 %v4736
    %7995 = vmatpush1.bf16.msra.mxu0 %v4735
    %7996 = vmatprep.subr.bf16.mxu0 %v4744
    %7997 = vmatpush1.bf16.msra.mxu0 %v4743
    %7998 = vmatprep.subr.bf16.mxu0 %v4752
    %7999 = vmatpush1.bf16.msra.mxu0 %v4751
    %8000 = vmatprep.subr.bf16.mxu0 %v4760
    %8001 = vmatpush1.bf16.msra.mxu0 %v4759
    %8002 = vmatprep.mubr.bf16.mxu0 %v1336
    %8003 = vmatmul.mubr.bf16.gmra.mrb[0].mxu0 %v1335
    %v8004 = vpop.f32.mrb[0].mxu0
    %v8005 = vadd.f32 %v1270, %v8004
    %v8006 = vpop.f32.mrb[0].mxu0
    %v8007 = vadd.f32 %v1274, %v8006
    %v8008 = vpop.f32.mrb[0].mxu0
    %v8009 = vadd.f32 %v1270, %v8008
    %v8010 = vpop.f32.mrb[0].mxu0
    %v8011 = vadd.f32 %v1274, %v8010
    %8012 = vdwg.mxu0
    %8013 = vmatprep.subr.bf16.mxu0 %v4768
    %8014 = vmatpush1.bf16.msra.mxu0 %v4767
    %8015 = vmatprep.subr.bf16.mxu0 %v4776
    %8016 = vmatpush1.bf16.msra.mxu0 %v4775
    %8017 = vmatprep.subr.bf16.mxu0 %v4784
    %8018 = vmatpush1.bf16.msra.mxu0 %v4783
    %8019 = vmatprep.subr.bf16.mxu0 %v4792
    %8020 = vmatpush1.bf16.msra.mxu0 %v4791
    %8021 = vmatprep.subr.bf16.mxu0 %v4800
    %8022 = vmatpush1.bf16.msra.mxu0 %v4799
    %8023 = vmatprep.subr.bf16.mxu0 %v4808
    %8024 = vmatpush1.bf16.msra.mxu0 %v4807
    %8025 = vmatprep.subr.bf16.mxu0 %v4816
    %8026 = vmatpush1.bf16.msra.mxu0 %v4815
    %8027 = vmatprep.subr.bf16.mxu0 %v4824
    %8028 = vmatpush1.bf16.msra.mxu0 %v4823
    %8029 = vmatprep.subr.bf16.mxu0 %v4832
    %8030 = vmatpush1.bf16.msra.mxu0 %v4831
    %8031 = vmatprep.subr.bf16.mxu0 %v4840
    %8032 = vmatpush1.bf16.msra.mxu0 %v4839
    %8033 = vmatprep.subr.bf16.mxu0 %v4848
    %8034 = vmatpush1.bf16.msra.mxu0 %v4847
    %8035 = vmatprep.subr.bf16.mxu0 %v4856
    %8036 = vmatpush1.bf16.msra.mxu0 %v4855
    %8037 = vmatprep.subr.bf16.mxu0 %v4864
    %8038 = vmatpush1.bf16.msra.mxu0 %v4863
    %8039 = vmatprep.subr.bf16.mxu0 %v4872
    %8040 = vmatpush1.bf16.msra.mxu0 %v4871
    %8041 = vmatprep.subr.bf16.mxu0 %v4880
    %8042 = vmatpush1.bf16.msra.mxu0 %v4879
    %8043 = vmatprep.subr.bf16.mxu0 %v4888
    %8044 = vmatpush1.bf16.msra.mxu0 %v4887
    %8045 = vmatprep.mubr.bf16.mxu0 %v1338
    %8046 = vmatmul.mubr.bf16.gmra.mrb[0].mxu0 %v1337
    %v8047 = vpop.f32.mrb[0].mxu0
    %v8048 = vadd.f32 %v8005, %v8047
    %v8049 = vpop.f32.mrb[0].mxu0
    %v8050 = vadd.f32 %v8007, %v8049
    %v8051 = vpop.f32.mrb[0].mxu0
    %v8052 = vadd.f32 %v8009, %v8051
    %v8053 = vpop.f32.mrb[0].mxu0
    %v8054 = vadd.f32 %v8011, %v8053
    %8055 = vdwg.mxu0
    %8056 = vmatprep.subr.bf16.mxu0 %v4896
    %8057 = vmatpush1.bf16.msra.mxu0 %v4895
    %8058 = vmatprep.subr.bf16.mxu0 %v4904
    %8059 = vmatpush1.bf16.msra.mxu0 %v4903
    %8060 = vmatprep.subr.bf16.mxu0 %v4912
    %8061 = vmatpush1.bf16.msra.mxu0 %v4911
    %8062 = vmatprep.subr.bf16.mxu0 %v4920
    %8063 = vmatpush1.bf16.msra.mxu0 %v4919
    %8064 = vmatprep.subr.bf16.mxu0 %v4928
    %8065 = vmatpush1.bf16.msra.mxu0 %v4927
    %8066 = vmatprep.subr.bf16.mxu0 %v4936
    %8067 = vmatpush1.bf16.msra.mxu0 %v4935
    %8068 = vmatprep.subr.bf16.mxu0 %v4944
    %8069 = vmatpush1.bf16.msra.mxu0 %v4943
    %8070 = vmatprep.subr.bf16.mxu0 %v4952
    %8071 = vmatpush1.bf16.msra.mxu0 %v4951
    %8072 = vmatprep.subr.bf16.mxu0 %v4960
    %8073 = vmatpush1.bf16.msra.mxu0 %v4959
    %8074 = vmatprep.subr.bf16.mxu0 %v4968
    %8075 = vmatpush1.bf16.msra.mxu0 %v4967
    %8076 = vmatprep.subr.bf16.mxu0 %v4976
    %8077 = vmatpush1.bf16.msra.mxu0 %v4975
    %8078 = vmatprep.subr.bf16.mxu0 %v4984
    %8079 = vmatpush1.bf16.msra.mxu0 %v4983
    %8080 = vmatprep.subr.bf16.mxu0 %v4992
    %8081 = vmatpush1.bf16.msra.mxu0 %v4991
    %8082 = vmatprep.subr.bf16.mxu0 %v5000
    %8083 = vmatpush1.bf16.msra.mxu0 %v4999
    %8084 = vmatprep.subr.bf16.mxu0 %v5008
    %8085 = vmatpush1.bf16.msra.mxu0 %v5007
    %8086 = vmatprep.subr.bf16.mxu0 %v5016
    %8087 = vmatpush1.bf16.msra.mxu0 %v5015
    %8088 = vmatprep.mubr.bf16.mxu0 %v1340
    %8089 = vmatmul.mubr.bf16.gmra.mrb[0].mxu0 %v1339
    %v8090 = vpop.f32.mrb[0].mxu0
    %v8091 = vadd.f32 %v8048, %v8090
    %v8092 = vpop.f32.mrb[0].mxu0
    %v8093 = vadd.f32 %v8050, %v8092
    %v8094 = vpop.f32.mrb[0].mxu0
    %v8095 = vadd.f32 %v8052, %v8094
    %v8096 = vpop.f32.mrb[0].mxu0
    %v8097 = vadd.f32 %v8054, %v8096
    %8098 = vdwg.mxu0
    %8099 = vmatprep.subr.bf16.mxu0 %v5024
    %8100 = vmatpush1.bf16.msra.mxu0 %v5023
    %8101 = vmatprep.subr.bf16.mxu0 %v5032
    %8102 = vmatpush1.bf16.msra.mxu0 %v5031
    %8103 = vmatprep.subr.bf16.mxu0 %v5040
    %8104 = vmatpush1.bf16.msra.mxu0 %v5039
    %8105 = vmatprep.subr.bf16.mxu0 %v5048
    %8106 = vmatpush1.bf16.msra.mxu0 %v5047
    %8107 = vmatprep.subr.bf16.mxu0 %v5056
    %8108 = vmatpush1.bf16.msra.mxu0 %v5055
    %8109 = vmatprep.subr.bf16.mxu0 %v5064
    %8110 = vmatpush1.bf16.msra.mxu0 %v5063
    %8111 = vmatprep.subr.bf16.mxu0 %v5072
    %8112 = vmatpush1.bf16.msra.mxu0 %v5071
    %8113 = vmatprep.subr.bf16.mxu0 %v5080
    %8114 = vmatpush1.bf16.msra.mxu0 %v5079
    %8115 = vmatprep.subr.bf16.mxu0 %v5088
    %8116 = vmatpush1.bf16.msra.mxu0 %v5087
    %8117 = vmatprep.subr.bf16.mxu0 %v5096
    %8118 = vmatpush1.bf16.msra.mxu0 %v5095
    %8119 = vmatprep.subr.bf16.mxu0 %v5104
    %8120 = vmatpush1.bf16.msra.mxu0 %v5103
    %8121 = vmatprep.subr.bf16.mxu0 %v5112
    %8122 = vmatpush1.bf16.msra.mxu0 %v5111
    %8123 = vmatprep.subr.bf16.mxu0 %v5120
    %8124 = vmatpush1.bf16.msra.mxu0 %v5119
    %8125 = vmatprep.subr.bf16.mxu0 %v5128
    %8126 = vmatpush1.bf16.msra.mxu0 %v5127
    %8127 = vmatprep.subr.bf16.mxu0 %v5136
    %8128 = vmatpush1.bf16.msra.mxu0 %v5135
    %8129 = vmatprep.subr.bf16.mxu0 %v5144
    %8130 = vmatpush1.bf16.msra.mxu0 %v5143
    %8131 = vmatprep.mubr.bf16.mxu0 %v1342
    %8132 = vmatmul.mubr.bf16.gmra.mrb[0].mxu0 %v1341
    %v8133 = vpop.f32.mrb[0].mxu0
    %v8134 = vadd.f32 %v8091, %v8133
    %v8135 = vpop.f32.mrb[0].mxu0
    %v8136 = vadd.f32 %v8093, %v8135
    %v8137 = vpop.f32.mrb[0].mxu0
    %v8138 = vadd.f32 %v8095, %v8137
    %v8139 = vpop.f32.mrb[0].mxu0
    %v8140 = vadd.f32 %v8097, %v8139
    %8141 = vdwg.mxu0
    %8142 = vmatprep.subr.bf16.mxu0 %v5152
    %8143 = vmatpush1.bf16.msra.mxu0 %v5151
    %8144 = vmatprep.subr.bf16.mxu0 %v5160
    %8145 = vmatpush1.bf16.msra.mxu0 %v5159
    %8146 = vmatprep.subr.bf16.mxu0 %v5168
    %8147 = vmatpush1.bf16.msra.mxu0 %v5167
    %8148 = vmatprep.subr.bf16.mxu0 %v5176
    %8149 = vmatpush1.bf16.msra.mxu0 %v5175
    %8150 = vmatprep.subr.bf16.mxu0 %v5184
    %8151 = vmatpush1.bf16.msra.mxu0 %v5183
    %8152 = vmatprep.subr.bf16.mxu0 %v5192
    %8153 = vmatpush1.bf16.msra.mxu0 %v5191
    %8154 = vmatprep.subr.bf16.mxu0 %v5200
    %8155 = vmatpush1.bf16.msra.mxu0 %v5199
    %8156 = vmatprep.subr.bf16.mxu0 %v5208
    %8157 = vmatpush1.bf16.msra.mxu0 %v5207
    %8158 = vmatprep.subr.bf16.mxu0 %v5216
    %8159 = vmatpush1.bf16.msra.mxu0 %v5215
    %8160 = vmatprep.subr.bf16.mxu0 %v5224
    %8161 = vmatpush1.bf16.msra.mxu0 %v5223
    %8162 = vmatprep.subr.bf16.mxu0 %v5232
    %8163 = vmatpush1.bf16.msra.mxu0 %v5231
    %8164 = vmatprep.subr.bf16.mxu0 %v5240
    %8165 = vmatpush1.bf16.msra.mxu0 %v5239
    %8166 = vmatprep.subr.bf16.mxu0 %v5248
    %8167 = vmatpush1.bf16.msra.mxu0 %v5247
    %8168 = vmatprep.subr.bf16.mxu0 %v5256
    %8169 = vmatpush1.bf16.msra.mxu0 %v5255
    %8170 = vmatprep.subr.bf16.mxu0 %v5264
    %8171 = vmatpush1.bf16.msra.mxu0 %v5263
    %8172 = vmatprep.subr.bf16.mxu0 %v5272
    %8173 = vmatpush1.bf16.msra.mxu0 %v5271
    %8174 = vmatprep.mubr.bf16.mxu0 %v1344
    %8175 = vmatmul.mubr.bf16.gmra.mrb[0].mxu0 %v1343
    %v8176 = vpop.f32.mrb[0].mxu0
    %v8177 = vadd.f32 %v8134, %v8176
    %v8178 = vpop.f32.mrb[0].mxu0
    %v8179 = vadd.f32 %v8136, %v8178
    %v8180 = vpop.f32.mrb[0].mxu0
    %v8181 = vadd.f32 %v8138, %v8180
    %v8182 = vpop.f32.mrb[0].mxu0
    %v8183 = vadd.f32 %v8140, %v8182
    %8184 = vdwg.mxu0
    %8185 = vmatprep.subr.bf16.mxu0 %v5280
    %8186 = vmatpush1.bf16.msra.mxu0 %v5279
    %8187 = vmatprep.subr.bf16.mxu0 %v5288
    %8188 = vmatpush1.bf16.msra.mxu0 %v5287
    %8189 = vmatprep.subr.bf16.mxu0 %v5296
    %8190 = vmatpush1.bf16.msra.mxu0 %v5295
    %8191 = vmatprep.subr.bf16.mxu0 %v5304
    %8192 = vmatpush1.bf16.msra.mxu0 %v5303
    %8193 = vmatprep.subr.bf16.mxu0 %v5312
    %8194 = vmatpush1.bf16.msra.mxu0 %v5311
    %8195 = vmatprep.subr.bf16.mxu0 %v5320
    %8196 = vmatpush1.bf16.msra.mxu0 %v5319
    %8197 = vmatprep.subr.bf16.mxu0 %v5328
    %8198 = vmatpush1.bf16.msra.mxu0 %v5327
    %8199 = vmatprep.subr.bf16.mxu0 %v5336
    %8200 = vmatpush1.bf16.msra.mxu0 %v5335
    %8201 = vmatprep.subr.bf16.mxu0 %v5344
    %8202 = vmatpush1.bf16.msra.mxu0 %v5343
    %8203 = vmatprep.subr.bf16.mxu0 %v5352
    %8204 = vmatpush1.bf16.msra.mxu0 %v5351
    %8205 = vmatprep.subr.bf16.mxu0 %v5360
    %8206 = vmatpush1.bf16.msra.mxu0 %v5359
    %8207 = vmatprep.subr.bf16.mxu0 %v5368
    %8208 = vmatpush1.bf16.msra.mxu0 %v5367
    %8209 = vmatprep.subr.bf16.mxu0 %v5376
    %8210 = vmatpush1.bf16.msra.mxu0 %v5375
    %8211 = vmatprep.subr.bf16.mxu0 %v5384
    %8212 = vmatpush1.bf16.msra.mxu0 %v5383
    %8213 = vmatprep.subr.bf16.mxu0 %v5392
    %8214 = vmatpush1.bf16.msra.mxu0 %v5391
    %8215 = vmatprep.subr.bf16.mxu0 %v5400
    %8216 = vmatpush1.bf16.msra.mxu0 %v5399
    %8217 = vmatprep.mubr.bf16.mxu0 %v1346
    %8218 = vmatmul.mubr.bf16.gmra.mrb[0].mxu0 %v1345
    %v8219 = vpop.f32.mrb[0].mxu0
    %v8220 = vadd.f32 %v8177, %v8219
    %v8221 = vpop.f32.mrb[0].mxu0
    %v8222 = vadd.f32 %v8179, %v8221
    %v8223 = vpop.f32.mrb[0].mxu0
    %v8224 = vadd.f32 %v8181, %v8223
    %v8225 = vpop.f32.mrb[0].mxu0
    %v8226 = vadd.f32 %v8183, %v8225
    %8227 = vdwg.mxu0
    %8228 = vmatprep.subr.bf16.mxu0 %v5408
    %8229 = vmatpush1.bf16.msra.mxu0 %v5407
    %8230 = vmatprep.subr.bf16.mxu0 %v5416
    %8231 = vmatpush1.bf16.msra.mxu0 %v5415
    %8232 = vmatprep.subr.bf16.mxu0 %v5424
    %8233 = vmatpush1.bf16.msra.mxu0 %v5423
    %8234 = vmatprep.subr.bf16.mxu0 %v5432
    %8235 = vmatpush1.bf16.msra.mxu0 %v5431
    %8236 = vmatprep.subr.bf16.mxu0 %v5440
    %8237 = vmatpush1.bf16.msra.mxu0 %v5439
    %8238 = vmatprep.subr.bf16.mxu0 %v5448
    %8239 = vmatpush1.bf16.msra.mxu0 %v5447
    %8240 = vmatprep.subr.bf16.mxu0 %v5456
    %8241 = vmatpush1.bf16.msra.mxu0 %v5455
    %8242 = vmatprep.subr.bf16.mxu0 %v5464
    %8243 = vmatpush1.bf16.msra.mxu0 %v5463
    %8244 = vmatprep.subr.bf16.mxu0 %v5472
    %8245 = vmatpush1.bf16.msra.mxu0 %v5471
    %8246 = vmatprep.subr.bf16.mxu0 %v5480
    %8247 = vmatpush1.bf16.msra.mxu0 %v5479
    %8248 = vmatprep.subr.bf16.mxu0 %v5488
    %8249 = vmatpush1.bf16.msra.mxu0 %v5487
    %8250 = vmatprep.subr.bf16.mxu0 %v5496
    %8251 = vmatpush1.bf16.msra.mxu0 %v5495
    %8252 = vmatprep.subr.bf16.mxu0 %v5504
    %8253 = vmatpush1.bf16.msra.mxu0 %v5503
    %8254 = vmatprep.subr.bf16.mxu0 %v5512
    %8255 = vmatpush1.bf16.msra.mxu0 %v5511
    %8256 = vmatprep.subr.bf16.mxu0 %v5520
    %8257 = vmatpush1.bf16.msra.mxu0 %v5519
    %8258 = vmatprep.subr.bf16.mxu0 %v5528
    %8259 = vmatpush1.bf16.msra.mxu0 %v5527
    %8260 = vmatprep.mubr.bf16.mxu0 %v1348
    %8261 = vmatmul.mubr.bf16.gmra.mrb[0].mxu0 %v1347
    %v8262 = vpop.f32.mrb[0].mxu0
    %v8263 = vadd.f32 %v8220, %v8262
    %v8264 = vpop.f32.mrb[0].mxu0
    %v8265 = vadd.f32 %v8222, %v8264
    %v8266 = vpop.f32.mrb[0].mxu0
    %v8267 = vadd.f32 %v8224, %v8266
    %v8268 = vpop.f32.mrb[0].mxu0
    %v8269 = vadd.f32 %v8226, %v8268
    %8270 = vdwg.mxu0
    %8271 = vmatprep.subr.bf16.mxu0 %v5536
    %8272 = vmatpush1.bf16.msra.mxu0 %v5535
    %8273 = vmatprep.subr.bf16.mxu0 %v5544
    %8274 = vmatpush1.bf16.msra.mxu0 %v5543
    %8275 = vmatprep.subr.bf16.mxu0 %v5552
    %8276 = vmatpush1.bf16.msra.mxu0 %v5551
    %8277 = vmatprep.subr.bf16.mxu0 %v5560
    %8278 = vmatpush1.bf16.msra.mxu0 %v5559
    %8279 = vmatprep.subr.bf16.mxu0 %v5568
    %8280 = vmatpush1.bf16.msra.mxu0 %v5567
    %8281 = vmatprep.subr.bf16.mxu0 %v5576
    %8282 = vmatpush1.bf16.msra.mxu0 %v5575
    %8283 = vmatprep.subr.bf16.mxu0 %v5584
    %8284 = vmatpush1.bf16.msra.mxu0 %v5583
    %8285 = vmatprep.subr.bf16.mxu0 %v5592
    %8286 = vmatpush1.bf16.msra.mxu0 %v5591
    %8287 = vmatprep.subr.bf16.mxu0 %v5600
    %8288 = vmatpush1.bf16.msra.mxu0 %v5599
    %8289 = vmatprep.subr.bf16.mxu0 %v5608
    %8290 = vmatpush1.bf16.msra.mxu0 %v5607
    %8291 = vmatprep.subr.bf16.mxu0 %v5616
    %8292 = vmatpush1.bf16.msra.mxu0 %v5615
    %8293 = vmatprep.subr.bf16.mxu0 %v5624
    %8294 = vmatpush1.bf16.msra.mxu0 %v5623
    %8295 = vmatprep.subr.bf16.mxu0 %v5632
    %8296 = vmatpush1.bf16.msra.mxu0 %v5631
    %8297 = vmatprep.subr.bf16.mxu0 %v5640
    %8298 = vmatpush1.bf16.msra.mxu0 %v5639
    %8299 = vmatprep.subr.bf16.mxu0 %v5648
    %8300 = vmatpush1.bf16.msra.mxu0 %v5647
    %8301 = vmatprep.subr.bf16.mxu0 %v5656
    %8302 = vmatpush1.bf16.msra.mxu0 %v5655
    %8303 = vmatprep.mubr.bf16.mxu0 %v1350
    %8304 = vmatmul.mubr.bf16.gmra.mrb[0].mxu0 %v1349
    %v8305 = vpop.f32.mrb[0].mxu0
    %v8306 = vadd.f32 %v8263, %v8305
    %v8307 = vpop.f32.mrb[0].mxu0
    %v8308 = vadd.f32 %v8265, %v8307
    %v8309 = vpop.f32.mrb[0].mxu0
    %v8310 = vadd.f32 %v8267, %v8309
    %v8311 = vpop.f32.mrb[0].mxu0
    %v8312 = vadd.f32 %v8269, %v8311
    %8313 = vdwg.mxu0
    %8314 = vmatprep.subr.bf16.mxu0 %v5664
    %8315 = vmatpush1.bf16.msra.mxu0 %v5663
    %8316 = vmatprep.subr.bf16.mxu0 %v5672
    %8317 = vmatpush1.bf16.msra.mxu0 %v5671
    %8318 = vmatprep.subr.bf16.mxu0 %v5680
    %8319 = vmatpush1.bf16.msra.mxu0 %v5679
    %8320 = vmatprep.subr.bf16.mxu0 %v5688
    %8321 = vmatpush1.bf16.msra.mxu0 %v5687
    %8322 = vmatprep.subr.bf16.mxu0 %v5696
    %8323 = vmatpush1.bf16.msra.mxu0 %v5695
    %8324 = vmatprep.subr.bf16.mxu0 %v5704
    %8325 = vmatpush1.bf16.msra.mxu0 %v5703
    %8326 = vmatprep.subr.bf16.mxu0 %v5712
    %8327 = vmatpush1.bf16.msra.mxu0 %v5711
    %8328 = vmatprep.subr.bf16.mxu0 %v5720
    %8329 = vmatpush1.bf16.msra.mxu0 %v5719
    %8330 = vmatprep.subr.bf16.mxu0 0
    %8331 = vmatpush1.bf16.msra.mxu0 0
    %8332 = vmatprep.subr.bf16.mxu0 0
    %8333 = vmatpush1.bf16.msra.mxu0 0
    %8334 = vmatprep.subr.bf16.mxu0 0
    %8335 = vmatpush1.bf16.msra.mxu0 0
    %8336 = vmatprep.subr.bf16.mxu0 0
    %8337 = vmatpush1.bf16.msra.mxu0 0
    %8338 = vmatprep.subr.bf16.mxu0 0
    %8339 = vmatpush1.bf16.msra.mxu0 0
    %8340 = vmatprep.subr.bf16.mxu0 0
    %8341 = vmatpush1.bf16.msra.mxu0 0
    %8342 = vmatprep.subr.bf16.mxu0 0
    %8343 = vmatpush1.bf16.msra.mxu0 0
    %8344 = vmatprep.subr.bf16.mxu0 0
    %8345 = vmatpush1.bf16.msra.mxu0 0
    %8346 = vmatprep.mubr.bf16.mxu0 0
    %8347 = vmatmul.mubr.bf16.gmra.mrb[0].mxu0 %v1351
    %v8348 = vpop.f32.mrb[0].mxu0
    %v8349 = vadd.f32 %v8306, %v8348
    %v8350 = vpop.f32.mrb[0].mxu0
    %v8351 = vadd.f32 %v8308, %v8350
    %v8352 = vpop.f32.mrb[0].mxu0
    %v8353 = vadd.f32 %v8310, %v8352
    %v8354 = vpop.f32.mrb[0].mxu0
    %v8355 = vadd.f32 %v8312, %v8354
    %8356 = vdwg.mxu0
    %vm8357 = vcmp.gt.f32.partialorder %v7188, 0.0
    %vm8358 = vcmp.gt.f32.partialorder %v7190, 0.0
    %vm8359 = vcmp.gt.f32.partialorder %v7575, 0.0
    %vm8360 = vcmp.gt.f32.partialorder %v7577, 0.0
    %vm8361 = vcmp.gt.f32.partialorder %v7962, 0.0
    %vm8362 = vcmp.gt.f32.partialorder %v7964, 0.0
    %vm8363 = vcmp.gt.f32.partialorder %v8349, 0.0
    %vm8364 = vcmp.gt.f32.partialorder %v8351, 0.0
    %vm8365 = vcmp.gt.f32.partialorder %v7192, 0.0
    %vm8366 = vcmp.gt.f32.partialorder %v7194, 0.0
    %vm8367 = vcmp.gt.f32.partialorder %v7579, 0.0
    %vm8368 = vcmp.gt.f32.partialorder %v7581, 0.0
    %vm8369 = vcmp.gt.f32.partialorder %v7966, 0.0
    %vm8370 = vcmp.gt.f32.partialorder %v7968, 0.0
    %vm8371 = vcmp.gt.f32.partialorder %v8353, 0.0
    %vm8372 = vcmp.gt.f32.partialorder %v8355, 0.0
    %v8373 = vmul.f32 %v7188, 0.01
    %v8374 = vmul.f32 %v7190, 0.01
    %v8375 = vmul.f32 %v7575, 0.01
    %v8376 = vmul.f32 %v7577, 0.01
    %v8377 = vmul.f32 %v7962, 0.01
    %v8378 = vmul.f32 %v7964, 0.01
    %v8379 = vmul.f32 %v8349, 0.01
    %v8380 = vmul.f32 %v8351, 0.01
    %v8381 = vmul.f32 %v7192, 0.01
    %v8382 = vmul.f32 %v7194, 0.01
    %v8383 = vmul.f32 %v7579, 0.01
    %v8384 = vmul.f32 %v7581, 0.01
    %v8385 = vmul.f32 %v7966, 0.01
    %v8386 = vmul.f32 %v7968, 0.01
    %v8387 = vmul.f32 %v8353, 0.01
    %v8388 = vmul.f32 %v8355, 0.01
    %v8389 = vsel %vm8357, %v7188, %v8373
    %v8390 = vsel %vm8358, %v7190, %v8374
    %v8391 = vsel %vm8359, %v7575, %v8375
    %v8392 = vsel %vm8360, %v7577, %v8376
    %v8393 = vsel %vm8361, %v7962, %v8377
    %v8394 = vsel %vm8362, %v7964, %v8378
    %v8395 = vsel %vm8363, %v8349, %v8379
    %v8396 = vsel %vm8364, %v8351, %v8380
    %v8397 = vsel %vm8365, %v7192, %v8381
    %v8398 = vsel %vm8366, %v7194, %v8382
    %v8399 = vsel %vm8367, %v7579, %v8383
    %v8400 = vsel %vm8368, %v7581, %v8384
    %v8401 = vsel %vm8369, %v7966, %v8385
    %v8402 = vsel %vm8370, %v7968, %v8386
    %v8403 = vsel %vm8371, %v8353, %v8387
    %v8404 = vsel %vm8372, %v8355, %v8388
    %v8405 = vpack.c.bf16 %v8397, %v8389
    %v8406 = vpack.c.bf16 %v8398, %v8390
    %v8407 = vpack.c.bf16 %v8399, %v8391
    %v8408 = vpack.c.bf16 %v8400, %v8392
    %v8409 = vpack.c.bf16 %v8401, %v8393
    %v8410 = vpack.c.bf16 %v8402, %v8394
    %v8411 = vpack.c.bf16 %v8403, %v8395
    %v8412 = vpack.c.bf16 %v8404, %v8396
    %v8413 = vld [vmem:[#allocation8] sm:$0xf]
    %v8414 = vld [vmem:[#allocation8 + $0x4] sm:$0xf]
    %v8415 = vld [vmem:[#allocation8 + $0x8] sm:$0xf]
    %v8416 = vld [vmem:[#allocation8 + $0xc] sm:$0xf]
    %v8417 = vld [vmem:[#allocation8 + $0x10] sm:$0xf]
    %v8418 = vld [vmem:[#allocation8 + $0x14] sm:$0xf]
    %v8419 = vld [vmem:[#allocation8 + $0x18] sm:$0xf]
    %v8420 = vld [vmem:[#allocation8 + $0x1c] sm:$0xf]
    %v8421 = vld [vmem:[#allocation8 + $0x20] sm:$0xf]
    %v8422 = vld [vmem:[#allocation8 + $0x24] sm:$0xf]
    %v8423 = vld [vmem:[#allocation8 + $0x28] sm:$0xf]
    %v8424 = vld [vmem:[#allocation8 + $0x2c] sm:$0xf]
    %v8425 = vld [vmem:[#allocation8 + $0x30] sm:$0xf]
    %v8426 = vld [vmem:[#allocation8 + $0x34] sm:$0xf]
    %v8427 = vld [vmem:[#allocation8 + $0x38] sm:$0xf]
    %v8428 = vld [vmem:[#allocation8 + $0x3c] sm:$0xf]
    %v8429 = vld [vmem:[#allocation8 + $0x40] sm:$0xf]
    %v8430 = vld [vmem:[#allocation8 + $0x44] sm:$0xf]
    %v8431 = vld [vmem:[#allocation8 + $0x48] sm:$0xf]
    %v8432 = vld [vmem:[#allocation8 + $0x4c] sm:$0xf]
    %v8433 = vld [vmem:[#allocation8 + $0x50] sm:$0xf]
    %v8434 = vld [vmem:[#allocation8 + $0x54] sm:$0xf]
    %v8435 = vld [vmem:[#allocation8 + $0x58] sm:$0xf]
    %v8436 = vld [vmem:[#allocation8 + $0x5c] sm:$0xf]
    %v8437 = vld [vmem:[#allocation8 + $0x60] sm:$0xf]
    %v8438 = vld [vmem:[#allocation8 + $0x64] sm:$0xf]
    %v8439 = vld [vmem:[#allocation8 + $0x68] sm:$0xf]
    %v8440 = vld [vmem:[#allocation8 + $0x6c] sm:$0xf]
    %v8441 = vld [vmem:[#allocation8 + $0x70] sm:$0xf]
    %v8442 = vld [vmem:[#allocation8 + $0x74] sm:$0xf]
    %v8443 = vld [vmem:[#allocation8 + $0x78] sm:$0xf]
    %v8444 = vld [vmem:[#allocation8 + $0x7c] sm:$0xf]
    %v8445 = vld [vmem:[#allocation8 + $0x80] sm:$0xf]
    %v8446 = vld [vmem:[#allocation8 + $0x84] sm:$0xf]
    %v8447 = vld [vmem:[#allocation8 + $0x88] sm:$0xf]
    %v8448 = vld [vmem:[#allocation8 + $0x8c] sm:$0xf]
    %v8449 = vld [vmem:[#allocation8 + $0x90] sm:$0xf]
    %v8450 = vld [vmem:[#allocation8 + $0x94] sm:$0xf]
    %v8451 = vld [vmem:[#allocation8 + $0x98] sm:$0xf]
    %v8452 = vld [vmem:[#allocation8 + $0x9c] sm:$0xf]
    %v8453 = vld [vmem:[#allocation8 + $0xa0] sm:$0xf]
    %v8454 = vld [vmem:[#allocation8 + $0xa4] sm:$0xf]
    %v8455 = vld [vmem:[#allocation8 + $0xa8] sm:$0xf]
    %v8456 = vld [vmem:[#allocation8 + $0xac] sm:$0xf]
    %v8457 = vld [vmem:[#allocation8 + $0xb0] sm:$0xf]
    %v8458 = vld [vmem:[#allocation8 + $0xb4] sm:$0xf]
    %v8459 = vld [vmem:[#allocation8 + $0xb8] sm:$0xf]
    %v8460 = vld [vmem:[#allocation8 + $0xbc] sm:$0xf]
    %v8461 = vld [vmem:[#allocation8 + $0xc0] sm:$0xf]
    %v8462 = vld [vmem:[#allocation8 + $0xc4] sm:$0xf]
    %v8463 = vld [vmem:[#allocation8 + $0xc8] sm:$0xf]
    %v8464 = vld [vmem:[#allocation8 + $0xcc] sm:$0xf]
    %v8465 = vld [vmem:[#allocation8 + $0xd0] sm:$0xf]
    %v8466 = vld [vmem:[#allocation8 + $0xd4] sm:$0xf]
    %v8467 = vld [vmem:[#allocation8 + $0xd8] sm:$0xf]
    %v8468 = vld [vmem:[#allocation8 + $0xdc] sm:$0xf]
    %v8469 = vld [vmem:[#allocation8 + $0xe0] sm:$0xf]
    %v8470 = vld [vmem:[#allocation8 + $0xe4] sm:$0xf]
    %v8471 = vld [vmem:[#allocation8 + $0xe8] sm:$0xf]
    %v8472 = vld [vmem:[#allocation8 + $0xec] sm:$0xf]
    %v8473 = vld [vmem:[#allocation8 + $0xf0] sm:$0xf]
    %v8474 = vld [vmem:[#allocation8 + $0xf4] sm:$0xf]
    %v8475 = vld [vmem:[#allocation8 + $0xf8] sm:$0xf]
    %v8476 = vld [vmem:[#allocation8 + $0xfc] sm:$0xf]
    %v8477 = vld [vmem:[#allocation8 + $0x100] sm:$0xf]
    %v8478 = vld [vmem:[#allocation8 + $0x104] sm:$0xf]
    %v8479 = vld [vmem:[#allocation8 + $0x108] sm:$0xf]
    %v8480 = vld [vmem:[#allocation8 + $0x10c] sm:$0xf]
    %v8481 = vld [vmem:[#allocation8 + $0x110] sm:$0xf]
    %v8482 = vld [vmem:[#allocation8 + $0x114] sm:$0xf]
    %v8483 = vld [vmem:[#allocation8 + $0x118] sm:$0xf]
    %v8484 = vld [vmem:[#allocation8 + $0x11c] sm:$0xf]
    %v8485 = vld [vmem:[#allocation8 + $0x120] sm:$0xf]
    %v8486 = vld [vmem:[#allocation8 + $0x124] sm:$0xf]
    %v8487 = vld [vmem:[#allocation8 + $0x128] sm:$0xf]
    %v8488 = vld [vmem:[#allocation8 + $0x12c] sm:$0xf]
    %v8489 = vld [vmem:[#allocation8 + $0x130] sm:$0xf]
    %v8490 = vld [vmem:[#allocation8 + $0x134] sm:$0xf]
    %v8491 = vld [vmem:[#allocation8 + $0x138] sm:$0xf]
    %v8492 = vld [vmem:[#allocation8 + $0x13c] sm:$0xf]
    %v8493 = vld [vmem:[#allocation8 + $0x140] sm:$0xf]
    %v8494 = vld [vmem:[#allocation8 + $0x144] sm:$0xf]
    %v8495 = vld [vmem:[#allocation8 + $0x148] sm:$0xf]
    %v8496 = vld [vmem:[#allocation8 + $0x14c] sm:$0xf]
    %v8497 = vld [vmem:[#allocation8 + $0x150] sm:$0xf]
    %v8498 = vld [vmem:[#allocation8 + $0x154] sm:$0xf]
    %v8499 = vld [vmem:[#allocation8 + $0x158] sm:$0xf]
    %v8500 = vld [vmem:[#allocation8 + $0x15c] sm:$0xf]
    %v8501 = vld [vmem:[#allocation8 + $0x160] sm:$0xf]
    %v8502 = vld [vmem:[#allocation8 + $0x164] sm:$0xf]
    %v8503 = vld [vmem:[#allocation8 + $0x168] sm:$0xf]
    %v8504 = vld [vmem:[#allocation8 + $0x16c] sm:$0xf]
    %v8505 = vld [vmem:[#allocation8 + $0x170] sm:$0xf]
    %v8506 = vld [vmem:[#allocation8 + $0x174] sm:$0xf]
    %v8507 = vld [vmem:[#allocation8 + $0x178] sm:$0xf]
    %v8508 = vld [vmem:[#allocation8 + $0x17c] sm:$0xf]
    %v8509 = vld [vmem:[#allocation8 + $0x180] sm:$0xf]
    %v8510 = vld [vmem:[#allocation8 + $0x184] sm:$0xf]
    %v8511 = vld [vmem:[#allocation8 + $0x188] sm:$0xf]
    %v8512 = vld [vmem:[#allocation8 + $0x18c] sm:$0xf]
    %v8513 = vld [vmem:[#allocation8 + $0x190] sm:$0xf]
    %v8514 = vld [vmem:[#allocation8 + $0x194] sm:$0xf]
    %v8515 = vld [vmem:[#allocation8 + $0x198] sm:$0xf]
    %v8516 = vld [vmem:[#allocation8 + $0x19c] sm:$0xf]
    %v8517 = vld [vmem:[#allocation8 + $0x1a0] sm:$0xf]
    %v8518 = vld [vmem:[#allocation8 + $0x1a4] sm:$0xf]
    %v8519 = vld [vmem:[#allocation8 + $0x1a8] sm:$0xf]
    %v8520 = vld [vmem:[#allocation8 + $0x1ac] sm:$0xf]
    %v8521 = vld [vmem:[#allocation8 + $0x1b0] sm:$0xf]
    %v8522 = vld [vmem:[#allocation8 + $0x1b4] sm:$0xf]
    %v8523 = vld [vmem:[#allocation8 + $0x1b8] sm:$0xf]
    %v8524 = vld [vmem:[#allocation8 + $0x1bc] sm:$0xf]
    %v8525 = vld [vmem:[#allocation8 + $0x1c0] sm:$0xf]
    %v8526 = vld [vmem:[#allocation8 + $0x1c4] sm:$0xf]
    %v8527 = vld [vmem:[#allocation8 + $0x1c8] sm:$0xf]
    %v8528 = vld [vmem:[#allocation8 + $0x1cc] sm:$0xf]
    %v8529 = vld [vmem:[#allocation8 + $0x1d0] sm:$0xf]
    %v8530 = vld [vmem:[#allocation8 + $0x1d4] sm:$0xf]
    %v8531 = vld [vmem:[#allocation8 + $0x1d8] sm:$0xf]
    %v8532 = vld [vmem:[#allocation8 + $0x1dc] sm:$0xf]
    %v8533 = vld [vmem:[#allocation8 + $0x1e0] sm:$0xf]
    %v8534 = vld [vmem:[#allocation8 + $0x1e4] sm:$0xf]
    %v8535 = vld [vmem:[#allocation8 + $0x1e8] sm:$0xf]
    %v8536 = vld [vmem:[#allocation8 + $0x1ec] sm:$0xf]
    %v8537 = vld [vmem:[#allocation8 + $0x1f0] sm:$0xf]
    %v8538 = vld [vmem:[#allocation8 + $0x1f4] sm:$0xf]
    %v8539 = vld [vmem:[#allocation8 + $0x1f8] sm:$0xf]
    %v8540 = vld [vmem:[#allocation8 + $0x1fc] sm:$0xf]
    %v8541 = vld [vmem:[#allocation10] sm:$0x1]
    %v8543 = vlaneseq
    %v8544 = vshrl.u32 %v8543, 7
    %v8545 = vsub.s32 0, %v8544
    %v8546 = vrot.slane %v8541, %v8545
    %v8676 = vunpack.c.l.b16 %v8413
    %v8677 = vunpack.c.l.b16 %v8414
    %v8678 = vunpack.c.l.b16 %v8415
    %v8679 = vunpack.c.l.b16 %v8416
    %v8680 = vunpack.c.l.b16 %v8417
    %v8681 = vunpack.c.l.b16 %v8418
    %v8682 = vunpack.c.l.b16 %v8419
    %v8683 = vunpack.c.l.b16 %v8420
    %v8684 = vunpack.c.l.b16 %v8421
    %v8685 = vunpack.c.l.b16 %v8422
    %v8686 = vunpack.c.l.b16 %v8423
    %v8687 = vunpack.c.l.b16 %v8424
    %v8688 = vunpack.c.l.b16 %v8425
    %v8689 = vunpack.c.l.b16 %v8426
    %v8690 = vunpack.c.l.b16 %v8427
    %v8691 = vunpack.c.l.b16 %v8428
    %v8692 = vunpack.c.l.b16 %v8429
    %v8693 = vunpack.c.l.b16 %v8430
    %v8694 = vunpack.c.l.b16 %v8431
    %v8695 = vunpack.c.l.b16 %v8432
    %v8696 = vunpack.c.l.b16 %v8433
    %v8697 = vunpack.c.l.b16 %v8434
    %v8698 = vunpack.c.l.b16 %v8435
    %v8699 = vunpack.c.l.b16 %v8436
    %v8700 = vunpack.c.l.b16 %v8437
    %v8701 = vunpack.c.l.b16 %v8438
    %v8702 = vunpack.c.l.b16 %v8439
    %v8703 = vunpack.c.l.b16 %v8440
    %v8704 = vunpack.c.l.b16 %v8441
    %v8705 = vunpack.c.l.b16 %v8442
    %v8706 = vunpack.c.l.b16 %v8443
    %v8707 = vunpack.c.l.b16 %v8444
    %v8708 = vunpack.c.l.b16 %v8445
    %v8709 = vunpack.c.l.b16 %v8446
    %v8710 = vunpack.c.l.b16 %v8447
    %v8711 = vunpack.c.l.b16 %v8448
    %v8712 = vunpack.c.l.b16 %v8449
    %v8713 = vunpack.c.l.b16 %v8450
    %v8714 = vunpack.c.l.b16 %v8451
    %v8715 = vunpack.c.l.b16 %v8452
    %v8716 = vunpack.c.l.b16 %v8453
    %v8717 = vunpack.c.l.b16 %v8454
    %v8718 = vunpack.c.l.b16 %v8455
    %v8719 = vunpack.c.l.b16 %v8456
    %v8720 = vunpack.c.l.b16 %v8457
    %v8721 = vunpack.c.l.b16 %v8458
    %v8722 = vunpack.c.l.b16 %v8459
    %v8723 = vunpack.c.l.b16 %v8460
    %v8724 = vunpack.c.l.b16 %v8461
    %v8725 = vunpack.c.l.b16 %v8462
    %v8726 = vunpack.c.l.b16 %v8463
    %v8727 = vunpack.c.l.b16 %v8464
    %v8728 = vunpack.c.l.b16 %v8465
    %v8729 = vunpack.c.l.b16 %v8466
    %v8730 = vunpack.c.l.b16 %v8467
    %v8731 = vunpack.c.l.b16 %v8468
    %v8732 = vunpack.c.l.b16 %v8469
    %v8733 = vunpack.c.l.b16 %v8470
    %v8734 = vunpack.c.l.b16 %v8471
    %v8735 = vunpack.c.l.b16 %v8472
    %v8736 = vunpack.c.l.b16 %v8473
    %v8737 = vunpack.c.l.b16 %v8474
    %v8738 = vunpack.c.l.b16 %v8475
    %v8739 = vunpack.c.l.b16 %v8476
    %v8740 = vunpack.c.l.b16 %v8477
    %v8741 = vunpack.c.l.b16 %v8478
    %v8742 = vunpack.c.l.b16 %v8479
    %v8743 = vunpack.c.l.b16 %v8480
    %v8744 = vunpack.c.l.b16 %v8481
    %v8745 = vunpack.c.l.b16 %v8482
    %v8746 = vunpack.c.l.b16 %v8483
    %v8747 = vunpack.c.l.b16 %v8484
    %v8748 = vunpack.c.l.b16 %v8485
    %v8749 = vunpack.c.l.b16 %v8486
    %v8750 = vunpack.c.l.b16 %v8487
    %v8751 = vunpack.c.l.b16 %v8488
    %v8752 = vunpack.c.l.b16 %v8489
    %v8753 = vunpack.c.l.b16 %v8490
    %v8754 = vunpack.c.l.b16 %v8491
    %v8755 = vunpack.c.l.b16 %v8492
    %v8756 = vunpack.c.l.b16 %v8493
    %v8757 = vunpack.c.l.b16 %v8494
    %v8758 = vunpack.c.l.b16 %v8495
    %v8759 = vunpack.c.l.b16 %v8496
    %v8760 = vunpack.c.l.b16 %v8497
    %v8761 = vunpack.c.l.b16 %v8498
    %v8762 = vunpack.c.l.b16 %v8499
    %v8763 = vunpack.c.l.b16 %v8500
    %v8764 = vunpack.c.l.b16 %v8501
    %v8765 = vunpack.c.l.b16 %v8502
    %v8766 = vunpack.c.l.b16 %v8503
    %v8767 = vunpack.c.l.b16 %v8504
    %v8768 = vunpack.c.l.b16 %v8505
    %v8769 = vunpack.c.l.b16 %v8506
    %v8770 = vunpack.c.l.b16 %v8507
    %v8771 = vunpack.c.l.b16 %v8508
    %v8772 = vunpack.c.l.b16 %v8509
    %v8773 = vunpack.c.l.b16 %v8510
    %v8774 = vunpack.c.l.b16 %v8511
    %v8775 = vunpack.c.l.b16 %v8512
    %v8776 = vunpack.c.l.b16 %v8513
    %v8777 = vunpack.c.l.b16 %v8514
    %v8778 = vunpack.c.l.b16 %v8515
    %v8779 = vunpack.c.l.b16 %v8516
    %v8780 = vunpack.c.l.b16 %v8517
    %v8781 = vunpack.c.l.b16 %v8518
    %v8782 = vunpack.c.l.b16 %v8519
    %v8783 = vunpack.c.l.b16 %v8520
    %v8784 = vunpack.c.l.b16 %v8521
    %v8785 = vunpack.c.l.b16 %v8522
    %v8786 = vunpack.c.l.b16 %v8523
    %v8787 = vunpack.c.l.b16 %v8524
    %v8788 = vunpack.c.l.b16 %v8525
    %v8789 = vunpack.c.l.b16 %v8526
    %v8790 = vunpack.c.l.b16 %v8527
    %v8791 = vunpack.c.l.b16 %v8528
    %v8792 = vunpack.c.l.b16 %v8529
    %v8793 = vunpack.c.l.b16 %v8530
    %v8794 = vunpack.c.l.b16 %v8531
    %v8795 = vunpack.c.l.b16 %v8532
    %v8796 = vunpack.c.l.b16 %v8533
    %v8797 = vunpack.c.l.b16 %v8534
    %v8798 = vunpack.c.l.b16 %v8535
    %v8799 = vunpack.c.l.b16 %v8536
    %v8800 = vunpack.c.l.b16 %v8537
    %v8801 = vunpack.c.l.b16 %v8538
    %v8802 = vunpack.c.l.b16 %v8539
    %v8803 = vunpack.c.l.b16 %v8540
    %v8804 = vpack.c.b16 %v8677, %v8676
    %v8805 = vpack.c.b16 %v8679, %v8678
    %v8806 = vpack.c.b16 %v8681, %v8680
    %v8807 = vpack.c.b16 %v8683, %v8682
    %v8808 = vpack.c.b16 %v8685, %v8684
    %v8809 = vpack.c.b16 %v8687, %v8686
    %v8810 = vpack.c.b16 %v8689, %v8688
    %v8811 = vpack.c.b16 %v8691, %v8690
    %v8812 = vpack.c.b16 %v8693, %v8692
    %v8813 = vpack.c.b16 %v8695, %v8694
    %v8814 = vpack.c.b16 %v8697, %v8696
    %v8815 = vpack.c.b16 %v8699, %v8698
    %v8816 = vpack.c.b16 %v8701, %v8700
    %v8817 = vpack.c.b16 %v8703, %v8702
    %v8818 = vpack.c.b16 %v8705, %v8704
    %v8819 = vpack.c.b16 %v8707, %v8706
    %v8820 = vpack.c.b16 %v8709, %v8708
    %v8821 = vpack.c.b16 %v8711, %v8710
    %v8822 = vpack.c.b16 %v8713, %v8712
    %v8823 = vpack.c.b16 %v8715, %v8714
    %v8824 = vpack.c.b16 %v8717, %v8716
    %v8825 = vpack.c.b16 %v8719, %v8718
    %v8826 = vpack.c.b16 %v8721, %v8720
    %v8827 = vpack.c.b16 %v8723, %v8722
    %v8828 = vpack.c.b16 %v8725, %v8724
    %v8829 = vpack.c.b16 %v8727, %v8726
    %v8830 = vpack.c.b16 %v8729, %v8728
    %v8831 = vpack.c.b16 %v8731, %v8730
    %v8832 = vpack.c.b16 %v8733, %v8732
    %v8833 = vpack.c.b16 %v8735, %v8734
    %v8834 = vpack.c.b16 %v8737, %v8736
    %v8835 = vpack.c.b16 %v8739, %v8738
    %v8836 = vpack.c.b16 %v8741, %v8740
    %v8837 = vpack.c.b16 %v8743, %v8742
    %v8838 = vpack.c.b16 %v8745, %v8744
    %v8839 = vpack.c.b16 %v8747, %v8746
    %v8840 = vpack.c.b16 %v8749, %v8748
    %v8841 = vpack.c.b16 %v8751, %v8750
    %v8842 = vpack.c.b16 %v8753, %v8752
    %v8843 = vpack.c.b16 %v8755, %v8754
    %v8844 = vpack.c.b16 %v8757, %v8756
    %v8845 = vpack.c.b16 %v8759, %v8758
    %v8846 = vpack.c.b16 %v8761, %v8760
    %v8847 = vpack.c.b16 %v8763, %v8762
    %v8848 = vpack.c.b16 %v8765, %v8764
    %v8849 = vpack.c.b16 %v8767, %v8766
    %v8850 = vpack.c.b16 %v8769, %v8768
    %v8851 = vpack.c.b16 %v8771, %v8770
    %v8852 = vpack.c.b16 %v8773, %v8772
    %v8853 = vpack.c.b16 %v8775, %v8774
    %v8854 = vpack.c.b16 %v8777, %v8776
    %v8855 = vpack.c.b16 %v8779, %v8778
    %v8856 = vpack.c.b16 %v8781, %v8780
    %v8857 = vpack.c.b16 %v8783, %v8782
    %v8858 = vpack.c.b16 %v8785, %v8784
    %v8859 = vpack.c.b16 %v8787, %v8786
    %v8860 = vpack.c.b16 %v8789, %v8788
    %v8861 = vpack.c.b16 %v8791, %v8790
    %v8862 = vpack.c.b16 %v8793, %v8792
    %v8863 = vpack.c.b16 %v8795, %v8794
    %v8864 = vpack.c.b16 %v8797, %v8796
    %v8865 = vpack.c.b16 %v8799, %v8798
    %v8866 = vpack.c.b16 %v8801, %v8800
    %v8867 = vpack.c.b16 %v8803, %v8802
    %8932 = vmatprep.subr.bf16.mxu0 0
    %8933 = vmatpush1.bf16.msra.mxu0 %v8804
    %8934 = vmatprep.subr.bf16.mxu0 0
    %8935 = vmatpush1.bf16.msra.mxu0 %v8805
    %8936 = vmatprep.subr.bf16.mxu0 0
    %8937 = vmatpush1.bf16.msra.mxu0 %v8806
    %8938 = vmatprep.subr.bf16.mxu0 0
    %8939 = vmatpush1.bf16.msra.mxu0 %v8807
    %8940 = vmatprep.subr.bf16.mxu0 0
    %8941 = vmatpush1.bf16.msra.mxu0 %v8808
    %8942 = vmatprep.subr.bf16.mxu0 0
    %8943 = vmatpush1.bf16.msra.mxu0 %v8809
    %8944 = vmatprep.subr.bf16.mxu0 0
    %8945 = vmatpush1.bf16.msra.mxu0 %v8810
    %8946 = vmatprep.subr.bf16.mxu0 0
    %8947 = vmatpush1.bf16.msra.mxu0 %v8811
    %8948 = vmatprep.subr.bf16.mxu0 0
    %8949 = vmatpush1.bf16.msra.mxu0 %v8812
    %8950 = vmatprep.subr.bf16.mxu0 0
    %8951 = vmatpush1.bf16.msra.mxu0 %v8813
    %8952 = vmatprep.subr.bf16.mxu0 0
    %8953 = vmatpush1.bf16.msra.mxu0 %v8814
    %8954 = vmatprep.subr.bf16.mxu0 0
    %8955 = vmatpush1.bf16.msra.mxu0 %v8815
    %8956 = vmatprep.subr.bf16.mxu0 0
    %8957 = vmatpush1.bf16.msra.mxu0 %v8816
    %8958 = vmatprep.subr.bf16.mxu0 0
    %8959 = vmatpush1.bf16.msra.mxu0 %v8817
    %8960 = vmatprep.subr.bf16.mxu0 0
    %8961 = vmatpush1.bf16.msra.mxu0 %v8818
    %8962 = vmatprep.subr.bf16.mxu0 0
    %8963 = vmatpush1.bf16.msra.mxu0 %v8819
    %8964 = vmatprep.mubr.bf16.mxu0 %v8406
    %8965 = vmatmul.mubr.bf16.gmra.mrb[0].mxu0 %v8405
    %v8966 = vpop.f32.mrb[0].mxu0
    %v8967 = vadd.f32 %v8546, %v8966
    %v8968 = vpop.f32.mrb[0].mxu0
    %v8969 = vpop.f32.mrb[0].mxu0
    %v8970 = vadd.f32 %v8546, %v8969
    %v8971 = vpop.f32.mrb[0].mxu0
    %8972 = vdwg.mxu0
    %8973 = vmatprep.subr.bf16.mxu0 0
    %8974 = vmatpush1.bf16.msra.mxu0 %v8820
    %8975 = vmatprep.subr.bf16.mxu0 0
    %8976 = vmatpush1.bf16.msra.mxu0 %v8821
    %8977 = vmatprep.subr.bf16.mxu0 0
    %8978 = vmatpush1.bf16.msra.mxu0 %v8822
    %8979 = vmatprep.subr.bf16.mxu0 0
    %8980 = vmatpush1.bf16.msra.mxu0 %v8823
    %8981 = vmatprep.subr.bf16.mxu0 0
    %8982 = vmatpush1.bf16.msra.mxu0 %v8824
    %8983 = vmatprep.subr.bf16.mxu0 0
    %8984 = vmatpush1.bf16.msra.mxu0 %v8825
    %8985 = vmatprep.subr.bf16.mxu0 0
    %8986 = vmatpush1.bf16.msra.mxu0 %v8826
    %8987 = vmatprep.subr.bf16.mxu0 0
    %8988 = vmatpush1.bf16.msra.mxu0 %v8827
    %8989 = vmatprep.subr.bf16.mxu0 0
    %8990 = vmatpush1.bf16.msra.mxu0 %v8828
    %8991 = vmatprep.subr.bf16.mxu0 0
    %8992 = vmatpush1.bf16.msra.mxu0 %v8829
    %8993 = vmatprep.subr.bf16.mxu0 0
    %8994 = vmatpush1.bf16.msra.mxu0 %v8830
    %8995 = vmatprep.subr.bf16.mxu0 0
    %8996 = vmatpush1.bf16.msra.mxu0 %v8831
    %8997 = vmatprep.subr.bf16.mxu0 0
    %8998 = vmatpush1.bf16.msra.mxu0 %v8832
    %8999 = vmatprep.subr.bf16.mxu0 0
    %9000 = vmatpush1.bf16.msra.mxu0 %v8833
    %9001 = vmatprep.subr.bf16.mxu0 0
    %9002 = vmatpush1.bf16.msra.mxu0 %v8834
    %9003 = vmatprep.subr.bf16.mxu0 0
    %9004 = vmatpush1.bf16.msra.mxu0 %v8835
    %9005 = vmatprep.mubr.bf16.mxu0 %v8408
    %9006 = vmatmul.mubr.bf16.gmra.mrb[0].mxu0 %v8407
    %v9007 = vpop.f32.mrb[0].mxu0
    %v9008 = vadd.f32 %v8967, %v9007
    %v9009 = vpop.f32.mrb[0].mxu0
    %v9010 = vpop.f32.mrb[0].mxu0
    %v9011 = vadd.f32 %v8970, %v9010
    %v9012 = vpop.f32.mrb[0].mxu0
    %9013 = vdwg.mxu0
    %9014 = vmatprep.subr.bf16.mxu0 0
    %9015 = vmatpush1.bf16.msra.mxu0 %v8836
    %9016 = vmatprep.subr.bf16.mxu0 0
    %9017 = vmatpush1.bf16.msra.mxu0 %v8837
    %9018 = vmatprep.subr.bf16.mxu0 0
    %9019 = vmatpush1.bf16.msra.mxu0 %v8838
    %9020 = vmatprep.subr.bf16.mxu0 0
    %9021 = vmatpush1.bf16.msra.mxu0 %v8839
    %9022 = vmatprep.subr.bf16.mxu0 0
    %9023 = vmatpush1.bf16.msra.mxu0 %v8840
    %9024 = vmatprep.subr.bf16.mxu0 0
    %9025 = vmatpush1.bf16.msra.mxu0 %v8841
    %9026 = vmatprep.subr.bf16.mxu0 0
    %9027 = vmatpush1.bf16.msra.mxu0 %v8842
    %9028 = vmatprep.subr.bf16.mxu0 0
    %9029 = vmatpush1.bf16.msra.mxu0 %v8843
    %9030 = vmatprep.subr.bf16.mxu0 0
    %9031 = vmatpush1.bf16.msra.mxu0 %v8844
    %9032 = vmatprep.subr.bf16.mxu0 0
    %9033 = vmatpush1.bf16.msra.mxu0 %v8845
    %9034 = vmatprep.subr.bf16.mxu0 0
    %9035 = vmatpush1.bf16.msra.mxu0 %v8846
    %9036 = vmatprep.subr.bf16.mxu0 0
    %9037 = vmatpush1.bf16.msra.mxu0 %v8847
    %9038 = vmatprep.subr.bf16.mxu0 0
    %9039 = vmatpush1.bf16.msra.mxu0 %v8848
    %9040 = vmatprep.subr.bf16.mxu0 0
    %9041 = vmatpush1.bf16.msra.mxu0 %v8849
    %9042 = vmatprep.subr.bf16.mxu0 0
    %9043 = vmatpush1.bf16.msra.mxu0 %v8850
    %9044 = vmatprep.subr.bf16.mxu0 0
    %9045 = vmatpush1.bf16.msra.mxu0 %v8851
    %9046 = vmatprep.mubr.bf16.mxu0 %v8410
    %9047 = vmatmul.mubr.bf16.gmra.mrb[0].mxu0 %v8409
    %v9048 = vpop.f32.mrb[0].mxu0
    %v9049 = vadd.f32 %v9008, %v9048
    %v9050 = vpop.f32.mrb[0].mxu0
    %v9051 = vpop.f32.mrb[0].mxu0
    %v9052 = vadd.f32 %v9011, %v9051
    %v9053 = vpop.f32.mrb[0].mxu0
    %9054 = vdwg.mxu0
    %9055 = vmatprep.subr.bf16.mxu0 0
    %9056 = vmatpush1.bf16.msra.mxu0 %v8852
    %9057 = vmatprep.subr.bf16.mxu0 0
    %9058 = vmatpush1.bf16.msra.mxu0 %v8853
    %9059 = vmatprep.subr.bf16.mxu0 0
    %9060 = vmatpush1.bf16.msra.mxu0 %v8854
    %9061 = vmatprep.subr.bf16.mxu0 0
    %9062 = vmatpush1.bf16.msra.mxu0 %v8855
    %9063 = vmatprep.subr.bf16.mxu0 0
    %9064 = vmatpush1.bf16.msra.mxu0 %v8856
    %9065 = vmatprep.subr.bf16.mxu0 0
    %9066 = vmatpush1.bf16.msra.mxu0 %v8857
    %9067 = vmatprep.subr.bf16.mxu0 0
    %9068 = vmatpush1.bf16.msra.mxu0 %v8858
    %9069 = vmatprep.subr.bf16.mxu0 0
    %9070 = vmatpush1.bf16.msra.mxu0 %v8859
    %9071 = vmatprep.subr.bf16.mxu0 0
    %9072 = vmatpush1.bf16.msra.mxu0 %v8860
    %9073 = vmatprep.subr.bf16.mxu0 0
    %9074 = vmatpush1.bf16.msra.mxu0 %v8861
    %9075 = vmatprep.subr.bf16.mxu0 0
    %9076 = vmatpush1.bf16.msra.mxu0 %v8862
    %9077 = vmatprep.subr.bf16.mxu0 0
    %9078 = vmatpush1.bf16.msra.mxu0 %v8863
    %9079 = vmatprep.subr.bf16.mxu0 0
    %9080 = vmatpush1.bf16.msra.mxu0 %v8864
    %9081 = vmatprep.subr.bf16.mxu0 0
    %9082 = vmatpush1.bf16.msra.mxu0 %v8865
    %9083 = vmatprep.subr.bf16.mxu0 0
    %9084 = vmatpush1.bf16.msra.mxu0 %v8866
    %9085 = vmatprep.subr.bf16.mxu0 0
    %9086 = vmatpush1.bf16.msra.mxu0 %v8867
    %9087 = vmatprep.mubr.bf16.mxu0 %v8412
    %9088 = vmatmul.mubr.bf16.gmra.mrb[0].mxu0 %v8411
    %v9089 = vpop.f32.mrb[0].mxu0
    %v9090 = vadd.f32 %v9049, %v9089
    %v9091 = vpop.f32.mrb[0].mxu0
    %v9092 = vpop.f32.mrb[0].mxu0
    %v9093 = vadd.f32 %v9052, %v9092
    %v9094 = vpop.f32.mrb[0].mxu0
    %9095 = vdwg.mxu0
    %vm9096 = vcmp.gt.f32.partialorder %v9090, 0.0
    %vm9097 = vcmp.gt.f32.partialorder %v9093, 0.0
    %v9098 = vmul.f32 %v9090, 0.01
    %v9099 = vmul.f32 %v9093, 0.01
    %v9100 = vsel %vm9096, %v9090, %v9098
    %v9101 = vsel %vm9097, %v9093, %v9099
    %v9102 = vpack.c.bf16 %v9101, %v9100
    %v9103 = vld [vmem:[%s5] sm:$0xf]
    %v9104 = vld [vmem:[%s5 + $0x4] sm:$0xf]
    %v9105 = vld [vmem:[%s5 + $0x8] sm:$0xf]
    %v9106 = vld [vmem:[%s5 + $0xc] sm:$0xf]
    %v9107 = vld [vmem:[%s5 + $0x10] sm:$0xf]
    %v9108 = vld [vmem:[%s5 + $0x14] sm:$0xf]
    %v9109 = vld [vmem:[%s5 + $0x18] sm:$0xf]
    %v9110 = vld [vmem:[%s5 + $0x1c] sm:$0xf]
    %v9111 = vld [vmem:[%s5 + $0x20] sm:$0xf]
    %v9112 = vld [vmem:[%s5 + $0x24] sm:$0xf]
    %v9113 = vld [vmem:[%s5 + $0x28] sm:$0xf]
    %v9114 = vld [vmem:[%s5 + $0x2c] sm:$0xf]
    %v9115 = vld [vmem:[%s5 + $0x30] sm:$0xf]
    %v9116 = vld [vmem:[%s5 + $0x34] sm:$0xf]
    %v9117 = vld [vmem:[%s5 + $0x38] sm:$0xf]
    %v9118 = vld [vmem:[%s5 + $0x3c] sm:$0xf]
    %v9119 = vld [vmem:[#allocation11] sm:$0x1]
    %v9121 = vlaneseq
    %v9122 = vshrl.u32 %v9121, 7
    %v9123 = vsub.s32 0, %v9122
    %v9124 = vrot.slane %v9119, %v9123
    %v9142 = vunpack.c.l.b16 %v9103
    %v9143 = vunpack.c.l.b16 %v9104
    %v9144 = vunpack.c.l.b16 %v9105
    %v9145 = vunpack.c.l.b16 %v9106
    %v9146 = vunpack.c.l.b16 %v9107
    %v9147 = vunpack.c.l.b16 %v9108
    %v9148 = vunpack.c.l.b16 %v9109
    %v9149 = vunpack.c.l.b16 %v9110
    %v9150 = vunpack.c.l.b16 %v9111
    %v9151 = vunpack.c.l.b16 %v9112
    %v9152 = vunpack.c.l.b16 %v9113
    %v9153 = vunpack.c.l.b16 %v9114
    %v9154 = vunpack.c.l.b16 %v9115
    %v9155 = vunpack.c.l.b16 %v9116
    %v9156 = vunpack.c.l.b16 %v9117
    %v9157 = vunpack.c.l.b16 %v9118
    %v9158 = vpack.c.b16 %v9143, %v9142
    %v9159 = vpack.c.b16 %v9145, %v9144
    %v9160 = vpack.c.b16 %v9147, %v9146
    %v9161 = vpack.c.b16 %v9149, %v9148
    %v9162 = vpack.c.b16 %v9151, %v9150
    %v9163 = vpack.c.b16 %v9153, %v9152
    %v9164 = vpack.c.b16 %v9155, %v9154
    %v9165 = vpack.c.b16 %v9157, %v9156
    %9174 = vmatprep.subr.bf16.mxu0 0
    %9175 = vmatpush1.bf16.msra.mxu0 %v9158
    %9176 = vmatprep.subr.bf16.mxu0 0
    %9177 = vmatpush1.bf16.msra.mxu0 %v9159
    %9178 = vmatprep.subr.bf16.mxu0 0
    %9179 = vmatpush1.bf16.msra.mxu0 %v9160
    %9180 = vmatprep.subr.bf16.mxu0 0
    %9181 = vmatpush1.bf16.msra.mxu0 %v9161
    %9182 = vmatprep.subr.bf16.mxu0 0
    %9183 = vmatpush1.bf16.msra.mxu0 %v9162
    %9184 = vmatprep.subr.bf16.mxu0 0
    %9185 = vmatpush1.bf16.msra.mxu0 %v9163
    %9186 = vmatprep.subr.bf16.mxu0 0
    %9187 = vmatpush1.bf16.msra.mxu0 %v9164
    %9188 = vmatprep.subr.bf16.mxu0 0
    %9189 = vmatpush1.bf16.msra.mxu0 %v9165
    %9190 = vmatprep.subr.bf16.mxu0 0
    %9191 = vmatpush1.bf16.msra.mxu0 0
    %9192 = vmatprep.subr.bf16.mxu0 0
    %9193 = vmatpush1.bf16.msra.mxu0 0
    %9194 = vmatprep.subr.bf16.mxu0 0
    %9195 = vmatpush1.bf16.msra.mxu0 0
    %9196 = vmatprep.subr.bf16.mxu0 0
    %9197 = vmatpush1.bf16.msra.mxu0 0
    %9198 = vmatprep.subr.bf16.mxu0 0
    %9199 = vmatpush1.bf16.msra.mxu0 0
    %9200 = vmatprep.subr.bf16.mxu0 0
    %9201 = vmatpush1.bf16.msra.mxu0 0
    %9202 = vmatprep.subr.bf16.mxu0 0
    %9203 = vmatpush1.bf16.msra.mxu0 0
    %9204 = vmatprep.subr.bf16.mxu0 0
    %9205 = vmatpush1.bf16.msra.mxu0 0
    %9206 = vmatprep.mubr.bf16.mxu0 0
    %9207 = vmatmul.mubr.bf16.gmra.mrb[0].mxu0 %v9102
    %v9208 = vpop.f32.mrb[0].mxu0
    %v9209 = vadd.f32 %v9124, %v9208
    %v9210 = vpop.f32.mrb[0].mxu0
    %v9211 = vpop.f32.mrb[0].mxu0
    %v9212 = vadd.f32 %v9124, %v9211
    %v9213 = vpop.f32.mrb[0].mxu0
    %9214 = vdwg.mxu0
    %vm9215 = vcmp.gt.f32.partialorder %v9209, 0.0
    %vm9216 = vcmp.gt.f32.partialorder %v9212, 0.0
    %v9217 = vmul.f32 %v9209, 0.01
    %v9218 = vmul.f32 %v9212, 0.01
    %v9219 = vsel %vm9215, %v9209, %v9217
    %v9220 = vsel %vm9216, %v9212, %v9218
    %v9221 = vpack.c.bf16 %v9220, %v9219
    %v9222 = vld [vmem:[#allocation13] sm:$0xf]
    %v9223 = vld [vmem:[#allocation13 + $0x4] sm:$0xf]
    %v9224 = vld [vmem:[#allocation13 + $0x8] sm:$0xf]
    %v9225 = vld [vmem:[#allocation13 + $0xc] sm:$0xf]
    %v9226 = vld [vmem:[#allocation13 + $0x10] sm:$0xf]
    %v9227 = vld [vmem:[#allocation13 + $0x14] sm:$0xf]
    %v9228 = vld [vmem:[#allocation13 + $0x18] sm:$0xf]
    %v9229 = vld [vmem:[#allocation13 + $0x1c] sm:$0xf]
    %v9230 = vld [vmem:[#allocation14] sm:$0x1]
    %v9232 = vlaneseq
    %v9233 = vshrl.u32 %v9232, 7
    %v9234 = vsub.s32 0, %v9233
    %v9235 = vrot.slane %v9230, %v9234
    %v9245 = vunpack.c.l.b16 %v9222
    %v9246 = vunpack.c.l.b16 %v9223
    %v9247 = vunpack.c.l.b16 %v9224
    %v9248 = vunpack.c.l.b16 %v9225
    %v9249 = vunpack.c.l.b16 %v9226
    %v9250 = vunpack.c.l.b16 %v9227
    %v9251 = vunpack.c.l.b16 %v9228
    %v9252 = vunpack.c.l.b16 %v9229
    %v9253 = vpack.c.b16 %v9246, %v9245
    %v9254 = vpack.c.b16 %v9248, %v9247
    %v9255 = vpack.c.b16 %v9250, %v9249
    %v9256 = vpack.c.b16 %v9252, %v9251
    %vm9261 = vcmask 523264
    %v9263 = vsel %vm9261, %v9221, 0
    %9265 = vmatprep.subr.bf16.mxu0 0
    %9266 = vmatpush1.bf16.msra.mxu0 %v9253
    %9267 = vmatprep.subr.bf16.mxu0 0
    %9268 = vmatpush1.bf16.msra.mxu0 %v9254
    %9269 = vmatprep.subr.bf16.mxu0 0
    %9270 = vmatpush1.bf16.msra.mxu0 %v9255
    %9271 = vmatprep.subr.bf16.mxu0 0
    %9272 = vmatpush1.bf16.msra.mxu0 %v9256
    %9273 = vmatprep.subr.bf16.mxu0 0
    %9274 = vmatpush1.bf16.msra.mxu0 0
    %9275 = vmatprep.subr.bf16.mxu0 0
    %9276 = vmatpush1.bf16.msra.mxu0 0
    %9277 = vmatprep.subr.bf16.mxu0 0
    %9278 = vmatpush1.bf16.msra.mxu0 0
    %9279 = vmatprep.subr.bf16.mxu0 0
    %9280 = vmatpush1.bf16.msra.mxu0 0
    %9281 = vmatprep.subr.bf16.mxu0 0
    %9282 = vmatpush1.bf16.msra.mxu0 0
    %9283 = vmatprep.subr.bf16.mxu0 0
    %9284 = vmatpush1.bf16.msra.mxu0 0
    %9285 = vmatprep.subr.bf16.mxu0 0
    %9286 = vmatpush1.bf16.msra.mxu0 0
    %9287 = vmatprep.subr.bf16.mxu0 0
    %9288 = vmatpush1.bf16.msra.mxu0 0
    %9289 = vmatprep.subr.bf16.mxu0 0
    %9290 = vmatpush1.bf16.msra.mxu0 0
    %9291 = vmatprep.subr.bf16.mxu0 0
    %9292 = vmatpush1.bf16.msra.mxu0 0
    %9293 = vmatprep.subr.bf16.mxu0 0
    %9294 = vmatpush1.bf16.msra.mxu0 0
    %9295 = vmatprep.subr.bf16.mxu0 0
    %9296 = vmatpush1.bf16.msra.mxu0 0
    %9297 = vmatprep.mubr.bf16.mxu0 0
    %9298 = vmatmul.mubr.bf16.gmra.mrb[0].mxu0 %v9263
    %v9299 = vpop.f32.mrb[0].mxu0
    %v9300 = vadd.f32 %v9235, %v9299
    %v9301 = vpop.f32.mrb[0].mxu0
    %v9302 = vpop.f32.mrb[0].mxu0
    %v9303 = vadd.f32 %v9235, %v9302
    %v9304 = vpop.f32.mrb[0].mxu0
    %9305 = vdwg.mxu0
    %9306 = vst [vmem:[#allocation16] sm:$0xff] %v9300
    %9307 = vst [vmem:[#allocation16 + $0x8] sm:$0xff] %v9303
    // Predicated region
    $region70: #{tpu_custom_call.1} parent=1 // pred_check
      _
    $region71: #{tpu_custom_call.1} parent=1 // pred_check_branch
      %9309 = sbr.rel (0) target = $region73
    $region72: #{tpu_custom_call.1} parent=1 // pred_region
      %s9311 = ssub.s32 256, 256
      %9312 = vsyncadd [#allocation4], %s9311
      %s9313 = sshll.u32 [#allocation16], 4
      %s9314 = int_to_ptr.vmem [resolvable:$true] %s9313
      %9319 = dma.vmem_to_hbm [thread:$0]  %s9314, 256, %s9, [#allocation4], 128, 128, 8
    $region73: #{tpu_custom_call.1} parent=1 // pred_fallthru
      _
    // Predicated region
    $region74: #{tpu_custom_call.1} parent=1 // pred_check
      _
    $region75: #{tpu_custom_call.1} parent=1 // pred_check_branch
      %9321 = sbr.rel (0) target = $region77
    $region76: #{tpu_custom_call.1} parent=1 // pred_region
      %9322 = dma.done [#allocation4], 256
    $region77: #{tpu_custom_call.1} parent=1 // pred_fallthru
      _
    %9323 = vsyncpa [#allocation3], 1
    %9324 = vsyncpa [#allocation6], 1
    %9325 = vsyncpa [#allocation9], 1
    %9326 = vsyncpa [#allocation12], 1
    %9327 = vsyncpa [#allocation15], 1
    %9328 = vsyncpa [#allocation4], 1

</llo_original>
